<compile_context>
chip_gen: v6e
topology: v6e:2x2x1
jax: 0.10.0
libtpu: 0.0.40
codegen_flags: <defaults>
</compile_context>

<pallas_src>
import math

import jax
import jax.numpy as jnp
from jax.experimental import pallas as pl
from jax.experimental.pallas import tpu as pltpu

# Small, module-consistent shapes.
B = 2          # batch
S_TGT = 8      # target (decoder) sequence length
S_SRC = 16     # source (encoder) sequence length
D = 32         # d_model
H = 4          # heads
DK = D // H    # head dim (== 8 == sublane tile)
DFF = 64       # feed-forward hidden
L = 2          # number of decoder blocks
EPS = 1e-6


def decoder_kernel(ln_ref, x_ref, enc_ref, sbias_ref, cbias_ref,
                   wdd_ref, bd_ref, w1_ref, b1_ref, w2_ref, o_ref):
    h = x_ref[...]            # (B*S_TGT, D)   target activations, batch in sublanes
    enc = enc_ref[...]        # (B*S_SRC, D)   raw encoder output (not re-normalized)
    sbias = sbias_ref[...]    # (B*H*S_TGT, S_TGT)  additive self-attn mask bias
    cbias = cbias_ref[...]    # (B*H*S_TGT, S_SRC)  additive cross-attn mask bias

    scale = 1.0 / math.sqrt(DK)

    def layernorm(t, a, c):
        # Matches Layer_Normalization: unbiased std (N-1), eps added to the std.
        mean = jnp.mean(t, axis=-1, keepdims=True)
        cen = t - mean
        var = jnp.sum(cen * cen, axis=-1, keepdims=True) * (1.0 / (D - 1))
        return a * cen / (jnp.sqrt(var) + EPS) + c          # exact division

    def attention(q2d, k2d, v2d, bias, s_q, s_kv):
        # q2d: (B*s_q, D); k2d/v2d: (B*s_kv, D); bias: (B*H*s_q, s_kv)
        # 1) per-(batch,head) scores, one K transpose per batch
        scs = []
        for b in range(B):                                   # static, B=2
            qb = q2d[b * s_q:(b + 1) * s_q, :]
            kbT = k2d[b * s_kv:(b + 1) * s_kv, :].T          # (D, s_kv): one transpose
            for hh in range(H):                              # static, H=4
                lo = hh * DK
                qh = qb[:, lo:lo + DK]                       # (s_q, DK)
                khT = kbT[lo:lo + DK, :]                     # (DK, s_kv) sublane-aligned
                scs.append(jnp.dot(qh, khT,
                                   preferred_element_type=jnp.float32))
        # 2) one stacked softmax over all (batch, head) rows
        sc = jnp.concatenate(scs, axis=0) * scale + bias     # (B*H*s_q, s_kv)
        m = jnp.max(sc, axis=-1, keepdims=True)
        p = jnp.exp(sc - m)
        p = p / jnp.sum(p, axis=-1, keepdims=True)           # exact division
        # 3) per-(batch,head) P @ V, concat heads (lanes) then batches (sublanes)
        outs = []
        for b in range(B):
            vb = v2d[b * s_kv:(b + 1) * s_kv, :]
            heads = []
            for hh in range(H):
                row = (b * H + hh) * s_q
                p_bh = p[row:row + s_q, :]                   # sublane-aligned slice
                vh = vb[:, hh * DK:(hh + 1) * DK]
                heads.append(jnp.dot(p_bh, vh,
                                     preferred_element_type=jnp.float32))
            outs.append(jnp.concatenate(heads, axis=-1))     # (s_q, D)
        return jnp.concatenate(outs, axis=0)                 # (B*s_q, D)

    for l in range(L):                                       # static layer loop
        base = 6 * l
        a1, c1 = ln_ref[base + 0], ln_ref[base + 1]
        a2, c2 = ln_ref[base + 2], ln_ref[base + 3]
        a3, c3 = ln_ref[base + 4], ln_ref[base + 5]
        wb = 8 * l      # (D,D) weight stack base:  q_s,k_s,v_s,o_s,q_c,k_c,v_c,o_c
        bb = 9 * l      # (1,D) bias   stack base:  q_s,k_s,v_s,o_s,q_c,k_c,v_c,o_c,b2

        # ---- residual 1: masked multi-head self-attention over LN(h) ----
        hn = layernorm(h, a1, c1)
        q = jnp.dot(hn, wdd_ref[wb + 0], preferred_element_type=jnp.float32) + bd_ref[bb + 0]
        k = jnp.dot(hn, wdd_ref[wb + 1], preferred_element_type=jnp.float32) + bd_ref[bb + 1]
        v = jnp.dot(hn, wdd_ref[wb + 2], preferred_element_type=jnp.float32) + bd_ref[bb + 2]
        attn = attention(q, k, v, sbias, S_TGT, S_TGT)
        h = h + jnp.dot(attn, wdd_ref[wb + 3],
                        preferred_element_type=jnp.float32) + bd_ref[bb + 3]

        # ---- residual 2: cross-attention (query = LN(h), key/value = encoder out) ----
        hn = layernorm(h, a2, c2)
        q = jnp.dot(hn, wdd_ref[wb + 4], preferred_element_type=jnp.float32) + bd_ref[bb + 4]
        k = jnp.dot(enc, wdd_ref[wb + 5], preferred_element_type=jnp.float32) + bd_ref[bb + 5]
        v = jnp.dot(enc, wdd_ref[wb + 6], preferred_element_type=jnp.float32) + bd_ref[bb + 6]
        attn = attention(q, k, v, cbias, S_TGT, S_SRC)
        h = h + jnp.dot(attn, wdd_ref[wb + 7],
                        preferred_element_type=jnp.float32) + bd_ref[bb + 7]

        # ---- residual 3: feed-forward ----
        hn = layernorm(h, a3, c3)
        f = jnp.maximum(
            jnp.dot(hn, w1_ref[l], preferred_element_type=jnp.float32) + b1_ref[l], 0.0)
        f = jnp.dot(f, w2_ref[l], preferred_element_type=jnp.float32) + bd_ref[bb + 8]
        h = h + f

    # ---- Decoder's final Layer_Normalization ----
    o_ref[...] = layernorm(h, ln_ref[6 * L], ln_ref[6 * L + 1])


def decoder_pallas(x, enc, src_mask, tgt_mask, layer_params, final_ln):
    Bn, St, Dn = x.shape
    Ss = enc.shape[1]

    # ---- one-time weight preprocessing (layer stacking / operand consolidation) ----
    wdd_list, bd_list, ln_list = [], [], []
    for lp in layer_params:
        (a1, c1, a2, c2, a3, c3,
         wq_s, bq_s, wk_s, bk_s, wv_s, bv_s, wo_s, bo_s,
         wq_c, bq_c, wk_c, bk_c, wv_c, bv_c, wo_c, bo_c,
         w1, b1, w2, b2) = lp
        wdd_list += [wq_s, wk_s, wv_s, wo_s, wq_c, wk_c, wv_c, wo_c]
        bd_list += [bq_s, bk_s, bv_s, bo_s, bq_c, bk_c, bv_c, bo_c, b2]
        ln_list += [a1, c1, a2, c2, a3, c3]
    ln_list += list(final_ln)

    wdd = jnp.stack(wdd_list)                                   # (L*8, D, D)
    bd = jnp.stack(bd_list)                                     # (L*9, 1, D)
    w1s = jnp.stack([lp[22] for lp in layer_params])            # (L, D, DFF)
    b1s = jnp.stack([lp[23] for lp in layer_params])            # (L, 1, DFF)
    w2s = jnp.stack([lp[24] for lp in layer_params])            # (L, DFF, D)
    ln = jnp.stack([jnp.asarray(v, jnp.float32) for v in ln_list])   # (6L+2,)

    # Additive attention biases, fully broadcast & stacked over (batch, head) once
    # in the wrapper: mask==1 -> +0, mask==0 -> -1e9.
    tgt_bias = (tgt_mask - 1.0) * 1e9                            # (B, St, St)
    src_bias = (src_mask - 1.0) * 1e9                            # (B, 1, Ss)
    sbias = jnp.broadcast_to(tgt_bias[:, None, :, :],
                             (Bn, H, St, St)).reshape(Bn * H * St, St)
    cbias = jnp.broadcast_to(src_bias[:, None, :, :],
                             (Bn, H, St, Ss)).reshape(Bn * H * St, Ss)

    x2d = x.reshape(Bn * St, Dn)        # batch folded into sublanes
    enc2d = enc.reshape(Bn * Ss, Dn)

    vmem_inputs = (x2d, enc2d, sbias, cbias, wdd, bd, w1s, b1s, w2s)
    in_specs = ([pl.BlockSpec(memory_space=pltpu.MemorySpace.SMEM)]       # LN scalars
                + [pl.BlockSpec(memory_space=pltpu.MemorySpace.VMEM)] * len(vmem_inputs))
    out_spec = pl.BlockSpec(memory_space=pltpu.MemorySpace.VMEM)

    out2d = pl.pallas_call(
        decoder_kernel,
        out_shape=jax.ShapeDtypeStruct((Bn * St, Dn), jnp.float32),
        in_specs=in_specs,                # no grid: single invocation, all resident
        out_specs=out_spec,
    )(ln, *vmem_inputs)
    return out2d.reshape(Bn, St, Dn)


def ref_decoder(x, enc, src_mask, tgt_mask, layer_params, final_ln):
    """Pure-JAX reference mirroring the PyTorch Decoder exactly (eval mode)."""
    def layernorm(t, a, c):
        mean = t.mean(axis=-1, keepdims=True)
        var = ((t - mean) ** 2).sum(axis=-1, keepdims=True) / (t.shape[-1] - 1)
        return a * (t - mean) / (jnp.sqrt(var) + EPS) + c

    def mha(q_in, k_in, v_in, mask, wq, bq, wk, bk, wv, bv, wo, bo):
        Bn, Sq, Dn = q_in.shape
        Sk = k_in.shape[1]
        q = q_in @ wq + bq
        k = k_in @ wk + bk
        v = v_in @ wv + bv
        qh = q.reshape(Bn, Sq, H, DK).transpose(0, 2, 1, 3)
        kh = k.reshape(Bn, Sk, H, DK).transpose(0, 2, 1, 3)
        vh = v.reshape(Bn, Sk, H, DK).transpose(0, 2, 1, 3)
        sc = jnp.einsum('bhqd,bhkd->bhqk', qh, kh) / math.sqrt(DK)
        sc = jnp.where(mask[:, None, :, :] == 0.0, -1e9, sc)
        p = jax.nn.softmax(sc, axis=-1)
        o = jnp.einsum('bhqk,bhkd->bhqd', p, vh).transpose(0, 2, 1, 3).reshape(Bn, Sq, Dn)
        return o @ wo + bo

    h = x
    for lp in layer_params:
        (a1, c1, a2, c2, a3, c3,
         wq_s, bq_s, wk_s, bk_s, wv_s, bv_s, wo_s, bo_s,
         wq_c, bq_c, wk_c, bk_c, wv_c, bv_c, wo_c, bo_c,
         w1, b1, w2, b2) = lp
        hn = layernorm(h, a1, c1)
        h = h + mha(hn, hn, hn, tgt_mask, wq_s, bq_s, wk_s, bk_s, wv_s, bv_s, wo_s, bo_s)
        hn = layernorm(h, a2, c2)
        h = h + mha(hn, enc, enc, src_mask, wq_c, bq_c, wk_c, bk_c, wv_c, bv_c, wo_c, bo_c)
        hn = layernorm(h, a3, c3)
        h = h + (jnp.maximum(hn @ w1 + b1, 0.0) @ w2 + b2)
    af, cf = final_ln
    return layernorm(h, af, cf)


if __name__ == "__main__":
    key = jax.random.PRNGKey(0)
    kx, kenc, kp = jax.random.split(key, 3)

    x = jax.random.normal(kx, (B, S_TGT, D), jnp.float32)
    enc = jax.random.normal(kenc, (B, S_SRC, D), jnp.float32)

    # Source key-padding mask: batch 0 full, batch 1 has last 3 tokens masked.
    src_lens = jnp.array([S_SRC, S_SRC - 3])
    src_pos = jnp.arange(S_SRC)
    src_mask = (src_pos[None, :] < src_lens[:, None]).astype(jnp.float32).reshape(B, 1, S_SRC)

    # Target mask: causal AND key-padding (batch 1 has last 2 tokens masked).
    tgt_lens = jnp.array([S_TGT, S_TGT - 2])
    tgt_pos = jnp.arange(S_TGT)
    pad = (tgt_pos[None, :] < tgt_lens[:, None]).astype(jnp.float32)       # (B, S_TGT)
    causal = jnp.tril(jnp.ones((S_TGT, S_TGT), jnp.float32))
    tgt_mask = causal[None, :, :] * pad[:, None, :]                        # (B, S_TGT, S_TGT)

    keys = iter(jax.random.split(kp, 128))

    def nk():
        return next(keys)

    def w(shape, scale=0.1):
        return jax.random.normal(nk(), shape, jnp.float32) * scale

    def ln_pair():
        return (jax.random.uniform(nk(), (), jnp.float32, 0.8, 1.2),
                jax.random.uniform(nk(), (), jnp.float32, -0.2, 0.2))

    layer_params = []
    for _ in range(L):
        a1, c1 = ln_pair()
        a2, c2 = ln_pair()
        a3, c3 = ln_pair()
        wq_s, bq_s = w((D, D)), w((1, D))
        wk_s, bk_s = w((D, D)), w((1, D))
        wv_s, bv_s = w((D, D)), w((1, D))
        wo_s, bo_s = w((D, D)), w((1, D))
        wq_c, bq_c = w((D, D)), w((1, D))
        wk_c, bk_c = w((D, D)), w((1, D))
        wv_c, bv_c = w((D, D)), w((1, D))
        wo_c, bo_c = w((D, D)), w((1, D))
        w1, b1 = w((D, DFF)), w((1, DFF))
        w2, b2 = w((DFF, D)), w((1, D))
        layer_params.append((a1, c1, a2, c2, a3, c3,
                             wq_s, bq_s, wk_s, bk_s, wv_s, bv_s, wo_s, bo_s,
                             wq_c, bq_c, wk_c, bk_c, wv_c, bv_c, wo_c, bo_c,
                             w1, b1, w2, b2))
    final_ln = ln_pair()

    out = decoder_pallas(x, enc, src_mask, tgt_mask, layer_params, final_ln)
    out = jax.block_until_ready(out)

    ref = ref_decoder(x, enc, src_mask, tgt_mask, layer_params, final_ln)
    assert out.shape == (B, S_TGT, D)
    max_err = float(jnp.max(jnp.abs(out - ref)))
    # All divisions are exact f32 now (previous failure: approx reciprocals -> 7e-3),
    # so the kernel should match the reference to fp32 accumulation-order noise.
    assert jnp.allclose(out, ref, atol=5e-4, rtol=5e-4), max_err
    print("KERNEL_OK")
</pallas_src>

<mosaic_0001>
module attributes {stable_mosaic.version = 11 : i64} {
  func.func @decoder_kernel(%arg0: memref<14xf32, #tpu.memory_space<smem>>, %arg1: memref<16x32xf32, #tpu.memory_space<vmem>>, %arg2: memref<32x32xf32, #tpu.memory_space<vmem>>, %arg3: memref<64x8xf32, #tpu.memory_space<vmem>>, %arg4: memref<64x16xf32, #tpu.memory_space<vmem>>, %arg5: memref<16x32x32xf32, #tpu.memory_space<vmem>>, %arg6: memref<18x1x32xf32, #tpu.memory_space<vmem>>, %arg7: memref<2x32x64xf32, #tpu.memory_space<vmem>>, %arg8: memref<2x1x64xf32, #tpu.memory_space<vmem>>, %arg9: memref<2x64x32xf32, #tpu.memory_space<vmem>>, %arg10: memref<16x32xf32, #tpu.memory_space<vmem>>) attributes {dimension_semantics = [], scalar_prefetch = 0 : i64, scratch_operands = 0 : i64, tpu.core_type = #tpu.core_type<tc>} {
    %c0 = arith.constant 0 : index
    %c0_0 = arith.constant 0 : index
    %0 = vector.load %arg1[%c0, %c0_0] : memref<16x32xf32, #tpu.memory_space<vmem>>, vector<16x32xf32>
    %c0_1 = arith.constant 0 : index
    %c0_2 = arith.constant 0 : index
    %1 = vector.load %arg2[%c0_1, %c0_2] : memref<32x32xf32, #tpu.memory_space<vmem>>, vector<32x32xf32>
    %c0_3 = arith.constant 0 : index
    %c0_4 = arith.constant 0 : index
    %2 = vector.load %arg3[%c0_3, %c0_4] : memref<64x8xf32, #tpu.memory_space<vmem>>, vector<64x8xf32>
    %c0_5 = arith.constant 0 : index
    %c0_6 = arith.constant 0 : index
    %3 = vector.load %arg4[%c0_5, %c0_6] : memref<64x16xf32, #tpu.memory_space<vmem>>, vector<64x16xf32>
    %c0_7 = arith.constant 0 : index
    %4 = memref.load %arg0[%c0_7] : memref<14xf32, #tpu.memory_space<smem>>
    %c1 = arith.constant 1 : index
    %5 = memref.load %arg0[%c1] : memref<14xf32, #tpu.memory_space<smem>>
    %c2 = arith.constant 2 : index
    %6 = memref.load %arg0[%c2] : memref<14xf32, #tpu.memory_space<smem>>
    %c3 = arith.constant 3 : index
    %7 = memref.load %arg0[%c3] : memref<14xf32, #tpu.memory_space<smem>>
    %c4 = arith.constant 4 : index
    %8 = memref.load %arg0[%c4] : memref<14xf32, #tpu.memory_space<smem>>
    %c5 = arith.constant 5 : index
    %9 = memref.load %arg0[%c5] : memref<14xf32, #tpu.memory_space<smem>>
    %cst = arith.constant dense<0.000000e+00> : vector<16xf32>
    %10 = vector.multi_reduction <add>, %0, %cst [1] : vector<16x32xf32> to vector<16xf32>
    %11 = vector.shape_cast %10 : vector<16xf32> to vector<16x1xf32>
    %cst_8 = arith.constant 3.200000e+01 : f32
    %12 = vector.broadcast %cst_8 : f32 to vector<16x1xf32>
    %13 = arith.divf %11, %12 : vector<16x1xf32>
    %14 = vector.broadcast %13 : vector<16x1xf32> to vector<16x32xf32>
    %15 = arith.subf %0, %14 : vector<16x32xf32>
    %16 = arith.mulf %15, %15 : vector<16x32xf32>
    %cst_9 = arith.constant dense<0.000000e+00> : vector<16xf32>
    %17 = vector.multi_reduction <add>, %16, %cst_9 [1] : vector<16x32xf32> to vector<16xf32>
    %18 = vector.shape_cast %17 : vector<16xf32> to vector<16x1xf32>
    %cst_10 = arith.constant 0.0322580636 : f32
    %19 = vector.broadcast %cst_10 : f32 to vector<16x1xf32>
    %20 = arith.mulf %18, %19 : vector<16x1xf32>
    %21 = vector.broadcast %4 : f32 to vector<16x32xf32>
    %22 = arith.mulf %21, %15 : vector<16x32xf32>
    %23 = math.sqrt %20 : vector<16x1xf32>
    %cst_11 = arith.constant 9.99999997E-7 : f32
    %24 = vector.broadcast %cst_11 : f32 to vector<16x1xf32>
    %25 = arith.addf %23, %24 : vector<16x1xf32>
    %26 = vector.broadcast %25 : vector<16x1xf32> to vector<16x32xf32>
    %27 = arith.divf %22, %26 : vector<16x32xf32>
    %28 = vector.broadcast %5 : f32 to vector<16x32xf32>
    %29 = arith.addf %27, %28 : vector<16x32xf32>
    %c0_12 = arith.constant 0 : index
    %c0_13 = arith.constant 0 : index
    %c0_14 = arith.constant 0 : index
    %30 = vector.load %arg5[%c0_12, %c0_13, %c0_14] : memref<16x32x32xf32, #tpu.memory_space<vmem>>, vector<1x32x32xf32>
    %31 = vector.shape_cast %30 : vector<1x32x32xf32> to vector<32x32xf32>
    %cst_15 = arith.constant dense<0.000000e+00> : vector<16x32xf32>
    %32 = tpu.matmul %29, %31, %cst_15 {dimension_numbers = #tpu.dot_dimension_numbers<[1], [0], [0], [1], [0, 0, 1, 1], [], []>} : vector<16x32xf32>, vector<32x32xf32>, vector<16x32xf32> -> vector<16x32xf32>
    %c0_16 = arith.constant 0 : index
    %c0_17 = arith.constant 0 : index
    %c0_18 = arith.constant 0 : index
    %33 = vector.load %arg6[%c0_16, %c0_17, %c0_18] : memref<18x1x32xf32, #tpu.memory_space<vmem>>, vector<1x1x32xf32>
    %34 = vector.shape_cast %33 : vector<1x1x32xf32> to vector<1x32xf32>
    %35 = vector.broadcast %34 : vector<1x32xf32> to vector<16x32xf32>
    %36 = arith.addf %32, %35 : vector<16x32xf32>
    %c1_19 = arith.constant 1 : index
    %c0_20 = arith.constant 0 : index
    %c0_21 = arith.constant 0 : index
    %37 = vector.load %arg5[%c1_19, %c0_20, %c0_21] : memref<16x32x32xf32, #tpu.memory_space<vmem>>, vector<1x32x32xf32>
    %38 = vector.shape_cast %37 : vector<1x32x32xf32> to vector<32x32xf32>
    %cst_22 = arith.constant dense<0.000000e+00> : vector<16x32xf32>
    %39 = tpu.matmul %29, %38, %cst_22 {dimension_numbers = #tpu.dot_dimension_numbers<[1], [0], [0], [1], [0, 0, 1, 1], [], []>} : vector<16x32xf32>, vector<32x32xf32>, vector<16x32xf32> -> vector<16x32xf32>
    %c1_23 = arith.constant 1 : index
    %c0_24 = arith.constant 0 : index
    %c0_25 = arith.constant 0 : index
    %40 = vector.load %arg6[%c1_23, %c0_24, %c0_25] : memref<18x1x32xf32, #tpu.memory_space<vmem>>, vector<1x1x32xf32>
    %41 = vector.shape_cast %40 : vector<1x1x32xf32> to vector<1x32xf32>
    %42 = vector.broadcast %41 : vector<1x32xf32> to vector<16x32xf32>
    %43 = arith.addf %39, %42 : vector<16x32xf32>
    %c2_26 = arith.constant 2 : index
    %c0_27 = arith.constant 0 : index
    %c0_28 = arith.constant 0 : index
    %44 = vector.load %arg5[%c2_26, %c0_27, %c0_28] : memref<16x32x32xf32, #tpu.memory_space<vmem>>, vector<1x32x32xf32>
    %45 = vector.shape_cast %44 : vector<1x32x32xf32> to vector<32x32xf32>
    %cst_29 = arith.constant dense<0.000000e+00> : vector<16x32xf32>
    %46 = tpu.matmul %29, %45, %cst_29 {dimension_numbers = #tpu.dot_dimension_numbers<[1], [0], [0], [1], [0, 0, 1, 1], [], []>} : vector<16x32xf32>, vector<32x32xf32>, vector<16x32xf32> -> vector<16x32xf32>
    %c2_30 = arith.constant 2 : index
    %c0_31 = arith.constant 0 : index
    %c0_32 = arith.constant 0 : index
    %47 = vector.load %arg6[%c2_30, %c0_31, %c0_32] : memref<18x1x32xf32, #tpu.memory_space<vmem>>, vector<1x1x32xf32>
    %48 = vector.shape_cast %47 : vector<1x1x32xf32> to vector<1x32xf32>
    %49 = vector.broadcast %48 : vector<1x32xf32> to vector<16x32xf32>
    %50 = arith.addf %46, %49 : vector<16x32xf32>
    %51 = vector.extract_strided_slice %36 {offsets = [0, 0], sizes = [8, 32], strides = [1, 1]} : vector<16x32xf32> to vector<8x32xf32>
    %52 = vector.extract_strided_slice %43 {offsets = [0, 0], sizes = [8, 32], strides = [1, 1]} : vector<16x32xf32> to vector<8x32xf32>
    %53 = tpu.transpose %52, [1, 0] : vector<8x32xf32> -> vector<32x8xf32>
    %54 = vector.extract_strided_slice %51 {offsets = [0, 0], sizes = [8, 8], strides = [1, 1]} : vector<8x32xf32> to vector<8x8xf32>
    %55 = vector.extract_strided_slice %53 {offsets = [0, 0], sizes = [8, 8], strides = [1, 1]} : vector<32x8xf32> to vector<8x8xf32>
    %cst_33 = arith.constant dense<0.000000e+00> : vector<8x8xf32>
    %56 = tpu.matmul %54, %55, %cst_33 {dimension_numbers = #tpu.dot_dimension_numbers<[1], [0], [0], [1], [0, 0, 1, 1], [], []>} : vector<8x8xf32>, vector<8x8xf32>, vector<8x8xf32> -> vector<8x8xf32>
    %57 = vector.extract_strided_slice %51 {offsets = [0, 8], sizes = [8, 8], strides = [1, 1]} : vector<8x32xf32> to vector<8x8xf32>
    %58 = vector.extract_strided_slice %53 {offsets = [8, 0], sizes = [8, 8], strides = [1, 1]} : vector<32x8xf32> to vector<8x8xf32>
    %cst_34 = arith.constant dense<0.000000e+00> : vector<8x8xf32>
    %59 = tpu.matmul %57, %58, %cst_34 {dimension_numbers = #tpu.dot_dimension_numbers<[1], [0], [0], [1], [0, 0, 1, 1], [], []>} : vector<8x8xf32>, vector<8x8xf32>, vector<8x8xf32> -> vector<8x8xf32>
    %60 = vector.extract_strided_slice %51 {offsets = [0, 16], sizes = [8, 8], strides = [1, 1]} : vector<8x32xf32> to vector<8x8xf32>
    %61 = vector.extract_strided_slice %53 {offsets = [16, 0], sizes = [8, 8], strides = [1, 1]} : vector<32x8xf32> to vector<8x8xf32>
    %cst_35 = arith.constant dense<0.000000e+00> : vector<8x8xf32>
    %62 = tpu.matmul %60, %61, %cst_35 {dimension_numbers = #tpu.dot_dimension_numbers<[1], [0], [0], [1], [0, 0, 1, 1], [], []>} : vector<8x8xf32>, vector<8x8xf32>, vector<8x8xf32> -> vector<8x8xf32>
    %63 = vector.extract_strided_slice %51 {offsets = [0, 24], sizes = [8, 8], strides = [1, 1]} : vector<8x32xf32> to vector<8x8xf32>
    %64 = vector.extract_strided_slice %53 {offsets = [24, 0], sizes = [8, 8], strides = [1, 1]} : vector<32x8xf32> to vector<8x8xf32>
    %cst_36 = arith.constant dense<0.000000e+00> : vector<8x8xf32>
    %65 = tpu.matmul %63, %64, %cst_36 {dimension_numbers = #tpu.dot_dimension_numbers<[1], [0], [0], [1], [0, 0, 1, 1], [], []>} : vector<8x8xf32>, vector<8x8xf32>, vector<8x8xf32> -> vector<8x8xf32>
    %66 = vector.extract_strided_slice %36 {offsets = [8, 0], sizes = [8, 32], strides = [1, 1]} : vector<16x32xf32> to vector<8x32xf32>
    %67 = vector.extract_strided_slice %43 {offsets = [8, 0], sizes = [8, 32], strides = [1, 1]} : vector<16x32xf32> to vector<8x32xf32>
    %68 = tpu.transpose %67, [1, 0] : vector<8x32xf32> -> vector<32x8xf32>
    %69 = vector.extract_strided_slice %66 {offsets = [0, 0], sizes = [8, 8], strides = [1, 1]} : vector<8x32xf32> to vector<8x8xf32>
    %70 = vector.extract_strided_slice %68 {offsets = [0, 0], sizes = [8, 8], strides = [1, 1]} : vector<32x8xf32> to vector<8x8xf32>
    %cst_37 = arith.constant dense<0.000000e+00> : vector<8x8xf32>
    %71 = tpu.matmul %69, %70, %cst_37 {dimension_numbers = #tpu.dot_dimension_numbers<[1], [0], [0], [1], [0, 0, 1, 1], [], []>} : vector<8x8xf32>, vector<8x8xf32>, vector<8x8xf32> -> vector<8x8xf32>
    %72 = vector.extract_strided_slice %66 {offsets = [0, 8], sizes = [8, 8], strides = [1, 1]} : vector<8x32xf32> to vector<8x8xf32>
    %73 = vector.extract_strided_slice %68 {offsets = [8, 0], sizes = [8, 8], strides = [1, 1]} : vector<32x8xf32> to vector<8x8xf32>
    %cst_38 = arith.constant dense<0.000000e+00> : vector<8x8xf32>
    %74 = tpu.matmul %72, %73, %cst_38 {dimension_numbers = #tpu.dot_dimension_numbers<[1], [0], [0], [1], [0, 0, 1, 1], [], []>} : vector<8x8xf32>, vector<8x8xf32>, vector<8x8xf32> -> vector<8x8xf32>
    %75 = vector.extract_strided_slice %66 {offsets = [0, 16], sizes = [8, 8], strides = [1, 1]} : vector<8x32xf32> to vector<8x8xf32>
    %76 = vector.extract_strided_slice %68 {offsets = [16, 0], sizes = [8, 8], strides = [1, 1]} : vector<32x8xf32> to vector<8x8xf32>
    %cst_39 = arith.constant dense<0.000000e+00> : vector<8x8xf32>
    %77 = tpu.matmul %75, %76, %cst_39 {dimension_numbers = #tpu.dot_dimension_numbers<[1], [0], [0], [1], [0, 0, 1, 1], [], []>} : vector<8x8xf32>, vector<8x8xf32>, vector<8x8xf32> -> vector<8x8xf32>
    %78 = vector.extract_strided_slice %66 {offsets = [0, 24], sizes = [8, 8], strides = [1, 1]} : vector<8x32xf32> to vector<8x8xf32>
    %79 = vector.extract_strided_slice %68 {offsets = [24, 0], sizes = [8, 8], strides = [1, 1]} : vector<32x8xf32> to vector<8x8xf32>
    %cst_40 = arith.constant dense<0.000000e+00> : vector<8x8xf32>
    %80 = tpu.matmul %78, %79, %cst_40 {dimension_numbers = #tpu.dot_dimension_numbers<[1], [0], [0], [1], [0, 0, 1, 1], [], []>} : vector<8x8xf32>, vector<8x8xf32>, vector<8x8xf32> -> vector<8x8xf32>
    %81 = tpu.concatenate %56, %59, %62, %65, %71, %74, %77, %80 in 0 : vector<8x8xf32>, vector<8x8xf32>, vector<8x8xf32>, vector<8x8xf32>, vector<8x8xf32>, vector<8x8xf32>, vector<8x8xf32>, vector<8x8xf32> -> vector<64x8xf32>
    %cst_41 = arith.constant 0.353553385 : f32
    %82 = vector.broadcast %cst_41 : f32 to vector<64x8xf32>
    %83 = arith.mulf %81, %82 : vector<64x8xf32>
    %84 = arith.addf %83, %2 : vector<64x8xf32>
    %cst_42 = arith.constant dense<0xFF800000> : vector<64xf32>
    %85 = vector.multi_reduction <maximumf>, %84, %cst_42 [1] : vector<64x8xf32> to vector<64xf32>
    %86 = vector.shape_cast %85 : vector<64xf32> to vector<64x1xf32>
    %87 = vector.broadcast %86 : vector<64x1xf32> to vector<64x8xf32>
    %88 = arith.subf %84, %87 : vector<64x8xf32>
    %89 = math.exp %88 : vector<64x8xf32>
    %cst_43 = arith.constant dense<0.000000e+00> : vector<64xf32>
    %90 = vector.multi_reduction <add>, %89, %cst_43 [1] : vector<64x8xf32> to vector<64xf32>
    %91 = vector.shape_cast %90 : vector<64xf32> to vector<64x1xf32>
    %92 = vector.broadcast %91 : vector<64x1xf32> to vector<64x8xf32>
    %93 = arith.divf %89, %92 : vector<64x8xf32>
    %94 = vector.extract_strided_slice %50 {offsets = [0, 0], sizes = [8, 32], strides = [1, 1]} : vector<16x32xf32> to vector<8x32xf32>
    %95 = vector.extract_strided_slice %93 {offsets = [0, 0], sizes = [8, 8], strides = [1, 1]} : vector<64x8xf32> to vector<8x8xf32>
    %96 = vector.extract_strided_slice %94 {offsets = [0, 0], sizes = [8, 8], strides = [1, 1]} : vector<8x32xf32> to vector<8x8xf32>
    %cst_44 = arith.constant dense<0.000000e+00> : vector<8x8xf32>
    %97 = tpu.matmul %95, %96, %cst_44 {dimension_numbers = #tpu.dot_dimension_numbers<[1], [0], [0], [1], [0, 0, 1, 1], [], []>} : vector<8x8xf32>, vector<8x8xf32>, vector<8x8xf32> -> vector<8x8xf32>
    %98 = vector.extract_strided_slice %93 {offsets = [8, 0], sizes = [8, 8], strides = [1, 1]} : vector<64x8xf32> to vector<8x8xf32>
    %99 = vector.extract_strided_slice %94 {offsets = [0, 8], sizes = [8, 8], strides = [1, 1]} : vector<8x32xf32> to vector<8x8xf32>
    %cst_45 = arith.constant dense<0.000000e+00> : vector<8x8xf32>
    %100 = tpu.matmul %98, %99, %cst_45 {dimension_numbers = #tpu.dot_dimension_numbers<[1], [0], [0], [1], [0, 0, 1, 1], [], []>} : vector<8x8xf32>, vector<8x8xf32>, vector<8x8xf32> -> vector<8x8xf32>
    %101 = vector.extract_strided_slice %93 {offsets = [16, 0], sizes = [8, 8], strides = [1, 1]} : vector<64x8xf32> to vector<8x8xf32>
    %102 = vector.extract_strided_slice %94 {offsets = [0, 16], sizes = [8, 8], strides = [1, 1]} : vector<8x32xf32> to vector<8x8xf32>
    %cst_46 = arith.constant dense<0.000000e+00> : vector<8x8xf32>
    %103 = tpu.matmul %101, %102, %cst_46 {dimension_numbers = #tpu.dot_dimension_numbers<[1], [0], [0], [1], [0, 0, 1, 1], [], []>} : vector<8x8xf32>, vector<8x8xf32>, vector<8x8xf32> -> vector<8x8xf32>
    %104 = vector.extract_strided_slice %93 {offsets = [24, 0], sizes = [8, 8], strides = [1, 1]} : vector<64x8xf32> to vector<8x8xf32>
    %105 = vector.extract_strided_slice %94 {offsets = [0, 24], sizes = [8, 8], strides = [1, 1]} : vector<8x32xf32> to vector<8x8xf32>
    %cst_47 = arith.constant dense<0.000000e+00> : vector<8x8xf32>
    %106 = tpu.matmul %104, %105, %cst_47 {dimension_numbers = #tpu.dot_dimension_numbers<[1], [0], [0], [1], [0, 0, 1, 1], [], []>} : vector<8x8xf32>, vector<8x8xf32>, vector<8x8xf32> -> vector<8x8xf32>
    %107 = tpu.concatenate %97, %100, %103, %106 in 1 : vector<8x8xf32>, vector<8x8xf32>, vector<8x8xf32>, vector<8x8xf32> -> vector<8x32xf32>
    %108 = vector.extract_strided_slice %50 {offsets = [8, 0], sizes = [8, 32], strides = [1, 1]} : vector<16x32xf32> to vector<8x32xf32>
    %109 = vector.extract_strided_slice %93 {offsets = [32, 0], sizes = [8, 8], strides = [1, 1]} : vector<64x8xf32> to vector<8x8xf32>
    %110 = vector.extract_strided_slice %108 {offsets = [0, 0], sizes = [8, 8], strides = [1, 1]} : vector<8x32xf32> to vector<8x8xf32>
    %cst_48 = arith.constant dense<0.000000e+00> : vector<8x8xf32>
    %111 = tpu.matmul %109, %110, %cst_48 {dimension_numbers = #tpu.dot_dimension_numbers<[1], [0], [0], [1], [0, 0, 1, 1], [], []>} : vector<8x8xf32>, vector<8x8xf32>, vector<8x8xf32> -> vector<8x8xf32>
    %112 = vector.extract_strided_slice %93 {offsets = [40, 0], sizes = [8, 8], strides = [1, 1]} : vector<64x8xf32> to vector<8x8xf32>
    %113 = vector.extract_strided_slice %108 {offsets = [0, 8], sizes = [8, 8], strides = [1, 1]} : vector<8x32xf32> to vector<8x8xf32>
    %cst_49 = arith.constant dense<0.000000e+00> : vector<8x8xf32>
    %114 = tpu.matmul %112, %113, %cst_49 {dimension_numbers = #tpu.dot_dimension_numbers<[1], [0], [0], [1], [0, 0, 1, 1], [], []>} : vector<8x8xf32>, vector<8x8xf32>, vector<8x8xf32> -> vector<8x8xf32>
    %115 = vector.extract_strided_slice %93 {offsets = [48, 0], sizes = [8, 8], strides = [1, 1]} : vector<64x8xf32> to vector<8x8xf32>
    %116 = vector.extract_strided_slice %108 {offsets = [0, 16], sizes = [8, 8], strides = [1, 1]} : vector<8x32xf32> to vector<8x8xf32>
    %cst_50 = arith.constant dense<0.000000e+00> : vector<8x8xf32>
    %117 = tpu.matmul %115, %116, %cst_50 {dimension_numbers = #tpu.dot_dimension_numbers<[1], [0], [0], [1], [0, 0, 1, 1], [], []>} : vector<8x8xf32>, vector<8x8xf32>, vector<8x8xf32> -> vector<8x8xf32>
    %118 = vector.extract_strided_slice %93 {offsets = [56, 0], sizes = [8, 8], strides = [1, 1]} : vector<64x8xf32> to vector<8x8xf32>
    %119 = vector.extract_strided_slice %108 {offsets = [0, 24], sizes = [8, 8], strides = [1, 1]} : vector<8x32xf32> to vector<8x8xf32>
    %cst_51 = arith.constant dense<0.000000e+00> : vector<8x8xf32>
    %120 = tpu.matmul %118, %119, %cst_51 {dimension_numbers = #tpu.dot_dimension_numbers<[1], [0], [0], [1], [0, 0, 1, 1], [], []>} : vector<8x8xf32>, vector<8x8xf32>, vector<8x8xf32> -> vector<8x8xf32>
    %121 = tpu.concatenate %111, %114, %117, %120 in 1 : vector<8x8xf32>, vector<8x8xf32>, vector<8x8xf32>, vector<8x8xf32> -> vector<8x32xf32>
    %122 = tpu.concatenate %107, %121 in 0 : vector<8x32xf32>, vector<8x32xf32> -> vector<16x32xf32>
    %c3_52 = arith.constant 3 : index
    %c0_53 = arith.constant 0 : index
    %c0_54 = arith.constant 0 : index
    %123 = vector.load %arg5[%c3_52, %c0_53, %c0_54] : memref<16x32x32xf32, #tpu.memory_space<vmem>>, vector<1x32x32xf32>
    %124 = vector.shape_cast %123 : vector<1x32x32xf32> to vector<32x32xf32>
    %cst_55 = arith.constant dense<0.000000e+00> : vector<16x32xf32>
    %125 = tpu.matmul %122, %124, %cst_55 {dimension_numbers = #tpu.dot_dimension_numbers<[1], [0], [0], [1], [0, 0, 1, 1], [], []>} : vector<16x32xf32>, vector<32x32xf32>, vector<16x32xf32> -> vector<16x32xf32>
    %126 = arith.addf %0, %125 : vector<16x32xf32>
    %c3_56 = arith.constant 3 : index
    %c0_57 = arith.constant 0 : index
    %c0_58 = arith.constant 0 : index
    %127 = vector.load %arg6[%c3_56, %c0_57, %c0_58] : memref<18x1x32xf32, #tpu.memory_space<vmem>>, vector<1x1x32xf32>
    %128 = vector.shape_cast %127 : vector<1x1x32xf32> to vector<1x32xf32>
    %129 = vector.broadcast %128 : vector<1x32xf32> to vector<16x32xf32>
    %130 = arith.addf %126, %129 : vector<16x32xf32>
    %cst_59 = arith.constant dense<0.000000e+00> : vector<16xf32>
    %131 = vector.multi_reduction <add>, %130, %cst_59 [1] : vector<16x32xf32> to vector<16xf32>
    %132 = vector.shape_cast %131 : vector<16xf32> to vector<16x1xf32>
    %cst_60 = arith.constant 3.200000e+01 : f32
    %133 = vector.broadcast %cst_60 : f32 to vector<16x1xf32>
    %134 = arith.divf %132, %133 : vector<16x1xf32>
    %135 = vector.broadcast %134 : vector<16x1xf32> to vector<16x32xf32>
    %136 = arith.subf %130, %135 : vector<16x32xf32>
    %137 = arith.mulf %136, %136 : vector<16x32xf32>
    %cst_61 = arith.constant dense<0.000000e+00> : vector<16xf32>
    %138 = vector.multi_reduction <add>, %137, %cst_61 [1] : vector<16x32xf32> to vector<16xf32>
    %139 = vector.shape_cast %138 : vector<16xf32> to vector<16x1xf32>
    %cst_62 = arith.constant 0.0322580636 : f32
    %140 = vector.broadcast %cst_62 : f32 to vector<16x1xf32>
    %141 = arith.mulf %139, %140 : vector<16x1xf32>
    %142 = vector.broadcast %6 : f32 to vector<16x32xf32>
    %143 = arith.mulf %142, %136 : vector<16x32xf32>
    %144 = math.sqrt %141 : vector<16x1xf32>
    %cst_63 = arith.constant 9.99999997E-7 : f32
    %145 = vector.broadcast %cst_63 : f32 to vector<16x1xf32>
    %146 = arith.addf %144, %145 : vector<16x1xf32>
    %147 = vector.broadcast %146 : vector<16x1xf32> to vector<16x32xf32>
    %148 = arith.divf %143, %147 : vector<16x32xf32>
    %149 = vector.broadcast %7 : f32 to vector<16x32xf32>
    %150 = arith.addf %148, %149 : vector<16x32xf32>
    %c4_64 = arith.constant 4 : index
    %c0_65 = arith.constant 0 : index
    %c0_66 = arith.constant 0 : index
    %151 = vector.load %arg5[%c4_64, %c0_65, %c0_66] : memref<16x32x32xf32, #tpu.memory_space<vmem>>, vector<1x32x32xf32>
    %152 = vector.shape_cast %151 : vector<1x32x32xf32> to vector<32x32xf32>
    %cst_67 = arith.constant dense<0.000000e+00> : vector<16x32xf32>
    %153 = tpu.matmul %150, %152, %cst_67 {dimension_numbers = #tpu.dot_dimension_numbers<[1], [0], [0], [1], [0, 0, 1, 1], [], []>} : vector<16x32xf32>, vector<32x32xf32>, vector<16x32xf32> -> vector<16x32xf32>
    %c4_68 = arith.constant 4 : index
    %c0_69 = arith.constant 0 : index
    %c0_70 = arith.constant 0 : index
    %154 = vector.load %arg6[%c4_68, %c0_69, %c0_70] : memref<18x1x32xf32, #tpu.memory_space<vmem>>, vector<1x1x32xf32>
    %155 = vector.shape_cast %154 : vector<1x1x32xf32> to vector<1x32xf32>
    %156 = vector.broadcast %155 : vector<1x32xf32> to vector<16x32xf32>
    %157 = arith.addf %153, %156 : vector<16x32xf32>
    %c5_71 = arith.constant 5 : index
    %c0_72 = arith.constant 0 : index
    %c0_73 = arith.constant 0 : index
    %158 = vector.load %arg5[%c5_71, %c0_72, %c0_73] : memref<16x32x32xf32, #tpu.memory_space<vmem>>, vector<1x32x32xf32>
    %159 = vector.shape_cast %158 : vector<1x32x32xf32> to vector<32x32xf32>
    %cst_74 = arith.constant dense<0.000000e+00> : vector<32x32xf32>
    %160 = tpu.matmul %1, %159, %cst_74 {dimension_numbers = #tpu.dot_dimension_numbers<[1], [0], [0], [1], [0, 0, 1, 1], [], []>} : vector<32x32xf32>, vector<32x32xf32>, vector<32x32xf32> -> vector<32x32xf32>
    %c5_75 = arith.constant 5 : index
    %c0_76 = arith.constant 0 : index
    %c0_77 = arith.constant 0 : index
    %161 = vector.load %arg6[%c5_75, %c0_76, %c0_77] : memref<18x1x32xf32, #tpu.memory_space<vmem>>, vector<1x1x32xf32>
    %162 = vector.shape_cast %161 : vector<1x1x32xf32> to vector<1x32xf32>
    %163 = vector.broadcast %162 : vector<1x32xf32> to vector<32x32xf32>
    %164 = arith.addf %160, %163 : vector<32x32xf32>
    %c6 = arith.constant 6 : index
    %c0_78 = arith.constant 0 : index
    %c0_79 = arith.constant 0 : index
    %165 = vector.load %arg5[%c6, %c0_78, %c0_79] : memref<16x32x32xf32, #tpu.memory_space<vmem>>, vector<1x32x32xf32>
    %166 = vector.shape_cast %165 : vector<1x32x32xf32> to vector<32x32xf32>
    %cst_80 = arith.constant dense<0.000000e+00> : vector<32x32xf32>
    %167 = tpu.matmul %1, %166, %cst_80 {dimension_numbers = #tpu.dot_dimension_numbers<[1], [0], [0], [1], [0, 0, 1, 1], [], []>} : vector<32x32xf32>, vector<32x32xf32>, vector<32x32xf32> -> vector<32x32xf32>
    %c6_81 = arith.constant 6 : index
    %c0_82 = arith.constant 0 : index
    %c0_83 = arith.constant 0 : index
    %168 = vector.load %arg6[%c6_81, %c0_82, %c0_83] : memref<18x1x32xf32, #tpu.memory_space<vmem>>, vector<1x1x32xf32>
    %169 = vector.shape_cast %168 : vector<1x1x32xf32> to vector<1x32xf32>
    %170 = vector.broadcast %169 : vector<1x32xf32> to vector<32x32xf32>
    %171 = arith.addf %167, %170 : vector<32x32xf32>
    %172 = vector.extract_strided_slice %157 {offsets = [0, 0], sizes = [8, 32], strides = [1, 1]} : vector<16x32xf32> to vector<8x32xf32>
    %173 = vector.extract_strided_slice %164 {offsets = [0, 0], sizes = [16, 32], strides = [1, 1]} : vector<32x32xf32> to vector<16x32xf32>
    %174 = tpu.transpose %173, [1, 0] : vector<16x32xf32> -> vector<32x16xf32>
    %175 = vector.extract_strided_slice %172 {offsets = [0, 0], sizes = [8, 8], strides = [1, 1]} : vector<8x32xf32> to vector<8x8xf32>
    %176 = vector.extract_strided_slice %174 {offsets = [0, 0], sizes = [8, 16], strides = [1, 1]} : vector<32x16xf32> to vector<8x16xf32>
    %cst_84 = arith.constant dense<0.000000e+00> : vector<8x16xf32>
    %177 = tpu.matmul %175, %176, %cst_84 {dimension_numbers = #tpu.dot_dimension_numbers<[1], [0], [0], [1], [0, 0, 1, 1], [], []>} : vector<8x8xf32>, vector<8x16xf32>, vector<8x16xf32> -> vector<8x16xf32>
    %178 = vector.extract_strided_slice %172 {offsets = [0, 8], sizes = [8, 8], strides = [1, 1]} : vector<8x32xf32> to vector<8x8xf32>
    %179 = vector.extract_strided_slice %174 {offsets = [8, 0], sizes = [8, 16], strides = [1, 1]} : vector<32x16xf32> to vector<8x16xf32>
    %cst_85 = arith.constant dense<0.000000e+00> : vector<8x16xf32>
    %180 = tpu.matmul %178, %179, %cst_85 {dimension_numbers = #tpu.dot_dimension_numbers<[1], [0], [0], [1], [0, 0, 1, 1], [], []>} : vector<8x8xf32>, vector<8x16xf32>, vector<8x16xf32> -> vector<8x16xf32>
    %181 = vector.extract_strided_slice %172 {offsets = [0, 16], sizes = [8, 8], strides = [1, 1]} : vector<8x32xf32> to vector<8x8xf32>
    %182 = vector.extract_strided_slice %174 {offsets = [16, 0], sizes = [8, 16], strides = [1, 1]} : vector<32x16xf32> to vector<8x16xf32>
    %cst_86 = arith.constant dense<0.000000e+00> : vector<8x16xf32>
    %183 = tpu.matmul %181, %182, %cst_86 {dimension_numbers = #tpu.dot_dimension_numbers<[1], [0], [0], [1], [0, 0, 1, 1], [], []>} : vector<8x8xf32>, vector<8x16xf32>, vector<8x16xf32> -> vector<8x16xf32>
    %184 = vector.extract_strided_slice %172 {offsets = [0, 24], sizes = [8, 8], strides = [1, 1]} : vector<8x32xf32> to vector<8x8xf32>
    %185 = vector.extract_strided_slice %174 {offsets = [24, 0], sizes = [8, 16], strides = [1, 1]} : vector<32x16xf32> to vector<8x16xf32>
    %cst_87 = arith.constant dense<0.000000e+00> : vector<8x16xf32>
    %186 = tpu.matmul %184, %185, %cst_87 {dimension_numbers = #tpu.dot_dimension_numbers<[1], [0], [0], [1], [0, 0, 1, 1], [], []>} : vector<8x8xf32>, vector<8x16xf32>, vector<8x16xf32> -> vector<8x16xf32>
    %187 = vector.extract_strided_slice %157 {offsets = [8, 0], sizes = [8, 32], strides = [1, 1]} : vector<16x32xf32> to vector<8x32xf32>
    %188 = vector.extract_strided_slice %164 {offsets = [16, 0], sizes = [16, 32], strides = [1, 1]} : vector<32x32xf32> to vector<16x32xf32>
    %189 = tpu.transpose %188, [1, 0] : vector<16x32xf32> -> vector<32x16xf32>
    %190 = vector.extract_strided_slice %187 {offsets = [0, 0], sizes = [8, 8], strides = [1, 1]} : vector<8x32xf32> to vector<8x8xf32>
    %191 = vector.extract_strided_slice %189 {offsets = [0, 0], sizes = [8, 16], strides = [1, 1]} : vector<32x16xf32> to vector<8x16xf32>
    %cst_88 = arith.constant dense<0.000000e+00> : vector<8x16xf32>
    %192 = tpu.matmul %190, %191, %cst_88 {dimension_numbers = #tpu.dot_dimension_numbers<[1], [0], [0], [1], [0, 0, 1, 1], [], []>} : vector<8x8xf32>, vector<8x16xf32>, vector<8x16xf32> -> vector<8x16xf32>
    %193 = vector.extract_strided_slice %187 {offsets = [0, 8], sizes = [8, 8], strides = [1, 1]} : vector<8x32xf32> to vector<8x8xf32>
    %194 = vector.extract_strided_slice %189 {offsets = [8, 0], sizes = [8, 16], strides = [1, 1]} : vector<32x16xf32> to vector<8x16xf32>
    %cst_89 = arith.constant dense<0.000000e+00> : vector<8x16xf32>
    %195 = tpu.matmul %193, %194, %cst_89 {dimension_numbers = #tpu.dot_dimension_numbers<[1], [0], [0], [1], [0, 0, 1, 1], [], []>} : vector<8x8xf32>, vector<8x16xf32>, vector<8x16xf32> -> vector<8x16xf32>
    %196 = vector.extract_strided_slice %187 {offsets = [0, 16], sizes = [8, 8], strides = [1, 1]} : vector<8x32xf32> to vector<8x8xf32>
    %197 = vector.extract_strided_slice %189 {offsets = [16, 0], sizes = [8, 16], strides = [1, 1]} : vector<32x16xf32> to vector<8x16xf32>
    %cst_90 = arith.constant dense<0.000000e+00> : vector<8x16xf32>
    %198 = tpu.matmul %196, %197, %cst_90 {dimension_numbers = #tpu.dot_dimension_numbers<[1], [0], [0], [1], [0, 0, 1, 1], [], []>} : vector<8x8xf32>, vector<8x16xf32>, vector<8x16xf32> -> vector<8x16xf32>
    %199 = vector.extract_strided_slice %187 {offsets = [0, 24], sizes = [8, 8], strides = [1, 1]} : vector<8x32xf32> to vector<8x8xf32>
    %200 = vector.extract_strided_slice %189 {offsets = [24, 0], sizes = [8, 16], strides = [1, 1]} : vector<32x16xf32> to vector<8x16xf32>
    %cst_91 = arith.constant dense<0.000000e+00> : vector<8x16xf32>
    %201 = tpu.matmul %199, %200, %cst_91 {dimension_numbers = #tpu.dot_dimension_numbers<[1], [0], [0], [1], [0, 0, 1, 1], [], []>} : vector<8x8xf32>, vector<8x16xf32>, vector<8x16xf32> -> vector<8x16xf32>
    %202 = tpu.concatenate %177, %180, %183, %186, %192, %195, %198, %201 in 0 : vector<8x16xf32>, vector<8x16xf32>, vector<8x16xf32>, vector<8x16xf32>, vector<8x16xf32>, vector<8x16xf32>, vector<8x16xf32>, vector<8x16xf32> -> vector<64x16xf32>
    %cst_92 = arith.constant 0.353553385 : f32
    %203 = vector.broadcast %cst_92 : f32 to vector<64x16xf32>
    %204 = arith.mulf %202, %203 : vector<64x16xf32>
    %205 = arith.addf %204, %3 : vector<64x16xf32>
    %cst_93 = arith.constant dense<0xFF800000> : vector<64xf32>
    %206 = vector.multi_reduction <maximumf>, %205, %cst_93 [1] : vector<64x16xf32> to vector<64xf32>
    %207 = vector.shape_cast %206 : vector<64xf32> to vector<64x1xf32>
    %208 = vector.broadcast %207 : vector<64x1xf32> to vector<64x16xf32>
    %209 = arith.subf %205, %208 : vector<64x16xf32>
    %210 = math.exp %209 : vector<64x16xf32>
    %cst_94 = arith.constant dense<0.000000e+00> : vector<64xf32>
    %211 = vector.multi_reduction <add>, %210, %cst_94 [1] : vector<64x16xf32> to vector<64xf32>
    %212 = vector.shape_cast %211 : vector<64xf32> to vector<64x1xf32>
    %213 = vector.broadcast %212 : vector<64x1xf32> to vector<64x16xf32>
    %214 = arith.divf %210, %213 : vector<64x16xf32>
    %215 = vector.extract_strided_slice %171 {offsets = [0, 0], sizes = [16, 32], strides = [1, 1]} : vector<32x32xf32> to vector<16x32xf32>
    %216 = vector.extract_strided_slice %214 {offsets = [0, 0], sizes = [8, 16], strides = [1, 1]} : vector<64x16xf32> to vector<8x16xf32>
    %217 = vector.extract_strided_slice %215 {offsets = [0, 0], sizes = [16, 8], strides = [1, 1]} : vector<16x32xf32> to vector<16x8xf32>
    %cst_95 = arith.constant dense<0.000000e+00> : vector<8x8xf32>
    %218 = tpu.matmul %216, %217, %cst_95 {dimension_numbers = #tpu.dot_dimension_numbers<[1], [0], [0], [1], [0, 0, 1, 1], [], []>} : vector<8x16xf32>, vector<16x8xf32>, vector<8x8xf32> -> vector<8x8xf32>
    %219 = vector.extract_strided_slice %214 {offsets = [8, 0], sizes = [8, 16], strides = [1, 1]} : vector<64x16xf32> to vector<8x16xf32>
    %220 = vector.extract_strided_slice %215 {offsets = [0, 8], sizes = [16, 8], strides = [1, 1]} : vector<16x32xf32> to vector<16x8xf32>
    %cst_96 = arith.constant dense<0.000000e+00> : vector<8x8xf32>
    %221 = tpu.matmul %219, %220, %cst_96 {dimension_numbers = #tpu.dot_dimension_numbers<[1], [0], [0], [1], [0, 0, 1, 1], [], []>} : vector<8x16xf32>, vector<16x8xf32>, vector<8x8xf32> -> vector<8x8xf32>
    %222 = vector.extract_strided_slice %214 {offsets = [16, 0], sizes = [8, 16], strides = [1, 1]} : vector<64x16xf32> to vector<8x16xf32>
    %223 = vector.extract_strided_slice %215 {offsets = [0, 16], sizes = [16, 8], strides = [1, 1]} : vector<16x32xf32> to vector<16x8xf32>
    %cst_97 = arith.constant dense<0.000000e+00> : vector<8x8xf32>
    %224 = tpu.matmul %222, %223, %cst_97 {dimension_numbers = #tpu.dot_dimension_numbers<[1], [0], [0], [1], [0, 0, 1, 1], [], []>} : vector<8x16xf32>, vector<16x8xf32>, vector<8x8xf32> -> vector<8x8xf32>
    %225 = vector.extract_strided_slice %214 {offsets = [24, 0], sizes = [8, 16], strides = [1, 1]} : vector<64x16xf32> to vector<8x16xf32>
    %226 = vector.extract_strided_slice %215 {offsets = [0, 24], sizes = [16, 8], strides = [1, 1]} : vector<16x32xf32> to vector<16x8xf32>
    %cst_98 = arith.constant dense<0.000000e+00> : vector<8x8xf32>
    %227 = tpu.matmul %225, %226, %cst_98 {dimension_numbers = #tpu.dot_dimension_numbers<[1], [0], [0], [1], [0, 0, 1, 1], [], []>} : vector<8x16xf32>, vector<16x8xf32>, vector<8x8xf32> -> vector<8x8xf32>
    %228 = tpu.concatenate %218, %221, %224, %227 in 1 : vector<8x8xf32>, vector<8x8xf32>, vector<8x8xf32>, vector<8x8xf32> -> vector<8x32xf32>
    %229 = vector.extract_strided_slice %171 {offsets = [16, 0], sizes = [16, 32], strides = [1, 1]} : vector<32x32xf32> to vector<16x32xf32>
    %230 = vector.extract_strided_slice %214 {offsets = [32, 0], sizes = [8, 16], strides = [1, 1]} : vector<64x16xf32> to vector<8x16xf32>
    %231 = vector.extract_strided_slice %229 {offsets = [0, 0], sizes = [16, 8], strides = [1, 1]} : vector<16x32xf32> to vector<16x8xf32>
    %cst_99 = arith.constant dense<0.000000e+00> : vector<8x8xf32>
    %232 = tpu.matmul %230, %231, %cst_99 {dimension_numbers = #tpu.dot_dimension_numbers<[1], [0], [0], [1], [0, 0, 1, 1], [], []>} : vector<8x16xf32>, vector<16x8xf32>, vector<8x8xf32> -> vector<8x8xf32>
    %233 = vector.extract_strided_slice %214 {offsets = [40, 0], sizes = [8, 16], strides = [1, 1]} : vector<64x16xf32> to vector<8x16xf32>
    %234 = vector.extract_strided_slice %229 {offsets = [0, 8], sizes = [16, 8], strides = [1, 1]} : vector<16x32xf32> to vector<16x8xf32>
    %cst_100 = arith.constant dense<0.000000e+00> : vector<8x8xf32>
    %235 = tpu.matmul %233, %234, %cst_100 {dimension_numbers = #tpu.dot_dimension_numbers<[1], [0], [0], [1], [0, 0, 1, 1], [], []>} : vector<8x16xf32>, vector<16x8xf32>, vector<8x8xf32> -> vector<8x8xf32>
    %236 = vector.extract_strided_slice %214 {offsets = [48, 0], sizes = [8, 16], strides = [1, 1]} : vector<64x16xf32> to vector<8x16xf32>
    %237 = vector.extract_strided_slice %229 {offsets = [0, 16], sizes = [16, 8], strides = [1, 1]} : vector<16x32xf32> to vector<16x8xf32>
    %cst_101 = arith.constant dense<0.000000e+00> : vector<8x8xf32>
    %238 = tpu.matmul %236, %237, %cst_101 {dimension_numbers = #tpu.dot_dimension_numbers<[1], [0], [0], [1], [0, 0, 1, 1], [], []>} : vector<8x16xf32>, vector<16x8xf32>, vector<8x8xf32> -> vector<8x8xf32>
    %239 = vector.extract_strided_slice %214 {offsets = [56, 0], sizes = [8, 16], strides = [1, 1]} : vector<64x16xf32> to vector<8x16xf32>
    %240 = vector.extract_strided_slice %229 {offsets = [0, 24], sizes = [16, 8], strides = [1, 1]} : vector<16x32xf32> to vector<16x8xf32>
    %cst_102 = arith.constant dense<0.000000e+00> : vector<8x8xf32>
    %241 = tpu.matmul %239, %240, %cst_102 {dimension_numbers = #tpu.dot_dimension_numbers<[1], [0], [0], [1], [0, 0, 1, 1], [], []>} : vector<8x16xf32>, vector<16x8xf32>, vector<8x8xf32> -> vector<8x8xf32>
    %242 = tpu.concatenate %232, %235, %238, %241 in 1 : vector<8x8xf32>, vector<8x8xf32>, vector<8x8xf32>, vector<8x8xf32> -> vector<8x32xf32>
    %243 = tpu.concatenate %228, %242 in 0 : vector<8x32xf32>, vector<8x32xf32> -> vector<16x32xf32>
    %c7 = arith.constant 7 : index
    %c0_103 = arith.constant 0 : index
    %c0_104 = arith.constant 0 : index
    %244 = vector.load %arg5[%c7, %c0_103, %c0_104] : memref<16x32x32xf32, #tpu.memory_space<vmem>>, vector<1x32x32xf32>
    %245 = vector.shape_cast %244 : vector<1x32x32xf32> to vector<32x32xf32>
    %cst_105 = arith.constant dense<0.000000e+00> : vector<16x32xf32>
    %246 = tpu.matmul %243, %245, %cst_105 {dimension_numbers = #tpu.dot_dimension_numbers<[1], [0], [0], [1], [0, 0, 1, 1], [], []>} : vector<16x32xf32>, vector<32x32xf32>, vector<16x32xf32> -> vector<16x32xf32>
    %247 = arith.addf %130, %246 : vector<16x32xf32>
    %c7_106 = arith.constant 7 : index
    %c0_107 = arith.constant 0 : index
    %c0_108 = arith.constant 0 : index
    %248 = vector.load %arg6[%c7_106, %c0_107, %c0_108] : memref<18x1x32xf32, #tpu.memory_space<vmem>>, vector<1x1x32xf32>
    %249 = vector.shape_cast %248 : vector<1x1x32xf32> to vector<1x32xf32>
    %250 = vector.broadcast %249 : vector<1x32xf32> to vector<16x32xf32>
    %251 = arith.addf %247, %250 : vector<16x32xf32>
    %cst_109 = arith.constant dense<0.000000e+00> : vector<16xf32>
    %252 = vector.multi_reduction <add>, %251, %cst_109 [1] : vector<16x32xf32> to vector<16xf32>
    %253 = vector.shape_cast %252 : vector<16xf32> to vector<16x1xf32>
    %cst_110 = arith.constant 3.200000e+01 : f32
    %254 = vector.broadcast %cst_110 : f32 to vector<16x1xf32>
    %255 = arith.divf %253, %254 : vector<16x1xf32>
    %256 = vector.broadcast %255 : vector<16x1xf32> to vector<16x32xf32>
    %257 = arith.subf %251, %256 : vector<16x32xf32>
    %258 = arith.mulf %257, %257 : vector<16x32xf32>
    %cst_111 = arith.constant dense<0.000000e+00> : vector<16xf32>
    %259 = vector.multi_reduction <add>, %258, %cst_111 [1] : vector<16x32xf32> to vector<16xf32>
    %260 = vector.shape_cast %259 : vector<16xf32> to vector<16x1xf32>
    %cst_112 = arith.constant 0.0322580636 : f32
    %261 = vector.broadcast %cst_112 : f32 to vector<16x1xf32>
    %262 = arith.mulf %260, %261 : vector<16x1xf32>
    %263 = vector.broadcast %8 : f32 to vector<16x32xf32>
    %264 = arith.mulf %263, %257 : vector<16x32xf32>
    %265 = math.sqrt %262 : vector<16x1xf32>
    %cst_113 = arith.constant 9.99999997E-7 : f32
    %266 = vector.broadcast %cst_113 : f32 to vector<16x1xf32>
    %267 = arith.addf %265, %266 : vector<16x1xf32>
    %268 = vector.broadcast %267 : vector<16x1xf32> to vector<16x32xf32>
    %269 = arith.divf %264, %268 : vector<16x32xf32>
    %270 = vector.broadcast %9 : f32 to vector<16x32xf32>
    %271 = arith.addf %269, %270 : vector<16x32xf32>
    %c0_114 = arith.constant 0 : index
    %c0_115 = arith.constant 0 : index
    %c0_116 = arith.constant 0 : index
    %272 = vector.load %arg7[%c0_114, %c0_115, %c0_116] : memref<2x32x64xf32, #tpu.memory_space<vmem>>, vector<1x32x64xf32>
    %273 = vector.shape_cast %272 : vector<1x32x64xf32> to vector<32x64xf32>
    %cst_117 = arith.constant dense<0.000000e+00> : vector<16x64xf32>
    %274 = tpu.matmul %271, %273, %cst_117 {dimension_numbers = #tpu.dot_dimension_numbers<[1], [0], [0], [1], [0, 0, 1, 1], [], []>} : vector<16x32xf32>, vector<32x64xf32>, vector<16x64xf32> -> vector<16x64xf32>
    %c0_118 = arith.constant 0 : index
    %c0_119 = arith.constant 0 : index
    %c0_120 = arith.constant 0 : index
    %275 = vector.load %arg8[%c0_118, %c0_119, %c0_120] : memref<2x1x64xf32, #tpu.memory_space<vmem>>, vector<1x1x64xf32>
    %276 = vector.shape_cast %275 : vector<1x1x64xf32> to vector<1x64xf32>
    %277 = vector.broadcast %276 : vector<1x64xf32> to vector<16x64xf32>
    %278 = arith.addf %274, %277 : vector<16x64xf32>
    %cst_121 = arith.constant 0.000000e+00 : f32
    %279 = vector.broadcast %cst_121 : f32 to vector<16x64xf32>
    %280 = arith.maximumf %278, %279 : vector<16x64xf32>
    %c0_122 = arith.constant 0 : index
    %c0_123 = arith.constant 0 : index
    %c0_124 = arith.constant 0 : index
    %281 = vector.load %arg9[%c0_122, %c0_123, %c0_124] : memref<2x64x32xf32, #tpu.memory_space<vmem>>, vector<1x64x32xf32>
    %282 = vector.shape_cast %281 : vector<1x64x32xf32> to vector<64x32xf32>
    %cst_125 = arith.constant dense<0.000000e+00> : vector<16x32xf32>
    %283 = tpu.matmul %280, %282, %cst_125 {dimension_numbers = #tpu.dot_dimension_numbers<[1], [0], [0], [1], [0, 0, 1, 1], [], []>} : vector<16x64xf32>, vector<64x32xf32>, vector<16x32xf32> -> vector<16x32xf32>
    %c8 = arith.constant 8 : index
    %c0_126 = arith.constant 0 : index
    %c0_127 = arith.constant 0 : index
    %284 = vector.load %arg6[%c8, %c0_126, %c0_127] : memref<18x1x32xf32, #tpu.memory_space<vmem>>, vector<1x1x32xf32>
    %285 = vector.shape_cast %284 : vector<1x1x32xf32> to vector<1x32xf32>
    %286 = vector.broadcast %285 : vector<1x32xf32> to vector<16x32xf32>
    %287 = arith.addf %283, %286 : vector<16x32xf32>
    %288 = arith.addf %251, %287 : vector<16x32xf32>
    %c6_128 = arith.constant 6 : index
    %289 = memref.load %arg0[%c6_128] : memref<14xf32, #tpu.memory_space<smem>>
    %c7_129 = arith.constant 7 : index
    %290 = memref.load %arg0[%c7_129] : memref<14xf32, #tpu.memory_space<smem>>
    %c8_130 = arith.constant 8 : index
    %291 = memref.load %arg0[%c8_130] : memref<14xf32, #tpu.memory_space<smem>>
    %c9 = arith.constant 9 : index
    %292 = memref.load %arg0[%c9] : memref<14xf32, #tpu.memory_space<smem>>
    %c10 = arith.constant 10 : index
    %293 = memref.load %arg0[%c10] : memref<14xf32, #tpu.memory_space<smem>>
    %c11 = arith.constant 11 : index
    %294 = memref.load %arg0[%c11] : memref<14xf32, #tpu.memory_space<smem>>
    %cst_131 = arith.constant dense<0.000000e+00> : vector<16xf32>
    %295 = vector.multi_reduction <add>, %288, %cst_131 [1] : vector<16x32xf32> to vector<16xf32>
    %296 = vector.shape_cast %295 : vector<16xf32> to vector<16x1xf32>
    %cst_132 = arith.constant 3.200000e+01 : f32
    %297 = vector.broadcast %cst_132 : f32 to vector<16x1xf32>
    %298 = arith.divf %296, %297 : vector<16x1xf32>
    %299 = vector.broadcast %298 : vector<16x1xf32> to vector<16x32xf32>
    %300 = arith.subf %288, %299 : vector<16x32xf32>
    %301 = arith.mulf %300, %300 : vector<16x32xf32>
    %cst_133 = arith.constant dense<0.000000e+00> : vector<16xf32>
    %302 = vector.multi_reduction <add>, %301, %cst_133 [1] : vector<16x32xf32> to vector<16xf32>
    %303 = vector.shape_cast %302 : vector<16xf32> to vector<16x1xf32>
    %cst_134 = arith.constant 0.0322580636 : f32
    %304 = vector.broadcast %cst_134 : f32 to vector<16x1xf32>
    %305 = arith.mulf %303, %304 : vector<16x1xf32>
    %306 = vector.broadcast %289 : f32 to vector<16x32xf32>
    %307 = arith.mulf %306, %300 : vector<16x32xf32>
    %308 = math.sqrt %305 : vector<16x1xf32>
    %cst_135 = arith.constant 9.99999997E-7 : f32
    %309 = vector.broadcast %cst_135 : f32 to vector<16x1xf32>
    %310 = arith.addf %308, %309 : vector<16x1xf32>
    %311 = vector.broadcast %310 : vector<16x1xf32> to vector<16x32xf32>
    %312 = arith.divf %307, %311 : vector<16x32xf32>
    %313 = vector.broadcast %290 : f32 to vector<16x32xf32>
    %314 = arith.addf %312, %313 : vector<16x32xf32>
    %c8_136 = arith.constant 8 : index
    %c0_137 = arith.constant 0 : index
    %c0_138 = arith.constant 0 : index
    %315 = vector.load %arg5[%c8_136, %c0_137, %c0_138] : memref<16x32x32xf32, #tpu.memory_space<vmem>>, vector<1x32x32xf32>
    %316 = vector.shape_cast %315 : vector<1x32x32xf32> to vector<32x32xf32>
    %cst_139 = arith.constant dense<0.000000e+00> : vector<16x32xf32>
    %317 = tpu.matmul %314, %316, %cst_139 {dimension_numbers = #tpu.dot_dimension_numbers<[1], [0], [0], [1], [0, 0, 1, 1], [], []>} : vector<16x32xf32>, vector<32x32xf32>, vector<16x32xf32> -> vector<16x32xf32>
    %c9_140 = arith.constant 9 : index
    %c0_141 = arith.constant 0 : index
    %c0_142 = arith.constant 0 : index
    %318 = vector.load %arg6[%c9_140, %c0_141, %c0_142] : memref<18x1x32xf32, #tpu.memory_space<vmem>>, vector<1x1x32xf32>
    %319 = vector.shape_cast %318 : vector<1x1x32xf32> to vector<1x32xf32>
    %320 = vector.broadcast %319 : vector<1x32xf32> to vector<16x32xf32>
    %321 = arith.addf %317, %320 : vector<16x32xf32>
    %c9_143 = arith.constant 9 : index
    %c0_144 = arith.constant 0 : index
    %c0_145 = arith.constant 0 : index
    %322 = vector.load %arg5[%c9_143, %c0_144, %c0_145] : memref<16x32x32xf32, #tpu.memory_space<vmem>>, vector<1x32x32xf32>
    %323 = vector.shape_cast %322 : vector<1x32x32xf32> to vector<32x32xf32>
    %cst_146 = arith.constant dense<0.000000e+00> : vector<16x32xf32>
    %324 = tpu.matmul %314, %323, %cst_146 {dimension_numbers = #tpu.dot_dimension_numbers<[1], [0], [0], [1], [0, 0, 1, 1], [], []>} : vector<16x32xf32>, vector<32x32xf32>, vector<16x32xf32> -> vector<16x32xf32>
    %c10_147 = arith.constant 10 : index
    %c0_148 = arith.constant 0 : index
    %c0_149 = arith.constant 0 : index
    %325 = vector.load %arg6[%c10_147, %c0_148, %c0_149] : memref<18x1x32xf32, #tpu.memory_space<vmem>>, vector<1x1x32xf32>
    %326 = vector.shape_cast %325 : vector<1x1x32xf32> to vector<1x32xf32>
    %327 = vector.broadcast %326 : vector<1x32xf32> to vector<16x32xf32>
    %328 = arith.addf %324, %327 : vector<16x32xf32>
    %c10_150 = arith.constant 10 : index
    %c0_151 = arith.constant 0 : index
    %c0_152 = arith.constant 0 : index
    %329 = vector.load %arg5[%c10_150, %c0_151, %c0_152] : memref<16x32x32xf32, #tpu.memory_space<vmem>>, vector<1x32x32xf32>
    %330 = vector.shape_cast %329 : vector<1x32x32xf32> to vector<32x32xf32>
    %cst_153 = arith.constant dense<0.000000e+00> : vector<16x32xf32>
    %331 = tpu.matmul %314, %330, %cst_153 {dimension_numbers = #tpu.dot_dimension_numbers<[1], [0], [0], [1], [0, 0, 1, 1], [], []>} : vector<16x32xf32>, vector<32x32xf32>, vector<16x32xf32> -> vector<16x32xf32>
    %c11_154 = arith.constant 11 : index
    %c0_155 = arith.constant 0 : index
    %c0_156 = arith.constant 0 : index
    %332 = vector.load %arg6[%c11_154, %c0_155, %c0_156] : memref<18x1x32xf32, #tpu.memory_space<vmem>>, vector<1x1x32xf32>
    %333 = vector.shape_cast %332 : vector<1x1x32xf32> to vector<1x32xf32>
    %334 = vector.broadcast %333 : vector<1x32xf32> to vector<16x32xf32>
    %335 = arith.addf %331, %334 : vector<16x32xf32>
    %336 = vector.extract_strided_slice %321 {offsets = [0, 0], sizes = [8, 32], strides = [1, 1]} : vector<16x32xf32> to vector<8x32xf32>
    %337 = vector.extract_strided_slice %328 {offsets = [0, 0], sizes = [8, 32], strides = [1, 1]} : vector<16x32xf32> to vector<8x32xf32>
    %338 = tpu.transpose %337, [1, 0] : vector<8x32xf32> -> vector<32x8xf32>
    %339 = vector.extract_strided_slice %336 {offsets = [0, 0], sizes = [8, 8], strides = [1, 1]} : vector<8x32xf32> to vector<8x8xf32>
    %340 = vector.extract_strided_slice %338 {offsets = [0, 0], sizes = [8, 8], strides = [1, 1]} : vector<32x8xf32> to vector<8x8xf32>
    %cst_157 = arith.constant dense<0.000000e+00> : vector<8x8xf32>
    %341 = tpu.matmul %339, %340, %cst_157 {dimension_numbers = #tpu.dot_dimension_numbers<[1], [0], [0], [1], [0, 0, 1, 1], [], []>} : vector<8x8xf32>, vector<8x8xf32>, vector<8x8xf32> -> vector<8x8xf32>
    %342 = vector.extract_strided_slice %336 {offsets = [0, 8], sizes = [8, 8], strides = [1, 1]} : vector<8x32xf32> to vector<8x8xf32>
    %343 = vector.extract_strided_slice %338 {offsets = [8, 0], sizes = [8, 8], strides = [1, 1]} : vector<32x8xf32> to vector<8x8xf32>
    %cst_158 = arith.constant dense<0.000000e+00> : vector<8x8xf32>
    %344 = tpu.matmul %342, %343, %cst_158 {dimension_numbers = #tpu.dot_dimension_numbers<[1], [0], [0], [1], [0, 0, 1, 1], [], []>} : vector<8x8xf32>, vector<8x8xf32>, vector<8x8xf32> -> vector<8x8xf32>
    %345 = vector.extract_strided_slice %336 {offsets = [0, 16], sizes = [8, 8], strides = [1, 1]} : vector<8x32xf32> to vector<8x8xf32>
    %346 = vector.extract_strided_slice %338 {offsets = [16, 0], sizes = [8, 8], strides = [1, 1]} : vector<32x8xf32> to vector<8x8xf32>
    %cst_159 = arith.constant dense<0.000000e+00> : vector<8x8xf32>
    %347 = tpu.matmul %345, %346, %cst_159 {dimension_numbers = #tpu.dot_dimension_numbers<[1], [0], [0], [1], [0, 0, 1, 1], [], []>} : vector<8x8xf32>, vector<8x8xf32>, vector<8x8xf32> -> vector<8x8xf32>
    %348 = vector.extract_strided_slice %336 {offsets = [0, 24], sizes = [8, 8], strides = [1, 1]} : vector<8x32xf32> to vector<8x8xf32>
    %349 = vector.extract_strided_slice %338 {offsets = [24, 0], sizes = [8, 8], strides = [1, 1]} : vector<32x8xf32> to vector<8x8xf32>
    %cst_160 = arith.constant dense<0.000000e+00> : vector<8x8xf32>
    %350 = tpu.matmul %348, %349, %cst_160 {dimension_numbers = #tpu.dot_dimension_numbers<[1], [0], [0], [1], [0, 0, 1, 1], [], []>} : vector<8x8xf32>, vector<8x8xf32>, vector<8x8xf32> -> vector<8x8xf32>
    %351 = vector.extract_strided_slice %321 {offsets = [8, 0], sizes = [8, 32], strides = [1, 1]} : vector<16x32xf32> to vector<8x32xf32>
    %352 = vector.extract_strided_slice %328 {offsets = [8, 0], sizes = [8, 32], strides = [1, 1]} : vector<16x32xf32> to vector<8x32xf32>
    %353 = tpu.transpose %352, [1, 0] : vector<8x32xf32> -> vector<32x8xf32>
    %354 = vector.extract_strided_slice %351 {offsets = [0, 0], sizes = [8, 8], strides = [1, 1]} : vector<8x32xf32> to vector<8x8xf32>
    %355 = vector.extract_strided_slice %353 {offsets = [0, 0], sizes = [8, 8], strides = [1, 1]} : vector<32x8xf32> to vector<8x8xf32>
    %cst_161 = arith.constant dense<0.000000e+00> : vector<8x8xf32>
    %356 = tpu.matmul %354, %355, %cst_161 {dimension_numbers = #tpu.dot_dimension_numbers<[1], [0], [0], [1], [0, 0, 1, 1], [], []>} : vector<8x8xf32>, vector<8x8xf32>, vector<8x8xf32> -> vector<8x8xf32>
    %357 = vector.extract_strided_slice %351 {offsets = [0, 8], sizes = [8, 8], strides = [1, 1]} : vector<8x32xf32> to vector<8x8xf32>
    %358 = vector.extract_strided_slice %353 {offsets = [8, 0], sizes = [8, 8], strides = [1, 1]} : vector<32x8xf32> to vector<8x8xf32>
    %cst_162 = arith.constant dense<0.000000e+00> : vector<8x8xf32>
    %359 = tpu.matmul %357, %358, %cst_162 {dimension_numbers = #tpu.dot_dimension_numbers<[1], [0], [0], [1], [0, 0, 1, 1], [], []>} : vector<8x8xf32>, vector<8x8xf32>, vector<8x8xf32> -> vector<8x8xf32>
    %360 = vector.extract_strided_slice %351 {offsets = [0, 16], sizes = [8, 8], strides = [1, 1]} : vector<8x32xf32> to vector<8x8xf32>
    %361 = vector.extract_strided_slice %353 {offsets = [16, 0], sizes = [8, 8], strides = [1, 1]} : vector<32x8xf32> to vector<8x8xf32>
    %cst_163 = arith.constant dense<0.000000e+00> : vector<8x8xf32>
    %362 = tpu.matmul %360, %361, %cst_163 {dimension_numbers = #tpu.dot_dimension_numbers<[1], [0], [0], [1], [0, 0, 1, 1], [], []>} : vector<8x8xf32>, vector<8x8xf32>, vector<8x8xf32> -> vector<8x8xf32>
    %363 = vector.extract_strided_slice %351 {offsets = [0, 24], sizes = [8, 8], strides = [1, 1]} : vector<8x32xf32> to vector<8x8xf32>
    %364 = vector.extract_strided_slice %353 {offsets = [24, 0], sizes = [8, 8], strides = [1, 1]} : vector<32x8xf32> to vector<8x8xf32>
    %cst_164 = arith.constant dense<0.000000e+00> : vector<8x8xf32>
    %365 = tpu.matmul %363, %364, %cst_164 {dimension_numbers = #tpu.dot_dimension_numbers<[1], [0], [0], [1], [0, 0, 1, 1], [], []>} : vector<8x8xf32>, vector<8x8xf32>, vector<8x8xf32> -> vector<8x8xf32>
    %366 = tpu.concatenate %341, %344, %347, %350, %356, %359, %362, %365 in 0 : vector<8x8xf32>, vector<8x8xf32>, vector<8x8xf32>, vector<8x8xf32>, vector<8x8xf32>, vector<8x8xf32>, vector<8x8xf32>, vector<8x8xf32> -> vector<64x8xf32>
    %cst_165 = arith.constant 0.353553385 : f32
    %367 = vector.broadcast %cst_165 : f32 to vector<64x8xf32>
    %368 = arith.mulf %366, %367 : vector<64x8xf32>
    %369 = arith.addf %368, %2 : vector<64x8xf32>
    %cst_166 = arith.constant dense<0xFF800000> : vector<64xf32>
    %370 = vector.multi_reduction <maximumf>, %369, %cst_166 [1] : vector<64x8xf32> to vector<64xf32>
    %371 = vector.shape_cast %370 : vector<64xf32> to vector<64x1xf32>
    %372 = vector.broadcast %371 : vector<64x1xf32> to vector<64x8xf32>
    %373 = arith.subf %369, %372 : vector<64x8xf32>
    %374 = math.exp %373 : vector<64x8xf32>
    %cst_167 = arith.constant dense<0.000000e+00> : vector<64xf32>
    %375 = vector.multi_reduction <add>, %374, %cst_167 [1] : vector<64x8xf32> to vector<64xf32>
    %376 = vector.shape_cast %375 : vector<64xf32> to vector<64x1xf32>
    %377 = vector.broadcast %376 : vector<64x1xf32> to vector<64x8xf32>
    %378 = arith.divf %374, %377 : vector<64x8xf32>
    %379 = vector.extract_strided_slice %335 {offsets = [0, 0], sizes = [8, 32], strides = [1, 1]} : vector<16x32xf32> to vector<8x32xf32>
    %380 = vector.extract_strided_slice %378 {offsets = [0, 0], sizes = [8, 8], strides = [1, 1]} : vector<64x8xf32> to vector<8x8xf32>
    %381 = vector.extract_strided_slice %379 {offsets = [0, 0], sizes = [8, 8], strides = [1, 1]} : vector<8x32xf32> to vector<8x8xf32>
    %cst_168 = arith.constant dense<0.000000e+00> : vector<8x8xf32>
    %382 = tpu.matmul %380, %381, %cst_168 {dimension_numbers = #tpu.dot_dimension_numbers<[1], [0], [0], [1], [0, 0, 1, 1], [], []>} : vector<8x8xf32>, vector<8x8xf32>, vector<8x8xf32> -> vector<8x8xf32>
    %383 = vector.extract_strided_slice %378 {offsets = [8, 0], sizes = [8, 8], strides = [1, 1]} : vector<64x8xf32> to vector<8x8xf32>
    %384 = vector.extract_strided_slice %379 {offsets = [0, 8], sizes = [8, 8], strides = [1, 1]} : vector<8x32xf32> to vector<8x8xf32>
    %cst_169 = arith.constant dense<0.000000e+00> : vector<8x8xf32>
    %385 = tpu.matmul %383, %384, %cst_169 {dimension_numbers = #tpu.dot_dimension_numbers<[1], [0], [0], [1], [0, 0, 1, 1], [], []>} : vector<8x8xf32>, vector<8x8xf32>, vector<8x8xf32> -> vector<8x8xf32>
    %386 = vector.extract_strided_slice %378 {offsets = [16, 0], sizes = [8, 8], strides = [1, 1]} : vector<64x8xf32> to vector<8x8xf32>
    %387 = vector.extract_strided_slice %379 {offsets = [0, 16], sizes = [8, 8], strides = [1, 1]} : vector<8x32xf32> to vector<8x8xf32>
    %cst_170 = arith.constant dense<0.000000e+00> : vector<8x8xf32>
    %388 = tpu.matmul %386, %387, %cst_170 {dimension_numbers = #tpu.dot_dimension_numbers<[1], [0], [0], [1], [0, 0, 1, 1], [], []>} : vector<8x8xf32>, vector<8x8xf32>, vector<8x8xf32> -> vector<8x8xf32>
    %389 = vector.extract_strided_slice %378 {offsets = [24, 0], sizes = [8, 8], strides = [1, 1]} : vector<64x8xf32> to vector<8x8xf32>
    %390 = vector.extract_strided_slice %379 {offsets = [0, 24], sizes = [8, 8], strides = [1, 1]} : vector<8x32xf32> to vector<8x8xf32>
    %cst_171 = arith.constant dense<0.000000e+00> : vector<8x8xf32>
    %391 = tpu.matmul %389, %390, %cst_171 {dimension_numbers = #tpu.dot_dimension_numbers<[1], [0], [0], [1], [0, 0, 1, 1], [], []>} : vector<8x8xf32>, vector<8x8xf32>, vector<8x8xf32> -> vector<8x8xf32>
    %392 = tpu.concatenate %382, %385, %388, %391 in 1 : vector<8x8xf32>, vector<8x8xf32>, vector<8x8xf32>, vector<8x8xf32> -> vector<8x32xf32>
    %393 = vector.extract_strided_slice %335 {offsets = [8, 0], sizes = [8, 32], strides = [1, 1]} : vector<16x32xf32> to vector<8x32xf32>
    %394 = vector.extract_strided_slice %378 {offsets = [32, 0], sizes = [8, 8], strides = [1, 1]} : vector<64x8xf32> to vector<8x8xf32>
    %395 = vector.extract_strided_slice %393 {offsets = [0, 0], sizes = [8, 8], strides = [1, 1]} : vector<8x32xf32> to vector<8x8xf32>
    %cst_172 = arith.constant dense<0.000000e+00> : vector<8x8xf32>
    %396 = tpu.matmul %394, %395, %cst_172 {dimension_numbers = #tpu.dot_dimension_numbers<[1], [0], [0], [1], [0, 0, 1, 1], [], []>} : vector<8x8xf32>, vector<8x8xf32>, vector<8x8xf32> -> vector<8x8xf32>
    %397 = vector.extract_strided_slice %378 {offsets = [40, 0], sizes = [8, 8], strides = [1, 1]} : vector<64x8xf32> to vector<8x8xf32>
    %398 = vector.extract_strided_slice %393 {offsets = [0, 8], sizes = [8, 8], strides = [1, 1]} : vector<8x32xf32> to vector<8x8xf32>
    %cst_173 = arith.constant dense<0.000000e+00> : vector<8x8xf32>
    %399 = tpu.matmul %397, %398, %cst_173 {dimension_numbers = #tpu.dot_dimension_numbers<[1], [0], [0], [1], [0, 0, 1, 1], [], []>} : vector<8x8xf32>, vector<8x8xf32>, vector<8x8xf32> -> vector<8x8xf32>
    %400 = vector.extract_strided_slice %378 {offsets = [48, 0], sizes = [8, 8], strides = [1, 1]} : vector<64x8xf32> to vector<8x8xf32>
    %401 = vector.extract_strided_slice %393 {offsets = [0, 16], sizes = [8, 8], strides = [1, 1]} : vector<8x32xf32> to vector<8x8xf32>
    %cst_174 = arith.constant dense<0.000000e+00> : vector<8x8xf32>
    %402 = tpu.matmul %400, %401, %cst_174 {dimension_numbers = #tpu.dot_dimension_numbers<[1], [0], [0], [1], [0, 0, 1, 1], [], []>} : vector<8x8xf32>, vector<8x8xf32>, vector<8x8xf32> -> vector<8x8xf32>
    %403 = vector.extract_strided_slice %378 {offsets = [56, 0], sizes = [8, 8], strides = [1, 1]} : vector<64x8xf32> to vector<8x8xf32>
    %404 = vector.extract_strided_slice %393 {offsets = [0, 24], sizes = [8, 8], strides = [1, 1]} : vector<8x32xf32> to vector<8x8xf32>
    %cst_175 = arith.constant dense<0.000000e+00> : vector<8x8xf32>
    %405 = tpu.matmul %403, %404, %cst_175 {dimension_numbers = #tpu.dot_dimension_numbers<[1], [0], [0], [1], [0, 0, 1, 1], [], []>} : vector<8x8xf32>, vector<8x8xf32>, vector<8x8xf32> -> vector<8x8xf32>
    %406 = tpu.concatenate %396, %399, %402, %405 in 1 : vector<8x8xf32>, vector<8x8xf32>, vector<8x8xf32>, vector<8x8xf32> -> vector<8x32xf32>
    %407 = tpu.concatenate %392, %406 in 0 : vector<8x32xf32>, vector<8x32xf32> -> vector<16x32xf32>
    %c11_176 = arith.constant 11 : index
    %c0_177 = arith.constant 0 : index
    %c0_178 = arith.constant 0 : index
    %408 = vector.load %arg5[%c11_176, %c0_177, %c0_178] : memref<16x32x32xf32, #tpu.memory_space<vmem>>, vector<1x32x32xf32>
    %409 = vector.shape_cast %408 : vector<1x32x32xf32> to vector<32x32xf32>
    %cst_179 = arith.constant dense<0.000000e+00> : vector<16x32xf32>
    %410 = tpu.matmul %407, %409, %cst_179 {dimension_numbers = #tpu.dot_dimension_numbers<[1], [0], [0], [1], [0, 0, 1, 1], [], []>} : vector<16x32xf32>, vector<32x32xf32>, vector<16x32xf32> -> vector<16x32xf32>
    %411 = arith.addf %288, %410 : vector<16x32xf32>
    %c12 = arith.constant 12 : index
    %c0_180 = arith.constant 0 : index
    %c0_181 = arith.constant 0 : index
    %412 = vector.load %arg6[%c12, %c0_180, %c0_181] : memref<18x1x32xf32, #tpu.memory_space<vmem>>, vector<1x1x32xf32>
    %413 = vector.shape_cast %412 : vector<1x1x32xf32> to vector<1x32xf32>
    %414 = vector.broadcast %413 : vector<1x32xf32> to vector<16x32xf32>
    %415 = arith.addf %411, %414 : vector<16x32xf32>
    %cst_182 = arith.constant dense<0.000000e+00> : vector<16xf32>
    %416 = vector.multi_reduction <add>, %415, %cst_182 [1] : vector<16x32xf32> to vector<16xf32>
    %417 = vector.shape_cast %416 : vector<16xf32> to vector<16x1xf32>
    %cst_183 = arith.constant 3.200000e+01 : f32
    %418 = vector.broadcast %cst_183 : f32 to vector<16x1xf32>
    %419 = arith.divf %417, %418 : vector<16x1xf32>
    %420 = vector.broadcast %419 : vector<16x1xf32> to vector<16x32xf32>
    %421 = arith.subf %415, %420 : vector<16x32xf32>
    %422 = arith.mulf %421, %421 : vector<16x32xf32>
    %cst_184 = arith.constant dense<0.000000e+00> : vector<16xf32>
    %423 = vector.multi_reduction <add>, %422, %cst_184 [1] : vector<16x32xf32> to vector<16xf32>
    %424 = vector.shape_cast %423 : vector<16xf32> to vector<16x1xf32>
    %cst_185 = arith.constant 0.0322580636 : f32
    %425 = vector.broadcast %cst_185 : f32 to vector<16x1xf32>
    %426 = arith.mulf %424, %425 : vector<16x1xf32>
    %427 = vector.broadcast %291 : f32 to vector<16x32xf32>
    %428 = arith.mulf %427, %421 : vector<16x32xf32>
    %429 = math.sqrt %426 : vector<16x1xf32>
    %cst_186 = arith.constant 9.99999997E-7 : f32
    %430 = vector.broadcast %cst_186 : f32 to vector<16x1xf32>
    %431 = arith.addf %429, %430 : vector<16x1xf32>
    %432 = vector.broadcast %431 : vector<16x1xf32> to vector<16x32xf32>
    %433 = arith.divf %428, %432 : vector<16x32xf32>
    %434 = vector.broadcast %292 : f32 to vector<16x32xf32>
    %435 = arith.addf %433, %434 : vector<16x32xf32>
    %c12_187 = arith.constant 12 : index
    %c0_188 = arith.constant 0 : index
    %c0_189 = arith.constant 0 : index
    %436 = vector.load %arg5[%c12_187, %c0_188, %c0_189] : memref<16x32x32xf32, #tpu.memory_space<vmem>>, vector<1x32x32xf32>
    %437 = vector.shape_cast %436 : vector<1x32x32xf32> to vector<32x32xf32>
    %cst_190 = arith.constant dense<0.000000e+00> : vector<16x32xf32>
    %438 = tpu.matmul %435, %437, %cst_190 {dimension_numbers = #tpu.dot_dimension_numbers<[1], [0], [0], [1], [0, 0, 1, 1], [], []>} : vector<16x32xf32>, vector<32x32xf32>, vector<16x32xf32> -> vector<16x32xf32>
    %c13 = arith.constant 13 : index
    %c0_191 = arith.constant 0 : index
    %c0_192 = arith.constant 0 : index
    %439 = vector.load %arg6[%c13, %c0_191, %c0_192] : memref<18x1x32xf32, #tpu.memory_space<vmem>>, vector<1x1x32xf32>
    %440 = vector.shape_cast %439 : vector<1x1x32xf32> to vector<1x32xf32>
    %441 = vector.broadcast %440 : vector<1x32xf32> to vector<16x32xf32>
    %442 = arith.addf %438, %441 : vector<16x32xf32>
    %c13_193 = arith.constant 13 : index
    %c0_194 = arith.constant 0 : index
    %c0_195 = arith.constant 0 : index
    %443 = vector.load %arg5[%c13_193, %c0_194, %c0_195] : memref<16x32x32xf32, #tpu.memory_space<vmem>>, vector<1x32x32xf32>
    %444 = vector.shape_cast %443 : vector<1x32x32xf32> to vector<32x32xf32>
    %cst_196 = arith.constant dense<0.000000e+00> : vector<32x32xf32>
    %445 = tpu.matmul %1, %444, %cst_196 {dimension_numbers = #tpu.dot_dimension_numbers<[1], [0], [0], [1], [0, 0, 1, 1], [], []>} : vector<32x32xf32>, vector<32x32xf32>, vector<32x32xf32> -> vector<32x32xf32>
    %c14 = arith.constant 14 : index
    %c0_197 = arith.constant 0 : index
    %c0_198 = arith.constant 0 : index
    %446 = vector.load %arg6[%c14, %c0_197, %c0_198] : memref<18x1x32xf32, #tpu.memory_space<vmem>>, vector<1x1x32xf32>
    %447 = vector.shape_cast %446 : vector<1x1x32xf32> to vector<1x32xf32>
    %448 = vector.broadcast %447 : vector<1x32xf32> to vector<32x32xf32>
    %449 = arith.addf %445, %448 : vector<32x32xf32>
    %c14_199 = arith.constant 14 : index
    %c0_200 = arith.constant 0 : index
    %c0_201 = arith.constant 0 : index
    %450 = vector.load %arg5[%c14_199, %c0_200, %c0_201] : memref<16x32x32xf32, #tpu.memory_space<vmem>>, vector<1x32x32xf32>
    %451 = vector.shape_cast %450 : vector<1x32x32xf32> to vector<32x32xf32>
    %cst_202 = arith.constant dense<0.000000e+00> : vector<32x32xf32>
    %452 = tpu.matmul %1, %451, %cst_202 {dimension_numbers = #tpu.dot_dimension_numbers<[1], [0], [0], [1], [0, 0, 1, 1], [], []>} : vector<32x32xf32>, vector<32x32xf32>, vector<32x32xf32> -> vector<32x32xf32>
    %c15 = arith.constant 15 : index
    %c0_203 = arith.constant 0 : index
    %c0_204 = arith.constant 0 : index
    %453 = vector.load %arg6[%c15, %c0_203, %c0_204] : memref<18x1x32xf32, #tpu.memory_space<vmem>>, vector<1x1x32xf32>
    %454 = vector.shape_cast %453 : vector<1x1x32xf32> to vector<1x32xf32>
    %455 = vector.broadcast %454 : vector<1x32xf32> to vector<32x32xf32>
    %456 = arith.addf %452, %455 : vector<32x32xf32>
    %457 = vector.extract_strided_slice %442 {offsets = [0, 0], sizes = [8, 32], strides = [1, 1]} : vector<16x32xf32> to vector<8x32xf32>
    %458 = vector.extract_strided_slice %449 {offsets = [0, 0], sizes = [16, 32], strides = [1, 1]} : vector<32x32xf32> to vector<16x32xf32>
    %459 = tpu.transpose %458, [1, 0] : vector<16x32xf32> -> vector<32x16xf32>
    %460 = vector.extract_strided_slice %457 {offsets = [0, 0], sizes = [8, 8], strides = [1, 1]} : vector<8x32xf32> to vector<8x8xf32>
    %461 = vector.extract_strided_slice %459 {offsets = [0, 0], sizes = [8, 16], strides = [1, 1]} : vector<32x16xf32> to vector<8x16xf32>
    %cst_205 = arith.constant dense<0.000000e+00> : vector<8x16xf32>
    %462 = tpu.matmul %460, %461, %cst_205 {dimension_numbers = #tpu.dot_dimension_numbers<[1], [0], [0], [1], [0, 0, 1, 1], [], []>} : vector<8x8xf32>, vector<8x16xf32>, vector<8x16xf32> -> vector<8x16xf32>
    %463 = vector.extract_strided_slice %457 {offsets = [0, 8], sizes = [8, 8], strides = [1, 1]} : vector<8x32xf32> to vector<8x8xf32>
    %464 = vector.extract_strided_slice %459 {offsets = [8, 0], sizes = [8, 16], strides = [1, 1]} : vector<32x16xf32> to vector<8x16xf32>
    %cst_206 = arith.constant dense<0.000000e+00> : vector<8x16xf32>
    %465 = tpu.matmul %463, %464, %cst_206 {dimension_numbers = #tpu.dot_dimension_numbers<[1], [0], [0], [1], [0, 0, 1, 1], [], []>} : vector<8x8xf32>, vector<8x16xf32>, vector<8x16xf32> -> vector<8x16xf32>
    %466 = vector.extract_strided_slice %457 {offsets = [0, 16], sizes = [8, 8], strides = [1, 1]} : vector<8x32xf32> to vector<8x8xf32>
    %467 = vector.extract_strided_slice %459 {offsets = [16, 0], sizes = [8, 16], strides = [1, 1]} : vector<32x16xf32> to vector<8x16xf32>
    %cst_207 = arith.constant dense<0.000000e+00> : vector<8x16xf32>
    %468 = tpu.matmul %466, %467, %cst_207 {dimension_numbers = #tpu.dot_dimension_numbers<[1], [0], [0], [1], [0, 0, 1, 1], [], []>} : vector<8x8xf32>, vector<8x16xf32>, vector<8x16xf32> -> vector<8x16xf32>
    %469 = vector.extract_strided_slice %457 {offsets = [0, 24], sizes = [8, 8], strides = [1, 1]} : vector<8x32xf32> to vector<8x8xf32>
    %470 = vector.extract_strided_slice %459 {offsets = [24, 0], sizes = [8, 16], strides = [1, 1]} : vector<32x16xf32> to vector<8x16xf32>
    %cst_208 = arith.constant dense<0.000000e+00> : vector<8x16xf32>
    %471 = tpu.matmul %469, %470, %cst_208 {dimension_numbers = #tpu.dot_dimension_numbers<[1], [0], [0], [1], [0, 0, 1, 1], [], []>} : vector<8x8xf32>, vector<8x16xf32>, vector<8x16xf32> -> vector<8x16xf32>
    %472 = vector.extract_strided_slice %442 {offsets = [8, 0], sizes = [8, 32], strides = [1, 1]} : vector<16x32xf32> to vector<8x32xf32>
    %473 = vector.extract_strided_slice %449 {offsets = [16, 0], sizes = [16, 32], strides = [1, 1]} : vector<32x32xf32> to vector<16x32xf32>
    %474 = tpu.transpose %473, [1, 0] : vector<16x32xf32> -> vector<32x16xf32>
    %475 = vector.extract_strided_slice %472 {offsets = [0, 0], sizes = [8, 8], strides = [1, 1]} : vector<8x32xf32> to vector<8x8xf32>
    %476 = vector.extract_strided_slice %474 {offsets = [0, 0], sizes = [8, 16], strides = [1, 1]} : vector<32x16xf32> to vector<8x16xf32>
    %cst_209 = arith.constant dense<0.000000e+00> : vector<8x16xf32>
    %477 = tpu.matmul %475, %476, %cst_209 {dimension_numbers = #tpu.dot_dimension_numbers<[1], [0], [0], [1], [0, 0, 1, 1], [], []>} : vector<8x8xf32>, vector<8x16xf32>, vector<8x16xf32> -> vector<8x16xf32>
    %478 = vector.extract_strided_slice %472 {offsets = [0, 8], sizes = [8, 8], strides = [1, 1]} : vector<8x32xf32> to vector<8x8xf32>
    %479 = vector.extract_strided_slice %474 {offsets = [8, 0], sizes = [8, 16], strides = [1, 1]} : vector<32x16xf32> to vector<8x16xf32>
    %cst_210 = arith.constant dense<0.000000e+00> : vector<8x16xf32>
    %480 = tpu.matmul %478, %479, %cst_210 {dimension_numbers = #tpu.dot_dimension_numbers<[1], [0], [0], [1], [0, 0, 1, 1], [], []>} : vector<8x8xf32>, vector<8x16xf32>, vector<8x16xf32> -> vector<8x16xf32>
    %481 = vector.extract_strided_slice %472 {offsets = [0, 16], sizes = [8, 8], strides = [1, 1]} : vector<8x32xf32> to vector<8x8xf32>
    %482 = vector.extract_strided_slice %474 {offsets = [16, 0], sizes = [8, 16], strides = [1, 1]} : vector<32x16xf32> to vector<8x16xf32>
    %cst_211 = arith.constant dense<0.000000e+00> : vector<8x16xf32>
    %483 = tpu.matmul %481, %482, %cst_211 {dimension_numbers = #tpu.dot_dimension_numbers<[1], [0], [0], [1], [0, 0, 1, 1], [], []>} : vector<8x8xf32>, vector<8x16xf32>, vector<8x16xf32> -> vector<8x16xf32>
    %484 = vector.extract_strided_slice %472 {offsets = [0, 24], sizes = [8, 8], strides = [1, 1]} : vector<8x32xf32> to vector<8x8xf32>
    %485 = vector.extract_strided_slice %474 {offsets = [24, 0], sizes = [8, 16], strides = [1, 1]} : vector<32x16xf32> to vector<8x16xf32>
    %cst_212 = arith.constant dense<0.000000e+00> : vector<8x16xf32>
    %486 = tpu.matmul %484, %485, %cst_212 {dimension_numbers = #tpu.dot_dimension_numbers<[1], [0], [0], [1], [0, 0, 1, 1], [], []>} : vector<8x8xf32>, vector<8x16xf32>, vector<8x16xf32> -> vector<8x16xf32>
    %487 = tpu.concatenate %462, %465, %468, %471, %477, %480, %483, %486 in 0 : vector<8x16xf32>, vector<8x16xf32>, vector<8x16xf32>, vector<8x16xf32>, vector<8x16xf32>, vector<8x16xf32>, vector<8x16xf32>, vector<8x16xf32> -> vector<64x16xf32>
    %cst_213 = arith.constant 0.353553385 : f32
    %488 = vector.broadcast %cst_213 : f32 to vector<64x16xf32>
    %489 = arith.mulf %487, %488 : vector<64x16xf32>
    %490 = arith.addf %489, %3 : vector<64x16xf32>
    %cst_214 = arith.constant dense<0xFF800000> : vector<64xf32>
    %491 = vector.multi_reduction <maximumf>, %490, %cst_214 [1] : vector<64x16xf32> to vector<64xf32>
    %492 = vector.shape_cast %491 : vector<64xf32> to vector<64x1xf32>
    %493 = vector.broadcast %492 : vector<64x1xf32> to vector<64x16xf32>
    %494 = arith.subf %490, %493 : vector<64x16xf32>
    %495 = math.exp %494 : vector<64x16xf32>
    %cst_215 = arith.constant dense<0.000000e+00> : vector<64xf32>
    %496 = vector.multi_reduction <add>, %495, %cst_215 [1] : vector<64x16xf32> to vector<64xf32>
    %497 = vector.shape_cast %496 : vector<64xf32> to vector<64x1xf32>
    %498 = vector.broadcast %497 : vector<64x1xf32> to vector<64x16xf32>
    %499 = arith.divf %495, %498 : vector<64x16xf32>
    %500 = vector.extract_strided_slice %456 {offsets = [0, 0], sizes = [16, 32], strides = [1, 1]} : vector<32x32xf32> to vector<16x32xf32>
    %501 = vector.extract_strided_slice %499 {offsets = [0, 0], sizes = [8, 16], strides = [1, 1]} : vector<64x16xf32> to vector<8x16xf32>
    %502 = vector.extract_strided_slice %500 {offsets = [0, 0], sizes = [16, 8], strides = [1, 1]} : vector<16x32xf32> to vector<16x8xf32>
    %cst_216 = arith.constant dense<0.000000e+00> : vector<8x8xf32>
    %503 = tpu.matmul %501, %502, %cst_216 {dimension_numbers = #tpu.dot_dimension_numbers<[1], [0], [0], [1], [0, 0, 1, 1], [], []>} : vector<8x16xf32>, vector<16x8xf32>, vector<8x8xf32> -> vector<8x8xf32>
    %504 = vector.extract_strided_slice %499 {offsets = [8, 0], sizes = [8, 16], strides = [1, 1]} : vector<64x16xf32> to vector<8x16xf32>
    %505 = vector.extract_strided_slice %500 {offsets = [0, 8], sizes = [16, 8], strides = [1, 1]} : vector<16x32xf32> to vector<16x8xf32>
    %cst_217 = arith.constant dense<0.000000e+00> : vector<8x8xf32>
    %506 = tpu.matmul %504, %505, %cst_217 {dimension_numbers = #tpu.dot_dimension_numbers<[1], [0], [0], [1], [0, 0, 1, 1], [], []>} : vector<8x16xf32>, vector<16x8xf32>, vector<8x8xf32> -> vector<8x8xf32>
    %507 = vector.extract_strided_slice %499 {offsets = [16, 0], sizes = [8, 16], strides = [1, 1]} : vector<64x16xf32> to vector<8x16xf32>
    %508 = vector.extract_strided_slice %500 {offsets = [0, 16], sizes = [16, 8], strides = [1, 1]} : vector<16x32xf32> to vector<16x8xf32>
    %cst_218 = arith.constant dense<0.000000e+00> : vector<8x8xf32>
    %509 = tpu.matmul %507, %508, %cst_218 {dimension_numbers = #tpu.dot_dimension_numbers<[1], [0], [0], [1], [0, 0, 1, 1], [], []>} : vector<8x16xf32>, vector<16x8xf32>, vector<8x8xf32> -> vector<8x8xf32>
    %510 = vector.extract_strided_slice %499 {offsets = [24, 0], sizes = [8, 16], strides = [1, 1]} : vector<64x16xf32> to vector<8x16xf32>
    %511 = vector.extract_strided_slice %500 {offsets = [0, 24], sizes = [16, 8], strides = [1, 1]} : vector<16x32xf32> to vector<16x8xf32>
    %cst_219 = arith.constant dense<0.000000e+00> : vector<8x8xf32>
    %512 = tpu.matmul %510, %511, %cst_219 {dimension_numbers = #tpu.dot_dimension_numbers<[1], [0], [0], [1], [0, 0, 1, 1], [], []>} : vector<8x16xf32>, vector<16x8xf32>, vector<8x8xf32> -> vector<8x8xf32>
    %513 = tpu.concatenate %503, %506, %509, %512 in 1 : vector<8x8xf32>, vector<8x8xf32>, vector<8x8xf32>, vector<8x8xf32> -> vector<8x32xf32>
    %514 = vector.extract_strided_slice %456 {offsets = [16, 0], sizes = [16, 32], strides = [1, 1]} : vector<32x32xf32> to vector<16x32xf32>
    %515 = vector.extract_strided_slice %499 {offsets = [32, 0], sizes = [8, 16], strides = [1, 1]} : vector<64x16xf32> to vector<8x16xf32>
    %516 = vector.extract_strided_slice %514 {offsets = [0, 0], sizes = [16, 8], strides = [1, 1]} : vector<16x32xf32> to vector<16x8xf32>
    %cst_220 = arith.constant dense<0.000000e+00> : vector<8x8xf32>
    %517 = tpu.matmul %515, %516, %cst_220 {dimension_numbers = #tpu.dot_dimension_numbers<[1], [0], [0], [1], [0, 0, 1, 1], [], []>} : vector<8x16xf32>, vector<16x8xf32>, vector<8x8xf32> -> vector<8x8xf32>
    %518 = vector.extract_strided_slice %499 {offsets = [40, 0], sizes = [8, 16], strides = [1, 1]} : vector<64x16xf32> to vector<8x16xf32>
    %519 = vector.extract_strided_slice %514 {offsets = [0, 8], sizes = [16, 8], strides = [1, 1]} : vector<16x32xf32> to vector<16x8xf32>
    %cst_221 = arith.constant dense<0.000000e+00> : vector<8x8xf32>
    %520 = tpu.matmul %518, %519, %cst_221 {dimension_numbers = #tpu.dot_dimension_numbers<[1], [0], [0], [1], [0, 0, 1, 1], [], []>} : vector<8x16xf32>, vector<16x8xf32>, vector<8x8xf32> -> vector<8x8xf32>
    %521 = vector.extract_strided_slice %499 {offsets = [48, 0], sizes = [8, 16], strides = [1, 1]} : vector<64x16xf32> to vector<8x16xf32>
    %522 = vector.extract_strided_slice %514 {offsets = [0, 16], sizes = [16, 8], strides = [1, 1]} : vector<16x32xf32> to vector<16x8xf32>
    %cst_222 = arith.constant dense<0.000000e+00> : vector<8x8xf32>
    %523 = tpu.matmul %521, %522, %cst_222 {dimension_numbers = #tpu.dot_dimension_numbers<[1], [0], [0], [1], [0, 0, 1, 1], [], []>} : vector<8x16xf32>, vector<16x8xf32>, vector<8x8xf32> -> vector<8x8xf32>
    %524 = vector.extract_strided_slice %499 {offsets = [56, 0], sizes = [8, 16], strides = [1, 1]} : vector<64x16xf32> to vector<8x16xf32>
    %525 = vector.extract_strided_slice %514 {offsets = [0, 24], sizes = [16, 8], strides = [1, 1]} : vector<16x32xf32> to vector<16x8xf32>
    %cst_223 = arith.constant dense<0.000000e+00> : vector<8x8xf32>
    %526 = tpu.matmul %524, %525, %cst_223 {dimension_numbers = #tpu.dot_dimension_numbers<[1], [0], [0], [1], [0, 0, 1, 1], [], []>} : vector<8x16xf32>, vector<16x8xf32>, vector<8x8xf32> -> vector<8x8xf32>
    %527 = tpu.concatenate %517, %520, %523, %526 in 1 : vector<8x8xf32>, vector<8x8xf32>, vector<8x8xf32>, vector<8x8xf32> -> vector<8x32xf32>
    %528 = tpu.concatenate %513, %527 in 0 : vector<8x32xf32>, vector<8x32xf32> -> vector<16x32xf32>
    %c15_224 = arith.constant 15 : index
    %c0_225 = arith.constant 0 : index
    %c0_226 = arith.constant 0 : index
    %529 = vector.load %arg5[%c15_224, %c0_225, %c0_226] : memref<16x32x32xf32, #tpu.memory_space<vmem>>, vector<1x32x32xf32>
    %530 = vector.shape_cast %529 : vector<1x32x32xf32> to vector<32x32xf32>
    %cst_227 = arith.constant dense<0.000000e+00> : vector<16x32xf32>
    %531 = tpu.matmul %528, %530, %cst_227 {dimension_numbers = #tpu.dot_dimension_numbers<[1], [0], [0], [1], [0, 0, 1, 1], [], []>} : vector<16x32xf32>, vector<32x32xf32>, vector<16x32xf32> -> vector<16x32xf32>
    %532 = arith.addf %415, %531 : vector<16x32xf32>
    %c16 = arith.constant 16 : index
    %c0_228 = arith.constant 0 : index
    %c0_229 = arith.constant 0 : index
    %533 = vector.load %arg6[%c16, %c0_228, %c0_229] : memref<18x1x32xf32, #tpu.memory_space<vmem>>, vector<1x1x32xf32>
    %534 = vector.shape_cast %533 : vector<1x1x32xf32> to vector<1x32xf32>
    %535 = vector.broadcast %534 : vector<1x32xf32> to vector<16x32xf32>
    %536 = arith.addf %532, %535 : vector<16x32xf32>
    %cst_230 = arith.constant dense<0.000000e+00> : vector<16xf32>
    %537 = vector.multi_reduction <add>, %536, %cst_230 [1] : vector<16x32xf32> to vector<16xf32>
    %538 = vector.shape_cast %537 : vector<16xf32> to vector<16x1xf32>
    %cst_231 = arith.constant 3.200000e+01 : f32
    %539 = vector.broadcast %cst_231 : f32 to vector<16x1xf32>
    %540 = arith.divf %538, %539 : vector<16x1xf32>
    %541 = vector.broadcast %540 : vector<16x1xf32> to vector<16x32xf32>
    %542 = arith.subf %536, %541 : vector<16x32xf32>
    %543 = arith.mulf %542, %542 : vector<16x32xf32>
    %cst_232 = arith.constant dense<0.000000e+00> : vector<16xf32>
    %544 = vector.multi_reduction <add>, %543, %cst_232 [1] : vector<16x32xf32> to vector<16xf32>
    %545 = vector.shape_cast %544 : vector<16xf32> to vector<16x1xf32>
    %cst_233 = arith.constant 0.0322580636 : f32
    %546 = vector.broadcast %cst_233 : f32 to vector<16x1xf32>
    %547 = arith.mulf %545, %546 : vector<16x1xf32>
    %548 = vector.broadcast %293 : f32 to vector<16x32xf32>
    %549 = arith.mulf %548, %542 : vector<16x32xf32>
    %550 = math.sqrt %547 : vector<16x1xf32>
    %cst_234 = arith.constant 9.99999997E-7 : f32
    %551 = vector.broadcast %cst_234 : f32 to vector<16x1xf32>
    %552 = arith.addf %550, %551 : vector<16x1xf32>
    %553 = vector.broadcast %552 : vector<16x1xf32> to vector<16x32xf32>
    %554 = arith.divf %549, %553 : vector<16x32xf32>
    %555 = vector.broadcast %294 : f32 to vector<16x32xf32>
    %556 = arith.addf %554, %555 : vector<16x32xf32>
    %c1_235 = arith.constant 1 : index
    %c0_236 = arith.constant 0 : index
    %c0_237 = arith.constant 0 : index
    %557 = vector.load %arg7[%c1_235, %c0_236, %c0_237] : memref<2x32x64xf32, #tpu.memory_space<vmem>>, vector<1x32x64xf32>
    %558 = vector.shape_cast %557 : vector<1x32x64xf32> to vector<32x64xf32>
    %cst_238 = arith.constant dense<0.000000e+00> : vector<16x64xf32>
    %559 = tpu.matmul %556, %558, %cst_238 {dimension_numbers = #tpu.dot_dimension_numbers<[1], [0], [0], [1], [0, 0, 1, 1], [], []>} : vector<16x32xf32>, vector<32x64xf32>, vector<16x64xf32> -> vector<16x64xf32>
    %c1_239 = arith.constant 1 : index
    %c0_240 = arith.constant 0 : index
    %c0_241 = arith.constant 0 : index
    %560 = vector.load %arg8[%c1_239, %c0_240, %c0_241] : memref<2x1x64xf32, #tpu.memory_space<vmem>>, vector<1x1x64xf32>
    %561 = vector.shape_cast %560 : vector<1x1x64xf32> to vector<1x64xf32>
    %562 = vector.broadcast %561 : vector<1x64xf32> to vector<16x64xf32>
    %563 = arith.addf %559, %562 : vector<16x64xf32>
    %cst_242 = arith.constant 0.000000e+00 : f32
    %564 = vector.broadcast %cst_242 : f32 to vector<16x64xf32>
    %565 = arith.maximumf %563, %564 : vector<16x64xf32>
    %c1_243 = arith.constant 1 : index
    %c0_244 = arith.constant 0 : index
    %c0_245 = arith.constant 0 : index
    %566 = vector.load %arg9[%c1_243, %c0_244, %c0_245] : memref<2x64x32xf32, #tpu.memory_space<vmem>>, vector<1x64x32xf32>
    %567 = vector.shape_cast %566 : vector<1x64x32xf32> to vector<64x32xf32>
    %cst_246 = arith.constant dense<0.000000e+00> : vector<16x32xf32>
    %568 = tpu.matmul %565, %567, %cst_246 {dimension_numbers = #tpu.dot_dimension_numbers<[1], [0], [0], [1], [0, 0, 1, 1], [], []>} : vector<16x64xf32>, vector<64x32xf32>, vector<16x32xf32> -> vector<16x32xf32>
    %c17 = arith.constant 17 : index
    %c0_247 = arith.constant 0 : index
    %c0_248 = arith.constant 0 : index
    %569 = vector.load %arg6[%c17, %c0_247, %c0_248] : memref<18x1x32xf32, #tpu.memory_space<vmem>>, vector<1x1x32xf32>
    %570 = vector.shape_cast %569 : vector<1x1x32xf32> to vector<1x32xf32>
    %571 = vector.broadcast %570 : vector<1x32xf32> to vector<16x32xf32>
    %572 = arith.addf %568, %571 : vector<16x32xf32>
    %573 = arith.addf %536, %572 : vector<16x32xf32>
    %c12_249 = arith.constant 12 : index
    %574 = memref.load %arg0[%c12_249] : memref<14xf32, #tpu.memory_space<smem>>
    %c13_250 = arith.constant 13 : index
    %575 = memref.load %arg0[%c13_250] : memref<14xf32, #tpu.memory_space<smem>>
    %cst_251 = arith.constant dense<0.000000e+00> : vector<16xf32>
    %576 = vector.multi_reduction <add>, %573, %cst_251 [1] : vector<16x32xf32> to vector<16xf32>
    %577 = vector.shape_cast %576 : vector<16xf32> to vector<16x1xf32>
    %cst_252 = arith.constant 3.200000e+01 : f32
    %578 = vector.broadcast %cst_252 : f32 to vector<16x1xf32>
    %579 = arith.divf %577, %578 : vector<16x1xf32>
    %580 = vector.broadcast %579 : vector<16x1xf32> to vector<16x32xf32>
    %581 = arith.subf %573, %580 : vector<16x32xf32>
    %582 = arith.mulf %581, %581 : vector<16x32xf32>
    %cst_253 = arith.constant dense<0.000000e+00> : vector<16xf32>
    %583 = vector.multi_reduction <add>, %582, %cst_253 [1] : vector<16x32xf32> to vector<16xf32>
    %584 = vector.shape_cast %583 : vector<16xf32> to vector<16x1xf32>
    %cst_254 = arith.constant 0.0322580636 : f32
    %585 = vector.broadcast %cst_254 : f32 to vector<16x1xf32>
    %586 = arith.mulf %584, %585 : vector<16x1xf32>
    %587 = vector.broadcast %574 : f32 to vector<16x32xf32>
    %588 = arith.mulf %587, %581 : vector<16x32xf32>
    %589 = math.sqrt %586 : vector<16x1xf32>
    %cst_255 = arith.constant 9.99999997E-7 : f32
    %590 = vector.broadcast %cst_255 : f32 to vector<16x1xf32>
    %591 = arith.addf %589, %590 : vector<16x1xf32>
    %592 = vector.broadcast %591 : vector<16x1xf32> to vector<16x32xf32>
    %593 = arith.divf %588, %592 : vector<16x32xf32>
    %594 = vector.broadcast %575 : f32 to vector<16x32xf32>
    %595 = arith.addf %593, %594 : vector<16x32xf32>
    %c0_256 = arith.constant 0 : index
    %c0_257 = arith.constant 0 : index
    %596 = vector.load %arg10[%c0_256, %c0_257] : memref<16x32xf32, #tpu.memory_space<vmem>>, vector<16x32xf32>
    tpu.vector_store %arg10[%c0_256, %c0_257], %595 {strides = array<i32>} : memref<16x32xf32, #tpu.memory_space<vmem>>, vector<16x32xf32>,
    return
  }
}

</mosaic_0001>

<llo_original>
// kernel: tpu_custom_call.1
$region0: #{tpu_custom_call.1}
  #allocation0 [shape = 'u32[]', space=smem, size = 0x4, offset = 0x4, fixed_abs, tag = 'smem constant byte address 0x4 - core index']
  #allocation1 [shape = 'u32[144,128]{1,0:T(1,128)}', space=vmem, size = 0x12000, scoped, tag = 'internal scratch']
  %s0 = inlined_call_operand.vmem [shape: f32[14], index: 0, kind: input, shape index: {}]
  %s1 = inlined_call_operand.vmem [shape: f32[16,32], index: 1, kind: input, shape index: {}]
  %s2 = inlined_call_operand.vmem [shape: f32[32,32], index: 2, kind: input, shape index: {}]
  %s3 = inlined_call_operand.vmem [shape: f32[64,8], index: 3, kind: input, shape index: {}]
  %s4 = inlined_call_operand.vmem [shape: f32[64,16], index: 4, kind: input, shape index: {}]
  %s5 = inlined_call_operand.hbm [shape: f32[16,32,32], index: 5, kind: input, shape index: {}]
  %s6 = inlined_call_operand.vmem [shape: f32[18,1,32], index: 6, kind: input, shape index: {}]
  %s7 = inlined_call_operand.vmem [shape: f32[2,32,64], index: 7, kind: input, shape index: {}]
  %s8 = inlined_call_operand.vmem [shape: f32[2,1,64], index: 8, kind: input, shape index: {}]
  %s9 = inlined_call_operand.vmem [shape: f32[2,64,32], index: 9, kind: input, shape index: {}]
  %s10 = inlined_call_operand.hbm [shape: f32[16,32], index: 10, kind: output, shape index: {}]
  %s11 = sld [smem:[#allocation0]]
  $region58: #{tpu_custom_call.1} parent=0
    _
  %s13 = ssub.s32 1, %s11
  %s14 = scalar_select 0, %s13, %s11
  $region1: #{tpu_custom_call.1} parent=0
    #allocation2 [shape = 'u8[512]{0}', space=smem, size = 0x200, scoped, tag = 'input window, operand 0, single buffered']
    #allocation3 [shape = 's32[1]{0}', space=sflag, size = 0x4, scoped, tag = 'scoped memory for tpu_custom_call.1']
    #allocation4 [shape = 's32[1]{0}', space=sflag, size = 0x4, scoped, tag = 'scoped memory for tpu_custom_call.1']
    #allocation5 [shape = 's32[1]{0}', space=sflag, size = 0x4, scoped, tag = 'scoped memory for tpu_custom_call.1']
    #allocation6 [shape = 'u8[262144]{0}', space=vmem, size = 0x40000, scoped, tag = 'input window, operand 5, single buffered']
    #allocation7 [shape = 'u8[8192]{0}', space=vmem, size = 0x2000, scoped, tag = 'output window, operand 0, single buffered']
    %15 = vsyncpa [#allocation5], 0
    %16 = vsyncpa [#allocation3], 0
    %17 = vsyncpa [#allocation4], 0
    // Predicated region
    $region2: #{tpu_custom_call.1} parent=1 // pred_check
      _
    $region3: #{tpu_custom_call.1} parent=1 // pred_check_branch
      %19 = sbr.rel (0) target = $region5
    $region4: #{tpu_custom_call.1} parent=1 // pred_region
      %s21 = ssub.s32 16, 16
      %22 = vsyncadd [#allocation5], %s21
      %s24 = sshll.u32 %s0, 4
      %s25 = int_to_ptr.vmem [resolvable:$true] %s24
      %27 = dma.vmem_to_smem %s25, 16, [#allocation2], [#allocation5]
    $region5: #{tpu_custom_call.1} parent=1 // pred_fallthru
      _
    // Predicated region
    $region6: #{tpu_custom_call.1} parent=1 // pred_check
      _
    $region7: #{tpu_custom_call.1} parent=1 // pred_check_branch
      %29 = sbr.rel (0) target = $region9
    $region8: #{tpu_custom_call.1} parent=1 // pred_region
      _
    $region9: #{tpu_custom_call.1} parent=1 // pred_fallthru
      _
    // Predicated region
    $region10: #{tpu_custom_call.1} parent=1 // pred_check
      _
    $region11: #{tpu_custom_call.1} parent=1 // pred_check_branch
      %31 = sbr.rel (0) target = $region13
    $region12: #{tpu_custom_call.1} parent=1 // pred_region
      _
    $region13: #{tpu_custom_call.1} parent=1 // pred_fallthru
      _
    // Predicated region
    $region14: #{tpu_custom_call.1} parent=1 // pred_check
      _
    $region15: #{tpu_custom_call.1} parent=1 // pred_check_branch
      %33 = sbr.rel (0) target = $region17
    $region16: #{tpu_custom_call.1} parent=1 // pred_region
      _
    $region17: #{tpu_custom_call.1} parent=1 // pred_fallthru
      _
    // Predicated region
    $region18: #{tpu_custom_call.1} parent=1 // pred_check
      _
    $region19: #{tpu_custom_call.1} parent=1 // pred_check_branch
      %35 = sbr.rel (0) target = $region21
    $region20: #{tpu_custom_call.1} parent=1 // pred_region
      _
    $region21: #{tpu_custom_call.1} parent=1 // pred_fallthru
      _
    // Predicated region
    $region22: #{tpu_custom_call.1} parent=1 // pred_check
      _
    $region23: #{tpu_custom_call.1} parent=1 // pred_check_branch
      %37 = sbr.rel (0) target = $region25
    $region24: #{tpu_custom_call.1} parent=1 // pred_region
      %s39 = ssub.s32 8192, 8192
      %40 = vsyncadd [#allocation3], %s39
      %s41 = sshll.u32 [#allocation6], 4
      %s42 = int_to_ptr.vmem [resolvable:$true] %s41
      %47 = dma.hbm_to_vmem [thread:$0]  %s5, 8192, %s42, [#allocation3], 128, 128, 8
    $region25: #{tpu_custom_call.1} parent=1 // pred_fallthru
      _
    // Predicated region
    $region26: #{tpu_custom_call.1} parent=1 // pred_check
      _
    $region27: #{tpu_custom_call.1} parent=1 // pred_check_branch
      %49 = sbr.rel (0) target = $region29
    $region28: #{tpu_custom_call.1} parent=1 // pred_region
      _
    $region29: #{tpu_custom_call.1} parent=1 // pred_fallthru
      _
    // Predicated region
    $region30: #{tpu_custom_call.1} parent=1 // pred_check
      _
    $region31: #{tpu_custom_call.1} parent=1 // pred_check_branch
      %51 = sbr.rel (0) target = $region33
    $region32: #{tpu_custom_call.1} parent=1 // pred_region
      _
    $region33: #{tpu_custom_call.1} parent=1 // pred_fallthru
      _
    // Predicated region
    $region34: #{tpu_custom_call.1} parent=1 // pred_check
      _
    $region35: #{tpu_custom_call.1} parent=1 // pred_check_branch
      %53 = sbr.rel (0) target = $region37
    $region36: #{tpu_custom_call.1} parent=1 // pred_region
      _
    $region37: #{tpu_custom_call.1} parent=1 // pred_fallthru
      _
    // Predicated region
    $region38: #{tpu_custom_call.1} parent=1 // pred_check
      _
    $region39: #{tpu_custom_call.1} parent=1 // pred_check_branch
      %55 = sbr.rel (0) target = $region41
    $region40: #{tpu_custom_call.1} parent=1 // pred_region
      _
    $region41: #{tpu_custom_call.1} parent=1 // pred_fallthru
      _
    // Predicated region
    $region42: #{tpu_custom_call.1} parent=1 // pred_check
      _
    $region43: #{tpu_custom_call.1} parent=1 // pred_check_branch
      %57 = sbr.rel (0) target = $region45
    $region44: #{tpu_custom_call.1} parent=1 // pred_region
      %58 = dma.done [#allocation5], 16
    $region45: #{tpu_custom_call.1} parent=1 // pred_fallthru
      _
    // Predicated region
    $region46: #{tpu_custom_call.1} parent=1 // pred_check
      _
    $region47: #{tpu_custom_call.1} parent=1 // pred_check_branch
      %60 = sbr.rel (0) target = $region49
    $region48: #{tpu_custom_call.1} parent=1 // pred_region
      %61 = dma.done [#allocation3], 8192
    $region49: #{tpu_custom_call.1} parent=1 // pred_fallthru
      _
    %62 = sfence
    %v63 = vld [vmem:[%s1] sm:$0xff]
    %v64 = vld [vmem:[%s1 + $0x8] sm:$0xff]
    %v65 = vld [vmem:[%s2] sm:$0xff]
    %v66 = vld [vmem:[%s2 + $0x8] sm:$0xff]
    %v67 = vld [vmem:[%s2 + $0x10] sm:$0xff]
    %v68 = vld [vmem:[%s2 + $0x18] sm:$0xff]
    %v69 = vld [vmem:[%s3] sm:$0xff]
    %v70 = vld [vmem:[%s3 + $0x8] sm:$0xff]
    %v71 = vld [vmem:[%s3 + $0x10] sm:$0xff]
    %v72 = vld [vmem:[%s3 + $0x18] sm:$0xff]
    %v73 = vld [vmem:[%s3 + $0x20] sm:$0xff]
    %v74 = vld [vmem:[%s3 + $0x28] sm:$0xff]
    %v75 = vld [vmem:[%s3 + $0x30] sm:$0xff]
    %v76 = vld [vmem:[%s3 + $0x38] sm:$0xff]
    %v77 = vld [vmem:[%s4] sm:$0xff]
    %v78 = vld [vmem:[%s4 + $0x8] sm:$0xff]
    %v79 = vld [vmem:[%s4 + $0x10] sm:$0xff]
    %v80 = vld [vmem:[%s4 + $0x18] sm:$0xff]
    %v81 = vld [vmem:[%s4 + $0x20] sm:$0xff]
    %v82 = vld [vmem:[%s4 + $0x28] sm:$0xff]
    %v83 = vld [vmem:[%s4 + $0x30] sm:$0xff]
    %v84 = vld [vmem:[%s4 + $0x38] sm:$0xff]
    %s85 = sld [smem:[#allocation2]]
    %s86 = sld [smem:[#allocation2 + $0x1]]
    %s87 = sld [smem:[#allocation2 + $0x2]]
    %s88 = sld [smem:[#allocation2 + $0x3]]
    %s89 = sld [smem:[#allocation2 + $0x4]]
    %s90 = sld [smem:[#allocation2 + $0x5]]
    %vm91 = vcmask 261120
    %v92 = vsel %vm91, %v63, 0.0
    %93 = vadd.xlane.f32.xlu0 %v92
    %v94 = vpop.xlane.xlu0 %93
    %v95 = vsel %vm91, %v64, 0.0
    %96 = vadd.xlane.f32.xlu0 %v95
    %v97 = vpop.xlane.xlu0 %96
    %v98 = vrcp.pop 32.0
    %v99 = vmul.f32 %v94, %v98
    %v100 = vmul.f32 %v97, %v98
    %v101 = vsub.f32 %v63, %v99
    %v102 = vsub.f32 %v64, %v100
    %v103 = vmul.f32 %v101, %v101
    %v104 = vmul.f32 %v102, %v102
    %v105 = vsel %vm91, %v103, 0.0
    %106 = vadd.xlane.f32.xlu0 %v105
    %v107 = vpop.xlane.xlu0 %106
    %v108 = vsel %vm91, %v104, 0.0
    %109 = vadd.xlane.f32.xlu0 %v108
    %v110 = vpop.xlane.xlu0 %109
    %v111 = vmul.f32 %v107, 0.032258064
    %v112 = vmul.f32 %v110, 0.032258064
    %v113 = vstv %s85
    %v114 = vmul.f32 %v113, %v101
    %v115 = vmul.f32 %v113, %v102
    %v116 = vrsqrt.pop %v111
    %v117 = vmul.f32 %v111, %v116
    %vm118 = vcmp.eq.f32.partialorder %v111, inf
    %v119 = vsel %vm118, %v111, %v117
    %vm120 = vcmp.eq.f32.partialorder %v111, 0.0
    %v121 = vand.u32 %v111, 2147483648
    %v122 = vsel %vm120, %v121, %v119
    %v123 = vrsqrt.pop %v112
    %v124 = vmul.f32 %v112, %v123
    %vm125 = vcmp.eq.f32.partialorder %v112, inf
    %v126 = vsel %vm125, %v112, %v124
    %vm127 = vcmp.eq.f32.partialorder %v112, 0.0
    %v128 = vand.u32 %v112, 2147483648
    %v129 = vsel %vm127, %v128, %v126
    %v130 = vadd.f32 %v122, 1e-06
    %v131 = vadd.f32 %v129, 1e-06
    %v132 = vrcp.pop %v130
    %v133 = vmul.f32 %v114, %v132
    %v134 = vrcp.pop %v131
    %v135 = vmul.f32 %v115, %v134
    %v136 = vstv %s86
    %v137 = vadd.f32 %v133, %v136
    %v138 = vadd.f32 %v135, %v136
    %v139 = vld [vmem:[#allocation6] sm:$0xff]
    %v140 = vld [vmem:[#allocation6 + $0x8] sm:$0xff]
    %v141 = vld [vmem:[#allocation6 + $0x10] sm:$0xff]
    %v142 = vld [vmem:[#allocation6 + $0x18] sm:$0xff]
    %v143 = vld [vmem:[%s6] sm:$0x1]
    %v145 = vlaneseq
    %v146 = vshrl.u32 %v145, 7
    %v147 = vsub.s32 0, %v146
    %v148 = vrot.slane %v143, %v147
    %v151 = vsel %vm91, %v137, 0
    %v154 = vsel %vm91, %v138, 0
    %156 = vmatprep.subr.mxu0 0.0
    %157 = vmatpush1.msra.mxu0 0.0
    %158 = vmatprep.subr.mxu0 0.0
    %159 = vmatpush1.msra.mxu0 0.0
    %160 = vmatprep.subr.mxu0 0.0
    %161 = vmatpush1.msra.mxu0 0.0
    %162 = vmatprep.subr.mxu0 0.0
    %163 = vmatpush1.msra.mxu0 0.0
    %164 = vmatprep.subr.mxu0 0.0
    %165 = vmatpush1.msra.mxu0 0.0
    %166 = vmatprep.subr.mxu0 0.0
    %167 = vmatpush1.msra.mxu0 0.0
    %168 = vmatprep.subr.mxu0 0.0
    %169 = vmatpush1.msra.mxu0 0.0
    %170 = vmatprep.subr.mxu0 0.0
    %171 = vmatpush1.msra.mxu0 0.0
    %172 = vmatprep.subr.mxu0 0.0
    %173 = vmatpush1.msra.mxu0 0.0
    %174 = vmatprep.subr.mxu0 0.0
    %175 = vmatpush1.msra.mxu0 0.0
    %176 = vmatprep.subr.mxu0 0.0
    %177 = vmatpush1.msra.mxu0 0.0
    %178 = vmatprep.subr.mxu0 0.0
    %179 = vmatpush1.msra.mxu0 0.0
    %180 = vmatprep.subr.mxu0 0.0
    %181 = vmatpush1.msra.mxu0 %v142
    %182 = vmatprep.subr.mxu0 0.0
    %183 = vmatpush1.msra.mxu0 %v141
    %184 = vmatprep.subr.mxu0 0.0
    %185 = vmatpush1.msra.mxu0 %v140
    %186 = vmatprep.subr.mxu0 0.0
    %187 = vmatpush1.msra.mxu0 %v139
    %188 = vmatprep.subr.mxu0 0.0
    %189 = vmatpush2.msra.mxu0 0.0
    %190 = vmatprep.subr.mxu0 0.0
    %191 = vmatpush2.msra.mxu0 0.0
    %192 = vmatprep.subr.mxu0 0.0
    %193 = vmatpush2.msra.mxu0 0.0
    %194 = vmatprep.subr.mxu0 0.0
    %195 = vmatpush2.msra.mxu0 0.0
    %196 = vmatprep.subr.mxu0 0.0
    %197 = vmatpush2.msra.mxu0 0.0
    %198 = vmatprep.subr.mxu0 0.0
    %199 = vmatpush2.msra.mxu0 0.0
    %200 = vmatprep.subr.mxu0 0.0
    %201 = vmatpush2.msra.mxu0 0.0
    %202 = vmatprep.subr.mxu0 0.0
    %203 = vmatpush2.msra.mxu0 0.0
    %204 = vmatprep.subr.mxu0 0.0
    %205 = vmatpush2.msra.mxu0 0.0
    %206 = vmatprep.subr.mxu0 0.0
    %207 = vmatpush2.msra.mxu0 0.0
    %208 = vmatprep.subr.mxu0 0.0
    %209 = vmatpush2.msra.mxu0 0.0
    %210 = vmatprep.subr.mxu0 0.0
    %211 = vmatpush2.msra.mxu0 0.0
    %212 = vmatprep.subr.mxu0 0.0
    %213 = vmatpush2.msra.mxu0 0.0
    %214 = vmatprep.subr.mxu0 0.0
    %215 = vmatpush2.msra.mxu0 0.0
    %216 = vmatprep.subr.mxu0 0.0
    %217 = vmatpush2.msra.mxu0 0.0
    %218 = vmatprep.subr.mxu0 0.0
    %219 = vmatpush2.msra.mxu0 0.0
    %220 = vmatprep.mubr.f32.mxu0 0.0
    %221 = vmatmul.mubr.f32.gmra.mxu0 %v151
    %v222 = vpop.f32.mrf.mxu0
    %v223 = vadd.f32 %v148, %v222
    %v224 = vpop.f32.mrf.mxu0
    %225 = vmatprep.mubr.f32.mxu0 0.0
    %226 = vmatmul.mubr.f32.gmra.mxu0 %v154
    %v227 = vpop.f32.mrf.mxu0
    %v228 = vadd.f32 %v148, %v227
    %v229 = vpop.f32.mrf.mxu0
    %230 = vdwg.mxu0
    %s231 = scalar_lea.vmem [#allocation6], 32
    %v232 = vld [vmem:[%s231] sm:$0xff]
    %v233 = vld [vmem:[%s231 + $0x8] sm:$0xff]
    %v234 = vld [vmem:[%s231 + $0x10] sm:$0xff]
    %v235 = vld [vmem:[%s231 + $0x18] sm:$0xff]
    %s236 = scalar_lea.vmem %s6, 1
    %v237 = vld [vmem:[%s236] sm:$0x1]
    %v239 = vlaneseq
    %v240 = vshrl.u32 %v239, 7
    %v241 = vsub.s32 0, %v240
    %v242 = vrot.slane %v237, %v241
    %244 = vmatprep.subr.mxu0 0.0
    %245 = vmatpush1.msra.mxu0 0.0
    %246 = vmatprep.subr.mxu0 0.0
    %247 = vmatpush1.msra.mxu0 0.0
    %248 = vmatprep.subr.mxu0 0.0
    %249 = vmatpush1.msra.mxu0 0.0
    %250 = vmatprep.subr.mxu0 0.0
    %251 = vmatpush1.msra.mxu0 0.0
    %252 = vmatprep.subr.mxu0 0.0
    %253 = vmatpush1.msra.mxu0 0.0
    %254 = vmatprep.subr.mxu0 0.0
    %255 = vmatpush1.msra.mxu0 0.0
    %256 = vmatprep.subr.mxu0 0.0
    %257 = vmatpush1.msra.mxu0 0.0
    %258 = vmatprep.subr.mxu0 0.0
    %259 = vmatpush1.msra.mxu0 0.0
    %260 = vmatprep.subr.mxu0 0.0
    %261 = vmatpush1.msra.mxu0 0.0
    %262 = vmatprep.subr.mxu0 0.0
    %263 = vmatpush1.msra.mxu0 0.0
    %264 = vmatprep.subr.mxu0 0.0
    %265 = vmatpush1.msra.mxu0 0.0
    %266 = vmatprep.subr.mxu0 0.0
    %267 = vmatpush1.msra.mxu0 0.0
    %268 = vmatprep.subr.mxu0 0.0
    %269 = vmatpush1.msra.mxu0 %v235
    %270 = vmatprep.subr.mxu0 0.0
    %271 = vmatpush1.msra.mxu0 %v234
    %272 = vmatprep.subr.mxu0 0.0
    %273 = vmatpush1.msra.mxu0 %v233
    %274 = vmatprep.subr.mxu0 0.0
    %275 = vmatpush1.msra.mxu0 %v232
    %276 = vmatprep.subr.mxu0 0.0
    %277 = vmatpush2.msra.mxu0 0.0
    %278 = vmatprep.subr.mxu0 0.0
    %279 = vmatpush2.msra.mxu0 0.0
    %280 = vmatprep.subr.mxu0 0.0
    %281 = vmatpush2.msra.mxu0 0.0
    %282 = vmatprep.subr.mxu0 0.0
    %283 = vmatpush2.msra.mxu0 0.0
    %284 = vmatprep.subr.mxu0 0.0
    %285 = vmatpush2.msra.mxu0 0.0
    %286 = vmatprep.subr.mxu0 0.0
    %287 = vmatpush2.msra.mxu0 0.0
    %288 = vmatprep.subr.mxu0 0.0
    %289 = vmatpush2.msra.mxu0 0.0
    %290 = vmatprep.subr.mxu0 0.0
    %291 = vmatpush2.msra.mxu0 0.0
    %292 = vmatprep.subr.mxu0 0.0
    %293 = vmatpush2.msra.mxu0 0.0
    %294 = vmatprep.subr.mxu0 0.0
    %295 = vmatpush2.msra.mxu0 0.0
    %296 = vmatprep.subr.mxu0 0.0
    %297 = vmatpush2.msra.mxu0 0.0
    %298 = vmatprep.subr.mxu0 0.0
    %299 = vmatpush2.msra.mxu0 0.0
    %300 = vmatprep.subr.mxu0 0.0
    %301 = vmatpush2.msra.mxu0 0.0
    %302 = vmatprep.subr.mxu0 0.0
    %303 = vmatpush2.msra.mxu0 0.0
    %304 = vmatprep.subr.mxu0 0.0
    %305 = vmatpush2.msra.mxu0 0.0
    %306 = vmatprep.subr.mxu0 0.0
    %307 = vmatpush2.msra.mxu0 0.0
    %308 = vmatprep.mubr.f32.mxu0 0.0
    %309 = vmatmul.mubr.f32.gmra.mxu0 %v151
    %v310 = vpop.f32.mrf.mxu0
    %v311 = vadd.f32 %v242, %v310
    %v312 = vpop.f32.mrf.mxu0
    %313 = vmatprep.mubr.f32.mxu0 0.0
    %314 = vmatmul.mubr.f32.gmra.mxu0 %v154
    %v315 = vpop.f32.mrf.mxu0
    %v316 = vadd.f32 %v242, %v315
    %v317 = vpop.f32.mrf.mxu0
    %318 = vdwg.mxu0
    %s319 = scalar_lea.vmem [#allocation6], 64
    %v320 = vld [vmem:[%s319] sm:$0xff]
    %v321 = vld [vmem:[%s319 + $0x8] sm:$0xff]
    %v322 = vld [vmem:[%s319 + $0x10] sm:$0xff]
    %v323 = vld [vmem:[%s319 + $0x18] sm:$0xff]
    %s324 = scalar_lea.vmem %s6, 2
    %v325 = vld [vmem:[%s324] sm:$0x1]
    %v327 = vlaneseq
    %v328 = vshrl.u32 %v327, 7
    %v329 = vsub.s32 0, %v328
    %v330 = vrot.slane %v325, %v329
    %332 = vmatprep.subr.mxu0 0.0
    %333 = vmatpush1.msra.mxu0 0.0
    %334 = vmatprep.subr.mxu0 0.0
    %335 = vmatpush1.msra.mxu0 0.0
    %336 = vmatprep.subr.mxu0 0.0
    %337 = vmatpush1.msra.mxu0 0.0
    %338 = vmatprep.subr.mxu0 0.0
    %339 = vmatpush1.msra.mxu0 0.0
    %340 = vmatprep.subr.mxu0 0.0
    %341 = vmatpush1.msra.mxu0 0.0
    %342 = vmatprep.subr.mxu0 0.0
    %343 = vmatpush1.msra.mxu0 0.0
    %344 = vmatprep.subr.mxu0 0.0
    %345 = vmatpush1.msra.mxu0 0.0
    %346 = vmatprep.subr.mxu0 0.0
    %347 = vmatpush1.msra.mxu0 0.0
    %348 = vmatprep.subr.mxu0 0.0
    %349 = vmatpush1.msra.mxu0 0.0
    %350 = vmatprep.subr.mxu0 0.0
    %351 = vmatpush1.msra.mxu0 0.0
    %352 = vmatprep.subr.mxu0 0.0
    %353 = vmatpush1.msra.mxu0 0.0
    %354 = vmatprep.subr.mxu0 0.0
    %355 = vmatpush1.msra.mxu0 0.0
    %356 = vmatprep.subr.mxu0 0.0
    %357 = vmatpush1.msra.mxu0 %v323
    %358 = vmatprep.subr.mxu0 0.0
    %359 = vmatpush1.msra.mxu0 %v322
    %360 = vmatprep.subr.mxu0 0.0
    %361 = vmatpush1.msra.mxu0 %v321
    %362 = vmatprep.subr.mxu0 0.0
    %363 = vmatpush1.msra.mxu0 %v320
    %364 = vmatprep.subr.mxu0 0.0
    %365 = vmatpush2.msra.mxu0 0.0
    %366 = vmatprep.subr.mxu0 0.0
    %367 = vmatpush2.msra.mxu0 0.0
    %368 = vmatprep.subr.mxu0 0.0
    %369 = vmatpush2.msra.mxu0 0.0
    %370 = vmatprep.subr.mxu0 0.0
    %371 = vmatpush2.msra.mxu0 0.0
    %372 = vmatprep.subr.mxu0 0.0
    %373 = vmatpush2.msra.mxu0 0.0
    %374 = vmatprep.subr.mxu0 0.0
    %375 = vmatpush2.msra.mxu0 0.0
    %376 = vmatprep.subr.mxu0 0.0
    %377 = vmatpush2.msra.mxu0 0.0
    %378 = vmatprep.subr.mxu0 0.0
    %379 = vmatpush2.msra.mxu0 0.0
    %380 = vmatprep.subr.mxu0 0.0
    %381 = vmatpush2.msra.mxu0 0.0
    %382 = vmatprep.subr.mxu0 0.0
    %383 = vmatpush2.msra.mxu0 0.0
    %384 = vmatprep.subr.mxu0 0.0
    %385 = vmatpush2.msra.mxu0 0.0
    %386 = vmatprep.subr.mxu0 0.0
    %387 = vmatpush2.msra.mxu0 0.0
    %388 = vmatprep.subr.mxu0 0.0
    %389 = vmatpush2.msra.mxu0 0.0
    %390 = vmatprep.subr.mxu0 0.0
    %391 = vmatpush2.msra.mxu0 0.0
    %392 = vmatprep.subr.mxu0 0.0
    %393 = vmatpush2.msra.mxu0 0.0
    %394 = vmatprep.subr.mxu0 0.0
    %395 = vmatpush2.msra.mxu0 0.0
    %396 = vmatprep.mubr.f32.mxu0 0.0
    %397 = vmatmul.mubr.f32.gmra.mxu0 %v151
    %v398 = vpop.f32.mrf.mxu0
    %v399 = vadd.f32 %v330, %v398
    %v400 = vpop.f32.mrf.mxu0
    %401 = vmatprep.mubr.f32.mxu0 0.0
    %402 = vmatmul.mubr.f32.gmra.mxu0 %v154
    %v403 = vpop.f32.mrf.mxu0
    %v404 = vadd.f32 %v330, %v403
    %v405 = vpop.f32.mrf.mxu0
    %406 = vdwg.mxu0
    %vm407 = vcmask 64512
    %v409 = vsel %vm407, %v223, 0
    %v412 = vsel %vm407, %v311, 0
    %414 = vmatprep.subr.mxu0 0.0
    %415 = vmatpush1.xpose.msra.mxu0 0.0
    %416 = vmatprep.subr.mxu0 0.0
    %417 = vmatpush1.xpose.msra.mxu0 0.0
    %418 = vmatprep.subr.mxu0 0.0
    %419 = vmatpush1.xpose.msra.mxu0 0.0
    %420 = vmatprep.subr.mxu0 0.0
    %421 = vmatpush1.xpose.msra.mxu0 0.0
    %422 = vmatprep.subr.mxu0 0.0
    %423 = vmatpush1.xpose.msra.mxu0 0.0
    %424 = vmatprep.subr.mxu0 0.0
    %425 = vmatpush1.xpose.msra.mxu0 0.0
    %426 = vmatprep.subr.mxu0 0.0
    %427 = vmatpush1.xpose.msra.mxu0 0.0
    %428 = vmatprep.subr.mxu0 0.0
    %429 = vmatpush1.xpose.msra.mxu0 0.0
    %430 = vmatprep.subr.mxu0 0.0
    %431 = vmatpush1.xpose.msra.mxu0 0.0
    %432 = vmatprep.subr.mxu0 0.0
    %433 = vmatpush1.xpose.msra.mxu0 0.0
    %434 = vmatprep.subr.mxu0 0.0
    %435 = vmatpush1.xpose.msra.mxu0 0.0
    %436 = vmatprep.subr.mxu0 0.0
    %437 = vmatpush1.xpose.msra.mxu0 0.0
    %438 = vmatprep.subr.mxu0 0.0
    %439 = vmatpush1.xpose.msra.mxu0 0.0
    %440 = vmatprep.subr.mxu0 0.0
    %441 = vmatpush1.xpose.msra.mxu0 0.0
    %442 = vmatprep.subr.mxu0 0.0
    %443 = vmatpush1.xpose.msra.mxu0 0.0
    %444 = vmatprep.subr.mxu0 0.0
    %445 = vmatpush1.xpose.msra.mxu0 %v412
    %446 = vmatprep.subr.mxu0 0.0
    %447 = vmatpush2.xpose.msra.mxu0 0.0
    %448 = vmatprep.subr.mxu0 0.0
    %449 = vmatpush2.xpose.msra.mxu0 0.0
    %450 = vmatprep.subr.mxu0 0.0
    %451 = vmatpush2.xpose.msra.mxu0 0.0
    %452 = vmatprep.subr.mxu0 0.0
    %453 = vmatpush2.xpose.msra.mxu0 0.0
    %454 = vmatprep.subr.mxu0 0.0
    %455 = vmatpush2.xpose.msra.mxu0 0.0
    %456 = vmatprep.subr.mxu0 0.0
    %457 = vmatpush2.xpose.msra.mxu0 0.0
    %458 = vmatprep.subr.mxu0 0.0
    %459 = vmatpush2.xpose.msra.mxu0 0.0
    %460 = vmatprep.subr.mxu0 0.0
    %461 = vmatpush2.xpose.msra.mxu0 0.0
    %462 = vmatprep.subr.mxu0 0.0
    %463 = vmatpush2.xpose.msra.mxu0 0.0
    %464 = vmatprep.subr.mxu0 0.0
    %465 = vmatpush2.xpose.msra.mxu0 0.0
    %466 = vmatprep.subr.mxu0 0.0
    %467 = vmatpush2.xpose.msra.mxu0 0.0
    %468 = vmatprep.subr.mxu0 0.0
    %469 = vmatpush2.xpose.msra.mxu0 0.0
    %470 = vmatprep.subr.mxu0 0.0
    %471 = vmatpush2.xpose.msra.mxu0 0.0
    %472 = vmatprep.subr.mxu0 0.0
    %473 = vmatpush2.xpose.msra.mxu0 0.0
    %474 = vmatprep.subr.mxu0 0.0
    %475 = vmatpush2.xpose.msra.mxu0 0.0
    %476 = vmatprep.subr.mxu0 0.0
    %477 = vmatpush2.xpose.msra.mxu0 0.0
    %478 = vmatprep.mubr.f32.mxu0 0.0
    %479 = vmatmul.mubr.f32.gmra.mxu0 %v409
    %v480 = vpop.f32.mrf.mxu0
    %v481 = vadd.f32 0.0, %v480
    %v482 = vpop.f32.mrf.mxu0
    %483 = vdwg.mxu0
    %484 = vrot.lane.b32.xlu0 %v223, 120
    %v485 = vpop.permute.xlu0 %484
    %486 = vrot.lane.b32.xlu0 %v311, 120
    %v487 = vpop.permute.xlu0 %486
    %v488 = vsel %vm407, %v485, 0
    %v490 = vsel %vm407, %v487, 0
    %492 = vmatprep.subr.mxu0 0.0
    %493 = vmatpush1.xpose.msra.mxu0 0.0
    %494 = vmatprep.subr.mxu0 0.0
    %495 = vmatpush1.xpose.msra.mxu0 0.0
    %496 = vmatprep.subr.mxu0 0.0
    %497 = vmatpush1.xpose.msra.mxu0 0.0
    %498 = vmatprep.subr.mxu0 0.0
    %499 = vmatpush1.xpose.msra.mxu0 0.0
    %500 = vmatprep.subr.mxu0 0.0
    %501 = vmatpush1.xpose.msra.mxu0 0.0
    %502 = vmatprep.subr.mxu0 0.0
    %503 = vmatpush1.xpose.msra.mxu0 0.0
    %504 = vmatprep.subr.mxu0 0.0
    %505 = vmatpush1.xpose.msra.mxu0 0.0
    %506 = vmatprep.subr.mxu0 0.0
    %507 = vmatpush1.xpose.msra.mxu0 0.0
    %508 = vmatprep.subr.mxu0 0.0
    %509 = vmatpush1.xpose.msra.mxu0 0.0
    %510 = vmatprep.subr.mxu0 0.0
    %511 = vmatpush1.xpose.msra.mxu0 0.0
    %512 = vmatprep.subr.mxu0 0.0
    %513 = vmatpush1.xpose.msra.mxu0 0.0
    %514 = vmatprep.subr.mxu0 0.0
    %515 = vmatpush1.xpose.msra.mxu0 0.0
    %516 = vmatprep.subr.mxu0 0.0
    %517 = vmatpush1.xpose.msra.mxu0 0.0
    %518 = vmatprep.subr.mxu0 0.0
    %519 = vmatpush1.xpose.msra.mxu0 0.0
    %520 = vmatprep.subr.mxu0 0.0
    %521 = vmatpush1.xpose.msra.mxu0 0.0
    %522 = vmatprep.subr.mxu0 0.0
    %523 = vmatpush1.xpose.msra.mxu0 %v490
    %524 = vmatprep.subr.mxu0 0.0
    %525 = vmatpush2.xpose.msra.mxu0 0.0
    %526 = vmatprep.subr.mxu0 0.0
    %527 = vmatpush2.xpose.msra.mxu0 0.0
    %528 = vmatprep.subr.mxu0 0.0
    %529 = vmatpush2.xpose.msra.mxu0 0.0
    %530 = vmatprep.subr.mxu0 0.0
    %531 = vmatpush2.xpose.msra.mxu0 0.0
    %532 = vmatprep.subr.mxu0 0.0
    %533 = vmatpush2.xpose.msra.mxu0 0.0
    %534 = vmatprep.subr.mxu0 0.0
    %535 = vmatpush2.xpose.msra.mxu0 0.0
    %536 = vmatprep.subr.mxu0 0.0
    %537 = vmatpush2.xpose.msra.mxu0 0.0
    %538 = vmatprep.subr.mxu0 0.0
    %539 = vmatpush2.xpose.msra.mxu0 0.0
    %540 = vmatprep.subr.mxu0 0.0
    %541 = vmatpush2.xpose.msra.mxu0 0.0
    %542 = vmatprep.subr.mxu0 0.0
    %543 = vmatpush2.xpose.msra.mxu0 0.0
    %544 = vmatprep.subr.mxu0 0.0
    %545 = vmatpush2.xpose.msra.mxu0 0.0
    %546 = vmatprep.subr.mxu0 0.0
    %547 = vmatpush2.xpose.msra.mxu0 0.0
    %548 = vmatprep.subr.mxu0 0.0
    %549 = vmatpush2.xpose.msra.mxu0 0.0
    %550 = vmatprep.subr.mxu0 0.0
    %551 = vmatpush2.xpose.msra.mxu0 0.0
    %552 = vmatprep.subr.mxu0 0.0
    %553 = vmatpush2.xpose.msra.mxu0 0.0
    %554 = vmatprep.subr.mxu0 0.0
    %555 = vmatpush2.xpose.msra.mxu0 0.0
    %556 = vmatprep.mubr.f32.mxu0 0.0
    %557 = vmatmul.mubr.f32.gmra.mxu0 %v488
    %v558 = vpop.f32.mrf.mxu0
    %v559 = vadd.f32 0.0, %v558
    %v560 = vpop.f32.mrf.mxu0
    %561 = vdwg.mxu0
    %562 = vrot.lane.b32.xlu0 %v223, 112
    %v563 = vpop.permute.xlu0 %562
    %564 = vrot.lane.b32.xlu0 %v311, 112
    %v565 = vpop.permute.xlu0 %564
    %v566 = vsel %vm407, %v563, 0
    %v568 = vsel %vm407, %v565, 0
    %570 = vmatprep.subr.mxu0 0.0
    %571 = vmatpush1.xpose.msra.mxu0 0.0
    %572 = vmatprep.subr.mxu0 0.0
    %573 = vmatpush1.xpose.msra.mxu0 0.0
    %574 = vmatprep.subr.mxu0 0.0
    %575 = vmatpush1.xpose.msra.mxu0 0.0
    %576 = vmatprep.subr.mxu0 0.0
    %577 = vmatpush1.xpose.msra.mxu0 0.0
    %578 = vmatprep.subr.mxu0 0.0
    %579 = vmatpush1.xpose.msra.mxu0 0.0
    %580 = vmatprep.subr.mxu0 0.0
    %581 = vmatpush1.xpose.msra.mxu0 0.0
    %582 = vmatprep.subr.mxu0 0.0
    %583 = vmatpush1.xpose.msra.mxu0 0.0
    %584 = vmatprep.subr.mxu0 0.0
    %585 = vmatpush1.xpose.msra.mxu0 0.0
    %586 = vmatprep.subr.mxu0 0.0
    %587 = vmatpush1.xpose.msra.mxu0 0.0
    %588 = vmatprep.subr.mxu0 0.0
    %589 = vmatpush1.xpose.msra.mxu0 0.0
    %590 = vmatprep.subr.mxu0 0.0
    %591 = vmatpush1.xpose.msra.mxu0 0.0
    %592 = vmatprep.subr.mxu0 0.0
    %593 = vmatpush1.xpose.msra.mxu0 0.0
    %594 = vmatprep.subr.mxu0 0.0
    %595 = vmatpush1.xpose.msra.mxu0 0.0
    %596 = vmatprep.subr.mxu0 0.0
    %597 = vmatpush1.xpose.msra.mxu0 0.0
    %598 = vmatprep.subr.mxu0 0.0
    %599 = vmatpush1.xpose.msra.mxu0 0.0
    %600 = vmatprep.subr.mxu0 0.0
    %601 = vmatpush1.xpose.msra.mxu0 %v568
    %602 = vmatprep.subr.mxu0 0.0
    %603 = vmatpush2.xpose.msra.mxu0 0.0
    %604 = vmatprep.subr.mxu0 0.0
    %605 = vmatpush2.xpose.msra.mxu0 0.0
    %606 = vmatprep.subr.mxu0 0.0
    %607 = vmatpush2.xpose.msra.mxu0 0.0
    %608 = vmatprep.subr.mxu0 0.0
    %609 = vmatpush2.xpose.msra.mxu0 0.0
    %610 = vmatprep.subr.mxu0 0.0
    %611 = vmatpush2.xpose.msra.mxu0 0.0
    %612 = vmatprep.subr.mxu0 0.0
    %613 = vmatpush2.xpose.msra.mxu0 0.0
    %614 = vmatprep.subr.mxu0 0.0
    %615 = vmatpush2.xpose.msra.mxu0 0.0
    %616 = vmatprep.subr.mxu0 0.0
    %617 = vmatpush2.xpose.msra.mxu0 0.0
    %618 = vmatprep.subr.mxu0 0.0
    %619 = vmatpush2.xpose.msra.mxu0 0.0
    %620 = vmatprep.subr.mxu0 0.0
    %621 = vmatpush2.xpose.msra.mxu0 0.0
    %622 = vmatprep.subr.mxu0 0.0
    %623 = vmatpush2.xpose.msra.mxu0 0.0
    %624 = vmatprep.subr.mxu0 0.0
    %625 = vmatpush2.xpose.msra.mxu0 0.0
    %626 = vmatprep.subr.mxu0 0.0
    %627 = vmatpush2.xpose.msra.mxu0 0.0
    %628 = vmatprep.subr.mxu0 0.0
    %629 = vmatpush2.xpose.msra.mxu0 0.0
    %630 = vmatprep.subr.mxu0 0.0
    %631 = vmatpush2.xpose.msra.mxu0 0.0
    %632 = vmatprep.subr.mxu0 0.0
    %633 = vmatpush2.xpose.msra.mxu0 0.0
    %634 = vmatprep.mubr.f32.mxu0 0.0
    %635 = vmatmul.mubr.f32.gmra.mxu0 %v566
    %v636 = vpop.f32.mrf.mxu0
    %v637 = vadd.f32 0.0, %v636
    %v638 = vpop.f32.mrf.mxu0
    %639 = vdwg.mxu0
    %640 = vrot.lane.b32.xlu0 %v223, 104
    %v641 = vpop.permute.xlu0 %640
    %642 = vrot.lane.b32.xlu0 %v311, 104
    %v643 = vpop.permute.xlu0 %642
    %v644 = vsel %vm407, %v641, 0
    %v646 = vsel %vm407, %v643, 0
    %648 = vmatprep.subr.mxu0 0.0
    %649 = vmatpush1.xpose.msra.mxu0 0.0
    %650 = vmatprep.subr.mxu0 0.0
    %651 = vmatpush1.xpose.msra.mxu0 0.0
    %652 = vmatprep.subr.mxu0 0.0
    %653 = vmatpush1.xpose.msra.mxu0 0.0
    %654 = vmatprep.subr.mxu0 0.0
    %655 = vmatpush1.xpose.msra.mxu0 0.0
    %656 = vmatprep.subr.mxu0 0.0
    %657 = vmatpush1.xpose.msra.mxu0 0.0
    %658 = vmatprep.subr.mxu0 0.0
    %659 = vmatpush1.xpose.msra.mxu0 0.0
    %660 = vmatprep.subr.mxu0 0.0
    %661 = vmatpush1.xpose.msra.mxu0 0.0
    %662 = vmatprep.subr.mxu0 0.0
    %663 = vmatpush1.xpose.msra.mxu0 0.0
    %664 = vmatprep.subr.mxu0 0.0
    %665 = vmatpush1.xpose.msra.mxu0 0.0
    %666 = vmatprep.subr.mxu0 0.0
    %667 = vmatpush1.xpose.msra.mxu0 0.0
    %668 = vmatprep.subr.mxu0 0.0
    %669 = vmatpush1.xpose.msra.mxu0 0.0
    %670 = vmatprep.subr.mxu0 0.0
    %671 = vmatpush1.xpose.msra.mxu0 0.0
    %672 = vmatprep.subr.mxu0 0.0
    %673 = vmatpush1.xpose.msra.mxu0 0.0
    %674 = vmatprep.subr.mxu0 0.0
    %675 = vmatpush1.xpose.msra.mxu0 0.0
    %676 = vmatprep.subr.mxu0 0.0
    %677 = vmatpush1.xpose.msra.mxu0 0.0
    %678 = vmatprep.subr.mxu0 0.0
    %679 = vmatpush1.xpose.msra.mxu0 %v646
    %680 = vmatprep.subr.mxu0 0.0
    %681 = vmatpush2.xpose.msra.mxu0 0.0
    %682 = vmatprep.subr.mxu0 0.0
    %683 = vmatpush2.xpose.msra.mxu0 0.0
    %684 = vmatprep.subr.mxu0 0.0
    %685 = vmatpush2.xpose.msra.mxu0 0.0
    %686 = vmatprep.subr.mxu0 0.0
    %687 = vmatpush2.xpose.msra.mxu0 0.0
    %688 = vmatprep.subr.mxu0 0.0
    %689 = vmatpush2.xpose.msra.mxu0 0.0
    %690 = vmatprep.subr.mxu0 0.0
    %691 = vmatpush2.xpose.msra.mxu0 0.0
    %692 = vmatprep.subr.mxu0 0.0
    %693 = vmatpush2.xpose.msra.mxu0 0.0
    %694 = vmatprep.subr.mxu0 0.0
    %695 = vmatpush2.xpose.msra.mxu0 0.0
    %696 = vmatprep.subr.mxu0 0.0
    %697 = vmatpush2.xpose.msra.mxu0 0.0
    %698 = vmatprep.subr.mxu0 0.0
    %699 = vmatpush2.xpose.msra.mxu0 0.0
    %700 = vmatprep.subr.mxu0 0.0
    %701 = vmatpush2.xpose.msra.mxu0 0.0
    %702 = vmatprep.subr.mxu0 0.0
    %703 = vmatpush2.xpose.msra.mxu0 0.0
    %704 = vmatprep.subr.mxu0 0.0
    %705 = vmatpush2.xpose.msra.mxu0 0.0
    %706 = vmatprep.subr.mxu0 0.0
    %707 = vmatpush2.xpose.msra.mxu0 0.0
    %708 = vmatprep.subr.mxu0 0.0
    %709 = vmatpush2.xpose.msra.mxu0 0.0
    %710 = vmatprep.subr.mxu0 0.0
    %711 = vmatpush2.xpose.msra.mxu0 0.0
    %712 = vmatprep.mubr.f32.mxu0 0.0
    %713 = vmatmul.mubr.f32.gmra.mxu0 %v644
    %v714 = vpop.f32.mrf.mxu0
    %v715 = vadd.f32 0.0, %v714
    %v716 = vpop.f32.mrf.mxu0
    %717 = vdwg.mxu0
    %v719 = vsel %vm407, %v228, 0
    %v722 = vsel %vm407, %v316, 0
    %724 = vmatprep.subr.mxu0 0.0
    %725 = vmatpush1.xpose.msra.mxu0 0.0
    %726 = vmatprep.subr.mxu0 0.0
    %727 = vmatpush1.xpose.msra.mxu0 0.0
    %728 = vmatprep.subr.mxu0 0.0
    %729 = vmatpush1.xpose.msra.mxu0 0.0
    %730 = vmatprep.subr.mxu0 0.0
    %731 = vmatpush1.xpose.msra.mxu0 0.0
    %732 = vmatprep.subr.mxu0 0.0
    %733 = vmatpush1.xpose.msra.mxu0 0.0
    %734 = vmatprep.subr.mxu0 0.0
    %735 = vmatpush1.xpose.msra.mxu0 0.0
    %736 = vmatprep.subr.mxu0 0.0
    %737 = vmatpush1.xpose.msra.mxu0 0.0
    %738 = vmatprep.subr.mxu0 0.0
    %739 = vmatpush1.xpose.msra.mxu0 0.0
    %740 = vmatprep.subr.mxu0 0.0
    %741 = vmatpush1.xpose.msra.mxu0 0.0
    %742 = vmatprep.subr.mxu0 0.0
    %743 = vmatpush1.xpose.msra.mxu0 0.0
    %744 = vmatprep.subr.mxu0 0.0
    %745 = vmatpush1.xpose.msra.mxu0 0.0
    %746 = vmatprep.subr.mxu0 0.0
    %747 = vmatpush1.xpose.msra.mxu0 0.0
    %748 = vmatprep.subr.mxu0 0.0
    %749 = vmatpush1.xpose.msra.mxu0 0.0
    %750 = vmatprep.subr.mxu0 0.0
    %751 = vmatpush1.xpose.msra.mxu0 0.0
    %752 = vmatprep.subr.mxu0 0.0
    %753 = vmatpush1.xpose.msra.mxu0 0.0
    %754 = vmatprep.subr.mxu0 0.0
    %755 = vmatpush1.xpose.msra.mxu0 %v722
    %756 = vmatprep.subr.mxu0 0.0
    %757 = vmatpush2.xpose.msra.mxu0 0.0
    %758 = vmatprep.subr.mxu0 0.0
    %759 = vmatpush2.xpose.msra.mxu0 0.0
    %760 = vmatprep.subr.mxu0 0.0
    %761 = vmatpush2.xpose.msra.mxu0 0.0
    %762 = vmatprep.subr.mxu0 0.0
    %763 = vmatpush2.xpose.msra.mxu0 0.0
    %764 = vmatprep.subr.mxu0 0.0
    %765 = vmatpush2.xpose.msra.mxu0 0.0
    %766 = vmatprep.subr.mxu0 0.0
    %767 = vmatpush2.xpose.msra.mxu0 0.0
    %768 = vmatprep.subr.mxu0 0.0
    %769 = vmatpush2.xpose.msra.mxu0 0.0
    %770 = vmatprep.subr.mxu0 0.0
    %771 = vmatpush2.xpose.msra.mxu0 0.0
    %772 = vmatprep.subr.mxu0 0.0
    %773 = vmatpush2.xpose.msra.mxu0 0.0
    %774 = vmatprep.subr.mxu0 0.0
    %775 = vmatpush2.xpose.msra.mxu0 0.0
    %776 = vmatprep.subr.mxu0 0.0
    %777 = vmatpush2.xpose.msra.mxu0 0.0
    %778 = vmatprep.subr.mxu0 0.0
    %779 = vmatpush2.xpose.msra.mxu0 0.0
    %780 = vmatprep.subr.mxu0 0.0
    %781 = vmatpush2.xpose.msra.mxu0 0.0
    %782 = vmatprep.subr.mxu0 0.0
    %783 = vmatpush2.xpose.msra.mxu0 0.0
    %784 = vmatprep.subr.mxu0 0.0
    %785 = vmatpush2.xpose.msra.mxu0 0.0
    %786 = vmatprep.subr.mxu0 0.0
    %787 = vmatpush2.xpose.msra.mxu0 0.0
    %788 = vmatprep.mubr.f32.mxu0 0.0
    %789 = vmatmul.mubr.f32.gmra.mxu0 %v719
    %v790 = vpop.f32.mrf.mxu0
    %v791 = vadd.f32 0.0, %v790
    %v792 = vpop.f32.mrf.mxu0
    %793 = vdwg.mxu0
    %794 = vrot.lane.b32.xlu0 %v228, 120
    %v795 = vpop.permute.xlu0 %794
    %796 = vrot.lane.b32.xlu0 %v316, 120
    %v797 = vpop.permute.xlu0 %796
    %v798 = vsel %vm407, %v795, 0
    %v800 = vsel %vm407, %v797, 0
    %802 = vmatprep.subr.mxu0 0.0
    %803 = vmatpush1.xpose.msra.mxu0 0.0
    %804 = vmatprep.subr.mxu0 0.0
    %805 = vmatpush1.xpose.msra.mxu0 0.0
    %806 = vmatprep.subr.mxu0 0.0
    %807 = vmatpush1.xpose.msra.mxu0 0.0
    %808 = vmatprep.subr.mxu0 0.0
    %809 = vmatpush1.xpose.msra.mxu0 0.0
    %810 = vmatprep.subr.mxu0 0.0
    %811 = vmatpush1.xpose.msra.mxu0 0.0
    %812 = vmatprep.subr.mxu0 0.0
    %813 = vmatpush1.xpose.msra.mxu0 0.0
    %814 = vmatprep.subr.mxu0 0.0
    %815 = vmatpush1.xpose.msra.mxu0 0.0
    %816 = vmatprep.subr.mxu0 0.0
    %817 = vmatpush1.xpose.msra.mxu0 0.0
    %818 = vmatprep.subr.mxu0 0.0
    %819 = vmatpush1.xpose.msra.mxu0 0.0
    %820 = vmatprep.subr.mxu0 0.0
    %821 = vmatpush1.xpose.msra.mxu0 0.0
    %822 = vmatprep.subr.mxu0 0.0
    %823 = vmatpush1.xpose.msra.mxu0 0.0
    %824 = vmatprep.subr.mxu0 0.0
    %825 = vmatpush1.xpose.msra.mxu0 0.0
    %826 = vmatprep.subr.mxu0 0.0
    %827 = vmatpush1.xpose.msra.mxu0 0.0
    %828 = vmatprep.subr.mxu0 0.0
    %829 = vmatpush1.xpose.msra.mxu0 0.0
    %830 = vmatprep.subr.mxu0 0.0
    %831 = vmatpush1.xpose.msra.mxu0 0.0
    %832 = vmatprep.subr.mxu0 0.0
    %833 = vmatpush1.xpose.msra.mxu0 %v800
    %834 = vmatprep.subr.mxu0 0.0
    %835 = vmatpush2.xpose.msra.mxu0 0.0
    %836 = vmatprep.subr.mxu0 0.0
    %837 = vmatpush2.xpose.msra.mxu0 0.0
    %838 = vmatprep.subr.mxu0 0.0
    %839 = vmatpush2.xpose.msra.mxu0 0.0
    %840 = vmatprep.subr.mxu0 0.0
    %841 = vmatpush2.xpose.msra.mxu0 0.0
    %842 = vmatprep.subr.mxu0 0.0
    %843 = vmatpush2.xpose.msra.mxu0 0.0
    %844 = vmatprep.subr.mxu0 0.0
    %845 = vmatpush2.xpose.msra.mxu0 0.0
    %846 = vmatprep.subr.mxu0 0.0
    %847 = vmatpush2.xpose.msra.mxu0 0.0
    %848 = vmatprep.subr.mxu0 0.0
    %849 = vmatpush2.xpose.msra.mxu0 0.0
    %850 = vmatprep.subr.mxu0 0.0
    %851 = vmatpush2.xpose.msra.mxu0 0.0
    %852 = vmatprep.subr.mxu0 0.0
    %853 = vmatpush2.xpose.msra.mxu0 0.0
    %854 = vmatprep.subr.mxu0 0.0
    %855 = vmatpush2.xpose.msra.mxu0 0.0
    %856 = vmatprep.subr.mxu0 0.0
    %857 = vmatpush2.xpose.msra.mxu0 0.0
    %858 = vmatprep.subr.mxu0 0.0
    %859 = vmatpush2.xpose.msra.mxu0 0.0
    %860 = vmatprep.subr.mxu0 0.0
    %861 = vmatpush2.xpose.msra.mxu0 0.0
    %862 = vmatprep.subr.mxu0 0.0
    %863 = vmatpush2.xpose.msra.mxu0 0.0
    %864 = vmatprep.subr.mxu0 0.0
    %865 = vmatpush2.xpose.msra.mxu0 0.0
    %866 = vmatprep.mubr.f32.mxu0 0.0
    %867 = vmatmul.mubr.f32.gmra.mxu0 %v798
    %v868 = vpop.f32.mrf.mxu0
    %v869 = vadd.f32 0.0, %v868
    %v870 = vpop.f32.mrf.mxu0
    %871 = vdwg.mxu0
    %872 = vrot.lane.b32.xlu0 %v228, 112
    %v873 = vpop.permute.xlu0 %872
    %874 = vrot.lane.b32.xlu0 %v316, 112
    %v875 = vpop.permute.xlu0 %874
    %v876 = vsel %vm407, %v873, 0
    %v878 = vsel %vm407, %v875, 0
    %880 = vmatprep.subr.mxu0 0.0
    %881 = vmatpush1.xpose.msra.mxu0 0.0
    %882 = vmatprep.subr.mxu0 0.0
    %883 = vmatpush1.xpose.msra.mxu0 0.0
    %884 = vmatprep.subr.mxu0 0.0
    %885 = vmatpush1.xpose.msra.mxu0 0.0
    %886 = vmatprep.subr.mxu0 0.0
    %887 = vmatpush1.xpose.msra.mxu0 0.0
    %888 = vmatprep.subr.mxu0 0.0
    %889 = vmatpush1.xpose.msra.mxu0 0.0
    %890 = vmatprep.subr.mxu0 0.0
    %891 = vmatpush1.xpose.msra.mxu0 0.0
    %892 = vmatprep.subr.mxu0 0.0
    %893 = vmatpush1.xpose.msra.mxu0 0.0
    %894 = vmatprep.subr.mxu0 0.0
    %895 = vmatpush1.xpose.msra.mxu0 0.0
    %896 = vmatprep.subr.mxu0 0.0
    %897 = vmatpush1.xpose.msra.mxu0 0.0
    %898 = vmatprep.subr.mxu0 0.0
    %899 = vmatpush1.xpose.msra.mxu0 0.0
    %900 = vmatprep.subr.mxu0 0.0
    %901 = vmatpush1.xpose.msra.mxu0 0.0
    %902 = vmatprep.subr.mxu0 0.0
    %903 = vmatpush1.xpose.msra.mxu0 0.0
    %904 = vmatprep.subr.mxu0 0.0
    %905 = vmatpush1.xpose.msra.mxu0 0.0
    %906 = vmatprep.subr.mxu0 0.0
    %907 = vmatpush1.xpose.msra.mxu0 0.0
    %908 = vmatprep.subr.mxu0 0.0
    %909 = vmatpush1.xpose.msra.mxu0 0.0
    %910 = vmatprep.subr.mxu0 0.0
    %911 = vmatpush1.xpose.msra.mxu0 %v878
    %912 = vmatprep.subr.mxu0 0.0
    %913 = vmatpush2.xpose.msra.mxu0 0.0
    %914 = vmatprep.subr.mxu0 0.0
    %915 = vmatpush2.xpose.msra.mxu0 0.0
    %916 = vmatprep.subr.mxu0 0.0
    %917 = vmatpush2.xpose.msra.mxu0 0.0
    %918 = vmatprep.subr.mxu0 0.0
    %919 = vmatpush2.xpose.msra.mxu0 0.0
    %920 = vmatprep.subr.mxu0 0.0
    %921 = vmatpush2.xpose.msra.mxu0 0.0
    %922 = vmatprep.subr.mxu0 0.0
    %923 = vmatpush2.xpose.msra.mxu0 0.0
    %924 = vmatprep.subr.mxu0 0.0
    %925 = vmatpush2.xpose.msra.mxu0 0.0
    %926 = vmatprep.subr.mxu0 0.0
    %927 = vmatpush2.xpose.msra.mxu0 0.0
    %928 = vmatprep.subr.mxu0 0.0
    %929 = vmatpush2.xpose.msra.mxu0 0.0
    %930 = vmatprep.subr.mxu0 0.0
    %931 = vmatpush2.xpose.msra.mxu0 0.0
    %932 = vmatprep.subr.mxu0 0.0
    %933 = vmatpush2.xpose.msra.mxu0 0.0
    %934 = vmatprep.subr.mxu0 0.0
    %935 = vmatpush2.xpose.msra.mxu0 0.0
    %936 = vmatprep.subr.mxu0 0.0
    %937 = vmatpush2.xpose.msra.mxu0 0.0
    %938 = vmatprep.subr.mxu0 0.0
    %939 = vmatpush2.xpose.msra.mxu0 0.0
    %940 = vmatprep.subr.mxu0 0.0
    %941 = vmatpush2.xpose.msra.mxu0 0.0
    %942 = vmatprep.subr.mxu0 0.0
    %943 = vmatpush2.xpose.msra.mxu0 0.0
    %944 = vmatprep.mubr.f32.mxu0 0.0
    %945 = vmatmul.mubr.f32.gmra.mxu0 %v876
    %v946 = vpop.f32.mrf.mxu0
    %v947 = vadd.f32 0.0, %v946
    %v948 = vpop.f32.mrf.mxu0
    %949 = vdwg.mxu0
    %950 = vrot.lane.b32.xlu0 %v228, 104
    %v951 = vpop.permute.xlu0 %950
    %952 = vrot.lane.b32.xlu0 %v316, 104
    %v953 = vpop.permute.xlu0 %952
    %v954 = vsel %vm407, %v951, 0
    %v956 = vsel %vm407, %v953, 0
    %958 = vmatprep.subr.mxu0 0.0
    %959 = vmatpush1.xpose.msra.mxu0 0.0
    %960 = vmatprep.subr.mxu0 0.0
    %961 = vmatpush1.xpose.msra.mxu0 0.0
    %962 = vmatprep.subr.mxu0 0.0
    %963 = vmatpush1.xpose.msra.mxu0 0.0
    %964 = vmatprep.subr.mxu0 0.0
    %965 = vmatpush1.xpose.msra.mxu0 0.0
    %966 = vmatprep.subr.mxu0 0.0
    %967 = vmatpush1.xpose.msra.mxu0 0.0
    %968 = vmatprep.subr.mxu0 0.0
    %969 = vmatpush1.xpose.msra.mxu0 0.0
    %970 = vmatprep.subr.mxu0 0.0
    %971 = vmatpush1.xpose.msra.mxu0 0.0
    %972 = vmatprep.subr.mxu0 0.0
    %973 = vmatpush1.xpose.msra.mxu0 0.0
    %974 = vmatprep.subr.mxu0 0.0
    %975 = vmatpush1.xpose.msra.mxu0 0.0
    %976 = vmatprep.subr.mxu0 0.0
    %977 = vmatpush1.xpose.msra.mxu0 0.0
    %978 = vmatprep.subr.mxu0 0.0
    %979 = vmatpush1.xpose.msra.mxu0 0.0
    %980 = vmatprep.subr.mxu0 0.0
    %981 = vmatpush1.xpose.msra.mxu0 0.0
    %982 = vmatprep.subr.mxu0 0.0
    %983 = vmatpush1.xpose.msra.mxu0 0.0
    %984 = vmatprep.subr.mxu0 0.0
    %985 = vmatpush1.xpose.msra.mxu0 0.0
    %986 = vmatprep.subr.mxu0 0.0
    %987 = vmatpush1.xpose.msra.mxu0 0.0
    %988 = vmatprep.subr.mxu0 0.0
    %989 = vmatpush1.xpose.msra.mxu0 %v956
    %990 = vmatprep.subr.mxu0 0.0
    %991 = vmatpush2.xpose.msra.mxu0 0.0
    %992 = vmatprep.subr.mxu0 0.0
    %993 = vmatpush2.xpose.msra.mxu0 0.0
    %994 = vmatprep.subr.mxu0 0.0
    %995 = vmatpush2.xpose.msra.mxu0 0.0
    %996 = vmatprep.subr.mxu0 0.0
    %997 = vmatpush2.xpose.msra.mxu0 0.0
    %998 = vmatprep.subr.mxu0 0.0
    %999 = vmatpush2.xpose.msra.mxu0 0.0
    %1000 = vmatprep.subr.mxu0 0.0
    %1001 = vmatpush2.xpose.msra.mxu0 0.0
    %1002 = vmatprep.subr.mxu0 0.0
    %1003 = vmatpush2.xpose.msra.mxu0 0.0
    %1004 = vmatprep.subr.mxu0 0.0
    %1005 = vmatpush2.xpose.msra.mxu0 0.0
    %1006 = vmatprep.subr.mxu0 0.0
    %1007 = vmatpush2.xpose.msra.mxu0 0.0
    %1008 = vmatprep.subr.mxu0 0.0
    %1009 = vmatpush2.xpose.msra.mxu0 0.0
    %1010 = vmatprep.subr.mxu0 0.0
    %1011 = vmatpush2.xpose.msra.mxu0 0.0
    %1012 = vmatprep.subr.mxu0 0.0
    %1013 = vmatpush2.xpose.msra.mxu0 0.0
    %1014 = vmatprep.subr.mxu0 0.0
    %1015 = vmatpush2.xpose.msra.mxu0 0.0
    %1016 = vmatprep.subr.mxu0 0.0
    %1017 = vmatpush2.xpose.msra.mxu0 0.0
    %1018 = vmatprep.subr.mxu0 0.0
    %1019 = vmatpush2.xpose.msra.mxu0 0.0
    %1020 = vmatprep.subr.mxu0 0.0
    %1021 = vmatpush2.xpose.msra.mxu0 0.0
    %1022 = vmatprep.mubr.f32.mxu0 0.0
    %1023 = vmatmul.mubr.f32.gmra.mxu0 %v954
    %v1024 = vpop.f32.mrf.mxu0
    %v1025 = vadd.f32 0.0, %v1024
    %v1026 = vpop.f32.mrf.mxu0
    %1027 = vdwg.mxu0
    %v1028 = vmul.f32 %v481, 0.35355338
    %v1029 = vmul.f32 %v559, 0.35355338
    %v1030 = vmul.f32 %v637, 0.35355338
    %v1031 = vmul.f32 %v715, 0.35355338
    %v1032 = vmul.f32 %v791, 0.35355338
    %v1033 = vmul.f32 %v869, 0.35355338
    %v1034 = vmul.f32 %v947, 0.35355338
    %v1035 = vmul.f32 %v1025, 0.35355338
    %v1036 = vadd.f32 %v1028, %v69
    %v1037 = vadd.f32 %v1029, %v70
    %v1038 = vadd.f32 %v1030, %v71
    %v1039 = vadd.f32 %v1031, %v72
    %v1040 = vadd.f32 %v1032, %v73
    %v1041 = vadd.f32 %v1033, %v74
    %v1042 = vadd.f32 %v1034, %v75
    %v1043 = vadd.f32 %v1035, %v76
    %v1044 = vsel %vm407, %v1036, -inf
    %1045 = vmax.xlane.f32.xlu0 %v1044
    %v1046 = vpop.xlane.xlu0 %1045
    %v1047 = vsel %vm407, %v1037, -inf
    %1048 = vmax.xlane.f32.xlu0 %v1047
    %v1049 = vpop.xlane.xlu0 %1048
    %v1050 = vsel %vm407, %v1038, -inf
    %1051 = vmax.xlane.f32.xlu0 %v1050
    %v1052 = vpop.xlane.xlu0 %1051
    %v1053 = vsel %vm407, %v1039, -inf
    %1054 = vmax.xlane.f32.xlu0 %v1053
    %v1055 = vpop.xlane.xlu0 %1054
    %v1056 = vsel %vm407, %v1040, -inf
    %1057 = vmax.xlane.f32.xlu0 %v1056
    %v1058 = vpop.xlane.xlu0 %1057
    %v1059 = vsel %vm407, %v1041, -inf
    %1060 = vmax.xlane.f32.xlu0 %v1059
    %v1061 = vpop.xlane.xlu0 %1060
    %v1062 = vsel %vm407, %v1042, -inf
    %1063 = vmax.xlane.f32.xlu0 %v1062
    %v1064 = vpop.xlane.xlu0 %1063
    %v1065 = vsel %vm407, %v1043, -inf
    %1066 = vmax.xlane.f32.xlu0 %v1065
    %v1067 = vpop.xlane.xlu0 %1066
    %v1068 = vsub.f32 %v1036, %v1046
    %v1069 = vsub.f32 %v1037, %v1049
    %v1070 = vsub.f32 %v1038, %v1052
    %v1071 = vsub.f32 %v1039, %v1055
    %v1072 = vsub.f32 %v1040, %v1058
    %v1073 = vsub.f32 %v1041, %v1061
    %v1074 = vsub.f32 %v1042, %v1064
    %v1075 = vsub.f32 %v1043, %v1067
    %v1076 = vmul.f32 %v1068, 1.442695
    %v1077 = vpow.pop %v1076
    %v1078 = vmul.f32 %v1069, 1.442695
    %v1079 = vpow.pop %v1078
    %v1080 = vmul.f32 %v1070, 1.442695
    %v1081 = vpow.pop %v1080
    %v1082 = vmul.f32 %v1071, 1.442695
    %v1083 = vpow.pop %v1082
    %v1084 = vmul.f32 %v1072, 1.442695
    %v1085 = vpow.pop %v1084
    %v1086 = vmul.f32 %v1073, 1.442695
    %v1087 = vpow.pop %v1086
    %v1088 = vmul.f32 %v1074, 1.442695
    %v1089 = vpow.pop %v1088
    %v1090 = vmul.f32 %v1075, 1.442695
    %v1091 = vpow.pop %v1090
    %v1092 = vsel %vm407, %v1077, 0.0
    %1093 = vadd.xlane.f32.xlu0 %v1092
    %v1094 = vpop.xlane.xlu0 %1093
    %v1095 = vsel %vm407, %v1079, 0.0
    %1096 = vadd.xlane.f32.xlu0 %v1095
    %v1097 = vpop.xlane.xlu0 %1096
    %v1098 = vsel %vm407, %v1081, 0.0
    %1099 = vadd.xlane.f32.xlu0 %v1098
    %v1100 = vpop.xlane.xlu0 %1099
    %v1101 = vsel %vm407, %v1083, 0.0
    %1102 = vadd.xlane.f32.xlu0 %v1101
    %v1103 = vpop.xlane.xlu0 %1102
    %v1104 = vsel %vm407, %v1085, 0.0
    %1105 = vadd.xlane.f32.xlu0 %v1104
    %v1106 = vpop.xlane.xlu0 %1105
    %v1107 = vsel %vm407, %v1087, 0.0
    %1108 = vadd.xlane.f32.xlu0 %v1107
    %v1109 = vpop.xlane.xlu0 %1108
    %v1110 = vsel %vm407, %v1089, 0.0
    %1111 = vadd.xlane.f32.xlu0 %v1110
    %v1112 = vpop.xlane.xlu0 %1111
    %v1113 = vsel %vm407, %v1091, 0.0
    %1114 = vadd.xlane.f32.xlu0 %v1113
    %v1115 = vpop.xlane.xlu0 %1114
    %v1116 = vrcp.pop %v1094
    %v1117 = vmul.f32 %v1077, %v1116
    %v1118 = vrcp.pop %v1097
    %v1119 = vmul.f32 %v1079, %v1118
    %v1120 = vrcp.pop %v1100
    %v1121 = vmul.f32 %v1081, %v1120
    %v1122 = vrcp.pop %v1103
    %v1123 = vmul.f32 %v1083, %v1122
    %v1124 = vrcp.pop %v1106
    %v1125 = vmul.f32 %v1085, %v1124
    %v1126 = vrcp.pop %v1109
    %v1127 = vmul.f32 %v1087, %v1126
    %v1128 = vrcp.pop %v1112
    %v1129 = vmul.f32 %v1089, %v1128
    %v1130 = vrcp.pop %v1115
    %v1131 = vmul.f32 %v1091, %v1130
    %v1133 = vsel %vm407, %v1117, 0
    %1135 = vmatprep.subr.mxu0 0.0
    %1136 = vmatpush1.msra.mxu0 0.0
    %1137 = vmatprep.subr.mxu0 0.0
    %1138 = vmatpush1.msra.mxu0 0.0
    %1139 = vmatprep.subr.mxu0 0.0
    %1140 = vmatpush1.msra.mxu0 0.0
    %1141 = vmatprep.subr.mxu0 0.0
    %1142 = vmatpush1.msra.mxu0 0.0
    %1143 = vmatprep.subr.mxu0 0.0
    %1144 = vmatpush1.msra.mxu0 0.0
    %1145 = vmatprep.subr.mxu0 0.0
    %1146 = vmatpush1.msra.mxu0 0.0
    %1147 = vmatprep.subr.mxu0 0.0
    %1148 = vmatpush1.msra.mxu0 0.0
    %1149 = vmatprep.subr.mxu0 0.0
    %1150 = vmatpush1.msra.mxu0 0.0
    %1151 = vmatprep.subr.mxu0 0.0
    %1152 = vmatpush1.msra.mxu0 0.0
    %1153 = vmatprep.subr.mxu0 0.0
    %1154 = vmatpush1.msra.mxu0 0.0
    %1155 = vmatprep.subr.mxu0 0.0
    %1156 = vmatpush1.msra.mxu0 0.0
    %1157 = vmatprep.subr.mxu0 0.0
    %1158 = vmatpush1.msra.mxu0 0.0
    %1159 = vmatprep.subr.mxu0 0.0
    %1160 = vmatpush1.msra.mxu0 0.0
    %1161 = vmatprep.subr.mxu0 0.0
    %1162 = vmatpush1.msra.mxu0 0.0
    %1163 = vmatprep.subr.mxu0 0.0
    %1164 = vmatpush1.msra.mxu0 0.0
    %1165 = vmatprep.subr.mxu0 0.0
    %1166 = vmatpush1.msra.mxu0 %v399
    %1167 = vmatprep.subr.mxu0 0.0
    %1168 = vmatpush2.msra.mxu0 0.0
    %1169 = vmatprep.subr.mxu0 0.0
    %1170 = vmatpush2.msra.mxu0 0.0
    %1171 = vmatprep.subr.mxu0 0.0
    %1172 = vmatpush2.msra.mxu0 0.0
    %1173 = vmatprep.subr.mxu0 0.0
    %1174 = vmatpush2.msra.mxu0 0.0
    %1175 = vmatprep.subr.mxu0 0.0
    %1176 = vmatpush2.msra.mxu0 0.0
    %1177 = vmatprep.subr.mxu0 0.0
    %1178 = vmatpush2.msra.mxu0 0.0
    %1179 = vmatprep.subr.mxu0 0.0
    %1180 = vmatpush2.msra.mxu0 0.0
    %1181 = vmatprep.subr.mxu0 0.0
    %1182 = vmatpush2.msra.mxu0 0.0
    %1183 = vmatprep.subr.mxu0 0.0
    %1184 = vmatpush2.msra.mxu0 0.0
    %1185 = vmatprep.subr.mxu0 0.0
    %1186 = vmatpush2.msra.mxu0 0.0
    %1187 = vmatprep.subr.mxu0 0.0
    %1188 = vmatpush2.msra.mxu0 0.0
    %1189 = vmatprep.subr.mxu0 0.0
    %1190 = vmatpush2.msra.mxu0 0.0
    %1191 = vmatprep.subr.mxu0 0.0
    %1192 = vmatpush2.msra.mxu0 0.0
    %1193 = vmatprep.subr.mxu0 0.0
    %1194 = vmatpush2.msra.mxu0 0.0
    %1195 = vmatprep.subr.mxu0 0.0
    %1196 = vmatpush2.msra.mxu0 0.0
    %1197 = vmatprep.subr.mxu0 0.0
    %1198 = vmatpush2.msra.mxu0 0.0
    %1199 = vmatprep.mubr.f32.mxu0 0.0
    %1200 = vmatmul.mubr.f32.gmra.mxu0 %v1133
    %v1201 = vpop.f32.mrf.mxu0
    %v1202 = vadd.f32 0.0, %v1201
    %v1203 = vpop.f32.mrf.mxu0
    %1204 = vdwg.mxu0
    %1206 = vrot.lane.b32.xlu0 %v399, 120
    %v1207 = vpop.permute.xlu0 %1206
    %v1210 = vsel %vm407, %v1119, 0
    %1212 = vmatprep.subr.mxu0 0.0
    %1213 = vmatpush1.msra.mxu0 0.0
    %1214 = vmatprep.subr.mxu0 0.0
    %1215 = vmatpush1.msra.mxu0 0.0
    %1216 = vmatprep.subr.mxu0 0.0
    %1217 = vmatpush1.msra.mxu0 0.0
    %1218 = vmatprep.subr.mxu0 0.0
    %1219 = vmatpush1.msra.mxu0 0.0
    %1220 = vmatprep.subr.mxu0 0.0
    %1221 = vmatpush1.msra.mxu0 0.0
    %1222 = vmatprep.subr.mxu0 0.0
    %1223 = vmatpush1.msra.mxu0 0.0
    %1224 = vmatprep.subr.mxu0 0.0
    %1225 = vmatpush1.msra.mxu0 0.0
    %1226 = vmatprep.subr.mxu0 0.0
    %1227 = vmatpush1.msra.mxu0 0.0
    %1228 = vmatprep.subr.mxu0 0.0
    %1229 = vmatpush1.msra.mxu0 0.0
    %1230 = vmatprep.subr.mxu0 0.0
    %1231 = vmatpush1.msra.mxu0 0.0
    %1232 = vmatprep.subr.mxu0 0.0
    %1233 = vmatpush1.msra.mxu0 0.0
    %1234 = vmatprep.subr.mxu0 0.0
    %1235 = vmatpush1.msra.mxu0 0.0
    %1236 = vmatprep.subr.mxu0 0.0
    %1237 = vmatpush1.msra.mxu0 0.0
    %1238 = vmatprep.subr.mxu0 0.0
    %1239 = vmatpush1.msra.mxu0 0.0
    %1240 = vmatprep.subr.mxu0 0.0
    %1241 = vmatpush1.msra.mxu0 0.0
    %1242 = vmatprep.subr.mxu0 0.0
    %1243 = vmatpush1.msra.mxu0 %v1207
    %1244 = vmatprep.subr.mxu0 0.0
    %1245 = vmatpush2.msra.mxu0 0.0
    %1246 = vmatprep.subr.mxu0 0.0
    %1247 = vmatpush2.msra.mxu0 0.0
    %1248 = vmatprep.subr.mxu0 0.0
    %1249 = vmatpush2.msra.mxu0 0.0
    %1250 = vmatprep.subr.mxu0 0.0
    %1251 = vmatpush2.msra.mxu0 0.0
    %1252 = vmatprep.subr.mxu0 0.0
    %1253 = vmatpush2.msra.mxu0 0.0
    %1254 = vmatprep.subr.mxu0 0.0
    %1255 = vmatpush2.msra.mxu0 0.0
    %1256 = vmatprep.subr.mxu0 0.0
    %1257 = vmatpush2.msra.mxu0 0.0
    %1258 = vmatprep.subr.mxu0 0.0
    %1259 = vmatpush2.msra.mxu0 0.0
    %1260 = vmatprep.subr.mxu0 0.0
    %1261 = vmatpush2.msra.mxu0 0.0
    %1262 = vmatprep.subr.mxu0 0.0
    %1263 = vmatpush2.msra.mxu0 0.0
    %1264 = vmatprep.subr.mxu0 0.0
    %1265 = vmatpush2.msra.mxu0 0.0
    %1266 = vmatprep.subr.mxu0 0.0
    %1267 = vmatpush2.msra.mxu0 0.0
    %1268 = vmatprep.subr.mxu0 0.0
    %1269 = vmatpush2.msra.mxu0 0.0
    %1270 = vmatprep.subr.mxu0 0.0
    %1271 = vmatpush2.msra.mxu0 0.0
    %1272 = vmatprep.subr.mxu0 0.0
    %1273 = vmatpush2.msra.mxu0 0.0
    %1274 = vmatprep.subr.mxu0 0.0
    %1275 = vmatpush2.msra.mxu0 0.0
    %1276 = vmatprep.mubr.f32.mxu0 0.0
    %1277 = vmatmul.mubr.f32.gmra.mxu0 %v1210
    %v1278 = vpop.f32.mrf.mxu0
    %v1279 = vadd.f32 0.0, %v1278
    %v1280 = vpop.f32.mrf.mxu0
    %1281 = vdwg.mxu0
    %1282 = vrot.lane.b32.xlu0 %v399, 112
    %v1283 = vpop.permute.xlu0 %1282
    %v1286 = vsel %vm407, %v1121, 0
    %1288 = vmatprep.subr.mxu0 0.0
    %1289 = vmatpush1.msra.mxu0 0.0
    %1290 = vmatprep.subr.mxu0 0.0
    %1291 = vmatpush1.msra.mxu0 0.0
    %1292 = vmatprep.subr.mxu0 0.0
    %1293 = vmatpush1.msra.mxu0 0.0
    %1294 = vmatprep.subr.mxu0 0.0
    %1295 = vmatpush1.msra.mxu0 0.0
    %1296 = vmatprep.subr.mxu0 0.0
    %1297 = vmatpush1.msra.mxu0 0.0
    %1298 = vmatprep.subr.mxu0 0.0
    %1299 = vmatpush1.msra.mxu0 0.0
    %1300 = vmatprep.subr.mxu0 0.0
    %1301 = vmatpush1.msra.mxu0 0.0
    %1302 = vmatprep.subr.mxu0 0.0
    %1303 = vmatpush1.msra.mxu0 0.0
    %1304 = vmatprep.subr.mxu0 0.0
    %1305 = vmatpush1.msra.mxu0 0.0
    %1306 = vmatprep.subr.mxu0 0.0
    %1307 = vmatpush1.msra.mxu0 0.0
    %1308 = vmatprep.subr.mxu0 0.0
    %1309 = vmatpush1.msra.mxu0 0.0
    %1310 = vmatprep.subr.mxu0 0.0
    %1311 = vmatpush1.msra.mxu0 0.0
    %1312 = vmatprep.subr.mxu0 0.0
    %1313 = vmatpush1.msra.mxu0 0.0
    %1314 = vmatprep.subr.mxu0 0.0
    %1315 = vmatpush1.msra.mxu0 0.0
    %1316 = vmatprep.subr.mxu0 0.0
    %1317 = vmatpush1.msra.mxu0 0.0
    %1318 = vmatprep.subr.mxu0 0.0
    %1319 = vmatpush1.msra.mxu0 %v1283
    %1320 = vmatprep.subr.mxu0 0.0
    %1321 = vmatpush2.msra.mxu0 0.0
    %1322 = vmatprep.subr.mxu0 0.0
    %1323 = vmatpush2.msra.mxu0 0.0
    %1324 = vmatprep.subr.mxu0 0.0
    %1325 = vmatpush2.msra.mxu0 0.0
    %1326 = vmatprep.subr.mxu0 0.0
    %1327 = vmatpush2.msra.mxu0 0.0
    %1328 = vmatprep.subr.mxu0 0.0
    %1329 = vmatpush2.msra.mxu0 0.0
    %1330 = vmatprep.subr.mxu0 0.0
    %1331 = vmatpush2.msra.mxu0 0.0
    %1332 = vmatprep.subr.mxu0 0.0
    %1333 = vmatpush2.msra.mxu0 0.0
    %1334 = vmatprep.subr.mxu0 0.0
    %1335 = vmatpush2.msra.mxu0 0.0
    %1336 = vmatprep.subr.mxu0 0.0
    %1337 = vmatpush2.msra.mxu0 0.0
    %1338 = vmatprep.subr.mxu0 0.0
    %1339 = vmatpush2.msra.mxu0 0.0
    %1340 = vmatprep.subr.mxu0 0.0
    %1341 = vmatpush2.msra.mxu0 0.0
    %1342 = vmatprep.subr.mxu0 0.0
    %1343 = vmatpush2.msra.mxu0 0.0
    %1344 = vmatprep.subr.mxu0 0.0
    %1345 = vmatpush2.msra.mxu0 0.0
    %1346 = vmatprep.subr.mxu0 0.0
    %1347 = vmatpush2.msra.mxu0 0.0
    %1348 = vmatprep.subr.mxu0 0.0
    %1349 = vmatpush2.msra.mxu0 0.0
    %1350 = vmatprep.subr.mxu0 0.0
    %1351 = vmatpush2.msra.mxu0 0.0
    %1352 = vmatprep.mubr.f32.mxu0 0.0
    %1353 = vmatmul.mubr.f32.gmra.mxu0 %v1286
    %v1354 = vpop.f32.mrf.mxu0
    %v1355 = vadd.f32 0.0, %v1354
    %v1356 = vpop.f32.mrf.mxu0
    %1357 = vdwg.mxu0
    %1358 = vrot.lane.b32.xlu0 %v399, 104
    %v1359 = vpop.permute.xlu0 %1358
    %v1362 = vsel %vm407, %v1123, 0
    %1364 = vmatprep.subr.mxu0 0.0
    %1365 = vmatpush1.msra.mxu0 0.0
    %1366 = vmatprep.subr.mxu0 0.0
    %1367 = vmatpush1.msra.mxu0 0.0
    %1368 = vmatprep.subr.mxu0 0.0
    %1369 = vmatpush1.msra.mxu0 0.0
    %1370 = vmatprep.subr.mxu0 0.0
    %1371 = vmatpush1.msra.mxu0 0.0
    %1372 = vmatprep.subr.mxu0 0.0
    %1373 = vmatpush1.msra.mxu0 0.0
    %1374 = vmatprep.subr.mxu0 0.0
    %1375 = vmatpush1.msra.mxu0 0.0
    %1376 = vmatprep.subr.mxu0 0.0
    %1377 = vmatpush1.msra.mxu0 0.0
    %1378 = vmatprep.subr.mxu0 0.0
    %1379 = vmatpush1.msra.mxu0 0.0
    %1380 = vmatprep.subr.mxu0 0.0
    %1381 = vmatpush1.msra.mxu0 0.0
    %1382 = vmatprep.subr.mxu0 0.0
    %1383 = vmatpush1.msra.mxu0 0.0
    %1384 = vmatprep.subr.mxu0 0.0
    %1385 = vmatpush1.msra.mxu0 0.0
    %1386 = vmatprep.subr.mxu0 0.0
    %1387 = vmatpush1.msra.mxu0 0.0
    %1388 = vmatprep.subr.mxu0 0.0
    %1389 = vmatpush1.msra.mxu0 0.0
    %1390 = vmatprep.subr.mxu0 0.0
    %1391 = vmatpush1.msra.mxu0 0.0
    %1392 = vmatprep.subr.mxu0 0.0
    %1393 = vmatpush1.msra.mxu0 0.0
    %1394 = vmatprep.subr.mxu0 0.0
    %1395 = vmatpush1.msra.mxu0 %v1359
    %1396 = vmatprep.subr.mxu0 0.0
    %1397 = vmatpush2.msra.mxu0 0.0
    %1398 = vmatprep.subr.mxu0 0.0
    %1399 = vmatpush2.msra.mxu0 0.0
    %1400 = vmatprep.subr.mxu0 0.0
    %1401 = vmatpush2.msra.mxu0 0.0
    %1402 = vmatprep.subr.mxu0 0.0
    %1403 = vmatpush2.msra.mxu0 0.0
    %1404 = vmatprep.subr.mxu0 0.0
    %1405 = vmatpush2.msra.mxu0 0.0
    %1406 = vmatprep.subr.mxu0 0.0
    %1407 = vmatpush2.msra.mxu0 0.0
    %1408 = vmatprep.subr.mxu0 0.0
    %1409 = vmatpush2.msra.mxu0 0.0
    %1410 = vmatprep.subr.mxu0 0.0
    %1411 = vmatpush2.msra.mxu0 0.0
    %1412 = vmatprep.subr.mxu0 0.0
    %1413 = vmatpush2.msra.mxu0 0.0
    %1414 = vmatprep.subr.mxu0 0.0
    %1415 = vmatpush2.msra.mxu0 0.0
    %1416 = vmatprep.subr.mxu0 0.0
    %1417 = vmatpush2.msra.mxu0 0.0
    %1418 = vmatprep.subr.mxu0 0.0
    %1419 = vmatpush2.msra.mxu0 0.0
    %1420 = vmatprep.subr.mxu0 0.0
    %1421 = vmatpush2.msra.mxu0 0.0
    %1422 = vmatprep.subr.mxu0 0.0
    %1423 = vmatpush2.msra.mxu0 0.0
    %1424 = vmatprep.subr.mxu0 0.0
    %1425 = vmatpush2.msra.mxu0 0.0
    %1426 = vmatprep.subr.mxu0 0.0
    %1427 = vmatpush2.msra.mxu0 0.0
    %1428 = vmatprep.mubr.f32.mxu0 0.0
    %1429 = vmatmul.mubr.f32.gmra.mxu0 %v1362
    %v1430 = vpop.f32.mrf.mxu0
    %v1431 = vadd.f32 0.0, %v1430
    %v1432 = vpop.f32.mrf.mxu0
    %1433 = vdwg.mxu0
    %1435 = vrot.lane.b32.xlu0 %v1279, 8
    %v1436 = vpop.permute.xlu0 %1435
    %1439 = vrot.lane.b32.xlu0 %v1355, 16
    %v1440 = vpop.permute.xlu0 %1439
    %1443 = vrot.lane.b32.xlu0 %v1431, 24
    %v1444 = vpop.permute.xlu0 %1443
    %v1446 = vsel %vm407, %v1202, %v1436
    %vm1447 = vcmask 130048
    %v1448 = vsel %vm1447, %v1446, %v1440
    %vm1449 = vcmask 195584
    %v1450 = vsel %vm1449, %v1448, %v1444
    %v1452 = vsel %vm407, %v1125, 0
    %1454 = vmatprep.subr.mxu0 0.0
    %1455 = vmatpush1.msra.mxu0 0.0
    %1456 = vmatprep.subr.mxu0 0.0
    %1457 = vmatpush1.msra.mxu0 0.0
    %1458 = vmatprep.subr.mxu0 0.0
    %1459 = vmatpush1.msra.mxu0 0.0
    %1460 = vmatprep.subr.mxu0 0.0
    %1461 = vmatpush1.msra.mxu0 0.0
    %1462 = vmatprep.subr.mxu0 0.0
    %1463 = vmatpush1.msra.mxu0 0.0
    %1464 = vmatprep.subr.mxu0 0.0
    %1465 = vmatpush1.msra.mxu0 0.0
    %1466 = vmatprep.subr.mxu0 0.0
    %1467 = vmatpush1.msra.mxu0 0.0
    %1468 = vmatprep.subr.mxu0 0.0
    %1469 = vmatpush1.msra.mxu0 0.0
    %1470 = vmatprep.subr.mxu0 0.0
    %1471 = vmatpush1.msra.mxu0 0.0
    %1472 = vmatprep.subr.mxu0 0.0
    %1473 = vmatpush1.msra.mxu0 0.0
    %1474 = vmatprep.subr.mxu0 0.0
    %1475 = vmatpush1.msra.mxu0 0.0
    %1476 = vmatprep.subr.mxu0 0.0
    %1477 = vmatpush1.msra.mxu0 0.0
    %1478 = vmatprep.subr.mxu0 0.0
    %1479 = vmatpush1.msra.mxu0 0.0
    %1480 = vmatprep.subr.mxu0 0.0
    %1481 = vmatpush1.msra.mxu0 0.0
    %1482 = vmatprep.subr.mxu0 0.0
    %1483 = vmatpush1.msra.mxu0 0.0
    %1484 = vmatprep.subr.mxu0 0.0
    %1485 = vmatpush1.msra.mxu0 %v404
    %1486 = vmatprep.subr.mxu0 0.0
    %1487 = vmatpush2.msra.mxu0 0.0
    %1488 = vmatprep.subr.mxu0 0.0
    %1489 = vmatpush2.msra.mxu0 0.0
    %1490 = vmatprep.subr.mxu0 0.0
    %1491 = vmatpush2.msra.mxu0 0.0
    %1492 = vmatprep.subr.mxu0 0.0
    %1493 = vmatpush2.msra.mxu0 0.0
    %1494 = vmatprep.subr.mxu0 0.0
    %1495 = vmatpush2.msra.mxu0 0.0
    %1496 = vmatprep.subr.mxu0 0.0
    %1497 = vmatpush2.msra.mxu0 0.0
    %1498 = vmatprep.subr.mxu0 0.0
    %1499 = vmatpush2.msra.mxu0 0.0
    %1500 = vmatprep.subr.mxu0 0.0
    %1501 = vmatpush2.msra.mxu0 0.0
    %1502 = vmatprep.subr.mxu0 0.0
    %1503 = vmatpush2.msra.mxu0 0.0
    %1504 = vmatprep.subr.mxu0 0.0
    %1505 = vmatpush2.msra.mxu0 0.0
    %1506 = vmatprep.subr.mxu0 0.0
    %1507 = vmatpush2.msra.mxu0 0.0
    %1508 = vmatprep.subr.mxu0 0.0
    %1509 = vmatpush2.msra.mxu0 0.0
    %1510 = vmatprep.subr.mxu0 0.0
    %1511 = vmatpush2.msra.mxu0 0.0
    %1512 = vmatprep.subr.mxu0 0.0
    %1513 = vmatpush2.msra.mxu0 0.0
    %1514 = vmatprep.subr.mxu0 0.0
    %1515 = vmatpush2.msra.mxu0 0.0
    %1516 = vmatprep.subr.mxu0 0.0
    %1517 = vmatpush2.msra.mxu0 0.0
    %1518 = vmatprep.mubr.f32.mxu0 0.0
    %1519 = vmatmul.mubr.f32.gmra.mxu0 %v1452
    %v1520 = vpop.f32.mrf.mxu0
    %v1521 = vadd.f32 0.0, %v1520
    %v1522 = vpop.f32.mrf.mxu0
    %1523 = vdwg.mxu0
    %1525 = vrot.lane.b32.xlu0 %v404, 120
    %v1526 = vpop.permute.xlu0 %1525
    %v1529 = vsel %vm407, %v1127, 0
    %1531 = vmatprep.subr.mxu0 0.0
    %1532 = vmatpush1.msra.mxu0 0.0
    %1533 = vmatprep.subr.mxu0 0.0
    %1534 = vmatpush1.msra.mxu0 0.0
    %1535 = vmatprep.subr.mxu0 0.0
    %1536 = vmatpush1.msra.mxu0 0.0
    %1537 = vmatprep.subr.mxu0 0.0
    %1538 = vmatpush1.msra.mxu0 0.0
    %1539 = vmatprep.subr.mxu0 0.0
    %1540 = vmatpush1.msra.mxu0 0.0
    %1541 = vmatprep.subr.mxu0 0.0
    %1542 = vmatpush1.msra.mxu0 0.0
    %1543 = vmatprep.subr.mxu0 0.0
    %1544 = vmatpush1.msra.mxu0 0.0
    %1545 = vmatprep.subr.mxu0 0.0
    %1546 = vmatpush1.msra.mxu0 0.0
    %1547 = vmatprep.subr.mxu0 0.0
    %1548 = vmatpush1.msra.mxu0 0.0
    %1549 = vmatprep.subr.mxu0 0.0
    %1550 = vmatpush1.msra.mxu0 0.0
    %1551 = vmatprep.subr.mxu0 0.0
    %1552 = vmatpush1.msra.mxu0 0.0
    %1553 = vmatprep.subr.mxu0 0.0
    %1554 = vmatpush1.msra.mxu0 0.0
    %1555 = vmatprep.subr.mxu0 0.0
    %1556 = vmatpush1.msra.mxu0 0.0
    %1557 = vmatprep.subr.mxu0 0.0
    %1558 = vmatpush1.msra.mxu0 0.0
    %1559 = vmatprep.subr.mxu0 0.0
    %1560 = vmatpush1.msra.mxu0 0.0
    %1561 = vmatprep.subr.mxu0 0.0
    %1562 = vmatpush1.msra.mxu0 %v1526
    %1563 = vmatprep.subr.mxu0 0.0
    %1564 = vmatpush2.msra.mxu0 0.0
    %1565 = vmatprep.subr.mxu0 0.0
    %1566 = vmatpush2.msra.mxu0 0.0
    %1567 = vmatprep.subr.mxu0 0.0
    %1568 = vmatpush2.msra.mxu0 0.0
    %1569 = vmatprep.subr.mxu0 0.0
    %1570 = vmatpush2.msra.mxu0 0.0
    %1571 = vmatprep.subr.mxu0 0.0
    %1572 = vmatpush2.msra.mxu0 0.0
    %1573 = vmatprep.subr.mxu0 0.0
    %1574 = vmatpush2.msra.mxu0 0.0
    %1575 = vmatprep.subr.mxu0 0.0
    %1576 = vmatpush2.msra.mxu0 0.0
    %1577 = vmatprep.subr.mxu0 0.0
    %1578 = vmatpush2.msra.mxu0 0.0
    %1579 = vmatprep.subr.mxu0 0.0
    %1580 = vmatpush2.msra.mxu0 0.0
    %1581 = vmatprep.subr.mxu0 0.0
    %1582 = vmatpush2.msra.mxu0 0.0
    %1583 = vmatprep.subr.mxu0 0.0
    %1584 = vmatpush2.msra.mxu0 0.0
    %1585 = vmatprep.subr.mxu0 0.0
    %1586 = vmatpush2.msra.mxu0 0.0
    %1587 = vmatprep.subr.mxu0 0.0
    %1588 = vmatpush2.msra.mxu0 0.0
    %1589 = vmatprep.subr.mxu0 0.0
    %1590 = vmatpush2.msra.mxu0 0.0
    %1591 = vmatprep.subr.mxu0 0.0
    %1592 = vmatpush2.msra.mxu0 0.0
    %1593 = vmatprep.subr.mxu0 0.0
    %1594 = vmatpush2.msra.mxu0 0.0
    %1595 = vmatprep.mubr.f32.mxu0 0.0
    %1596 = vmatmul.mubr.f32.gmra.mxu0 %v1529
    %v1597 = vpop.f32.mrf.mxu0
    %v1598 = vadd.f32 0.0, %v1597
    %v1599 = vpop.f32.mrf.mxu0
    %1600 = vdwg.mxu0
    %1601 = vrot.lane.b32.xlu0 %v404, 112
    %v1602 = vpop.permute.xlu0 %1601
    %v1605 = vsel %vm407, %v1129, 0
    %1607 = vmatprep.subr.mxu0 0.0
    %1608 = vmatpush1.msra.mxu0 0.0
    %1609 = vmatprep.subr.mxu0 0.0
    %1610 = vmatpush1.msra.mxu0 0.0
    %1611 = vmatprep.subr.mxu0 0.0
    %1612 = vmatpush1.msra.mxu0 0.0
    %1613 = vmatprep.subr.mxu0 0.0
    %1614 = vmatpush1.msra.mxu0 0.0
    %1615 = vmatprep.subr.mxu0 0.0
    %1616 = vmatpush1.msra.mxu0 0.0
    %1617 = vmatprep.subr.mxu0 0.0
    %1618 = vmatpush1.msra.mxu0 0.0
    %1619 = vmatprep.subr.mxu0 0.0
    %1620 = vmatpush1.msra.mxu0 0.0
    %1621 = vmatprep.subr.mxu0 0.0
    %1622 = vmatpush1.msra.mxu0 0.0
    %1623 = vmatprep.subr.mxu0 0.0
    %1624 = vmatpush1.msra.mxu0 0.0
    %1625 = vmatprep.subr.mxu0 0.0
    %1626 = vmatpush1.msra.mxu0 0.0
    %1627 = vmatprep.subr.mxu0 0.0
    %1628 = vmatpush1.msra.mxu0 0.0
    %1629 = vmatprep.subr.mxu0 0.0
    %1630 = vmatpush1.msra.mxu0 0.0
    %1631 = vmatprep.subr.mxu0 0.0
    %1632 = vmatpush1.msra.mxu0 0.0
    %1633 = vmatprep.subr.mxu0 0.0
    %1634 = vmatpush1.msra.mxu0 0.0
    %1635 = vmatprep.subr.mxu0 0.0
    %1636 = vmatpush1.msra.mxu0 0.0
    %1637 = vmatprep.subr.mxu0 0.0
    %1638 = vmatpush1.msra.mxu0 %v1602
    %1639 = vmatprep.subr.mxu0 0.0
    %1640 = vmatpush2.msra.mxu0 0.0
    %1641 = vmatprep.subr.mxu0 0.0
    %1642 = vmatpush2.msra.mxu0 0.0
    %1643 = vmatprep.subr.mxu0 0.0
    %1644 = vmatpush2.msra.mxu0 0.0
    %1645 = vmatprep.subr.mxu0 0.0
    %1646 = vmatpush2.msra.mxu0 0.0
    %1647 = vmatprep.subr.mxu0 0.0
    %1648 = vmatpush2.msra.mxu0 0.0
    %1649 = vmatprep.subr.mxu0 0.0
    %1650 = vmatpush2.msra.mxu0 0.0
    %1651 = vmatprep.subr.mxu0 0.0
    %1652 = vmatpush2.msra.mxu0 0.0
    %1653 = vmatprep.subr.mxu0 0.0
    %1654 = vmatpush2.msra.mxu0 0.0
    %1655 = vmatprep.subr.mxu0 0.0
    %1656 = vmatpush2.msra.mxu0 0.0
    %1657 = vmatprep.subr.mxu0 0.0
    %1658 = vmatpush2.msra.mxu0 0.0
    %1659 = vmatprep.subr.mxu0 0.0
    %1660 = vmatpush2.msra.mxu0 0.0
    %1661 = vmatprep.subr.mxu0 0.0
    %1662 = vmatpush2.msra.mxu0 0.0
    %1663 = vmatprep.subr.mxu0 0.0
    %1664 = vmatpush2.msra.mxu0 0.0
    %1665 = vmatprep.subr.mxu0 0.0
    %1666 = vmatpush2.msra.mxu0 0.0
    %1667 = vmatprep.subr.mxu0 0.0
    %1668 = vmatpush2.msra.mxu0 0.0
    %1669 = vmatprep.subr.mxu0 0.0
    %1670 = vmatpush2.msra.mxu0 0.0
    %1671 = vmatprep.mubr.f32.mxu0 0.0
    %1672 = vmatmul.mubr.f32.gmra.mxu0 %v1605
    %v1673 = vpop.f32.mrf.mxu0
    %v1674 = vadd.f32 0.0, %v1673
    %v1675 = vpop.f32.mrf.mxu0
    %1676 = vdwg.mxu0
    %1677 = vrot.lane.b32.xlu0 %v404, 104
    %v1678 = vpop.permute.xlu0 %1677
    %v1681 = vsel %vm407, %v1131, 0
    %1683 = vmatprep.subr.mxu0 0.0
    %1684 = vmatpush1.msra.mxu0 0.0
    %1685 = vmatprep.subr.mxu0 0.0
    %1686 = vmatpush1.msra.mxu0 0.0
    %1687 = vmatprep.subr.mxu0 0.0
    %1688 = vmatpush1.msra.mxu0 0.0
    %1689 = vmatprep.subr.mxu0 0.0
    %1690 = vmatpush1.msra.mxu0 0.0
    %1691 = vmatprep.subr.mxu0 0.0
    %1692 = vmatpush1.msra.mxu0 0.0
    %1693 = vmatprep.subr.mxu0 0.0
    %1694 = vmatpush1.msra.mxu0 0.0
    %1695 = vmatprep.subr.mxu0 0.0
    %1696 = vmatpush1.msra.mxu0 0.0
    %1697 = vmatprep.subr.mxu0 0.0
    %1698 = vmatpush1.msra.mxu0 0.0
    %1699 = vmatprep.subr.mxu0 0.0
    %1700 = vmatpush1.msra.mxu0 0.0
    %1701 = vmatprep.subr.mxu0 0.0
    %1702 = vmatpush1.msra.mxu0 0.0
    %1703 = vmatprep.subr.mxu0 0.0
    %1704 = vmatpush1.msra.mxu0 0.0
    %1705 = vmatprep.subr.mxu0 0.0
    %1706 = vmatpush1.msra.mxu0 0.0
    %1707 = vmatprep.subr.mxu0 0.0
    %1708 = vmatpush1.msra.mxu0 0.0
    %1709 = vmatprep.subr.mxu0 0.0
    %1710 = vmatpush1.msra.mxu0 0.0
    %1711 = vmatprep.subr.mxu0 0.0
    %1712 = vmatpush1.msra.mxu0 0.0
    %1713 = vmatprep.subr.mxu0 0.0
    %1714 = vmatpush1.msra.mxu0 %v1678
    %1715 = vmatprep.subr.mxu0 0.0
    %1716 = vmatpush2.msra.mxu0 0.0
    %1717 = vmatprep.subr.mxu0 0.0
    %1718 = vmatpush2.msra.mxu0 0.0
    %1719 = vmatprep.subr.mxu0 0.0
    %1720 = vmatpush2.msra.mxu0 0.0
    %1721 = vmatprep.subr.mxu0 0.0
    %1722 = vmatpush2.msra.mxu0 0.0
    %1723 = vmatprep.subr.mxu0 0.0
    %1724 = vmatpush2.msra.mxu0 0.0
    %1725 = vmatprep.subr.mxu0 0.0
    %1726 = vmatpush2.msra.mxu0 0.0
    %1727 = vmatprep.subr.mxu0 0.0
    %1728 = vmatpush2.msra.mxu0 0.0
    %1729 = vmatprep.subr.mxu0 0.0
    %1730 = vmatpush2.msra.mxu0 0.0
    %1731 = vmatprep.subr.mxu0 0.0
    %1732 = vmatpush2.msra.mxu0 0.0
    %1733 = vmatprep.subr.mxu0 0.0
    %1734 = vmatpush2.msra.mxu0 0.0
    %1735 = vmatprep.subr.mxu0 0.0
    %1736 = vmatpush2.msra.mxu0 0.0
    %1737 = vmatprep.subr.mxu0 0.0
    %1738 = vmatpush2.msra.mxu0 0.0
    %1739 = vmatprep.subr.mxu0 0.0
    %1740 = vmatpush2.msra.mxu0 0.0
    %1741 = vmatprep.subr.mxu0 0.0
    %1742 = vmatpush2.msra.mxu0 0.0
    %1743 = vmatprep.subr.mxu0 0.0
    %1744 = vmatpush2.msra.mxu0 0.0
    %1745 = vmatprep.subr.mxu0 0.0
    %1746 = vmatpush2.msra.mxu0 0.0
    %1747 = vmatprep.mubr.f32.mxu0 0.0
    %1748 = vmatmul.mubr.f32.gmra.mxu0 %v1681
    %v1749 = vpop.f32.mrf.mxu0
    %v1750 = vadd.f32 0.0, %v1749
    %v1751 = vpop.f32.mrf.mxu0
    %1752 = vdwg.mxu0
    %1754 = vrot.lane.b32.xlu0 %v1598, 8
    %v1755 = vpop.permute.xlu0 %1754
    %1758 = vrot.lane.b32.xlu0 %v1674, 16
    %v1759 = vpop.permute.xlu0 %1758
    %1762 = vrot.lane.b32.xlu0 %v1750, 24
    %v1763 = vpop.permute.xlu0 %1762
    %v1765 = vsel %vm407, %v1521, %v1755
    %v1766 = vsel %vm1447, %v1765, %v1759
    %v1767 = vsel %vm1449, %v1766, %v1763
    %s1768 = scalar_lea.vmem [#allocation6], 96
    %v1769 = vld [vmem:[%s1768] sm:$0xff]
    %v1770 = vld [vmem:[%s1768 + $0x8] sm:$0xff]
    %v1771 = vld [vmem:[%s1768 + $0x10] sm:$0xff]
    %v1772 = vld [vmem:[%s1768 + $0x18] sm:$0xff]
    %v1774 = vsel %vm91, %v1450, 0
    %v1777 = vsel %vm91, %v1767, 0
    %1779 = vmatprep.subr.mxu0 0.0
    %1780 = vmatpush1.msra.mxu0 0.0
    %1781 = vmatprep.subr.mxu0 0.0
    %1782 = vmatpush1.msra.mxu0 0.0
    %1783 = vmatprep.subr.mxu0 0.0
    %1784 = vmatpush1.msra.mxu0 0.0
    %1785 = vmatprep.subr.mxu0 0.0
    %1786 = vmatpush1.msra.mxu0 0.0
    %1787 = vmatprep.subr.mxu0 0.0
    %1788 = vmatpush1.msra.mxu0 0.0
    %1789 = vmatprep.subr.mxu0 0.0
    %1790 = vmatpush1.msra.mxu0 0.0
    %1791 = vmatprep.subr.mxu0 0.0
    %1792 = vmatpush1.msra.mxu0 0.0
    %1793 = vmatprep.subr.mxu0 0.0
    %1794 = vmatpush1.msra.mxu0 0.0
    %1795 = vmatprep.subr.mxu0 0.0
    %1796 = vmatpush1.msra.mxu0 0.0
    %1797 = vmatprep.subr.mxu0 0.0
    %1798 = vmatpush1.msra.mxu0 0.0
    %1799 = vmatprep.subr.mxu0 0.0
    %1800 = vmatpush1.msra.mxu0 0.0
    %1801 = vmatprep.subr.mxu0 0.0
    %1802 = vmatpush1.msra.mxu0 0.0
    %1803 = vmatprep.subr.mxu0 0.0
    %1804 = vmatpush1.msra.mxu0 %v1772
    %1805 = vmatprep.subr.mxu0 0.0
    %1806 = vmatpush1.msra.mxu0 %v1771
    %1807 = vmatprep.subr.mxu0 0.0
    %1808 = vmatpush1.msra.mxu0 %v1770
    %1809 = vmatprep.subr.mxu0 0.0
    %1810 = vmatpush1.msra.mxu0 %v1769
    %1811 = vmatprep.subr.mxu0 0.0
    %1812 = vmatpush2.msra.mxu0 0.0
    %1813 = vmatprep.subr.mxu0 0.0
    %1814 = vmatpush2.msra.mxu0 0.0
    %1815 = vmatprep.subr.mxu0 0.0
    %1816 = vmatpush2.msra.mxu0 0.0
    %1817 = vmatprep.subr.mxu0 0.0
    %1818 = vmatpush2.msra.mxu0 0.0
    %1819 = vmatprep.subr.mxu0 0.0
    %1820 = vmatpush2.msra.mxu0 0.0
    %1821 = vmatprep.subr.mxu0 0.0
    %1822 = vmatpush2.msra.mxu0 0.0
    %1823 = vmatprep.subr.mxu0 0.0
    %1824 = vmatpush2.msra.mxu0 0.0
    %1825 = vmatprep.subr.mxu0 0.0
    %1826 = vmatpush2.msra.mxu0 0.0
    %1827 = vmatprep.subr.mxu0 0.0
    %1828 = vmatpush2.msra.mxu0 0.0
    %1829 = vmatprep.subr.mxu0 0.0
    %1830 = vmatpush2.msra.mxu0 0.0
    %1831 = vmatprep.subr.mxu0 0.0
    %1832 = vmatpush2.msra.mxu0 0.0
    %1833 = vmatprep.subr.mxu0 0.0
    %1834 = vmatpush2.msra.mxu0 0.0
    %1835 = vmatprep.subr.mxu0 0.0
    %1836 = vmatpush2.msra.mxu0 0.0
    %1837 = vmatprep.subr.mxu0 0.0
    %1838 = vmatpush2.msra.mxu0 0.0
    %1839 = vmatprep.subr.mxu0 0.0
    %1840 = vmatpush2.msra.mxu0 0.0
    %1841 = vmatprep.subr.mxu0 0.0
    %1842 = vmatpush2.msra.mxu0 0.0
    %1843 = vmatprep.mubr.f32.mxu0 0.0
    %1844 = vmatmul.mubr.f32.gmra.mxu0 %v1774
    %v1845 = vpop.f32.mrf.mxu0
    %v1846 = vadd.f32 0.0, %v1845
    %v1847 = vpop.f32.mrf.mxu0
    %1848 = vmatprep.mubr.f32.mxu0 0.0
    %1849 = vmatmul.mubr.f32.gmra.mxu0 %v1777
    %v1850 = vpop.f32.mrf.mxu0
    %v1851 = vadd.f32 0.0, %v1850
    %v1852 = vpop.f32.mrf.mxu0
    %1853 = vdwg.mxu0
    %v1854 = vadd.f32 %v63, %v1846
    %v1855 = vadd.f32 %v64, %v1851
    %s1856 = scalar_lea.vmem %s6, 3
    %v1857 = vld [vmem:[%s1856] sm:$0x1]
    %v1859 = vlaneseq
    %v1860 = vshrl.u32 %v1859, 7
    %v1861 = vsub.s32 0, %v1860
    %v1862 = vrot.slane %v1857, %v1861
    %v1864 = vadd.f32 %v1854, %v1862
    %v1865 = vadd.f32 %v1855, %v1862
    %v1866 = vsel %vm91, %v1864, 0.0
    %1867 = vadd.xlane.f32.xlu0 %v1866
    %v1868 = vpop.xlane.xlu0 %1867
    %v1869 = vsel %vm91, %v1865, 0.0
    %1870 = vadd.xlane.f32.xlu0 %v1869
    %v1871 = vpop.xlane.xlu0 %1870
    %v1872 = vmul.f32 %v1868, %v98
    %v1873 = vmul.f32 %v1871, %v98
    %v1874 = vsub.f32 %v1864, %v1872
    %v1875 = vsub.f32 %v1865, %v1873
    %v1876 = vmul.f32 %v1874, %v1874
    %v1877 = vmul.f32 %v1875, %v1875
    %v1878 = vsel %vm91, %v1876, 0.0
    %1879 = vadd.xlane.f32.xlu0 %v1878
    %v1880 = vpop.xlane.xlu0 %1879
    %v1881 = vsel %vm91, %v1877, 0.0
    %1882 = vadd.xlane.f32.xlu0 %v1881
    %v1883 = vpop.xlane.xlu0 %1882
    %v1884 = vmul.f32 %v1880, 0.032258064
    %v1885 = vmul.f32 %v1883, 0.032258064
    %v1886 = vstv %s87
    %v1887 = vmul.f32 %v1886, %v1874
    %v1888 = vmul.f32 %v1886, %v1875
    %v1889 = vrsqrt.pop %v1884
    %v1890 = vmul.f32 %v1884, %v1889
    %vm1891 = vcmp.eq.f32.partialorder %v1884, inf
    %v1892 = vsel %vm1891, %v1884, %v1890
    %vm1893 = vcmp.eq.f32.partialorder %v1884, 0.0
    %v1894 = vand.u32 %v1884, 2147483648
    %v1895 = vsel %vm1893, %v1894, %v1892
    %v1896 = vrsqrt.pop %v1885
    %v1897 = vmul.f32 %v1885, %v1896
    %vm1898 = vcmp.eq.f32.partialorder %v1885, inf
    %v1899 = vsel %vm1898, %v1885, %v1897
    %vm1900 = vcmp.eq.f32.partialorder %v1885, 0.0
    %v1901 = vand.u32 %v1885, 2147483648
    %v1902 = vsel %vm1900, %v1901, %v1899
    %v1903 = vadd.f32 %v1895, 1e-06
    %v1904 = vadd.f32 %v1902, 1e-06
    %v1905 = vrcp.pop %v1903
    %v1906 = vmul.f32 %v1887, %v1905
    %v1907 = vrcp.pop %v1904
    %v1908 = vmul.f32 %v1888, %v1907
    %v1909 = vstv %s88
    %v1910 = vadd.f32 %v1906, %v1909
    %v1911 = vadd.f32 %v1908, %v1909
    %s1912 = scalar_lea.vmem [#allocation6], 128
    %v1913 = vld [vmem:[%s1912] sm:$0xff]
    %v1914 = vld [vmem:[%s1912 + $0x8] sm:$0xff]
    %v1915 = vld [vmem:[%s1912 + $0x10] sm:$0xff]
    %v1916 = vld [vmem:[%s1912 + $0x18] sm:$0xff]
    %s1917 = scalar_lea.vmem %s6, 4
    %v1918 = vld [vmem:[%s1917] sm:$0x1]
    %v1920 = vlaneseq
    %v1921 = vshrl.u32 %v1920, 7
    %v1922 = vsub.s32 0, %v1921
    %v1923 = vrot.slane %v1918, %v1922
    %v1926 = vsel %vm91, %v1910, 0
    %v1929 = vsel %vm91, %v1911, 0
    %1931 = vmatprep.subr.mxu0 0.0
    %1932 = vmatpush1.msra.mxu0 0.0
    %1933 = vmatprep.subr.mxu0 0.0
    %1934 = vmatpush1.msra.mxu0 0.0
    %1935 = vmatprep.subr.mxu0 0.0
    %1936 = vmatpush1.msra.mxu0 0.0
    %1937 = vmatprep.subr.mxu0 0.0
    %1938 = vmatpush1.msra.mxu0 0.0
    %1939 = vmatprep.subr.mxu0 0.0
    %1940 = vmatpush1.msra.mxu0 0.0
    %1941 = vmatprep.subr.mxu0 0.0
    %1942 = vmatpush1.msra.mxu0 0.0
    %1943 = vmatprep.subr.mxu0 0.0
    %1944 = vmatpush1.msra.mxu0 0.0
    %1945 = vmatprep.subr.mxu0 0.0
    %1946 = vmatpush1.msra.mxu0 0.0
    %1947 = vmatprep.subr.mxu0 0.0
    %1948 = vmatpush1.msra.mxu0 0.0
    %1949 = vmatprep.subr.mxu0 0.0
    %1950 = vmatpush1.msra.mxu0 0.0
    %1951 = vmatprep.subr.mxu0 0.0
    %1952 = vmatpush1.msra.mxu0 0.0
    %1953 = vmatprep.subr.mxu0 0.0
    %1954 = vmatpush1.msra.mxu0 0.0
    %1955 = vmatprep.subr.mxu0 0.0
    %1956 = vmatpush1.msra.mxu0 %v1916
    %1957 = vmatprep.subr.mxu0 0.0
    %1958 = vmatpush1.msra.mxu0 %v1915
    %1959 = vmatprep.subr.mxu0 0.0
    %1960 = vmatpush1.msra.mxu0 %v1914
    %1961 = vmatprep.subr.mxu0 0.0
    %1962 = vmatpush1.msra.mxu0 %v1913
    %1963 = vmatprep.subr.mxu0 0.0
    %1964 = vmatpush2.msra.mxu0 0.0
    %1965 = vmatprep.subr.mxu0 0.0
    %1966 = vmatpush2.msra.mxu0 0.0
    %1967 = vmatprep.subr.mxu0 0.0
    %1968 = vmatpush2.msra.mxu0 0.0
    %1969 = vmatprep.subr.mxu0 0.0
    %1970 = vmatpush2.msra.mxu0 0.0
    %1971 = vmatprep.subr.mxu0 0.0
    %1972 = vmatpush2.msra.mxu0 0.0
    %1973 = vmatprep.subr.mxu0 0.0
    %1974 = vmatpush2.msra.mxu0 0.0
    %1975 = vmatprep.subr.mxu0 0.0
    %1976 = vmatpush2.msra.mxu0 0.0
    %1977 = vmatprep.subr.mxu0 0.0
    %1978 = vmatpush2.msra.mxu0 0.0
    %1979 = vmatprep.subr.mxu0 0.0
    %1980 = vmatpush2.msra.mxu0 0.0
    %1981 = vmatprep.subr.mxu0 0.0
    %1982 = vmatpush2.msra.mxu0 0.0
    %1983 = vmatprep.subr.mxu0 0.0
    %1984 = vmatpush2.msra.mxu0 0.0
    %1985 = vmatprep.subr.mxu0 0.0
    %1986 = vmatpush2.msra.mxu0 0.0
    %1987 = vmatprep.subr.mxu0 0.0
    %1988 = vmatpush2.msra.mxu0 0.0
    %1989 = vmatprep.subr.mxu0 0.0
    %1990 = vmatpush2.msra.mxu0 0.0
    %1991 = vmatprep.subr.mxu0 0.0
    %1992 = vmatpush2.msra.mxu0 0.0
    %1993 = vmatprep.subr.mxu0 0.0
    %1994 = vmatpush2.msra.mxu0 0.0
    %1995 = vmatprep.mubr.f32.mxu0 0.0
    %1996 = vmatmul.mubr.f32.gmra.mxu0 %v1926
    %v1997 = vpop.f32.mrf.mxu0
    %v1998 = vadd.f32 %v1923, %v1997
    %v1999 = vpop.f32.mrf.mxu0
    %2000 = vmatprep.mubr.f32.mxu0 0.0
    %2001 = vmatmul.mubr.f32.gmra.mxu0 %v1929
    %v2002 = vpop.f32.mrf.mxu0
    %v2003 = vadd.f32 %v1923, %v2002
    %v2004 = vpop.f32.mrf.mxu0
    %2005 = vdwg.mxu0
    %s2006 = scalar_lea.vmem [#allocation6], 160
    %v2007 = vld [vmem:[%s2006] sm:$0xff]
    %v2008 = vld [vmem:[%s2006 + $0x8] sm:$0xff]
    %v2009 = vld [vmem:[%s2006 + $0x10] sm:$0xff]
    %v2010 = vld [vmem:[%s2006 + $0x18] sm:$0xff]
    %s2011 = scalar_lea.vmem %s6, 5
    %v2012 = vld [vmem:[%s2011] sm:$0x1]
    %v2014 = vlaneseq
    %v2015 = vshrl.u32 %v2014, 7
    %v2016 = vsub.s32 0, %v2015
    %v2017 = vrot.slane %v2012, %v2016
    %v2020 = vsel %vm91, %v65, 0
    %v2023 = vsel %vm91, %v66, 0
    %v2026 = vsel %vm91, %v67, 0
    %v2029 = vsel %vm91, %v68, 0
    %2031 = vmatprep.subr.mxu0 0.0
    %2032 = vmatpush1.msra.mxu0 0.0
    %2033 = vmatprep.subr.mxu0 0.0
    %2034 = vmatpush1.msra.mxu0 0.0
    %2035 = vmatprep.subr.mxu0 0.0
    %2036 = vmatpush1.msra.mxu0 0.0
    %2037 = vmatprep.subr.mxu0 0.0
    %2038 = vmatpush1.msra.mxu0 0.0
    %2039 = vmatprep.subr.mxu0 0.0
    %2040 = vmatpush1.msra.mxu0 0.0
    %2041 = vmatprep.subr.mxu0 0.0
    %2042 = vmatpush1.msra.mxu0 0.0
    %2043 = vmatprep.subr.mxu0 0.0
    %2044 = vmatpush1.msra.mxu0 0.0
    %2045 = vmatprep.subr.mxu0 0.0
    %2046 = vmatpush1.msra.mxu0 0.0
    %2047 = vmatprep.subr.mxu0 0.0
    %2048 = vmatpush1.msra.mxu0 0.0
    %2049 = vmatprep.subr.mxu0 0.0
    %2050 = vmatpush1.msra.mxu0 0.0
    %2051 = vmatprep.subr.mxu0 0.0
    %2052 = vmatpush1.msra.mxu0 0.0
    %2053 = vmatprep.subr.mxu0 0.0
    %2054 = vmatpush1.msra.mxu0 0.0
    %2055 = vmatprep.subr.mxu0 0.0
    %2056 = vmatpush1.msra.mxu0 %v2010
    %2057 = vmatprep.subr.mxu0 0.0
    %2058 = vmatpush1.msra.mxu0 %v2009
    %2059 = vmatprep.subr.mxu0 0.0
    %2060 = vmatpush1.msra.mxu0 %v2008
    %2061 = vmatprep.subr.mxu0 0.0
    %2062 = vmatpush1.msra.mxu0 %v2007
    %2063 = vmatprep.subr.mxu0 0.0
    %2064 = vmatpush2.msra.mxu0 0.0
    %2065 = vmatprep.subr.mxu0 0.0
    %2066 = vmatpush2.msra.mxu0 0.0
    %2067 = vmatprep.subr.mxu0 0.0
    %2068 = vmatpush2.msra.mxu0 0.0
    %2069 = vmatprep.subr.mxu0 0.0
    %2070 = vmatpush2.msra.mxu0 0.0
    %2071 = vmatprep.subr.mxu0 0.0
    %2072 = vmatpush2.msra.mxu0 0.0
    %2073 = vmatprep.subr.mxu0 0.0
    %2074 = vmatpush2.msra.mxu0 0.0
    %2075 = vmatprep.subr.mxu0 0.0
    %2076 = vmatpush2.msra.mxu0 0.0
    %2077 = vmatprep.subr.mxu0 0.0
    %2078 = vmatpush2.msra.mxu0 0.0
    %2079 = vmatprep.subr.mxu0 0.0
    %2080 = vmatpush2.msra.mxu0 0.0
    %2081 = vmatprep.subr.mxu0 0.0
    %2082 = vmatpush2.msra.mxu0 0.0
    %2083 = vmatprep.subr.mxu0 0.0
    %2084 = vmatpush2.msra.mxu0 0.0
    %2085 = vmatprep.subr.mxu0 0.0
    %2086 = vmatpush2.msra.mxu0 0.0
    %2087 = vmatprep.subr.mxu0 0.0
    %2088 = vmatpush2.msra.mxu0 0.0
    %2089 = vmatprep.subr.mxu0 0.0
    %2090 = vmatpush2.msra.mxu0 0.0
    %2091 = vmatprep.subr.mxu0 0.0
    %2092 = vmatpush2.msra.mxu0 0.0
    %2093 = vmatprep.subr.mxu0 0.0
    %2094 = vmatpush2.msra.mxu0 0.0
    %2095 = vmatprep.mubr.f32.mxu0 0.0
    %2096 = vmatmul.mubr.f32.gmra.mxu0 %v2020
    %v2097 = vpop.f32.mrf.mxu0
    %v2098 = vadd.f32 %v2017, %v2097
    %v2099 = vpop.f32.mrf.mxu0
    %2100 = vmatprep.mubr.f32.mxu0 0.0
    %2101 = vmatmul.mubr.f32.gmra.mxu0 %v2023
    %v2102 = vpop.f32.mrf.mxu0
    %v2103 = vadd.f32 %v2017, %v2102
    %v2104 = vpop.f32.mrf.mxu0
    %2105 = vmatprep.mubr.f32.mxu0 0.0
    %2106 = vmatmul.mubr.f32.gmra.mxu0 %v2026
    %v2107 = vpop.f32.mrf.mxu0
    %v2108 = vadd.f32 %v2017, %v2107
    %v2109 = vpop.f32.mrf.mxu0
    %2110 = vmatprep.mubr.f32.mxu0 0.0
    %2111 = vmatmul.mubr.f32.gmra.mxu0 %v2029
    %v2112 = vpop.f32.mrf.mxu0
    %v2113 = vadd.f32 %v2017, %v2112
    %v2114 = vpop.f32.mrf.mxu0
    %2115 = vdwg.mxu0
    %s2116 = scalar_lea.vmem [#allocation6], 192
    %v2117 = vld [vmem:[%s2116] sm:$0xff]
    %v2118 = vld [vmem:[%s2116 + $0x8] sm:$0xff]
    %v2119 = vld [vmem:[%s2116 + $0x10] sm:$0xff]
    %v2120 = vld [vmem:[%s2116 + $0x18] sm:$0xff]
    %s2121 = scalar_lea.vmem %s6, 6
    %v2122 = vld [vmem:[%s2121] sm:$0x1]
    %v2124 = vlaneseq
    %v2125 = vshrl.u32 %v2124, 7
    %v2126 = vsub.s32 0, %v2125
    %v2127 = vrot.slane %v2122, %v2126
    %2129 = vmatprep.subr.mxu0 0.0
    %2130 = vmatpush1.msra.mxu0 0.0
    %2131 = vmatprep.subr.mxu0 0.0
    %2132 = vmatpush1.msra.mxu0 0.0
    %2133 = vmatprep.subr.mxu0 0.0
    %2134 = vmatpush1.msra.mxu0 0.0
    %2135 = vmatprep.subr.mxu0 0.0
    %2136 = vmatpush1.msra.mxu0 0.0
    %2137 = vmatprep.subr.mxu0 0.0
    %2138 = vmatpush1.msra.mxu0 0.0
    %2139 = vmatprep.subr.mxu0 0.0
    %2140 = vmatpush1.msra.mxu0 0.0
    %2141 = vmatprep.subr.mxu0 0.0
    %2142 = vmatpush1.msra.mxu0 0.0
    %2143 = vmatprep.subr.mxu0 0.0
    %2144 = vmatpush1.msra.mxu0 0.0
    %2145 = vmatprep.subr.mxu0 0.0
    %2146 = vmatpush1.msra.mxu0 0.0
    %2147 = vmatprep.subr.mxu0 0.0
    %2148 = vmatpush1.msra.mxu0 0.0
    %2149 = vmatprep.subr.mxu0 0.0
    %2150 = vmatpush1.msra.mxu0 0.0
    %2151 = vmatprep.subr.mxu0 0.0
    %2152 = vmatpush1.msra.mxu0 0.0
    %2153 = vmatprep.subr.mxu0 0.0
    %2154 = vmatpush1.msra.mxu0 %v2120
    %2155 = vmatprep.subr.mxu0 0.0
    %2156 = vmatpush1.msra.mxu0 %v2119
    %2157 = vmatprep.subr.mxu0 0.0
    %2158 = vmatpush1.msra.mxu0 %v2118
    %2159 = vmatprep.subr.mxu0 0.0
    %2160 = vmatpush1.msra.mxu0 %v2117
    %2161 = vmatprep.subr.mxu0 0.0
    %2162 = vmatpush2.msra.mxu0 0.0
    %2163 = vmatprep.subr.mxu0 0.0
    %2164 = vmatpush2.msra.mxu0 0.0
    %2165 = vmatprep.subr.mxu0 0.0
    %2166 = vmatpush2.msra.mxu0 0.0
    %2167 = vmatprep.subr.mxu0 0.0
    %2168 = vmatpush2.msra.mxu0 0.0
    %2169 = vmatprep.subr.mxu0 0.0
    %2170 = vmatpush2.msra.mxu0 0.0
    %2171 = vmatprep.subr.mxu0 0.0
    %2172 = vmatpush2.msra.mxu0 0.0
    %2173 = vmatprep.subr.mxu0 0.0
    %2174 = vmatpush2.msra.mxu0 0.0
    %2175 = vmatprep.subr.mxu0 0.0
    %2176 = vmatpush2.msra.mxu0 0.0
    %2177 = vmatprep.subr.mxu0 0.0
    %2178 = vmatpush2.msra.mxu0 0.0
    %2179 = vmatprep.subr.mxu0 0.0
    %2180 = vmatpush2.msra.mxu0 0.0
    %2181 = vmatprep.subr.mxu0 0.0
    %2182 = vmatpush2.msra.mxu0 0.0
    %2183 = vmatprep.subr.mxu0 0.0
    %2184 = vmatpush2.msra.mxu0 0.0
    %2185 = vmatprep.subr.mxu0 0.0
    %2186 = vmatpush2.msra.mxu0 0.0
    %2187 = vmatprep.subr.mxu0 0.0
    %2188 = vmatpush2.msra.mxu0 0.0
    %2189 = vmatprep.subr.mxu0 0.0
    %2190 = vmatpush2.msra.mxu0 0.0
    %2191 = vmatprep.subr.mxu0 0.0
    %2192 = vmatpush2.msra.mxu0 0.0
    %2193 = vmatprep.mubr.f32.mxu0 0.0
    %2194 = vmatmul.mubr.f32.gmra.mxu0 %v2020
    %v2195 = vpop.f32.mrf.mxu0
    %v2196 = vadd.f32 %v2127, %v2195
    %v2197 = vpop.f32.mrf.mxu0
    %2198 = vmatprep.mubr.f32.mxu0 0.0
    %2199 = vmatmul.mubr.f32.gmra.mxu0 %v2023
    %v2200 = vpop.f32.mrf.mxu0
    %v2201 = vadd.f32 %v2127, %v2200
    %v2202 = vpop.f32.mrf.mxu0
    %2203 = vmatprep.mubr.f32.mxu0 0.0
    %2204 = vmatmul.mubr.f32.gmra.mxu0 %v2026
    %v2205 = vpop.f32.mrf.mxu0
    %v2206 = vadd.f32 %v2127, %v2205
    %v2207 = vpop.f32.mrf.mxu0
    %2208 = vmatprep.mubr.f32.mxu0 0.0
    %2209 = vmatmul.mubr.f32.gmra.mxu0 %v2029
    %v2210 = vpop.f32.mrf.mxu0
    %v2211 = vadd.f32 %v2127, %v2210
    %v2212 = vpop.f32.mrf.mxu0
    %2213 = vdwg.mxu0
    %v2215 = vsel %vm407, %v1998, 0
    %v2218 = vsel %vm407, %v2098, 0
    %v2221 = vsel %vm407, %v2103, 0
    %2223 = vmatprep.subr.mxu0 0.0
    %2224 = vmatpush1.xpose.msra.mxu0 0.0
    %2225 = vmatprep.subr.mxu0 0.0
    %2226 = vmatpush1.xpose.msra.mxu0 0.0
    %2227 = vmatprep.subr.mxu0 0.0
    %2228 = vmatpush1.xpose.msra.mxu0 0.0
    %2229 = vmatprep.subr.mxu0 0.0
    %2230 = vmatpush1.xpose.msra.mxu0 0.0
    %2231 = vmatprep.subr.mxu0 0.0
    %2232 = vmatpush1.xpose.msra.mxu0 0.0
    %2233 = vmatprep.subr.mxu0 0.0
    %2234 = vmatpush1.xpose.msra.mxu0 0.0
    %2235 = vmatprep.subr.mxu0 0.0
    %2236 = vmatpush1.xpose.msra.mxu0 0.0
    %2237 = vmatprep.subr.mxu0 0.0
    %2238 = vmatpush1.xpose.msra.mxu0 0.0
    %2239 = vmatprep.subr.mxu0 0.0
    %2240 = vmatpush1.xpose.msra.mxu0 0.0
    %2241 = vmatprep.subr.mxu0 0.0
    %2242 = vmatpush1.xpose.msra.mxu0 0.0
    %2243 = vmatprep.subr.mxu0 0.0
    %2244 = vmatpush1.xpose.msra.mxu0 0.0
    %2245 = vmatprep.subr.mxu0 0.0
    %2246 = vmatpush1.xpose.msra.mxu0 0.0
    %2247 = vmatprep.subr.mxu0 0.0
    %2248 = vmatpush1.xpose.msra.mxu0 0.0
    %2249 = vmatprep.subr.mxu0 0.0
    %2250 = vmatpush1.xpose.msra.mxu0 0.0
    %2251 = vmatprep.subr.mxu0 0.0
    %2252 = vmatpush1.xpose.msra.mxu0 %v2221
    %2253 = vmatprep.subr.mxu0 0.0
    %2254 = vmatpush1.xpose.msra.mxu0 %v2218
    %2255 = vmatprep.subr.mxu0 0.0
    %2256 = vmatpush2.xpose.msra.mxu0 0.0
    %2257 = vmatprep.subr.mxu0 0.0
    %2258 = vmatpush2.xpose.msra.mxu0 0.0
    %2259 = vmatprep.subr.mxu0 0.0
    %2260 = vmatpush2.xpose.msra.mxu0 0.0
    %2261 = vmatprep.subr.mxu0 0.0
    %2262 = vmatpush2.xpose.msra.mxu0 0.0
    %2263 = vmatprep.subr.mxu0 0.0
    %2264 = vmatpush2.xpose.msra.mxu0 0.0
    %2265 = vmatprep.subr.mxu0 0.0
    %2266 = vmatpush2.xpose.msra.mxu0 0.0
    %2267 = vmatprep.subr.mxu0 0.0
    %2268 = vmatpush2.xpose.msra.mxu0 0.0
    %2269 = vmatprep.subr.mxu0 0.0
    %2270 = vmatpush2.xpose.msra.mxu0 0.0
    %2271 = vmatprep.subr.mxu0 0.0
    %2272 = vmatpush2.xpose.msra.mxu0 0.0
    %2273 = vmatprep.subr.mxu0 0.0
    %2274 = vmatpush2.xpose.msra.mxu0 0.0
    %2275 = vmatprep.subr.mxu0 0.0
    %2276 = vmatpush2.xpose.msra.mxu0 0.0
    %2277 = vmatprep.subr.mxu0 0.0
    %2278 = vmatpush2.xpose.msra.mxu0 0.0
    %2279 = vmatprep.subr.mxu0 0.0
    %2280 = vmatpush2.xpose.msra.mxu0 0.0
    %2281 = vmatprep.subr.mxu0 0.0
    %2282 = vmatpush2.xpose.msra.mxu0 0.0
    %2283 = vmatprep.subr.mxu0 0.0
    %2284 = vmatpush2.xpose.msra.mxu0 0.0
    %2285 = vmatprep.subr.mxu0 0.0
    %2286 = vmatpush2.xpose.msra.mxu0 0.0
    %2287 = vmatprep.mubr.f32.mxu0 0.0
    %2288 = vmatmul.mubr.f32.gmra.mxu0 %v2215
    %v2289 = vpop.f32.mrf.mxu0
    %v2290 = vadd.f32 0.0, %v2289
    %v2291 = vpop.f32.mrf.mxu0
    %2292 = vdwg.mxu0
    %2293 = vrot.lane.b32.xlu0 %v1998, 120
    %v2294 = vpop.permute.xlu0 %2293
    %2295 = vrot.lane.b32.xlu0 %v2098, 120
    %v2296 = vpop.permute.xlu0 %2295
    %2297 = vrot.lane.b32.xlu0 %v2103, 120
    %v2298 = vpop.permute.xlu0 %2297
    %v2299 = vsel %vm407, %v2294, 0
    %v2301 = vsel %vm407, %v2296, 0
    %v2303 = vsel %vm407, %v2298, 0
    %2305 = vmatprep.subr.mxu0 0.0
    %2306 = vmatpush1.xpose.msra.mxu0 0.0
    %2307 = vmatprep.subr.mxu0 0.0
    %2308 = vmatpush1.xpose.msra.mxu0 0.0
    %2309 = vmatprep.subr.mxu0 0.0
    %2310 = vmatpush1.xpose.msra.mxu0 0.0
    %2311 = vmatprep.subr.mxu0 0.0
    %2312 = vmatpush1.xpose.msra.mxu0 0.0
    %2313 = vmatprep.subr.mxu0 0.0
    %2314 = vmatpush1.xpose.msra.mxu0 0.0
    %2315 = vmatprep.subr.mxu0 0.0
    %2316 = vmatpush1.xpose.msra.mxu0 0.0
    %2317 = vmatprep.subr.mxu0 0.0
    %2318 = vmatpush1.xpose.msra.mxu0 0.0
    %2319 = vmatprep.subr.mxu0 0.0
    %2320 = vmatpush1.xpose.msra.mxu0 0.0
    %2321 = vmatprep.subr.mxu0 0.0
    %2322 = vmatpush1.xpose.msra.mxu0 0.0
    %2323 = vmatprep.subr.mxu0 0.0
    %2324 = vmatpush1.xpose.msra.mxu0 0.0
    %2325 = vmatprep.subr.mxu0 0.0
    %2326 = vmatpush1.xpose.msra.mxu0 0.0
    %2327 = vmatprep.subr.mxu0 0.0
    %2328 = vmatpush1.xpose.msra.mxu0 0.0
    %2329 = vmatprep.subr.mxu0 0.0
    %2330 = vmatpush1.xpose.msra.mxu0 0.0
    %2331 = vmatprep.subr.mxu0 0.0
    %2332 = vmatpush1.xpose.msra.mxu0 0.0
    %2333 = vmatprep.subr.mxu0 0.0
    %2334 = vmatpush1.xpose.msra.mxu0 %v2303
    %2335 = vmatprep.subr.mxu0 0.0
    %2336 = vmatpush1.xpose.msra.mxu0 %v2301
    %2337 = vmatprep.subr.mxu0 0.0
    %2338 = vmatpush2.xpose.msra.mxu0 0.0
    %2339 = vmatprep.subr.mxu0 0.0
    %2340 = vmatpush2.xpose.msra.mxu0 0.0
    %2341 = vmatprep.subr.mxu0 0.0
    %2342 = vmatpush2.xpose.msra.mxu0 0.0
    %2343 = vmatprep.subr.mxu0 0.0
    %2344 = vmatpush2.xpose.msra.mxu0 0.0
    %2345 = vmatprep.subr.mxu0 0.0
    %2346 = vmatpush2.xpose.msra.mxu0 0.0
    %2347 = vmatprep.subr.mxu0 0.0
    %2348 = vmatpush2.xpose.msra.mxu0 0.0
    %2349 = vmatprep.subr.mxu0 0.0
    %2350 = vmatpush2.xpose.msra.mxu0 0.0
    %2351 = vmatprep.subr.mxu0 0.0
    %2352 = vmatpush2.xpose.msra.mxu0 0.0
    %2353 = vmatprep.subr.mxu0 0.0
    %2354 = vmatpush2.xpose.msra.mxu0 0.0
    %2355 = vmatprep.subr.mxu0 0.0
    %2356 = vmatpush2.xpose.msra.mxu0 0.0
    %2357 = vmatprep.subr.mxu0 0.0
    %2358 = vmatpush2.xpose.msra.mxu0 0.0
    %2359 = vmatprep.subr.mxu0 0.0
    %2360 = vmatpush2.xpose.msra.mxu0 0.0
    %2361 = vmatprep.subr.mxu0 0.0
    %2362 = vmatpush2.xpose.msra.mxu0 0.0
    %2363 = vmatprep.subr.mxu0 0.0
    %2364 = vmatpush2.xpose.msra.mxu0 0.0
    %2365 = vmatprep.subr.mxu0 0.0
    %2366 = vmatpush2.xpose.msra.mxu0 0.0
    %2367 = vmatprep.subr.mxu0 0.0
    %2368 = vmatpush2.xpose.msra.mxu0 0.0
    %2369 = vmatprep.mubr.f32.mxu0 0.0
    %2370 = vmatmul.mubr.f32.gmra.mxu0 %v2299
    %v2371 = vpop.f32.mrf.mxu0
    %v2372 = vadd.f32 0.0, %v2371
    %v2373 = vpop.f32.mrf.mxu0
    %2374 = vdwg.mxu0
    %2375 = vrot.lane.b32.xlu0 %v1998, 112
    %v2376 = vpop.permute.xlu0 %2375
    %2377 = vrot.lane.b32.xlu0 %v2098, 112
    %v2378 = vpop.permute.xlu0 %2377
    %2379 = vrot.lane.b32.xlu0 %v2103, 112
    %v2380 = vpop.permute.xlu0 %2379
    %v2381 = vsel %vm407, %v2376, 0
    %v2383 = vsel %vm407, %v2378, 0
    %v2385 = vsel %vm407, %v2380, 0
    %2387 = vmatprep.subr.mxu0 0.0
    %2388 = vmatpush1.xpose.msra.mxu0 0.0
    %2389 = vmatprep.subr.mxu0 0.0
    %2390 = vmatpush1.xpose.msra.mxu0 0.0
    %2391 = vmatprep.subr.mxu0 0.0
    %2392 = vmatpush1.xpose.msra.mxu0 0.0
    %2393 = vmatprep.subr.mxu0 0.0
    %2394 = vmatpush1.xpose.msra.mxu0 0.0
    %2395 = vmatprep.subr.mxu0 0.0
    %2396 = vmatpush1.xpose.msra.mxu0 0.0
    %2397 = vmatprep.subr.mxu0 0.0
    %2398 = vmatpush1.xpose.msra.mxu0 0.0
    %2399 = vmatprep.subr.mxu0 0.0
    %2400 = vmatpush1.xpose.msra.mxu0 0.0
    %2401 = vmatprep.subr.mxu0 0.0
    %2402 = vmatpush1.xpose.msra.mxu0 0.0
    %2403 = vmatprep.subr.mxu0 0.0
    %2404 = vmatpush1.xpose.msra.mxu0 0.0
    %2405 = vmatprep.subr.mxu0 0.0
    %2406 = vmatpush1.xpose.msra.mxu0 0.0
    %2407 = vmatprep.subr.mxu0 0.0
    %2408 = vmatpush1.xpose.msra.mxu0 0.0
    %2409 = vmatprep.subr.mxu0 0.0
    %2410 = vmatpush1.xpose.msra.mxu0 0.0
    %2411 = vmatprep.subr.mxu0 0.0
    %2412 = vmatpush1.xpose.msra.mxu0 0.0
    %2413 = vmatprep.subr.mxu0 0.0
    %2414 = vmatpush1.xpose.msra.mxu0 0.0
    %2415 = vmatprep.subr.mxu0 0.0
    %2416 = vmatpush1.xpose.msra.mxu0 %v2385
    %2417 = vmatprep.subr.mxu0 0.0
    %2418 = vmatpush1.xpose.msra.mxu0 %v2383
    %2419 = vmatprep.subr.mxu0 0.0
    %2420 = vmatpush2.xpose.msra.mxu0 0.0
    %2421 = vmatprep.subr.mxu0 0.0
    %2422 = vmatpush2.xpose.msra.mxu0 0.0
    %2423 = vmatprep.subr.mxu0 0.0
    %2424 = vmatpush2.xpose.msra.mxu0 0.0
    %2425 = vmatprep.subr.mxu0 0.0
    %2426 = vmatpush2.xpose.msra.mxu0 0.0
    %2427 = vmatprep.subr.mxu0 0.0
    %2428 = vmatpush2.xpose.msra.mxu0 0.0
    %2429 = vmatprep.subr.mxu0 0.0
    %2430 = vmatpush2.xpose.msra.mxu0 0.0
    %2431 = vmatprep.subr.mxu0 0.0
    %2432 = vmatpush2.xpose.msra.mxu0 0.0
    %2433 = vmatprep.subr.mxu0 0.0
    %2434 = vmatpush2.xpose.msra.mxu0 0.0
    %2435 = vmatprep.subr.mxu0 0.0
    %2436 = vmatpush2.xpose.msra.mxu0 0.0
    %2437 = vmatprep.subr.mxu0 0.0
    %2438 = vmatpush2.xpose.msra.mxu0 0.0
    %2439 = vmatprep.subr.mxu0 0.0
    %2440 = vmatpush2.xpose.msra.mxu0 0.0
    %2441 = vmatprep.subr.mxu0 0.0
    %2442 = vmatpush2.xpose.msra.mxu0 0.0
    %2443 = vmatprep.subr.mxu0 0.0
    %2444 = vmatpush2.xpose.msra.mxu0 0.0
    %2445 = vmatprep.subr.mxu0 0.0
    %2446 = vmatpush2.xpose.msra.mxu0 0.0
    %2447 = vmatprep.subr.mxu0 0.0
    %2448 = vmatpush2.xpose.msra.mxu0 0.0
    %2449 = vmatprep.subr.mxu0 0.0
    %2450 = vmatpush2.xpose.msra.mxu0 0.0
    %2451 = vmatprep.mubr.f32.mxu0 0.0
    %2452 = vmatmul.mubr.f32.gmra.mxu0 %v2381
    %v2453 = vpop.f32.mrf.mxu0
    %v2454 = vadd.f32 0.0, %v2453
    %v2455 = vpop.f32.mrf.mxu0
    %2456 = vdwg.mxu0
    %2457 = vrot.lane.b32.xlu0 %v1998, 104
    %v2458 = vpop.permute.xlu0 %2457
    %2459 = vrot.lane.b32.xlu0 %v2098, 104
    %v2460 = vpop.permute.xlu0 %2459
    %2461 = vrot.lane.b32.xlu0 %v2103, 104
    %v2462 = vpop.permute.xlu0 %2461
    %v2463 = vsel %vm407, %v2458, 0
    %v2465 = vsel %vm407, %v2460, 0
    %v2467 = vsel %vm407, %v2462, 0
    %2469 = vmatprep.subr.mxu0 0.0
    %2470 = vmatpush1.xpose.msra.mxu0 0.0
    %2471 = vmatprep.subr.mxu0 0.0
    %2472 = vmatpush1.xpose.msra.mxu0 0.0
    %2473 = vmatprep.subr.mxu0 0.0
    %2474 = vmatpush1.xpose.msra.mxu0 0.0
    %2475 = vmatprep.subr.mxu0 0.0
    %2476 = vmatpush1.xpose.msra.mxu0 0.0
    %2477 = vmatprep.subr.mxu0 0.0
    %2478 = vmatpush1.xpose.msra.mxu0 0.0
    %2479 = vmatprep.subr.mxu0 0.0
    %2480 = vmatpush1.xpose.msra.mxu0 0.0
    %2481 = vmatprep.subr.mxu0 0.0
    %2482 = vmatpush1.xpose.msra.mxu0 0.0
    %2483 = vmatprep.subr.mxu0 0.0
    %2484 = vmatpush1.xpose.msra.mxu0 0.0
    %2485 = vmatprep.subr.mxu0 0.0
    %2486 = vmatpush1.xpose.msra.mxu0 0.0
    %2487 = vmatprep.subr.mxu0 0.0
    %2488 = vmatpush1.xpose.msra.mxu0 0.0
    %2489 = vmatprep.subr.mxu0 0.0
    %2490 = vmatpush1.xpose.msra.mxu0 0.0
    %2491 = vmatprep.subr.mxu0 0.0
    %2492 = vmatpush1.xpose.msra.mxu0 0.0
    %2493 = vmatprep.subr.mxu0 0.0
    %2494 = vmatpush1.xpose.msra.mxu0 0.0
    %2495 = vmatprep.subr.mxu0 0.0
    %2496 = vmatpush1.xpose.msra.mxu0 0.0
    %2497 = vmatprep.subr.mxu0 0.0
    %2498 = vmatpush1.xpose.msra.mxu0 %v2467
    %2499 = vmatprep.subr.mxu0 0.0
    %2500 = vmatpush1.xpose.msra.mxu0 %v2465
    %2501 = vmatprep.subr.mxu0 0.0
    %2502 = vmatpush2.xpose.msra.mxu0 0.0
    %2503 = vmatprep.subr.mxu0 0.0
    %2504 = vmatpush2.xpose.msra.mxu0 0.0
    %2505 = vmatprep.subr.mxu0 0.0
    %2506 = vmatpush2.xpose.msra.mxu0 0.0
    %2507 = vmatprep.subr.mxu0 0.0
    %2508 = vmatpush2.xpose.msra.mxu0 0.0
    %2509 = vmatprep.subr.mxu0 0.0
    %2510 = vmatpush2.xpose.msra.mxu0 0.0
    %2511 = vmatprep.subr.mxu0 0.0
    %2512 = vmatpush2.xpose.msra.mxu0 0.0
    %2513 = vmatprep.subr.mxu0 0.0
    %2514 = vmatpush2.xpose.msra.mxu0 0.0
    %2515 = vmatprep.subr.mxu0 0.0
    %2516 = vmatpush2.xpose.msra.mxu0 0.0
    %2517 = vmatprep.subr.mxu0 0.0
    %2518 = vmatpush2.xpose.msra.mxu0 0.0
    %2519 = vmatprep.subr.mxu0 0.0
    %2520 = vmatpush2.xpose.msra.mxu0 0.0
    %2521 = vmatprep.subr.mxu0 0.0
    %2522 = vmatpush2.xpose.msra.mxu0 0.0
    %2523 = vmatprep.subr.mxu0 0.0
    %2524 = vmatpush2.xpose.msra.mxu0 0.0
    %2525 = vmatprep.subr.mxu0 0.0
    %2526 = vmatpush2.xpose.msra.mxu0 0.0
    %2527 = vmatprep.subr.mxu0 0.0
    %2528 = vmatpush2.xpose.msra.mxu0 0.0
    %2529 = vmatprep.subr.mxu0 0.0
    %2530 = vmatpush2.xpose.msra.mxu0 0.0
    %2531 = vmatprep.subr.mxu0 0.0
    %2532 = vmatpush2.xpose.msra.mxu0 0.0
    %2533 = vmatprep.mubr.f32.mxu0 0.0
    %2534 = vmatmul.mubr.f32.gmra.mxu0 %v2463
    %v2535 = vpop.f32.mrf.mxu0
    %v2536 = vadd.f32 0.0, %v2535
    %v2537 = vpop.f32.mrf.mxu0
    %2538 = vdwg.mxu0
    %v2540 = vsel %vm407, %v2003, 0
    %v2543 = vsel %vm407, %v2108, 0
    %v2546 = vsel %vm407, %v2113, 0
    %2548 = vmatprep.subr.mxu0 0.0
    %2549 = vmatpush1.xpose.msra.mxu0 0.0
    %2550 = vmatprep.subr.mxu0 0.0
    %2551 = vmatpush1.xpose.msra.mxu0 0.0
    %2552 = vmatprep.subr.mxu0 0.0
    %2553 = vmatpush1.xpose.msra.mxu0 0.0
    %2554 = vmatprep.subr.mxu0 0.0
    %2555 = vmatpush1.xpose.msra.mxu0 0.0
    %2556 = vmatprep.subr.mxu0 0.0
    %2557 = vmatpush1.xpose.msra.mxu0 0.0
    %2558 = vmatprep.subr.mxu0 0.0
    %2559 = vmatpush1.xpose.msra.mxu0 0.0
    %2560 = vmatprep.subr.mxu0 0.0
    %2561 = vmatpush1.xpose.msra.mxu0 0.0
    %2562 = vmatprep.subr.mxu0 0.0
    %2563 = vmatpush1.xpose.msra.mxu0 0.0
    %2564 = vmatprep.subr.mxu0 0.0
    %2565 = vmatpush1.xpose.msra.mxu0 0.0
    %2566 = vmatprep.subr.mxu0 0.0
    %2567 = vmatpush1.xpose.msra.mxu0 0.0
    %2568 = vmatprep.subr.mxu0 0.0
    %2569 = vmatpush1.xpose.msra.mxu0 0.0
    %2570 = vmatprep.subr.mxu0 0.0
    %2571 = vmatpush1.xpose.msra.mxu0 0.0
    %2572 = vmatprep.subr.mxu0 0.0
    %2573 = vmatpush1.xpose.msra.mxu0 0.0
    %2574 = vmatprep.subr.mxu0 0.0
    %2575 = vmatpush1.xpose.msra.mxu0 0.0
    %2576 = vmatprep.subr.mxu0 0.0
    %2577 = vmatpush1.xpose.msra.mxu0 %v2546
    %2578 = vmatprep.subr.mxu0 0.0
    %2579 = vmatpush1.xpose.msra.mxu0 %v2543
    %2580 = vmatprep.subr.mxu0 0.0
    %2581 = vmatpush2.xpose.msra.mxu0 0.0
    %2582 = vmatprep.subr.mxu0 0.0
    %2583 = vmatpush2.xpose.msra.mxu0 0.0
    %2584 = vmatprep.subr.mxu0 0.0
    %2585 = vmatpush2.xpose.msra.mxu0 0.0
    %2586 = vmatprep.subr.mxu0 0.0
    %2587 = vmatpush2.xpose.msra.mxu0 0.0
    %2588 = vmatprep.subr.mxu0 0.0
    %2589 = vmatpush2.xpose.msra.mxu0 0.0
    %2590 = vmatprep.subr.mxu0 0.0
    %2591 = vmatpush2.xpose.msra.mxu0 0.0
    %2592 = vmatprep.subr.mxu0 0.0
    %2593 = vmatpush2.xpose.msra.mxu0 0.0
    %2594 = vmatprep.subr.mxu0 0.0
    %2595 = vmatpush2.xpose.msra.mxu0 0.0
    %2596 = vmatprep.subr.mxu0 0.0
    %2597 = vmatpush2.xpose.msra.mxu0 0.0
    %2598 = vmatprep.subr.mxu0 0.0
    %2599 = vmatpush2.xpose.msra.mxu0 0.0
    %2600 = vmatprep.subr.mxu0 0.0
    %2601 = vmatpush2.xpose.msra.mxu0 0.0
    %2602 = vmatprep.subr.mxu0 0.0
    %2603 = vmatpush2.xpose.msra.mxu0 0.0
    %2604 = vmatprep.subr.mxu0 0.0
    %2605 = vmatpush2.xpose.msra.mxu0 0.0
    %2606 = vmatprep.subr.mxu0 0.0
    %2607 = vmatpush2.xpose.msra.mxu0 0.0
    %2608 = vmatprep.subr.mxu0 0.0
    %2609 = vmatpush2.xpose.msra.mxu0 0.0
    %2610 = vmatprep.subr.mxu0 0.0
    %2611 = vmatpush2.xpose.msra.mxu0 0.0
    %2612 = vmatprep.mubr.f32.mxu0 0.0
    %2613 = vmatmul.mubr.f32.gmra.mxu0 %v2540
    %v2614 = vpop.f32.mrf.mxu0
    %v2615 = vadd.f32 0.0, %v2614
    %v2616 = vpop.f32.mrf.mxu0
    %2617 = vdwg.mxu0
    %2618 = vrot.lane.b32.xlu0 %v2003, 120
    %v2619 = vpop.permute.xlu0 %2618
    %2620 = vrot.lane.b32.xlu0 %v2108, 120
    %v2621 = vpop.permute.xlu0 %2620
    %2622 = vrot.lane.b32.xlu0 %v2113, 120
    %v2623 = vpop.permute.xlu0 %2622
    %v2624 = vsel %vm407, %v2619, 0
    %v2626 = vsel %vm407, %v2621, 0
    %v2628 = vsel %vm407, %v2623, 0
    %2630 = vmatprep.subr.mxu0 0.0
    %2631 = vmatpush1.xpose.msra.mxu0 0.0
    %2632 = vmatprep.subr.mxu0 0.0
    %2633 = vmatpush1.xpose.msra.mxu0 0.0
    %2634 = vmatprep.subr.mxu0 0.0
    %2635 = vmatpush1.xpose.msra.mxu0 0.0
    %2636 = vmatprep.subr.mxu0 0.0
    %2637 = vmatpush1.xpose.msra.mxu0 0.0
    %2638 = vmatprep.subr.mxu0 0.0
    %2639 = vmatpush1.xpose.msra.mxu0 0.0
    %2640 = vmatprep.subr.mxu0 0.0
    %2641 = vmatpush1.xpose.msra.mxu0 0.0
    %2642 = vmatprep.subr.mxu0 0.0
    %2643 = vmatpush1.xpose.msra.mxu0 0.0
    %2644 = vmatprep.subr.mxu0 0.0
    %2645 = vmatpush1.xpose.msra.mxu0 0.0
    %2646 = vmatprep.subr.mxu0 0.0
    %2647 = vmatpush1.xpose.msra.mxu0 0.0
    %2648 = vmatprep.subr.mxu0 0.0
    %2649 = vmatpush1.xpose.msra.mxu0 0.0
    %2650 = vmatprep.subr.mxu0 0.0
    %2651 = vmatpush1.xpose.msra.mxu0 0.0
    %2652 = vmatprep.subr.mxu0 0.0
    %2653 = vmatpush1.xpose.msra.mxu0 0.0
    %2654 = vmatprep.subr.mxu0 0.0
    %2655 = vmatpush1.xpose.msra.mxu0 0.0
    %2656 = vmatprep.subr.mxu0 0.0
    %2657 = vmatpush1.xpose.msra.mxu0 0.0
    %2658 = vmatprep.subr.mxu0 0.0
    %2659 = vmatpush1.xpose.msra.mxu0 %v2628
    %2660 = vmatprep.subr.mxu0 0.0
    %2661 = vmatpush1.xpose.msra.mxu0 %v2626
    %2662 = vmatprep.subr.mxu0 0.0
    %2663 = vmatpush2.xpose.msra.mxu0 0.0
    %2664 = vmatprep.subr.mxu0 0.0
    %2665 = vmatpush2.xpose.msra.mxu0 0.0
    %2666 = vmatprep.subr.mxu0 0.0
    %2667 = vmatpush2.xpose.msra.mxu0 0.0
    %2668 = vmatprep.subr.mxu0 0.0
    %2669 = vmatpush2.xpose.msra.mxu0 0.0
    %2670 = vmatprep.subr.mxu0 0.0
    %2671 = vmatpush2.xpose.msra.mxu0 0.0
    %2672 = vmatprep.subr.mxu0 0.0
    %2673 = vmatpush2.xpose.msra.mxu0 0.0
    %2674 = vmatprep.subr.mxu0 0.0
    %2675 = vmatpush2.xpose.msra.mxu0 0.0
    %2676 = vmatprep.subr.mxu0 0.0
    %2677 = vmatpush2.xpose.msra.mxu0 0.0
    %2678 = vmatprep.subr.mxu0 0.0
    %2679 = vmatpush2.xpose.msra.mxu0 0.0
    %2680 = vmatprep.subr.mxu0 0.0
    %2681 = vmatpush2.xpose.msra.mxu0 0.0
    %2682 = vmatprep.subr.mxu0 0.0
    %2683 = vmatpush2.xpose.msra.mxu0 0.0
    %2684 = vmatprep.subr.mxu0 0.0
    %2685 = vmatpush2.xpose.msra.mxu0 0.0
    %2686 = vmatprep.subr.mxu0 0.0
    %2687 = vmatpush2.xpose.msra.mxu0 0.0
    %2688 = vmatprep.subr.mxu0 0.0
    %2689 = vmatpush2.xpose.msra.mxu0 0.0
    %2690 = vmatprep.subr.mxu0 0.0
    %2691 = vmatpush2.xpose.msra.mxu0 0.0
    %2692 = vmatprep.subr.mxu0 0.0
    %2693 = vmatpush2.xpose.msra.mxu0 0.0
    %2694 = vmatprep.mubr.f32.mxu0 0.0
    %2695 = vmatmul.mubr.f32.gmra.mxu0 %v2624
    %v2696 = vpop.f32.mrf.mxu0
    %v2697 = vadd.f32 0.0, %v2696
    %v2698 = vpop.f32.mrf.mxu0
    %2699 = vdwg.mxu0
    %2700 = vrot.lane.b32.xlu0 %v2003, 112
    %v2701 = vpop.permute.xlu0 %2700
    %2702 = vrot.lane.b32.xlu0 %v2108, 112
    %v2703 = vpop.permute.xlu0 %2702
    %2704 = vrot.lane.b32.xlu0 %v2113, 112
    %v2705 = vpop.permute.xlu0 %2704
    %v2706 = vsel %vm407, %v2701, 0
    %v2708 = vsel %vm407, %v2703, 0
    %v2710 = vsel %vm407, %v2705, 0
    %2712 = vmatprep.subr.mxu0 0.0
    %2713 = vmatpush1.xpose.msra.mxu0 0.0
    %2714 = vmatprep.subr.mxu0 0.0
    %2715 = vmatpush1.xpose.msra.mxu0 0.0
    %2716 = vmatprep.subr.mxu0 0.0
    %2717 = vmatpush1.xpose.msra.mxu0 0.0
    %2718 = vmatprep.subr.mxu0 0.0
    %2719 = vmatpush1.xpose.msra.mxu0 0.0
    %2720 = vmatprep.subr.mxu0 0.0
    %2721 = vmatpush1.xpose.msra.mxu0 0.0
    %2722 = vmatprep.subr.mxu0 0.0
    %2723 = vmatpush1.xpose.msra.mxu0 0.0
    %2724 = vmatprep.subr.mxu0 0.0
    %2725 = vmatpush1.xpose.msra.mxu0 0.0
    %2726 = vmatprep.subr.mxu0 0.0
    %2727 = vmatpush1.xpose.msra.mxu0 0.0
    %2728 = vmatprep.subr.mxu0 0.0
    %2729 = vmatpush1.xpose.msra.mxu0 0.0
    %2730 = vmatprep.subr.mxu0 0.0
    %2731 = vmatpush1.xpose.msra.mxu0 0.0
    %2732 = vmatprep.subr.mxu0 0.0
    %2733 = vmatpush1.xpose.msra.mxu0 0.0
    %2734 = vmatprep.subr.mxu0 0.0
    %2735 = vmatpush1.xpose.msra.mxu0 0.0
    %2736 = vmatprep.subr.mxu0 0.0
    %2737 = vmatpush1.xpose.msra.mxu0 0.0
    %2738 = vmatprep.subr.mxu0 0.0
    %2739 = vmatpush1.xpose.msra.mxu0 0.0
    %2740 = vmatprep.subr.mxu0 0.0
    %2741 = vmatpush1.xpose.msra.mxu0 %v2710
    %2742 = vmatprep.subr.mxu0 0.0
    %2743 = vmatpush1.xpose.msra.mxu0 %v2708
    %2744 = vmatprep.subr.mxu0 0.0
    %2745 = vmatpush2.xpose.msra.mxu0 0.0
    %2746 = vmatprep.subr.mxu0 0.0
    %2747 = vmatpush2.xpose.msra.mxu0 0.0
    %2748 = vmatprep.subr.mxu0 0.0
    %2749 = vmatpush2.xpose.msra.mxu0 0.0
    %2750 = vmatprep.subr.mxu0 0.0
    %2751 = vmatpush2.xpose.msra.mxu0 0.0
    %2752 = vmatprep.subr.mxu0 0.0
    %2753 = vmatpush2.xpose.msra.mxu0 0.0
    %2754 = vmatprep.subr.mxu0 0.0
    %2755 = vmatpush2.xpose.msra.mxu0 0.0
    %2756 = vmatprep.subr.mxu0 0.0
    %2757 = vmatpush2.xpose.msra.mxu0 0.0
    %2758 = vmatprep.subr.mxu0 0.0
    %2759 = vmatpush2.xpose.msra.mxu0 0.0
    %2760 = vmatprep.subr.mxu0 0.0
    %2761 = vmatpush2.xpose.msra.mxu0 0.0
    %2762 = vmatprep.subr.mxu0 0.0
    %2763 = vmatpush2.xpose.msra.mxu0 0.0
    %2764 = vmatprep.subr.mxu0 0.0
    %2765 = vmatpush2.xpose.msra.mxu0 0.0
    %2766 = vmatprep.subr.mxu0 0.0
    %2767 = vmatpush2.xpose.msra.mxu0 0.0
    %2768 = vmatprep.subr.mxu0 0.0
    %2769 = vmatpush2.xpose.msra.mxu0 0.0
    %2770 = vmatprep.subr.mxu0 0.0
    %2771 = vmatpush2.xpose.msra.mxu0 0.0
    %2772 = vmatprep.subr.mxu0 0.0
    %2773 = vmatpush2.xpose.msra.mxu0 0.0
    %2774 = vmatprep.subr.mxu0 0.0
    %2775 = vmatpush2.xpose.msra.mxu0 0.0
    %2776 = vmatprep.mubr.f32.mxu0 0.0
    %2777 = vmatmul.mubr.f32.gmra.mxu0 %v2706
    %v2778 = vpop.f32.mrf.mxu0
    %v2779 = vadd.f32 0.0, %v2778
    %v2780 = vpop.f32.mrf.mxu0
    %2781 = vdwg.mxu0
    %2782 = vrot.lane.b32.xlu0 %v2003, 104
    %v2783 = vpop.permute.xlu0 %2782
    %2784 = vrot.lane.b32.xlu0 %v2108, 104
    %v2785 = vpop.permute.xlu0 %2784
    %2786 = vrot.lane.b32.xlu0 %v2113, 104
    %v2787 = vpop.permute.xlu0 %2786
    %v2788 = vsel %vm407, %v2783, 0
    %v2790 = vsel %vm407, %v2785, 0
    %v2792 = vsel %vm407, %v2787, 0
    %2794 = vmatprep.subr.mxu0 0.0
    %2795 = vmatpush1.xpose.msra.mxu0 0.0
    %2796 = vmatprep.subr.mxu0 0.0
    %2797 = vmatpush1.xpose.msra.mxu0 0.0
    %2798 = vmatprep.subr.mxu0 0.0
    %2799 = vmatpush1.xpose.msra.mxu0 0.0
    %2800 = vmatprep.subr.mxu0 0.0
    %2801 = vmatpush1.xpose.msra.mxu0 0.0
    %2802 = vmatprep.subr.mxu0 0.0
    %2803 = vmatpush1.xpose.msra.mxu0 0.0
    %2804 = vmatprep.subr.mxu0 0.0
    %2805 = vmatpush1.xpose.msra.mxu0 0.0
    %2806 = vmatprep.subr.mxu0 0.0
    %2807 = vmatpush1.xpose.msra.mxu0 0.0
    %2808 = vmatprep.subr.mxu0 0.0
    %2809 = vmatpush1.xpose.msra.mxu0 0.0
    %2810 = vmatprep.subr.mxu0 0.0
    %2811 = vmatpush1.xpose.msra.mxu0 0.0
    %2812 = vmatprep.subr.mxu0 0.0
    %2813 = vmatpush1.xpose.msra.mxu0 0.0
    %2814 = vmatprep.subr.mxu0 0.0
    %2815 = vmatpush1.xpose.msra.mxu0 0.0
    %2816 = vmatprep.subr.mxu0 0.0
    %2817 = vmatpush1.xpose.msra.mxu0 0.0
    %2818 = vmatprep.subr.mxu0 0.0
    %2819 = vmatpush1.xpose.msra.mxu0 0.0
    %2820 = vmatprep.subr.mxu0 0.0
    %2821 = vmatpush1.xpose.msra.mxu0 0.0
    %2822 = vmatprep.subr.mxu0 0.0
    %2823 = vmatpush1.xpose.msra.mxu0 %v2792
    %2824 = vmatprep.subr.mxu0 0.0
    %2825 = vmatpush1.xpose.msra.mxu0 %v2790
    %2826 = vmatprep.subr.mxu0 0.0
    %2827 = vmatpush2.xpose.msra.mxu0 0.0
    %2828 = vmatprep.subr.mxu0 0.0
    %2829 = vmatpush2.xpose.msra.mxu0 0.0
    %2830 = vmatprep.subr.mxu0 0.0
    %2831 = vmatpush2.xpose.msra.mxu0 0.0
    %2832 = vmatprep.subr.mxu0 0.0
    %2833 = vmatpush2.xpose.msra.mxu0 0.0
    %2834 = vmatprep.subr.mxu0 0.0
    %2835 = vmatpush2.xpose.msra.mxu0 0.0
    %2836 = vmatprep.subr.mxu0 0.0
    %2837 = vmatpush2.xpose.msra.mxu0 0.0
    %2838 = vmatprep.subr.mxu0 0.0
    %2839 = vmatpush2.xpose.msra.mxu0 0.0
    %2840 = vmatprep.subr.mxu0 0.0
    %2841 = vmatpush2.xpose.msra.mxu0 0.0
    %2842 = vmatprep.subr.mxu0 0.0
    %2843 = vmatpush2.xpose.msra.mxu0 0.0
    %2844 = vmatprep.subr.mxu0 0.0
    %2845 = vmatpush2.xpose.msra.mxu0 0.0
    %2846 = vmatprep.subr.mxu0 0.0
    %2847 = vmatpush2.xpose.msra.mxu0 0.0
    %2848 = vmatprep.subr.mxu0 0.0
    %2849 = vmatpush2.xpose.msra.mxu0 0.0
    %2850 = vmatprep.subr.mxu0 0.0
    %2851 = vmatpush2.xpose.msra.mxu0 0.0
    %2852 = vmatprep.subr.mxu0 0.0
    %2853 = vmatpush2.xpose.msra.mxu0 0.0
    %2854 = vmatprep.subr.mxu0 0.0
    %2855 = vmatpush2.xpose.msra.mxu0 0.0
    %2856 = vmatprep.subr.mxu0 0.0
    %2857 = vmatpush2.xpose.msra.mxu0 0.0
    %2858 = vmatprep.mubr.f32.mxu0 0.0
    %2859 = vmatmul.mubr.f32.gmra.mxu0 %v2788
    %v2860 = vpop.f32.mrf.mxu0
    %v2861 = vadd.f32 0.0, %v2860
    %v2862 = vpop.f32.mrf.mxu0
    %2863 = vdwg.mxu0
    %v2864 = vmul.f32 %v2290, 0.35355338
    %v2865 = vmul.f32 %v2372, 0.35355338
    %v2866 = vmul.f32 %v2454, 0.35355338
    %v2867 = vmul.f32 %v2536, 0.35355338
    %v2868 = vmul.f32 %v2615, 0.35355338
    %v2869 = vmul.f32 %v2697, 0.35355338
    %v2870 = vmul.f32 %v2779, 0.35355338
    %v2871 = vmul.f32 %v2861, 0.35355338
    %v2872 = vadd.f32 %v2864, %v77
    %v2873 = vadd.f32 %v2865, %v78
    %v2874 = vadd.f32 %v2866, %v79
    %v2875 = vadd.f32 %v2867, %v80
    %v2876 = vadd.f32 %v2868, %v81
    %v2877 = vadd.f32 %v2869, %v82
    %v2878 = vadd.f32 %v2870, %v83
    %v2879 = vadd.f32 %v2871, %v84
    %v2880 = vsel %vm1447, %v2872, -inf
    %2881 = vmax.xlane.f32.xlu0 %v2880
    %v2882 = vpop.xlane.xlu0 %2881
    %v2883 = vsel %vm1447, %v2873, -inf
    %2884 = vmax.xlane.f32.xlu0 %v2883
    %v2885 = vpop.xlane.xlu0 %2884
    %v2886 = vsel %vm1447, %v2874, -inf
    %2887 = vmax.xlane.f32.xlu0 %v2886
    %v2888 = vpop.xlane.xlu0 %2887
    %v2889 = vsel %vm1447, %v2875, -inf
    %2890 = vmax.xlane.f32.xlu0 %v2889
    %v2891 = vpop.xlane.xlu0 %2890
    %v2892 = vsel %vm1447, %v2876, -inf
    %2893 = vmax.xlane.f32.xlu0 %v2892
    %v2894 = vpop.xlane.xlu0 %2893
    %v2895 = vsel %vm1447, %v2877, -inf
    %2896 = vmax.xlane.f32.xlu0 %v2895
    %v2897 = vpop.xlane.xlu0 %2896
    %v2898 = vsel %vm1447, %v2878, -inf
    %2899 = vmax.xlane.f32.xlu0 %v2898
    %v2900 = vpop.xlane.xlu0 %2899
    %v2901 = vsel %vm1447, %v2879, -inf
    %2902 = vmax.xlane.f32.xlu0 %v2901
    %v2903 = vpop.xlane.xlu0 %2902
    %v2904 = vsub.f32 %v2872, %v2882
    %v2905 = vsub.f32 %v2873, %v2885
    %v2906 = vsub.f32 %v2874, %v2888
    %v2907 = vsub.f32 %v2875, %v2891
    %v2908 = vsub.f32 %v2876, %v2894
    %v2909 = vsub.f32 %v2877, %v2897
    %v2910 = vsub.f32 %v2878, %v2900
    %v2911 = vsub.f32 %v2879, %v2903
    %v2912 = vmul.f32 %v2904, 1.442695
    %v2913 = vpow.pop %v2912
    %v2914 = vmul.f32 %v2905, 1.442695
    %v2915 = vpow.pop %v2914
    %v2916 = vmul.f32 %v2906, 1.442695
    %v2917 = vpow.pop %v2916
    %v2918 = vmul.f32 %v2907, 1.442695
    %v2919 = vpow.pop %v2918
    %v2920 = vmul.f32 %v2908, 1.442695
    %v2921 = vpow.pop %v2920
    %v2922 = vmul.f32 %v2909, 1.442695
    %v2923 = vpow.pop %v2922
    %v2924 = vmul.f32 %v2910, 1.442695
    %v2925 = vpow.pop %v2924
    %v2926 = vmul.f32 %v2911, 1.442695
    %v2927 = vpow.pop %v2926
    %v2928 = vsel %vm1447, %v2913, 0.0
    %2929 = vadd.xlane.f32.xlu0 %v2928
    %v2930 = vpop.xlane.xlu0 %2929
    %v2931 = vsel %vm1447, %v2915, 0.0
    %2932 = vadd.xlane.f32.xlu0 %v2931
    %v2933 = vpop.xlane.xlu0 %2932
    %v2934 = vsel %vm1447, %v2917, 0.0
    %2935 = vadd.xlane.f32.xlu0 %v2934
    %v2936 = vpop.xlane.xlu0 %2935
    %v2937 = vsel %vm1447, %v2919, 0.0
    %2938 = vadd.xlane.f32.xlu0 %v2937
    %v2939 = vpop.xlane.xlu0 %2938
    %v2940 = vsel %vm1447, %v2921, 0.0
    %2941 = vadd.xlane.f32.xlu0 %v2940
    %v2942 = vpop.xlane.xlu0 %2941
    %v2943 = vsel %vm1447, %v2923, 0.0
    %2944 = vadd.xlane.f32.xlu0 %v2943
    %v2945 = vpop.xlane.xlu0 %2944
    %v2946 = vsel %vm1447, %v2925, 0.0
    %2947 = vadd.xlane.f32.xlu0 %v2946
    %v2948 = vpop.xlane.xlu0 %2947
    %v2949 = vsel %vm1447, %v2927, 0.0
    %2950 = vadd.xlane.f32.xlu0 %v2949
    %v2951 = vpop.xlane.xlu0 %2950
    %v2952 = vrcp.pop %v2930
    %v2953 = vmul.f32 %v2913, %v2952
    %v2954 = vrcp.pop %v2933
    %v2955 = vmul.f32 %v2915, %v2954
    %v2956 = vrcp.pop %v2936
    %v2957 = vmul.f32 %v2917, %v2956
    %v2958 = vrcp.pop %v2939
    %v2959 = vmul.f32 %v2919, %v2958
    %v2960 = vrcp.pop %v2942
    %v2961 = vmul.f32 %v2921, %v2960
    %v2962 = vrcp.pop %v2945
    %v2963 = vmul.f32 %v2923, %v2962
    %v2964 = vrcp.pop %v2948
    %v2965 = vmul.f32 %v2925, %v2964
    %v2966 = vrcp.pop %v2951
    %v2967 = vmul.f32 %v2927, %v2966
    %v2969 = vsel %vm1447, %v2953, 0
    %2971 = vmatprep.subr.mxu0 0.0
    %2972 = vmatpush1.msra.mxu0 0.0
    %2973 = vmatprep.subr.mxu0 0.0
    %2974 = vmatpush1.msra.mxu0 0.0
    %2975 = vmatprep.subr.mxu0 0.0
    %2976 = vmatpush1.msra.mxu0 0.0
    %2977 = vmatprep.subr.mxu0 0.0
    %2978 = vmatpush1.msra.mxu0 0.0
    %2979 = vmatprep.subr.mxu0 0.0
    %2980 = vmatpush1.msra.mxu0 0.0
    %2981 = vmatprep.subr.mxu0 0.0
    %2982 = vmatpush1.msra.mxu0 0.0
    %2983 = vmatprep.subr.mxu0 0.0
    %2984 = vmatpush1.msra.mxu0 0.0
    %2985 = vmatprep.subr.mxu0 0.0
    %2986 = vmatpush1.msra.mxu0 0.0
    %2987 = vmatprep.subr.mxu0 0.0
    %2988 = vmatpush1.msra.mxu0 0.0
    %2989 = vmatprep.subr.mxu0 0.0
    %2990 = vmatpush1.msra.mxu0 0.0
    %2991 = vmatprep.subr.mxu0 0.0
    %2992 = vmatpush1.msra.mxu0 0.0
    %2993 = vmatprep.subr.mxu0 0.0
    %2994 = vmatpush1.msra.mxu0 0.0
    %2995 = vmatprep.subr.mxu0 0.0
    %2996 = vmatpush1.msra.mxu0 0.0
    %2997 = vmatprep.subr.mxu0 0.0
    %2998 = vmatpush1.msra.mxu0 0.0
    %2999 = vmatprep.subr.mxu0 0.0
    %3000 = vmatpush1.msra.mxu0 %v2201
    %3001 = vmatprep.subr.mxu0 0.0
    %3002 = vmatpush1.msra.mxu0 %v2196
    %3003 = vmatprep.subr.mxu0 0.0
    %3004 = vmatpush2.msra.mxu0 0.0
    %3005 = vmatprep.subr.mxu0 0.0
    %3006 = vmatpush2.msra.mxu0 0.0
    %3007 = vmatprep.subr.mxu0 0.0
    %3008 = vmatpush2.msra.mxu0 0.0
    %3009 = vmatprep.subr.mxu0 0.0
    %3010 = vmatpush2.msra.mxu0 0.0
    %3011 = vmatprep.subr.mxu0 0.0
    %3012 = vmatpush2.msra.mxu0 0.0
    %3013 = vmatprep.subr.mxu0 0.0
    %3014 = vmatpush2.msra.mxu0 0.0
    %3015 = vmatprep.subr.mxu0 0.0
    %3016 = vmatpush2.msra.mxu0 0.0
    %3017 = vmatprep.subr.mxu0 0.0
    %3018 = vmatpush2.msra.mxu0 0.0
    %3019 = vmatprep.subr.mxu0 0.0
    %3020 = vmatpush2.msra.mxu0 0.0
    %3021 = vmatprep.subr.mxu0 0.0
    %3022 = vmatpush2.msra.mxu0 0.0
    %3023 = vmatprep.subr.mxu0 0.0
    %3024 = vmatpush2.msra.mxu0 0.0
    %3025 = vmatprep.subr.mxu0 0.0
    %3026 = vmatpush2.msra.mxu0 0.0
    %3027 = vmatprep.subr.mxu0 0.0
    %3028 = vmatpush2.msra.mxu0 0.0
    %3029 = vmatprep.subr.mxu0 0.0
    %3030 = vmatpush2.msra.mxu0 0.0
    %3031 = vmatprep.subr.mxu0 0.0
    %3032 = vmatpush2.msra.mxu0 0.0
    %3033 = vmatprep.subr.mxu0 0.0
    %3034 = vmatpush2.msra.mxu0 0.0
    %3035 = vmatprep.mubr.f32.mxu0 0.0
    %3036 = vmatmul.mubr.f32.gmra.mxu0 %v2969
    %v3037 = vpop.f32.mrf.mxu0
    %v3038 = vadd.f32 0.0, %v3037
    %v3039 = vpop.f32.mrf.mxu0
    %3040 = vdwg.mxu0
    %3043 = vrot.lane.b32.xlu0 %v2196, 120
    %v3044 = vpop.permute.xlu0 %3043
    %3045 = vrot.lane.b32.xlu0 %v2201, 120
    %v3046 = vpop.permute.xlu0 %3045
    %v3050 = vsel %vm1447, %v2955, 0
    %3052 = vmatprep.subr.mxu0 0.0
    %3053 = vmatpush1.msra.mxu0 0.0
    %3054 = vmatprep.subr.mxu0 0.0
    %3055 = vmatpush1.msra.mxu0 0.0
    %3056 = vmatprep.subr.mxu0 0.0
    %3057 = vmatpush1.msra.mxu0 0.0
    %3058 = vmatprep.subr.mxu0 0.0
    %3059 = vmatpush1.msra.mxu0 0.0
    %3060 = vmatprep.subr.mxu0 0.0
    %3061 = vmatpush1.msra.mxu0 0.0
    %3062 = vmatprep.subr.mxu0 0.0
    %3063 = vmatpush1.msra.mxu0 0.0
    %3064 = vmatprep.subr.mxu0 0.0
    %3065 = vmatpush1.msra.mxu0 0.0
    %3066 = vmatprep.subr.mxu0 0.0
    %3067 = vmatpush1.msra.mxu0 0.0
    %3068 = vmatprep.subr.mxu0 0.0
    %3069 = vmatpush1.msra.mxu0 0.0
    %3070 = vmatprep.subr.mxu0 0.0
    %3071 = vmatpush1.msra.mxu0 0.0
    %3072 = vmatprep.subr.mxu0 0.0
    %3073 = vmatpush1.msra.mxu0 0.0
    %3074 = vmatprep.subr.mxu0 0.0
    %3075 = vmatpush1.msra.mxu0 0.0
    %3076 = vmatprep.subr.mxu0 0.0
    %3077 = vmatpush1.msra.mxu0 0.0
    %3078 = vmatprep.subr.mxu0 0.0
    %3079 = vmatpush1.msra.mxu0 0.0
    %3080 = vmatprep.subr.mxu0 0.0
    %3081 = vmatpush1.msra.mxu0 %v3046
    %3082 = vmatprep.subr.mxu0 0.0
    %3083 = vmatpush1.msra.mxu0 %v3044
    %3084 = vmatprep.subr.mxu0 0.0
    %3085 = vmatpush2.msra.mxu0 0.0
    %3086 = vmatprep.subr.mxu0 0.0
    %3087 = vmatpush2.msra.mxu0 0.0
    %3088 = vmatprep.subr.mxu0 0.0
    %3089 = vmatpush2.msra.mxu0 0.0
    %3090 = vmatprep.subr.mxu0 0.0
    %3091 = vmatpush2.msra.mxu0 0.0
    %3092 = vmatprep.subr.mxu0 0.0
    %3093 = vmatpush2.msra.mxu0 0.0
    %3094 = vmatprep.subr.mxu0 0.0
    %3095 = vmatpush2.msra.mxu0 0.0
    %3096 = vmatprep.subr.mxu0 0.0
    %3097 = vmatpush2.msra.mxu0 0.0
    %3098 = vmatprep.subr.mxu0 0.0
    %3099 = vmatpush2.msra.mxu0 0.0
    %3100 = vmatprep.subr.mxu0 0.0
    %3101 = vmatpush2.msra.mxu0 0.0
    %3102 = vmatprep.subr.mxu0 0.0
    %3103 = vmatpush2.msra.mxu0 0.0
    %3104 = vmatprep.subr.mxu0 0.0
    %3105 = vmatpush2.msra.mxu0 0.0
    %3106 = vmatprep.subr.mxu0 0.0
    %3107 = vmatpush2.msra.mxu0 0.0
    %3108 = vmatprep.subr.mxu0 0.0
    %3109 = vmatpush2.msra.mxu0 0.0
    %3110 = vmatprep.subr.mxu0 0.0
    %3111 = vmatpush2.msra.mxu0 0.0
    %3112 = vmatprep.subr.mxu0 0.0
    %3113 = vmatpush2.msra.mxu0 0.0
    %3114 = vmatprep.subr.mxu0 0.0
    %3115 = vmatpush2.msra.mxu0 0.0
    %3116 = vmatprep.mubr.f32.mxu0 0.0
    %3117 = vmatmul.mubr.f32.gmra.mxu0 %v3050
    %v3118 = vpop.f32.mrf.mxu0
    %v3119 = vadd.f32 0.0, %v3118
    %v3120 = vpop.f32.mrf.mxu0
    %3121 = vdwg.mxu0
    %3122 = vrot.lane.b32.xlu0 %v2196, 112
    %v3123 = vpop.permute.xlu0 %3122
    %3124 = vrot.lane.b32.xlu0 %v2201, 112
    %v3125 = vpop.permute.xlu0 %3124
    %v3129 = vsel %vm1447, %v2957, 0
    %3131 = vmatprep.subr.mxu0 0.0
    %3132 = vmatpush1.msra.mxu0 0.0
    %3133 = vmatprep.subr.mxu0 0.0
    %3134 = vmatpush1.msra.mxu0 0.0
    %3135 = vmatprep.subr.mxu0 0.0
    %3136 = vmatpush1.msra.mxu0 0.0
    %3137 = vmatprep.subr.mxu0 0.0
    %3138 = vmatpush1.msra.mxu0 0.0
    %3139 = vmatprep.subr.mxu0 0.0
    %3140 = vmatpush1.msra.mxu0 0.0
    %3141 = vmatprep.subr.mxu0 0.0
    %3142 = vmatpush1.msra.mxu0 0.0
    %3143 = vmatprep.subr.mxu0 0.0
    %3144 = vmatpush1.msra.mxu0 0.0
    %3145 = vmatprep.subr.mxu0 0.0
    %3146 = vmatpush1.msra.mxu0 0.0
    %3147 = vmatprep.subr.mxu0 0.0
    %3148 = vmatpush1.msra.mxu0 0.0
    %3149 = vmatprep.subr.mxu0 0.0
    %3150 = vmatpush1.msra.mxu0 0.0
    %3151 = vmatprep.subr.mxu0 0.0
    %3152 = vmatpush1.msra.mxu0 0.0
    %3153 = vmatprep.subr.mxu0 0.0
    %3154 = vmatpush1.msra.mxu0 0.0
    %3155 = vmatprep.subr.mxu0 0.0
    %3156 = vmatpush1.msra.mxu0 0.0
    %3157 = vmatprep.subr.mxu0 0.0
    %3158 = vmatpush1.msra.mxu0 0.0
    %3159 = vmatprep.subr.mxu0 0.0
    %3160 = vmatpush1.msra.mxu0 %v3125
    %3161 = vmatprep.subr.mxu0 0.0
    %3162 = vmatpush1.msra.mxu0 %v3123
    %3163 = vmatprep.subr.mxu0 0.0
    %3164 = vmatpush2.msra.mxu0 0.0
    %3165 = vmatprep.subr.mxu0 0.0
    %3166 = vmatpush2.msra.mxu0 0.0
    %3167 = vmatprep.subr.mxu0 0.0
    %3168 = vmatpush2.msra.mxu0 0.0
    %3169 = vmatprep.subr.mxu0 0.0
    %3170 = vmatpush2.msra.mxu0 0.0
    %3171 = vmatprep.subr.mxu0 0.0
    %3172 = vmatpush2.msra.mxu0 0.0
    %3173 = vmatprep.subr.mxu0 0.0
    %3174 = vmatpush2.msra.mxu0 0.0
    %3175 = vmatprep.subr.mxu0 0.0
    %3176 = vmatpush2.msra.mxu0 0.0
    %3177 = vmatprep.subr.mxu0 0.0
    %3178 = vmatpush2.msra.mxu0 0.0
    %3179 = vmatprep.subr.mxu0 0.0
    %3180 = vmatpush2.msra.mxu0 0.0
    %3181 = vmatprep.subr.mxu0 0.0
    %3182 = vmatpush2.msra.mxu0 0.0
    %3183 = vmatprep.subr.mxu0 0.0
    %3184 = vmatpush2.msra.mxu0 0.0
    %3185 = vmatprep.subr.mxu0 0.0
    %3186 = vmatpush2.msra.mxu0 0.0
    %3187 = vmatprep.subr.mxu0 0.0
    %3188 = vmatpush2.msra.mxu0 0.0
    %3189 = vmatprep.subr.mxu0 0.0
    %3190 = vmatpush2.msra.mxu0 0.0
    %3191 = vmatprep.subr.mxu0 0.0
    %3192 = vmatpush2.msra.mxu0 0.0
    %3193 = vmatprep.subr.mxu0 0.0
    %3194 = vmatpush2.msra.mxu0 0.0
    %3195 = vmatprep.mubr.f32.mxu0 0.0
    %3196 = vmatmul.mubr.f32.gmra.mxu0 %v3129
    %v3197 = vpop.f32.mrf.mxu0
    %v3198 = vadd.f32 0.0, %v3197
    %v3199 = vpop.f32.mrf.mxu0
    %3200 = vdwg.mxu0
    %3201 = vrot.lane.b32.xlu0 %v2196, 104
    %v3202 = vpop.permute.xlu0 %3201
    %3203 = vrot.lane.b32.xlu0 %v2201, 104
    %v3204 = vpop.permute.xlu0 %3203
    %v3208 = vsel %vm1447, %v2959, 0
    %3210 = vmatprep.subr.mxu0 0.0
    %3211 = vmatpush1.msra.mxu0 0.0
    %3212 = vmatprep.subr.mxu0 0.0
    %3213 = vmatpush1.msra.mxu0 0.0
    %3214 = vmatprep.subr.mxu0 0.0
    %3215 = vmatpush1.msra.mxu0 0.0
    %3216 = vmatprep.subr.mxu0 0.0
    %3217 = vmatpush1.msra.mxu0 0.0
    %3218 = vmatprep.subr.mxu0 0.0
    %3219 = vmatpush1.msra.mxu0 0.0
    %3220 = vmatprep.subr.mxu0 0.0
    %3221 = vmatpush1.msra.mxu0 0.0
    %3222 = vmatprep.subr.mxu0 0.0
    %3223 = vmatpush1.msra.mxu0 0.0
    %3224 = vmatprep.subr.mxu0 0.0
    %3225 = vmatpush1.msra.mxu0 0.0
    %3226 = vmatprep.subr.mxu0 0.0
    %3227 = vmatpush1.msra.mxu0 0.0
    %3228 = vmatprep.subr.mxu0 0.0
    %3229 = vmatpush1.msra.mxu0 0.0
    %3230 = vmatprep.subr.mxu0 0.0
    %3231 = vmatpush1.msra.mxu0 0.0
    %3232 = vmatprep.subr.mxu0 0.0
    %3233 = vmatpush1.msra.mxu0 0.0
    %3234 = vmatprep.subr.mxu0 0.0
    %3235 = vmatpush1.msra.mxu0 0.0
    %3236 = vmatprep.subr.mxu0 0.0
    %3237 = vmatpush1.msra.mxu0 0.0
    %3238 = vmatprep.subr.mxu0 0.0
    %3239 = vmatpush1.msra.mxu0 %v3204
    %3240 = vmatprep.subr.mxu0 0.0
    %3241 = vmatpush1.msra.mxu0 %v3202
    %3242 = vmatprep.subr.mxu0 0.0
    %3243 = vmatpush2.msra.mxu0 0.0
    %3244 = vmatprep.subr.mxu0 0.0
    %3245 = vmatpush2.msra.mxu0 0.0
    %3246 = vmatprep.subr.mxu0 0.0
    %3247 = vmatpush2.msra.mxu0 0.0
    %3248 = vmatprep.subr.mxu0 0.0
    %3249 = vmatpush2.msra.mxu0 0.0
    %3250 = vmatprep.subr.mxu0 0.0
    %3251 = vmatpush2.msra.mxu0 0.0
    %3252 = vmatprep.subr.mxu0 0.0
    %3253 = vmatpush2.msra.mxu0 0.0
    %3254 = vmatprep.subr.mxu0 0.0
    %3255 = vmatpush2.msra.mxu0 0.0
    %3256 = vmatprep.subr.mxu0 0.0
    %3257 = vmatpush2.msra.mxu0 0.0
    %3258 = vmatprep.subr.mxu0 0.0
    %3259 = vmatpush2.msra.mxu0 0.0
    %3260 = vmatprep.subr.mxu0 0.0
    %3261 = vmatpush2.msra.mxu0 0.0
    %3262 = vmatprep.subr.mxu0 0.0
    %3263 = vmatpush2.msra.mxu0 0.0
    %3264 = vmatprep.subr.mxu0 0.0
    %3265 = vmatpush2.msra.mxu0 0.0
    %3266 = vmatprep.subr.mxu0 0.0
    %3267 = vmatpush2.msra.mxu0 0.0
    %3268 = vmatprep.subr.mxu0 0.0
    %3269 = vmatpush2.msra.mxu0 0.0
    %3270 = vmatprep.subr.mxu0 0.0
    %3271 = vmatpush2.msra.mxu0 0.0
    %3272 = vmatprep.subr.mxu0 0.0
    %3273 = vmatpush2.msra.mxu0 0.0
    %3274 = vmatprep.mubr.f32.mxu0 0.0
    %3275 = vmatmul.mubr.f32.gmra.mxu0 %v3208
    %v3276 = vpop.f32.mrf.mxu0
    %v3277 = vadd.f32 0.0, %v3276
    %v3278 = vpop.f32.mrf.mxu0
    %3279 = vdwg.mxu0
    %3281 = vrot.lane.b32.xlu0 %v3119, 8
    %v3282 = vpop.permute.xlu0 %3281
    %3285 = vrot.lane.b32.xlu0 %v3198, 16
    %v3286 = vpop.permute.xlu0 %3285
    %3289 = vrot.lane.b32.xlu0 %v3277, 24
    %v3290 = vpop.permute.xlu0 %3289
    %v3292 = vsel %vm407, %v3038, %v3282
    %v3293 = vsel %vm1447, %v3292, %v3286
    %v3294 = vsel %vm1449, %v3293, %v3290
    %v3296 = vsel %vm1447, %v2961, 0
    %3298 = vmatprep.subr.mxu0 0.0
    %3299 = vmatpush1.msra.mxu0 0.0
    %3300 = vmatprep.subr.mxu0 0.0
    %3301 = vmatpush1.msra.mxu0 0.0
    %3302 = vmatprep.subr.mxu0 0.0
    %3303 = vmatpush1.msra.mxu0 0.0
    %3304 = vmatprep.subr.mxu0 0.0
    %3305 = vmatpush1.msra.mxu0 0.0
    %3306 = vmatprep.subr.mxu0 0.0
    %3307 = vmatpush1.msra.mxu0 0.0
    %3308 = vmatprep.subr.mxu0 0.0
    %3309 = vmatpush1.msra.mxu0 0.0
    %3310 = vmatprep.subr.mxu0 0.0
    %3311 = vmatpush1.msra.mxu0 0.0
    %3312 = vmatprep.subr.mxu0 0.0
    %3313 = vmatpush1.msra.mxu0 0.0
    %3314 = vmatprep.subr.mxu0 0.0
    %3315 = vmatpush1.msra.mxu0 0.0
    %3316 = vmatprep.subr.mxu0 0.0
    %3317 = vmatpush1.msra.mxu0 0.0
    %3318 = vmatprep.subr.mxu0 0.0
    %3319 = vmatpush1.msra.mxu0 0.0
    %3320 = vmatprep.subr.mxu0 0.0
    %3321 = vmatpush1.msra.mxu0 0.0
    %3322 = vmatprep.subr.mxu0 0.0
    %3323 = vmatpush1.msra.mxu0 0.0
    %3324 = vmatprep.subr.mxu0 0.0
    %3325 = vmatpush1.msra.mxu0 0.0
    %3326 = vmatprep.subr.mxu0 0.0
    %3327 = vmatpush1.msra.mxu0 %v2211
    %3328 = vmatprep.subr.mxu0 0.0
    %3329 = vmatpush1.msra.mxu0 %v2206
    %3330 = vmatprep.subr.mxu0 0.0
    %3331 = vmatpush2.msra.mxu0 0.0
    %3332 = vmatprep.subr.mxu0 0.0
    %3333 = vmatpush2.msra.mxu0 0.0
    %3334 = vmatprep.subr.mxu0 0.0
    %3335 = vmatpush2.msra.mxu0 0.0
    %3336 = vmatprep.subr.mxu0 0.0
    %3337 = vmatpush2.msra.mxu0 0.0
    %3338 = vmatprep.subr.mxu0 0.0
    %3339 = vmatpush2.msra.mxu0 0.0
    %3340 = vmatprep.subr.mxu0 0.0
    %3341 = vmatpush2.msra.mxu0 0.0
    %3342 = vmatprep.subr.mxu0 0.0
    %3343 = vmatpush2.msra.mxu0 0.0
    %3344 = vmatprep.subr.mxu0 0.0
    %3345 = vmatpush2.msra.mxu0 0.0
    %3346 = vmatprep.subr.mxu0 0.0
    %3347 = vmatpush2.msra.mxu0 0.0
    %3348 = vmatprep.subr.mxu0 0.0
    %3349 = vmatpush2.msra.mxu0 0.0
    %3350 = vmatprep.subr.mxu0 0.0
    %3351 = vmatpush2.msra.mxu0 0.0
    %3352 = vmatprep.subr.mxu0 0.0
    %3353 = vmatpush2.msra.mxu0 0.0
    %3354 = vmatprep.subr.mxu0 0.0
    %3355 = vmatpush2.msra.mxu0 0.0
    %3356 = vmatprep.subr.mxu0 0.0
    %3357 = vmatpush2.msra.mxu0 0.0
    %3358 = vmatprep.subr.mxu0 0.0
    %3359 = vmatpush2.msra.mxu0 0.0
    %3360 = vmatprep.subr.mxu0 0.0
    %3361 = vmatpush2.msra.mxu0 0.0
    %3362 = vmatprep.mubr.f32.mxu0 0.0
    %3363 = vmatmul.mubr.f32.gmra.mxu0 %v3296
    %v3364 = vpop.f32.mrf.mxu0
    %v3365 = vadd.f32 0.0, %v3364
    %v3366 = vpop.f32.mrf.mxu0
    %3367 = vdwg.mxu0
    %3370 = vrot.lane.b32.xlu0 %v2206, 120
    %v3371 = vpop.permute.xlu0 %3370
    %3372 = vrot.lane.b32.xlu0 %v2211, 120
    %v3373 = vpop.permute.xlu0 %3372
    %v3377 = vsel %vm1447, %v2963, 0
    %3379 = vmatprep.subr.mxu0 0.0
    %3380 = vmatpush1.msra.mxu0 0.0
    %3381 = vmatprep.subr.mxu0 0.0
    %3382 = vmatpush1.msra.mxu0 0.0
    %3383 = vmatprep.subr.mxu0 0.0
    %3384 = vmatpush1.msra.mxu0 0.0
    %3385 = vmatprep.subr.mxu0 0.0
    %3386 = vmatpush1.msra.mxu0 0.0
    %3387 = vmatprep.subr.mxu0 0.0
    %3388 = vmatpush1.msra.mxu0 0.0
    %3389 = vmatprep.subr.mxu0 0.0
    %3390 = vmatpush1.msra.mxu0 0.0
    %3391 = vmatprep.subr.mxu0 0.0
    %3392 = vmatpush1.msra.mxu0 0.0
    %3393 = vmatprep.subr.mxu0 0.0
    %3394 = vmatpush1.msra.mxu0 0.0
    %3395 = vmatprep.subr.mxu0 0.0
    %3396 = vmatpush1.msra.mxu0 0.0
    %3397 = vmatprep.subr.mxu0 0.0
    %3398 = vmatpush1.msra.mxu0 0.0
    %3399 = vmatprep.subr.mxu0 0.0
    %3400 = vmatpush1.msra.mxu0 0.0
    %3401 = vmatprep.subr.mxu0 0.0
    %3402 = vmatpush1.msra.mxu0 0.0
    %3403 = vmatprep.subr.mxu0 0.0
    %3404 = vmatpush1.msra.mxu0 0.0
    %3405 = vmatprep.subr.mxu0 0.0
    %3406 = vmatpush1.msra.mxu0 0.0
    %3407 = vmatprep.subr.mxu0 0.0
    %3408 = vmatpush1.msra.mxu0 %v3373
    %3409 = vmatprep.subr.mxu0 0.0
    %3410 = vmatpush1.msra.mxu0 %v3371
    %3411 = vmatprep.subr.mxu0 0.0
    %3412 = vmatpush2.msra.mxu0 0.0
    %3413 = vmatprep.subr.mxu0 0.0
    %3414 = vmatpush2.msra.mxu0 0.0
    %3415 = vmatprep.subr.mxu0 0.0
    %3416 = vmatpush2.msra.mxu0 0.0
    %3417 = vmatprep.subr.mxu0 0.0
    %3418 = vmatpush2.msra.mxu0 0.0
    %3419 = vmatprep.subr.mxu0 0.0
    %3420 = vmatpush2.msra.mxu0 0.0
    %3421 = vmatprep.subr.mxu0 0.0
    %3422 = vmatpush2.msra.mxu0 0.0
    %3423 = vmatprep.subr.mxu0 0.0
    %3424 = vmatpush2.msra.mxu0 0.0
    %3425 = vmatprep.subr.mxu0 0.0
    %3426 = vmatpush2.msra.mxu0 0.0
    %3427 = vmatprep.subr.mxu0 0.0
    %3428 = vmatpush2.msra.mxu0 0.0
    %3429 = vmatprep.subr.mxu0 0.0
    %3430 = vmatpush2.msra.mxu0 0.0
    %3431 = vmatprep.subr.mxu0 0.0
    %3432 = vmatpush2.msra.mxu0 0.0
    %3433 = vmatprep.subr.mxu0 0.0
    %3434 = vmatpush2.msra.mxu0 0.0
    %3435 = vmatprep.subr.mxu0 0.0
    %3436 = vmatpush2.msra.mxu0 0.0
    %3437 = vmatprep.subr.mxu0 0.0
    %3438 = vmatpush2.msra.mxu0 0.0
    %3439 = vmatprep.subr.mxu0 0.0
    %3440 = vmatpush2.msra.mxu0 0.0
    %3441 = vmatprep.subr.mxu0 0.0
    %3442 = vmatpush2.msra.mxu0 0.0
    %3443 = vmatprep.mubr.f32.mxu0 0.0
    %3444 = vmatmul.mubr.f32.gmra.mxu0 %v3377
    %v3445 = vpop.f32.mrf.mxu0
    %v3446 = vadd.f32 0.0, %v3445
    %v3447 = vpop.f32.mrf.mxu0
    %3448 = vdwg.mxu0
    %3449 = vrot.lane.b32.xlu0 %v2206, 112
    %v3450 = vpop.permute.xlu0 %3449
    %3451 = vrot.lane.b32.xlu0 %v2211, 112
    %v3452 = vpop.permute.xlu0 %3451
    %v3456 = vsel %vm1447, %v2965, 0
    %3458 = vmatprep.subr.mxu0 0.0
    %3459 = vmatpush1.msra.mxu0 0.0
    %3460 = vmatprep.subr.mxu0 0.0
    %3461 = vmatpush1.msra.mxu0 0.0
    %3462 = vmatprep.subr.mxu0 0.0
    %3463 = vmatpush1.msra.mxu0 0.0
    %3464 = vmatprep.subr.mxu0 0.0
    %3465 = vmatpush1.msra.mxu0 0.0
    %3466 = vmatprep.subr.mxu0 0.0
    %3467 = vmatpush1.msra.mxu0 0.0
    %3468 = vmatprep.subr.mxu0 0.0
    %3469 = vmatpush1.msra.mxu0 0.0
    %3470 = vmatprep.subr.mxu0 0.0
    %3471 = vmatpush1.msra.mxu0 0.0
    %3472 = vmatprep.subr.mxu0 0.0
    %3473 = vmatpush1.msra.mxu0 0.0
    %3474 = vmatprep.subr.mxu0 0.0
    %3475 = vmatpush1.msra.mxu0 0.0
    %3476 = vmatprep.subr.mxu0 0.0
    %3477 = vmatpush1.msra.mxu0 0.0
    %3478 = vmatprep.subr.mxu0 0.0
    %3479 = vmatpush1.msra.mxu0 0.0
    %3480 = vmatprep.subr.mxu0 0.0
    %3481 = vmatpush1.msra.mxu0 0.0
    %3482 = vmatprep.subr.mxu0 0.0
    %3483 = vmatpush1.msra.mxu0 0.0
    %3484 = vmatprep.subr.mxu0 0.0
    %3485 = vmatpush1.msra.mxu0 0.0
    %3486 = vmatprep.subr.mxu0 0.0
    %3487 = vmatpush1.msra.mxu0 %v3452
    %3488 = vmatprep.subr.mxu0 0.0
    %3489 = vmatpush1.msra.mxu0 %v3450
    %3490 = vmatprep.subr.mxu0 0.0
    %3491 = vmatpush2.msra.mxu0 0.0
    %3492 = vmatprep.subr.mxu0 0.0
    %3493 = vmatpush2.msra.mxu0 0.0
    %3494 = vmatprep.subr.mxu0 0.0
    %3495 = vmatpush2.msra.mxu0 0.0
    %3496 = vmatprep.subr.mxu0 0.0
    %3497 = vmatpush2.msra.mxu0 0.0
    %3498 = vmatprep.subr.mxu0 0.0
    %3499 = vmatpush2.msra.mxu0 0.0
    %3500 = vmatprep.subr.mxu0 0.0
    %3501 = vmatpush2.msra.mxu0 0.0
    %3502 = vmatprep.subr.mxu0 0.0
    %3503 = vmatpush2.msra.mxu0 0.0
    %3504 = vmatprep.subr.mxu0 0.0
    %3505 = vmatpush2.msra.mxu0 0.0
    %3506 = vmatprep.subr.mxu0 0.0
    %3507 = vmatpush2.msra.mxu0 0.0
    %3508 = vmatprep.subr.mxu0 0.0
    %3509 = vmatpush2.msra.mxu0 0.0
    %3510 = vmatprep.subr.mxu0 0.0
    %3511 = vmatpush2.msra.mxu0 0.0
    %3512 = vmatprep.subr.mxu0 0.0
    %3513 = vmatpush2.msra.mxu0 0.0
    %3514 = vmatprep.subr.mxu0 0.0
    %3515 = vmatpush2.msra.mxu0 0.0
    %3516 = vmatprep.subr.mxu0 0.0
    %3517 = vmatpush2.msra.mxu0 0.0
    %3518 = vmatprep.subr.mxu0 0.0
    %3519 = vmatpush2.msra.mxu0 0.0
    %3520 = vmatprep.subr.mxu0 0.0
    %3521 = vmatpush2.msra.mxu0 0.0
    %3522 = vmatprep.mubr.f32.mxu0 0.0
    %3523 = vmatmul.mubr.f32.gmra.mxu0 %v3456
    %v3524 = vpop.f32.mrf.mxu0
    %v3525 = vadd.f32 0.0, %v3524
    %v3526 = vpop.f32.mrf.mxu0
    %3527 = vdwg.mxu0
    %3528 = vrot.lane.b32.xlu0 %v2206, 104
    %v3529 = vpop.permute.xlu0 %3528
    %3530 = vrot.lane.b32.xlu0 %v2211, 104
    %v3531 = vpop.permute.xlu0 %3530
    %v3535 = vsel %vm1447, %v2967, 0
    %3537 = vmatprep.subr.mxu0 0.0
    %3538 = vmatpush1.msra.mxu0 0.0
    %3539 = vmatprep.subr.mxu0 0.0
    %3540 = vmatpush1.msra.mxu0 0.0
    %3541 = vmatprep.subr.mxu0 0.0
    %3542 = vmatpush1.msra.mxu0 0.0
    %3543 = vmatprep.subr.mxu0 0.0
    %3544 = vmatpush1.msra.mxu0 0.0
    %3545 = vmatprep.subr.mxu0 0.0
    %3546 = vmatpush1.msra.mxu0 0.0
    %3547 = vmatprep.subr.mxu0 0.0
    %3548 = vmatpush1.msra.mxu0 0.0
    %3549 = vmatprep.subr.mxu0 0.0
    %3550 = vmatpush1.msra.mxu0 0.0
    %3551 = vmatprep.subr.mxu0 0.0
    %3552 = vmatpush1.msra.mxu0 0.0
    %3553 = vmatprep.subr.mxu0 0.0
    %3554 = vmatpush1.msra.mxu0 0.0
    %3555 = vmatprep.subr.mxu0 0.0
    %3556 = vmatpush1.msra.mxu0 0.0
    %3557 = vmatprep.subr.mxu0 0.0
    %3558 = vmatpush1.msra.mxu0 0.0
    %3559 = vmatprep.subr.mxu0 0.0
    %3560 = vmatpush1.msra.mxu0 0.0
    %3561 = vmatprep.subr.mxu0 0.0
    %3562 = vmatpush1.msra.mxu0 0.0
    %3563 = vmatprep.subr.mxu0 0.0
    %3564 = vmatpush1.msra.mxu0 0.0
    %3565 = vmatprep.subr.mxu0 0.0
    %3566 = vmatpush1.msra.mxu0 %v3531
    %3567 = vmatprep.subr.mxu0 0.0
    %3568 = vmatpush1.msra.mxu0 %v3529
    %3569 = vmatprep.subr.mxu0 0.0
    %3570 = vmatpush2.msra.mxu0 0.0
    %3571 = vmatprep.subr.mxu0 0.0
    %3572 = vmatpush2.msra.mxu0 0.0
    %3573 = vmatprep.subr.mxu0 0.0
    %3574 = vmatpush2.msra.mxu0 0.0
    %3575 = vmatprep.subr.mxu0 0.0
    %3576 = vmatpush2.msra.mxu0 0.0
    %3577 = vmatprep.subr.mxu0 0.0
    %3578 = vmatpush2.msra.mxu0 0.0
    %3579 = vmatprep.subr.mxu0 0.0
    %3580 = vmatpush2.msra.mxu0 0.0
    %3581 = vmatprep.subr.mxu0 0.0
    %3582 = vmatpush2.msra.mxu0 0.0
    %3583 = vmatprep.subr.mxu0 0.0
    %3584 = vmatpush2.msra.mxu0 0.0
    %3585 = vmatprep.subr.mxu0 0.0
    %3586 = vmatpush2.msra.mxu0 0.0
    %3587 = vmatprep.subr.mxu0 0.0
    %3588 = vmatpush2.msra.mxu0 0.0
    %3589 = vmatprep.subr.mxu0 0.0
    %3590 = vmatpush2.msra.mxu0 0.0
    %3591 = vmatprep.subr.mxu0 0.0
    %3592 = vmatpush2.msra.mxu0 0.0
    %3593 = vmatprep.subr.mxu0 0.0
    %3594 = vmatpush2.msra.mxu0 0.0
    %3595 = vmatprep.subr.mxu0 0.0
    %3596 = vmatpush2.msra.mxu0 0.0
    %3597 = vmatprep.subr.mxu0 0.0
    %3598 = vmatpush2.msra.mxu0 0.0
    %3599 = vmatprep.subr.mxu0 0.0
    %3600 = vmatpush2.msra.mxu0 0.0
    %3601 = vmatprep.mubr.f32.mxu0 0.0
    %3602 = vmatmul.mubr.f32.gmra.mxu0 %v3535
    %v3603 = vpop.f32.mrf.mxu0
    %v3604 = vadd.f32 0.0, %v3603
    %v3605 = vpop.f32.mrf.mxu0
    %3606 = vdwg.mxu0
    %3608 = vrot.lane.b32.xlu0 %v3446, 8
    %v3609 = vpop.permute.xlu0 %3608
    %3612 = vrot.lane.b32.xlu0 %v3525, 16
    %v3613 = vpop.permute.xlu0 %3612
    %3616 = vrot.lane.b32.xlu0 %v3604, 24
    %v3617 = vpop.permute.xlu0 %3616
    %v3619 = vsel %vm407, %v3365, %v3609
    %v3620 = vsel %vm1447, %v3619, %v3613
    %v3621 = vsel %vm1449, %v3620, %v3617
    %s3622 = scalar_lea.vmem [#allocation6], 224
    %v3623 = vld [vmem:[%s3622] sm:$0xff]
    %v3624 = vld [vmem:[%s3622 + $0x8] sm:$0xff]
    %v3625 = vld [vmem:[%s3622 + $0x10] sm:$0xff]
    %v3626 = vld [vmem:[%s3622 + $0x18] sm:$0xff]
    %v3628 = vsel %vm91, %v3294, 0
    %v3631 = vsel %vm91, %v3621, 0
    %3633 = vmatprep.subr.mxu0 0.0
    %3634 = vmatpush1.msra.mxu0 0.0
    %3635 = vmatprep.subr.mxu0 0.0
    %3636 = vmatpush1.msra.mxu0 0.0
    %3637 = vmatprep.subr.mxu0 0.0
    %3638 = vmatpush1.msra.mxu0 0.0
    %3639 = vmatprep.subr.mxu0 0.0
    %3640 = vmatpush1.msra.mxu0 0.0
    %3641 = vmatprep.subr.mxu0 0.0
    %3642 = vmatpush1.msra.mxu0 0.0
    %3643 = vmatprep.subr.mxu0 0.0
    %3644 = vmatpush1.msra.mxu0 0.0
    %3645 = vmatprep.subr.mxu0 0.0
    %3646 = vmatpush1.msra.mxu0 0.0
    %3647 = vmatprep.subr.mxu0 0.0
    %3648 = vmatpush1.msra.mxu0 0.0
    %3649 = vmatprep.subr.mxu0 0.0
    %3650 = vmatpush1.msra.mxu0 0.0
    %3651 = vmatprep.subr.mxu0 0.0
    %3652 = vmatpush1.msra.mxu0 0.0
    %3653 = vmatprep.subr.mxu0 0.0
    %3654 = vmatpush1.msra.mxu0 0.0
    %3655 = vmatprep.subr.mxu0 0.0
    %3656 = vmatpush1.msra.mxu0 0.0
    %3657 = vmatprep.subr.mxu0 0.0
    %3658 = vmatpush1.msra.mxu0 %v3626
    %3659 = vmatprep.subr.mxu0 0.0
    %3660 = vmatpush1.msra.mxu0 %v3625
    %3661 = vmatprep.subr.mxu0 0.0
    %3662 = vmatpush1.msra.mxu0 %v3624
    %3663 = vmatprep.subr.mxu0 0.0
    %3664 = vmatpush1.msra.mxu0 %v3623
    %3665 = vmatprep.subr.mxu0 0.0
    %3666 = vmatpush2.msra.mxu0 0.0
    %3667 = vmatprep.subr.mxu0 0.0
    %3668 = vmatpush2.msra.mxu0 0.0
    %3669 = vmatprep.subr.mxu0 0.0
    %3670 = vmatpush2.msra.mxu0 0.0
    %3671 = vmatprep.subr.mxu0 0.0
    %3672 = vmatpush2.msra.mxu0 0.0
    %3673 = vmatprep.subr.mxu0 0.0
    %3674 = vmatpush2.msra.mxu0 0.0
    %3675 = vmatprep.subr.mxu0 0.0
    %3676 = vmatpush2.msra.mxu0 0.0
    %3677 = vmatprep.subr.mxu0 0.0
    %3678 = vmatpush2.msra.mxu0 0.0
    %3679 = vmatprep.subr.mxu0 0.0
    %3680 = vmatpush2.msra.mxu0 0.0
    %3681 = vmatprep.subr.mxu0 0.0
    %3682 = vmatpush2.msra.mxu0 0.0
    %3683 = vmatprep.subr.mxu0 0.0
    %3684 = vmatpush2.msra.mxu0 0.0
    %3685 = vmatprep.subr.mxu0 0.0
    %3686 = vmatpush2.msra.mxu0 0.0
    %3687 = vmatprep.subr.mxu0 0.0
    %3688 = vmatpush2.msra.mxu0 0.0
    %3689 = vmatprep.subr.mxu0 0.0
    %3690 = vmatpush2.msra.mxu0 0.0
    %3691 = vmatprep.subr.mxu0 0.0
    %3692 = vmatpush2.msra.mxu0 0.0
    %3693 = vmatprep.subr.mxu0 0.0
    %3694 = vmatpush2.msra.mxu0 0.0
    %3695 = vmatprep.subr.mxu0 0.0
    %3696 = vmatpush2.msra.mxu0 0.0
    %3697 = vmatprep.mubr.f32.mxu0 0.0
    %3698 = vmatmul.mubr.f32.gmra.mxu0 %v3628
    %v3699 = vpop.f32.mrf.mxu0
    %v3700 = vadd.f32 0.0, %v3699
    %v3701 = vpop.f32.mrf.mxu0
    %3702 = vmatprep.mubr.f32.mxu0 0.0
    %3703 = vmatmul.mubr.f32.gmra.mxu0 %v3631
    %v3704 = vpop.f32.mrf.mxu0
    %v3705 = vadd.f32 0.0, %v3704
    %v3706 = vpop.f32.mrf.mxu0
    %3707 = vdwg.mxu0
    %v3708 = vadd.f32 %v1864, %v3700
    %v3709 = vadd.f32 %v1865, %v3705
    %s3710 = scalar_lea.vmem %s6, 7
    %v3711 = vld [vmem:[%s3710] sm:$0x1]
    %v3713 = vlaneseq
    %v3714 = vshrl.u32 %v3713, 7
    %v3715 = vsub.s32 0, %v3714
    %v3716 = vrot.slane %v3711, %v3715
    %v3718 = vadd.f32 %v3708, %v3716
    %v3719 = vadd.f32 %v3709, %v3716
    %v3720 = vsel %vm91, %v3718, 0.0
    %3721 = vadd.xlane.f32.xlu0 %v3720
    %v3722 = vpop.xlane.xlu0 %3721
    %v3723 = vsel %vm91, %v3719, 0.0
    %3724 = vadd.xlane.f32.xlu0 %v3723
    %v3725 = vpop.xlane.xlu0 %3724
    %v3726 = vmul.f32 %v3722, %v98
    %v3727 = vmul.f32 %v3725, %v98
    %v3728 = vsub.f32 %v3718, %v3726
    %v3729 = vsub.f32 %v3719, %v3727
    %v3730 = vmul.f32 %v3728, %v3728
    %v3731 = vmul.f32 %v3729, %v3729
    %v3732 = vsel %vm91, %v3730, 0.0
    %3733 = vadd.xlane.f32.xlu0 %v3732
    %v3734 = vpop.xlane.xlu0 %3733
    %v3735 = vsel %vm91, %v3731, 0.0
    %3736 = vadd.xlane.f32.xlu0 %v3735
    %v3737 = vpop.xlane.xlu0 %3736
    %v3738 = vmul.f32 %v3734, 0.032258064
    %v3739 = vmul.f32 %v3737, 0.032258064
    %v3740 = vstv %s89
    %v3741 = vmul.f32 %v3740, %v3728
    %v3742 = vmul.f32 %v3740, %v3729
    %v3743 = vrsqrt.pop %v3738
    %v3744 = vmul.f32 %v3738, %v3743
    %vm3745 = vcmp.eq.f32.partialorder %v3738, inf
    %v3746 = vsel %vm3745, %v3738, %v3744
    %vm3747 = vcmp.eq.f32.partialorder %v3738, 0.0
    %v3748 = vand.u32 %v3738, 2147483648
    %v3749 = vsel %vm3747, %v3748, %v3746
    %v3750 = vrsqrt.pop %v3739
    %v3751 = vmul.f32 %v3739, %v3750
    %vm3752 = vcmp.eq.f32.partialorder %v3739, inf
    %v3753 = vsel %vm3752, %v3739, %v3751
    %vm3754 = vcmp.eq.f32.partialorder %v3739, 0.0
    %v3755 = vand.u32 %v3739, 2147483648
    %v3756 = vsel %vm3754, %v3755, %v3753
    %v3757 = vadd.f32 %v3749, 1e-06
    %v3758 = vadd.f32 %v3756, 1e-06
    %v3759 = vrcp.pop %v3757
    %v3760 = vmul.f32 %v3741, %v3759
    %v3761 = vrcp.pop %v3758
    %v3762 = vmul.f32 %v3742, %v3761
    %v3763 = vstv %s90
    %v3764 = vadd.f32 %v3760, %v3763
    %v3765 = vadd.f32 %v3762, %v3763
    %v3766 = vld [vmem:[%s7] sm:$0xff]
    %v3767 = vld [vmem:[%s7 + $0x8] sm:$0xff]
    %v3768 = vld [vmem:[%s7 + $0x10] sm:$0xff]
    %v3769 = vld [vmem:[%s7 + $0x18] sm:$0xff]
    %v3770 = vld [vmem:[%s8] sm:$0x1]
    %v3772 = vlaneseq
    %v3773 = vshrl.u32 %v3772, 7
    %v3774 = vsub.s32 0, %v3773
    %v3775 = vrot.slane %v3770, %v3774
    %v3778 = vsel %vm91, %v3764, 0
    %v3781 = vsel %vm91, %v3765, 0
    %3783 = vmatprep.subr.mxu0 0.0
    %3784 = vmatpush1.msra.mxu0 0.0
    %3785 = vmatprep.subr.mxu0 0.0
    %3786 = vmatpush1.msra.mxu0 0.0
    %3787 = vmatprep.subr.mxu0 0.0
    %3788 = vmatpush1.msra.mxu0 0.0
    %3789 = vmatprep.subr.mxu0 0.0
    %3790 = vmatpush1.msra.mxu0 0.0
    %3791 = vmatprep.subr.mxu0 0.0
    %3792 = vmatpush1.msra.mxu0 0.0
    %3793 = vmatprep.subr.mxu0 0.0
    %3794 = vmatpush1.msra.mxu0 0.0
    %3795 = vmatprep.subr.mxu0 0.0
    %3796 = vmatpush1.msra.mxu0 0.0
    %3797 = vmatprep.subr.mxu0 0.0
    %3798 = vmatpush1.msra.mxu0 0.0
    %3799 = vmatprep.subr.mxu0 0.0
    %3800 = vmatpush1.msra.mxu0 0.0
    %3801 = vmatprep.subr.mxu0 0.0
    %3802 = vmatpush1.msra.mxu0 0.0
    %3803 = vmatprep.subr.mxu0 0.0
    %3804 = vmatpush1.msra.mxu0 0.0
    %3805 = vmatprep.subr.mxu0 0.0
    %3806 = vmatpush1.msra.mxu0 0.0
    %3807 = vmatprep.subr.mxu0 0.0
    %3808 = vmatpush1.msra.mxu0 %v3769
    %3809 = vmatprep.subr.mxu0 0.0
    %3810 = vmatpush1.msra.mxu0 %v3768
    %3811 = vmatprep.subr.mxu0 0.0
    %3812 = vmatpush1.msra.mxu0 %v3767
    %3813 = vmatprep.subr.mxu0 0.0
    %3814 = vmatpush1.msra.mxu0 %v3766
    %3815 = vmatprep.subr.mxu0 0.0
    %3816 = vmatpush2.msra.mxu0 0.0
    %3817 = vmatprep.subr.mxu0 0.0
    %3818 = vmatpush2.msra.mxu0 0.0
    %3819 = vmatprep.subr.mxu0 0.0
    %3820 = vmatpush2.msra.mxu0 0.0
    %3821 = vmatprep.subr.mxu0 0.0
    %3822 = vmatpush2.msra.mxu0 0.0
    %3823 = vmatprep.subr.mxu0 0.0
    %3824 = vmatpush2.msra.mxu0 0.0
    %3825 = vmatprep.subr.mxu0 0.0
    %3826 = vmatpush2.msra.mxu0 0.0
    %3827 = vmatprep.subr.mxu0 0.0
    %3828 = vmatpush2.msra.mxu0 0.0
    %3829 = vmatprep.subr.mxu0 0.0
    %3830 = vmatpush2.msra.mxu0 0.0
    %3831 = vmatprep.subr.mxu0 0.0
    %3832 = vmatpush2.msra.mxu0 0.0
    %3833 = vmatprep.subr.mxu0 0.0
    %3834 = vmatpush2.msra.mxu0 0.0
    %3835 = vmatprep.subr.mxu0 0.0
    %3836 = vmatpush2.msra.mxu0 0.0
    %3837 = vmatprep.subr.mxu0 0.0
    %3838 = vmatpush2.msra.mxu0 0.0
    %3839 = vmatprep.subr.mxu0 0.0
    %3840 = vmatpush2.msra.mxu0 0.0
    %3841 = vmatprep.subr.mxu0 0.0
    %3842 = vmatpush2.msra.mxu0 0.0
    %3843 = vmatprep.subr.mxu0 0.0
    %3844 = vmatpush2.msra.mxu0 0.0
    %3845 = vmatprep.subr.mxu0 0.0
    %3846 = vmatpush2.msra.mxu0 0.0
    %3847 = vmatprep.mubr.f32.mxu0 0.0
    %3848 = vmatmul.mubr.f32.gmra.mxu0 %v3778
    %v3849 = vpop.f32.mrf.mxu0
    %v3850 = vadd.f32 %v3775, %v3849
    %v3851 = vpop.f32.mrf.mxu0
    %3852 = vmatprep.mubr.f32.mxu0 0.0
    %3853 = vmatmul.mubr.f32.gmra.mxu0 %v3781
    %v3854 = vpop.f32.mrf.mxu0
    %v3855 = vadd.f32 %v3775, %v3854
    %v3856 = vpop.f32.mrf.mxu0
    %3857 = vdwg.mxu0
    %v3858 = vmax.f32 %v3850, 0.0
    %v3859 = vmax.f32 %v3855, 0.0
    %v3860 = vld [vmem:[%s9] sm:$0xff]
    %v3861 = vld [vmem:[%s9 + $0x8] sm:$0xff]
    %v3862 = vld [vmem:[%s9 + $0x10] sm:$0xff]
    %v3863 = vld [vmem:[%s9 + $0x18] sm:$0xff]
    %v3864 = vld [vmem:[%s9 + $0x20] sm:$0xff]
    %v3865 = vld [vmem:[%s9 + $0x28] sm:$0xff]
    %v3866 = vld [vmem:[%s9 + $0x30] sm:$0xff]
    %v3867 = vld [vmem:[%s9 + $0x38] sm:$0xff]
    %s3868 = scalar_lea.vmem %s6, 8
    %v3869 = vld [vmem:[%s3868] sm:$0x1]
    %v3871 = vlaneseq
    %v3872 = vshrl.u32 %v3871, 7
    %v3873 = vsub.s32 0, %v3872
    %v3874 = vrot.slane %v3869, %v3873
    %vm3876 = vcmask 523264
    %v3878 = vsel %vm3876, %v3858, 0
    %v3881 = vsel %vm3876, %v3859, 0
    %3883 = vmatprep.subr.mxu0 0.0
    %3884 = vmatpush1.msra.mxu0 0.0
    %3885 = vmatprep.subr.mxu0 0.0
    %3886 = vmatpush1.msra.mxu0 0.0
    %3887 = vmatprep.subr.mxu0 0.0
    %3888 = vmatpush1.msra.mxu0 0.0
    %3889 = vmatprep.subr.mxu0 0.0
    %3890 = vmatpush1.msra.mxu0 0.0
    %3891 = vmatprep.subr.mxu0 0.0
    %3892 = vmatpush1.msra.mxu0 0.0
    %3893 = vmatprep.subr.mxu0 0.0
    %3894 = vmatpush1.msra.mxu0 0.0
    %3895 = vmatprep.subr.mxu0 0.0
    %3896 = vmatpush1.msra.mxu0 0.0
    %3897 = vmatprep.subr.mxu0 0.0
    %3898 = vmatpush1.msra.mxu0 0.0
    %3899 = vmatprep.subr.mxu0 0.0
    %3900 = vmatpush1.msra.mxu0 %v3867
    %3901 = vmatprep.subr.mxu0 0.0
    %3902 = vmatpush1.msra.mxu0 %v3866
    %3903 = vmatprep.subr.mxu0 0.0
    %3904 = vmatpush1.msra.mxu0 %v3865
    %3905 = vmatprep.subr.mxu0 0.0
    %3906 = vmatpush1.msra.mxu0 %v3864
    %3907 = vmatprep.subr.mxu0 0.0
    %3908 = vmatpush1.msra.mxu0 %v3863
    %3909 = vmatprep.subr.mxu0 0.0
    %3910 = vmatpush1.msra.mxu0 %v3862
    %3911 = vmatprep.subr.mxu0 0.0
    %3912 = vmatpush1.msra.mxu0 %v3861
    %3913 = vmatprep.subr.mxu0 0.0
    %3914 = vmatpush1.msra.mxu0 %v3860
    %3915 = vmatprep.subr.mxu0 0.0
    %3916 = vmatpush2.msra.mxu0 0.0
    %3917 = vmatprep.subr.mxu0 0.0
    %3918 = vmatpush2.msra.mxu0 0.0
    %3919 = vmatprep.subr.mxu0 0.0
    %3920 = vmatpush2.msra.mxu0 0.0
    %3921 = vmatprep.subr.mxu0 0.0
    %3922 = vmatpush2.msra.mxu0 0.0
    %3923 = vmatprep.subr.mxu0 0.0
    %3924 = vmatpush2.msra.mxu0 0.0
    %3925 = vmatprep.subr.mxu0 0.0
    %3926 = vmatpush2.msra.mxu0 0.0
    %3927 = vmatprep.subr.mxu0 0.0
    %3928 = vmatpush2.msra.mxu0 0.0
    %3929 = vmatprep.subr.mxu0 0.0
    %3930 = vmatpush2.msra.mxu0 0.0
    %3931 = vmatprep.subr.mxu0 0.0
    %3932 = vmatpush2.msra.mxu0 0.0
    %3933 = vmatprep.subr.mxu0 0.0
    %3934 = vmatpush2.msra.mxu0 0.0
    %3935 = vmatprep.subr.mxu0 0.0
    %3936 = vmatpush2.msra.mxu0 0.0
    %3937 = vmatprep.subr.mxu0 0.0
    %3938 = vmatpush2.msra.mxu0 0.0
    %3939 = vmatprep.subr.mxu0 0.0
    %3940 = vmatpush2.msra.mxu0 0.0
    %3941 = vmatprep.subr.mxu0 0.0
    %3942 = vmatpush2.msra.mxu0 0.0
    %3943 = vmatprep.subr.mxu0 0.0
    %3944 = vmatpush2.msra.mxu0 0.0
    %3945 = vmatprep.subr.mxu0 0.0
    %3946 = vmatpush2.msra.mxu0 0.0
    %3947 = vmatprep.mubr.f32.mxu0 0.0
    %3948 = vmatmul.mubr.f32.gmra.mxu0 %v3878
    %v3949 = vpop.f32.mrf.mxu0
    %v3950 = vadd.f32 %v3874, %v3949
    %v3951 = vpop.f32.mrf.mxu0
    %3952 = vmatprep.mubr.f32.mxu0 0.0
    %3953 = vmatmul.mubr.f32.gmra.mxu0 %v3881
    %v3954 = vpop.f32.mrf.mxu0
    %v3955 = vadd.f32 %v3874, %v3954
    %v3956 = vpop.f32.mrf.mxu0
    %3957 = vdwg.mxu0
    %v3958 = vadd.f32 %v3718, %v3950
    %v3959 = vadd.f32 %v3719, %v3955
    %s3960 = sld [smem:[#allocation2 + $0x6]]
    %s3961 = sld [smem:[#allocation2 + $0x7]]
    %s3962 = sld [smem:[#allocation2 + $0x8]]
    %s3963 = sld [smem:[#allocation2 + $0x9]]
    %s3964 = sld [smem:[#allocation2 + $0xa]]
    %s3965 = sld [smem:[#allocation2 + $0xb]]
    %v3966 = vsel %vm91, %v3958, 0.0
    %3967 = vadd.xlane.f32.xlu0 %v3966
    %v3968 = vpop.xlane.xlu0 %3967
    %v3969 = vsel %vm91, %v3959, 0.0
    %3970 = vadd.xlane.f32.xlu0 %v3969
    %v3971 = vpop.xlane.xlu0 %3970
    %v3972 = vmul.f32 %v3968, %v98
    %v3973 = vmul.f32 %v3971, %v98
    %v3974 = vsub.f32 %v3958, %v3972
    %v3975 = vsub.f32 %v3959, %v3973
    %v3976 = vmul.f32 %v3974, %v3974
    %v3977 = vmul.f32 %v3975, %v3975
    %v3978 = vsel %vm91, %v3976, 0.0
    %3979 = vadd.xlane.f32.xlu0 %v3978
    %v3980 = vpop.xlane.xlu0 %3979
    %v3981 = vsel %vm91, %v3977, 0.0
    %3982 = vadd.xlane.f32.xlu0 %v3981
    %v3983 = vpop.xlane.xlu0 %3982
    %v3984 = vmul.f32 %v3980, 0.032258064
    %v3985 = vmul.f32 %v3983, 0.032258064
    %v3986 = vstv %s3960
    %v3987 = vmul.f32 %v3986, %v3974
    %v3988 = vmul.f32 %v3986, %v3975
    %v3989 = vrsqrt.pop %v3984
    %v3990 = vmul.f32 %v3984, %v3989
    %vm3991 = vcmp.eq.f32.partialorder %v3984, inf
    %v3992 = vsel %vm3991, %v3984, %v3990
    %vm3993 = vcmp.eq.f32.partialorder %v3984, 0.0
    %v3994 = vand.u32 %v3984, 2147483648
    %v3995 = vsel %vm3993, %v3994, %v3992
    %v3996 = vrsqrt.pop %v3985
    %v3997 = vmul.f32 %v3985, %v3996
    %vm3998 = vcmp.eq.f32.partialorder %v3985, inf
    %v3999 = vsel %vm3998, %v3985, %v3997
    %vm4000 = vcmp.eq.f32.partialorder %v3985, 0.0
    %v4001 = vand.u32 %v3985, 2147483648
    %v4002 = vsel %vm4000, %v4001, %v3999
    %v4003 = vadd.f32 %v3995, 1e-06
    %v4004 = vadd.f32 %v4002, 1e-06
    %v4005 = vrcp.pop %v4003
    %v4006 = vmul.f32 %v3987, %v4005
    %v4007 = vrcp.pop %v4004
    %v4008 = vmul.f32 %v3988, %v4007
    %v4009 = vstv %s3961
    %v4010 = vadd.f32 %v4006, %v4009
    %v4011 = vadd.f32 %v4008, %v4009
    %s4012 = scalar_lea.vmem [#allocation6], 256
    %v4013 = vld [vmem:[%s4012] sm:$0xff]
    %v4014 = vld [vmem:[%s4012 + $0x8] sm:$0xff]
    %v4015 = vld [vmem:[%s4012 + $0x10] sm:$0xff]
    %v4016 = vld [vmem:[%s4012 + $0x18] sm:$0xff]
    %s4017 = scalar_lea.vmem %s6, 9
    %v4018 = vld [vmem:[%s4017] sm:$0x1]
    %v4020 = vlaneseq
    %v4021 = vshrl.u32 %v4020, 7
    %v4022 = vsub.s32 0, %v4021
    %v4023 = vrot.slane %v4018, %v4022
    %v4026 = vsel %vm91, %v4010, 0
    %v4029 = vsel %vm91, %v4011, 0
    %4031 = vmatprep.subr.mxu0 0.0
    %4032 = vmatpush1.msra.mxu0 0.0
    %4033 = vmatprep.subr.mxu0 0.0
    %4034 = vmatpush1.msra.mxu0 0.0
    %4035 = vmatprep.subr.mxu0 0.0
    %4036 = vmatpush1.msra.mxu0 0.0
    %4037 = vmatprep.subr.mxu0 0.0
    %4038 = vmatpush1.msra.mxu0 0.0
    %4039 = vmatprep.subr.mxu0 0.0
    %4040 = vmatpush1.msra.mxu0 0.0
    %4041 = vmatprep.subr.mxu0 0.0
    %4042 = vmatpush1.msra.mxu0 0.0
    %4043 = vmatprep.subr.mxu0 0.0
    %4044 = vmatpush1.msra.mxu0 0.0
    %4045 = vmatprep.subr.mxu0 0.0
    %4046 = vmatpush1.msra.mxu0 0.0
    %4047 = vmatprep.subr.mxu0 0.0
    %4048 = vmatpush1.msra.mxu0 0.0
    %4049 = vmatprep.subr.mxu0 0.0
    %4050 = vmatpush1.msra.mxu0 0.0
    %4051 = vmatprep.subr.mxu0 0.0
    %4052 = vmatpush1.msra.mxu0 0.0
    %4053 = vmatprep.subr.mxu0 0.0
    %4054 = vmatpush1.msra.mxu0 0.0
    %4055 = vmatprep.subr.mxu0 0.0
    %4056 = vmatpush1.msra.mxu0 %v4016
    %4057 = vmatprep.subr.mxu0 0.0
    %4058 = vmatpush1.msra.mxu0 %v4015
    %4059 = vmatprep.subr.mxu0 0.0
    %4060 = vmatpush1.msra.mxu0 %v4014
    %4061 = vmatprep.subr.mxu0 0.0
    %4062 = vmatpush1.msra.mxu0 %v4013
    %4063 = vmatprep.subr.mxu0 0.0
    %4064 = vmatpush2.msra.mxu0 0.0
    %4065 = vmatprep.subr.mxu0 0.0
    %4066 = vmatpush2.msra.mxu0 0.0
    %4067 = vmatprep.subr.mxu0 0.0
    %4068 = vmatpush2.msra.mxu0 0.0
    %4069 = vmatprep.subr.mxu0 0.0
    %4070 = vmatpush2.msra.mxu0 0.0
    %4071 = vmatprep.subr.mxu0 0.0
    %4072 = vmatpush2.msra.mxu0 0.0
    %4073 = vmatprep.subr.mxu0 0.0
    %4074 = vmatpush2.msra.mxu0 0.0
    %4075 = vmatprep.subr.mxu0 0.0
    %4076 = vmatpush2.msra.mxu0 0.0
    %4077 = vmatprep.subr.mxu0 0.0
    %4078 = vmatpush2.msra.mxu0 0.0
    %4079 = vmatprep.subr.mxu0 0.0
    %4080 = vmatpush2.msra.mxu0 0.0
    %4081 = vmatprep.subr.mxu0 0.0
    %4082 = vmatpush2.msra.mxu0 0.0
    %4083 = vmatprep.subr.mxu0 0.0
    %4084 = vmatpush2.msra.mxu0 0.0
    %4085 = vmatprep.subr.mxu0 0.0
    %4086 = vmatpush2.msra.mxu0 0.0
    %4087 = vmatprep.subr.mxu0 0.0
    %4088 = vmatpush2.msra.mxu0 0.0
    %4089 = vmatprep.subr.mxu0 0.0
    %4090 = vmatpush2.msra.mxu0 0.0
    %4091 = vmatprep.subr.mxu0 0.0
    %4092 = vmatpush2.msra.mxu0 0.0
    %4093 = vmatprep.subr.mxu0 0.0
    %4094 = vmatpush2.msra.mxu0 0.0
    %4095 = vmatprep.mubr.f32.mxu0 0.0
    %4096 = vmatmul.mubr.f32.gmra.mxu0 %v4026
    %v4097 = vpop.f32.mrf.mxu0
    %v4098 = vadd.f32 %v4023, %v4097
    %v4099 = vpop.f32.mrf.mxu0
    %4100 = vmatprep.mubr.f32.mxu0 0.0
    %4101 = vmatmul.mubr.f32.gmra.mxu0 %v4029
    %v4102 = vpop.f32.mrf.mxu0
    %v4103 = vadd.f32 %v4023, %v4102
    %v4104 = vpop.f32.mrf.mxu0
    %4105 = vdwg.mxu0
    %s4106 = scalar_lea.vmem [#allocation6], 288
    %v4107 = vld [vmem:[%s4106] sm:$0xff]
    %v4108 = vld [vmem:[%s4106 + $0x8] sm:$0xff]
    %v4109 = vld [vmem:[%s4106 + $0x10] sm:$0xff]
    %v4110 = vld [vmem:[%s4106 + $0x18] sm:$0xff]
    %s4111 = scalar_lea.vmem %s6, 10
    %v4112 = vld [vmem:[%s4111] sm:$0x1]
    %v4114 = vlaneseq
    %v4115 = vshrl.u32 %v4114, 7
    %v4116 = vsub.s32 0, %v4115
    %v4117 = vrot.slane %v4112, %v4116
    %4119 = vmatprep.subr.mxu0 0.0
    %4120 = vmatpush1.msra.mxu0 0.0
    %4121 = vmatprep.subr.mxu0 0.0
    %4122 = vmatpush1.msra.mxu0 0.0
    %4123 = vmatprep.subr.mxu0 0.0
    %4124 = vmatpush1.msra.mxu0 0.0
    %4125 = vmatprep.subr.mxu0 0.0
    %4126 = vmatpush1.msra.mxu0 0.0
    %4127 = vmatprep.subr.mxu0 0.0
    %4128 = vmatpush1.msra.mxu0 0.0
    %4129 = vmatprep.subr.mxu0 0.0
    %4130 = vmatpush1.msra.mxu0 0.0
    %4131 = vmatprep.subr.mxu0 0.0
    %4132 = vmatpush1.msra.mxu0 0.0
    %4133 = vmatprep.subr.mxu0 0.0
    %4134 = vmatpush1.msra.mxu0 0.0
    %4135 = vmatprep.subr.mxu0 0.0
    %4136 = vmatpush1.msra.mxu0 0.0
    %4137 = vmatprep.subr.mxu0 0.0
    %4138 = vmatpush1.msra.mxu0 0.0
    %4139 = vmatprep.subr.mxu0 0.0
    %4140 = vmatpush1.msra.mxu0 0.0
    %4141 = vmatprep.subr.mxu0 0.0
    %4142 = vmatpush1.msra.mxu0 0.0
    %4143 = vmatprep.subr.mxu0 0.0
    %4144 = vmatpush1.msra.mxu0 %v4110
    %4145 = vmatprep.subr.mxu0 0.0
    %4146 = vmatpush1.msra.mxu0 %v4109
    %4147 = vmatprep.subr.mxu0 0.0
    %4148 = vmatpush1.msra.mxu0 %v4108
    %4149 = vmatprep.subr.mxu0 0.0
    %4150 = vmatpush1.msra.mxu0 %v4107
    %4151 = vmatprep.subr.mxu0 0.0
    %4152 = vmatpush2.msra.mxu0 0.0
    %4153 = vmatprep.subr.mxu0 0.0
    %4154 = vmatpush2.msra.mxu0 0.0
    %4155 = vmatprep.subr.mxu0 0.0
    %4156 = vmatpush2.msra.mxu0 0.0
    %4157 = vmatprep.subr.mxu0 0.0
    %4158 = vmatpush2.msra.mxu0 0.0
    %4159 = vmatprep.subr.mxu0 0.0
    %4160 = vmatpush2.msra.mxu0 0.0
    %4161 = vmatprep.subr.mxu0 0.0
    %4162 = vmatpush2.msra.mxu0 0.0
    %4163 = vmatprep.subr.mxu0 0.0
    %4164 = vmatpush2.msra.mxu0 0.0
    %4165 = vmatprep.subr.mxu0 0.0
    %4166 = vmatpush2.msra.mxu0 0.0
    %4167 = vmatprep.subr.mxu0 0.0
    %4168 = vmatpush2.msra.mxu0 0.0
    %4169 = vmatprep.subr.mxu0 0.0
    %4170 = vmatpush2.msra.mxu0 0.0
    %4171 = vmatprep.subr.mxu0 0.0
    %4172 = vmatpush2.msra.mxu0 0.0
    %4173 = vmatprep.subr.mxu0 0.0
    %4174 = vmatpush2.msra.mxu0 0.0
    %4175 = vmatprep.subr.mxu0 0.0
    %4176 = vmatpush2.msra.mxu0 0.0
    %4177 = vmatprep.subr.mxu0 0.0
    %4178 = vmatpush2.msra.mxu0 0.0
    %4179 = vmatprep.subr.mxu0 0.0
    %4180 = vmatpush2.msra.mxu0 0.0
    %4181 = vmatprep.subr.mxu0 0.0
    %4182 = vmatpush2.msra.mxu0 0.0
    %4183 = vmatprep.mubr.f32.mxu0 0.0
    %4184 = vmatmul.mubr.f32.gmra.mxu0 %v4026
    %v4185 = vpop.f32.mrf.mxu0
    %v4186 = vadd.f32 %v4117, %v4185
    %v4187 = vpop.f32.mrf.mxu0
    %4188 = vmatprep.mubr.f32.mxu0 0.0
    %4189 = vmatmul.mubr.f32.gmra.mxu0 %v4029
    %v4190 = vpop.f32.mrf.mxu0
    %v4191 = vadd.f32 %v4117, %v4190
    %v4192 = vpop.f32.mrf.mxu0
    %4193 = vdwg.mxu0
    %s4194 = scalar_lea.vmem [#allocation6], 320
    %v4195 = vld [vmem:[%s4194] sm:$0xff]
    %v4196 = vld [vmem:[%s4194 + $0x8] sm:$0xff]
    %v4197 = vld [vmem:[%s4194 + $0x10] sm:$0xff]
    %v4198 = vld [vmem:[%s4194 + $0x18] sm:$0xff]
    %s4199 = scalar_lea.vmem %s6, 11
    %v4200 = vld [vmem:[%s4199] sm:$0x1]
    %v4202 = vlaneseq
    %v4203 = vshrl.u32 %v4202, 7
    %v4204 = vsub.s32 0, %v4203
    %v4205 = vrot.slane %v4200, %v4204
    %4207 = vmatprep.subr.mxu0 0.0
    %4208 = vmatpush1.msra.mxu0 0.0
    %4209 = vmatprep.subr.mxu0 0.0
    %4210 = vmatpush1.msra.mxu0 0.0
    %4211 = vmatprep.subr.mxu0 0.0
    %4212 = vmatpush1.msra.mxu0 0.0
    %4213 = vmatprep.subr.mxu0 0.0
    %4214 = vmatpush1.msra.mxu0 0.0
    %4215 = vmatprep.subr.mxu0 0.0
    %4216 = vmatpush1.msra.mxu0 0.0
    %4217 = vmatprep.subr.mxu0 0.0
    %4218 = vmatpush1.msra.mxu0 0.0
    %4219 = vmatprep.subr.mxu0 0.0
    %4220 = vmatpush1.msra.mxu0 0.0
    %4221 = vmatprep.subr.mxu0 0.0
    %4222 = vmatpush1.msra.mxu0 0.0
    %4223 = vmatprep.subr.mxu0 0.0
    %4224 = vmatpush1.msra.mxu0 0.0
    %4225 = vmatprep.subr.mxu0 0.0
    %4226 = vmatpush1.msra.mxu0 0.0
    %4227 = vmatprep.subr.mxu0 0.0
    %4228 = vmatpush1.msra.mxu0 0.0
    %4229 = vmatprep.subr.mxu0 0.0
    %4230 = vmatpush1.msra.mxu0 0.0
    %4231 = vmatprep.subr.mxu0 0.0
    %4232 = vmatpush1.msra.mxu0 %v4198
    %4233 = vmatprep.subr.mxu0 0.0
    %4234 = vmatpush1.msra.mxu0 %v4197
    %4235 = vmatprep.subr.mxu0 0.0
    %4236 = vmatpush1.msra.mxu0 %v4196
    %4237 = vmatprep.subr.mxu0 0.0
    %4238 = vmatpush1.msra.mxu0 %v4195
    %4239 = vmatprep.subr.mxu0 0.0
    %4240 = vmatpush2.msra.mxu0 0.0
    %4241 = vmatprep.subr.mxu0 0.0
    %4242 = vmatpush2.msra.mxu0 0.0
    %4243 = vmatprep.subr.mxu0 0.0
    %4244 = vmatpush2.msra.mxu0 0.0
    %4245 = vmatprep.subr.mxu0 0.0
    %4246 = vmatpush2.msra.mxu0 0.0
    %4247 = vmatprep.subr.mxu0 0.0
    %4248 = vmatpush2.msra.mxu0 0.0
    %4249 = vmatprep.subr.mxu0 0.0
    %4250 = vmatpush2.msra.mxu0 0.0
    %4251 = vmatprep.subr.mxu0 0.0
    %4252 = vmatpush2.msra.mxu0 0.0
    %4253 = vmatprep.subr.mxu0 0.0
    %4254 = vmatpush2.msra.mxu0 0.0
    %4255 = vmatprep.subr.mxu0 0.0
    %4256 = vmatpush2.msra.mxu0 0.0
    %4257 = vmatprep.subr.mxu0 0.0
    %4258 = vmatpush2.msra.mxu0 0.0
    %4259 = vmatprep.subr.mxu0 0.0
    %4260 = vmatpush2.msra.mxu0 0.0
    %4261 = vmatprep.subr.mxu0 0.0
    %4262 = vmatpush2.msra.mxu0 0.0
    %4263 = vmatprep.subr.mxu0 0.0
    %4264 = vmatpush2.msra.mxu0 0.0
    %4265 = vmatprep.subr.mxu0 0.0
    %4266 = vmatpush2.msra.mxu0 0.0
    %4267 = vmatprep.subr.mxu0 0.0
    %4268 = vmatpush2.msra.mxu0 0.0
    %4269 = vmatprep.subr.mxu0 0.0
    %4270 = vmatpush2.msra.mxu0 0.0
    %4271 = vmatprep.mubr.f32.mxu0 0.0
    %4272 = vmatmul.mubr.f32.gmra.mxu0 %v4026
    %v4273 = vpop.f32.mrf.mxu0
    %v4274 = vadd.f32 %v4205, %v4273
    %v4275 = vpop.f32.mrf.mxu0
    %4276 = vmatprep.mubr.f32.mxu0 0.0
    %4277 = vmatmul.mubr.f32.gmra.mxu0 %v4029
    %v4278 = vpop.f32.mrf.mxu0
    %v4279 = vadd.f32 %v4205, %v4278
    %v4280 = vpop.f32.mrf.mxu0
    %4281 = vdwg.mxu0
    %v4283 = vsel %vm407, %v4098, 0
    %v4286 = vsel %vm407, %v4186, 0
    %4288 = vmatprep.subr.mxu0 0.0
    %4289 = vmatpush1.xpose.msra.mxu0 0.0
    %4290 = vmatprep.subr.mxu0 0.0
    %4291 = vmatpush1.xpose.msra.mxu0 0.0
    %4292 = vmatprep.subr.mxu0 0.0
    %4293 = vmatpush1.xpose.msra.mxu0 0.0
    %4294 = vmatprep.subr.mxu0 0.0
    %4295 = vmatpush1.xpose.msra.mxu0 0.0
    %4296 = vmatprep.subr.mxu0 0.0
    %4297 = vmatpush1.xpose.msra.mxu0 0.0
    %4298 = vmatprep.subr.mxu0 0.0
    %4299 = vmatpush1.xpose.msra.mxu0 0.0
    %4300 = vmatprep.subr.mxu0 0.0
    %4301 = vmatpush1.xpose.msra.mxu0 0.0
    %4302 = vmatprep.subr.mxu0 0.0
    %4303 = vmatpush1.xpose.msra.mxu0 0.0
    %4304 = vmatprep.subr.mxu0 0.0
    %4305 = vmatpush1.xpose.msra.mxu0 0.0
    %4306 = vmatprep.subr.mxu0 0.0
    %4307 = vmatpush1.xpose.msra.mxu0 0.0
    %4308 = vmatprep.subr.mxu0 0.0
    %4309 = vmatpush1.xpose.msra.mxu0 0.0
    %4310 = vmatprep.subr.mxu0 0.0
    %4311 = vmatpush1.xpose.msra.mxu0 0.0
    %4312 = vmatprep.subr.mxu0 0.0
    %4313 = vmatpush1.xpose.msra.mxu0 0.0
    %4314 = vmatprep.subr.mxu0 0.0
    %4315 = vmatpush1.xpose.msra.mxu0 0.0
    %4316 = vmatprep.subr.mxu0 0.0
    %4317 = vmatpush1.xpose.msra.mxu0 0.0
    %4318 = vmatprep.subr.mxu0 0.0
    %4319 = vmatpush1.xpose.msra.mxu0 %v4286
    %4320 = vmatprep.subr.mxu0 0.0
    %4321 = vmatpush2.xpose.msra.mxu0 0.0
    %4322 = vmatprep.subr.mxu0 0.0
    %4323 = vmatpush2.xpose.msra.mxu0 0.0
    %4324 = vmatprep.subr.mxu0 0.0
    %4325 = vmatpush2.xpose.msra.mxu0 0.0
    %4326 = vmatprep.subr.mxu0 0.0
    %4327 = vmatpush2.xpose.msra.mxu0 0.0
    %4328 = vmatprep.subr.mxu0 0.0
    %4329 = vmatpush2.xpose.msra.mxu0 0.0
    %4330 = vmatprep.subr.mxu0 0.0
    %4331 = vmatpush2.xpose.msra.mxu0 0.0
    %4332 = vmatprep.subr.mxu0 0.0
    %4333 = vmatpush2.xpose.msra.mxu0 0.0
    %4334 = vmatprep.subr.mxu0 0.0
    %4335 = vmatpush2.xpose.msra.mxu0 0.0
    %4336 = vmatprep.subr.mxu0 0.0
    %4337 = vmatpush2.xpose.msra.mxu0 0.0
    %4338 = vmatprep.subr.mxu0 0.0
    %4339 = vmatpush2.xpose.msra.mxu0 0.0
    %4340 = vmatprep.subr.mxu0 0.0
    %4341 = vmatpush2.xpose.msra.mxu0 0.0
    %4342 = vmatprep.subr.mxu0 0.0
    %4343 = vmatpush2.xpose.msra.mxu0 0.0
    %4344 = vmatprep.subr.mxu0 0.0
    %4345 = vmatpush2.xpose.msra.mxu0 0.0
    %4346 = vmatprep.subr.mxu0 0.0
    %4347 = vmatpush2.xpose.msra.mxu0 0.0
    %4348 = vmatprep.subr.mxu0 0.0
    %4349 = vmatpush2.xpose.msra.mxu0 0.0
    %4350 = vmatprep.subr.mxu0 0.0
    %4351 = vmatpush2.xpose.msra.mxu0 0.0
    %4352 = vmatprep.mubr.f32.mxu0 0.0
    %4353 = vmatmul.mubr.f32.gmra.mxu0 %v4283
    %v4354 = vpop.f32.mrf.mxu0
    %v4355 = vadd.f32 0.0, %v4354
    %v4356 = vpop.f32.mrf.mxu0
    %4357 = vdwg.mxu0
    %4358 = vrot.lane.b32.xlu0 %v4098, 120
    %v4359 = vpop.permute.xlu0 %4358
    %4360 = vrot.lane.b32.xlu0 %v4186, 120
    %v4361 = vpop.permute.xlu0 %4360
    %v4362 = vsel %vm407, %v4359, 0
    %v4364 = vsel %vm407, %v4361, 0
    %4366 = vmatprep.subr.mxu0 0.0
    %4367 = vmatpush1.xpose.msra.mxu0 0.0
    %4368 = vmatprep.subr.mxu0 0.0
    %4369 = vmatpush1.xpose.msra.mxu0 0.0
    %4370 = vmatprep.subr.mxu0 0.0
    %4371 = vmatpush1.xpose.msra.mxu0 0.0
    %4372 = vmatprep.subr.mxu0 0.0
    %4373 = vmatpush1.xpose.msra.mxu0 0.0
    %4374 = vmatprep.subr.mxu0 0.0
    %4375 = vmatpush1.xpose.msra.mxu0 0.0
    %4376 = vmatprep.subr.mxu0 0.0
    %4377 = vmatpush1.xpose.msra.mxu0 0.0
    %4378 = vmatprep.subr.mxu0 0.0
    %4379 = vmatpush1.xpose.msra.mxu0 0.0
    %4380 = vmatprep.subr.mxu0 0.0
    %4381 = vmatpush1.xpose.msra.mxu0 0.0
    %4382 = vmatprep.subr.mxu0 0.0
    %4383 = vmatpush1.xpose.msra.mxu0 0.0
    %4384 = vmatprep.subr.mxu0 0.0
    %4385 = vmatpush1.xpose.msra.mxu0 0.0
    %4386 = vmatprep.subr.mxu0 0.0
    %4387 = vmatpush1.xpose.msra.mxu0 0.0
    %4388 = vmatprep.subr.mxu0 0.0
    %4389 = vmatpush1.xpose.msra.mxu0 0.0
    %4390 = vmatprep.subr.mxu0 0.0
    %4391 = vmatpush1.xpose.msra.mxu0 0.0
    %4392 = vmatprep.subr.mxu0 0.0
    %4393 = vmatpush1.xpose.msra.mxu0 0.0
    %4394 = vmatprep.subr.mxu0 0.0
    %4395 = vmatpush1.xpose.msra.mxu0 0.0
    %4396 = vmatprep.subr.mxu0 0.0
    %4397 = vmatpush1.xpose.msra.mxu0 %v4364
    %4398 = vmatprep.subr.mxu0 0.0
    %4399 = vmatpush2.xpose.msra.mxu0 0.0
    %4400 = vmatprep.subr.mxu0 0.0
    %4401 = vmatpush2.xpose.msra.mxu0 0.0
    %4402 = vmatprep.subr.mxu0 0.0
    %4403 = vmatpush2.xpose.msra.mxu0 0.0
    %4404 = vmatprep.subr.mxu0 0.0
    %4405 = vmatpush2.xpose.msra.mxu0 0.0
    %4406 = vmatprep.subr.mxu0 0.0
    %4407 = vmatpush2.xpose.msra.mxu0 0.0
    %4408 = vmatprep.subr.mxu0 0.0
    %4409 = vmatpush2.xpose.msra.mxu0 0.0
    %4410 = vmatprep.subr.mxu0 0.0
    %4411 = vmatpush2.xpose.msra.mxu0 0.0
    %4412 = vmatprep.subr.mxu0 0.0
    %4413 = vmatpush2.xpose.msra.mxu0 0.0
    %4414 = vmatprep.subr.mxu0 0.0
    %4415 = vmatpush2.xpose.msra.mxu0 0.0
    %4416 = vmatprep.subr.mxu0 0.0
    %4417 = vmatpush2.xpose.msra.mxu0 0.0
    %4418 = vmatprep.subr.mxu0 0.0
    %4419 = vmatpush2.xpose.msra.mxu0 0.0
    %4420 = vmatprep.subr.mxu0 0.0
    %4421 = vmatpush2.xpose.msra.mxu0 0.0
    %4422 = vmatprep.subr.mxu0 0.0
    %4423 = vmatpush2.xpose.msra.mxu0 0.0
    %4424 = vmatprep.subr.mxu0 0.0
    %4425 = vmatpush2.xpose.msra.mxu0 0.0
    %4426 = vmatprep.subr.mxu0 0.0
    %4427 = vmatpush2.xpose.msra.mxu0 0.0
    %4428 = vmatprep.subr.mxu0 0.0
    %4429 = vmatpush2.xpose.msra.mxu0 0.0
    %4430 = vmatprep.mubr.f32.mxu0 0.0
    %4431 = vmatmul.mubr.f32.gmra.mxu0 %v4362
    %v4432 = vpop.f32.mrf.mxu0
    %v4433 = vadd.f32 0.0, %v4432
    %v4434 = vpop.f32.mrf.mxu0
    %4435 = vdwg.mxu0
    %4436 = vrot.lane.b32.xlu0 %v4098, 112
    %v4437 = vpop.permute.xlu0 %4436
    %4438 = vrot.lane.b32.xlu0 %v4186, 112
    %v4439 = vpop.permute.xlu0 %4438
    %v4440 = vsel %vm407, %v4437, 0
    %v4442 = vsel %vm407, %v4439, 0
    %4444 = vmatprep.subr.mxu0 0.0
    %4445 = vmatpush1.xpose.msra.mxu0 0.0
    %4446 = vmatprep.subr.mxu0 0.0
    %4447 = vmatpush1.xpose.msra.mxu0 0.0
    %4448 = vmatprep.subr.mxu0 0.0
    %4449 = vmatpush1.xpose.msra.mxu0 0.0
    %4450 = vmatprep.subr.mxu0 0.0
    %4451 = vmatpush1.xpose.msra.mxu0 0.0
    %4452 = vmatprep.subr.mxu0 0.0
    %4453 = vmatpush1.xpose.msra.mxu0 0.0
    %4454 = vmatprep.subr.mxu0 0.0
    %4455 = vmatpush1.xpose.msra.mxu0 0.0
    %4456 = vmatprep.subr.mxu0 0.0
    %4457 = vmatpush1.xpose.msra.mxu0 0.0
    %4458 = vmatprep.subr.mxu0 0.0
    %4459 = vmatpush1.xpose.msra.mxu0 0.0
    %4460 = vmatprep.subr.mxu0 0.0
    %4461 = vmatpush1.xpose.msra.mxu0 0.0
    %4462 = vmatprep.subr.mxu0 0.0
    %4463 = vmatpush1.xpose.msra.mxu0 0.0
    %4464 = vmatprep.subr.mxu0 0.0
    %4465 = vmatpush1.xpose.msra.mxu0 0.0
    %4466 = vmatprep.subr.mxu0 0.0
    %4467 = vmatpush1.xpose.msra.mxu0 0.0
    %4468 = vmatprep.subr.mxu0 0.0
    %4469 = vmatpush1.xpose.msra.mxu0 0.0
    %4470 = vmatprep.subr.mxu0 0.0
    %4471 = vmatpush1.xpose.msra.mxu0 0.0
    %4472 = vmatprep.subr.mxu0 0.0
    %4473 = vmatpush1.xpose.msra.mxu0 0.0
    %4474 = vmatprep.subr.mxu0 0.0
    %4475 = vmatpush1.xpose.msra.mxu0 %v4442
    %4476 = vmatprep.subr.mxu0 0.0
    %4477 = vmatpush2.xpose.msra.mxu0 0.0
    %4478 = vmatprep.subr.mxu0 0.0
    %4479 = vmatpush2.xpose.msra.mxu0 0.0
    %4480 = vmatprep.subr.mxu0 0.0
    %4481 = vmatpush2.xpose.msra.mxu0 0.0
    %4482 = vmatprep.subr.mxu0 0.0
    %4483 = vmatpush2.xpose.msra.mxu0 0.0
    %4484 = vmatprep.subr.mxu0 0.0
    %4485 = vmatpush2.xpose.msra.mxu0 0.0
    %4486 = vmatprep.subr.mxu0 0.0
    %4487 = vmatpush2.xpose.msra.mxu0 0.0
    %4488 = vmatprep.subr.mxu0 0.0
    %4489 = vmatpush2.xpose.msra.mxu0 0.0
    %4490 = vmatprep.subr.mxu0 0.0
    %4491 = vmatpush2.xpose.msra.mxu0 0.0
    %4492 = vmatprep.subr.mxu0 0.0
    %4493 = vmatpush2.xpose.msra.mxu0 0.0
    %4494 = vmatprep.subr.mxu0 0.0
    %4495 = vmatpush2.xpose.msra.mxu0 0.0
    %4496 = vmatprep.subr.mxu0 0.0
    %4497 = vmatpush2.xpose.msra.mxu0 0.0
    %4498 = vmatprep.subr.mxu0 0.0
    %4499 = vmatpush2.xpose.msra.mxu0 0.0
    %4500 = vmatprep.subr.mxu0 0.0
    %4501 = vmatpush2.xpose.msra.mxu0 0.0
    %4502 = vmatprep.subr.mxu0 0.0
    %4503 = vmatpush2.xpose.msra.mxu0 0.0
    %4504 = vmatprep.subr.mxu0 0.0
    %4505 = vmatpush2.xpose.msra.mxu0 0.0
    %4506 = vmatprep.subr.mxu0 0.0
    %4507 = vmatpush2.xpose.msra.mxu0 0.0
    %4508 = vmatprep.mubr.f32.mxu0 0.0
    %4509 = vmatmul.mubr.f32.gmra.mxu0 %v4440
    %v4510 = vpop.f32.mrf.mxu0
    %v4511 = vadd.f32 0.0, %v4510
    %v4512 = vpop.f32.mrf.mxu0
    %4513 = vdwg.mxu0
    %4514 = vrot.lane.b32.xlu0 %v4098, 104
    %v4515 = vpop.permute.xlu0 %4514
    %4516 = vrot.lane.b32.xlu0 %v4186, 104
    %v4517 = vpop.permute.xlu0 %4516
    %v4518 = vsel %vm407, %v4515, 0
    %v4520 = vsel %vm407, %v4517, 0
    %4522 = vmatprep.subr.mxu0 0.0
    %4523 = vmatpush1.xpose.msra.mxu0 0.0
    %4524 = vmatprep.subr.mxu0 0.0
    %4525 = vmatpush1.xpose.msra.mxu0 0.0
    %4526 = vmatprep.subr.mxu0 0.0
    %4527 = vmatpush1.xpose.msra.mxu0 0.0
    %4528 = vmatprep.subr.mxu0 0.0
    %4529 = vmatpush1.xpose.msra.mxu0 0.0
    %4530 = vmatprep.subr.mxu0 0.0
    %4531 = vmatpush1.xpose.msra.mxu0 0.0
    %4532 = vmatprep.subr.mxu0 0.0
    %4533 = vmatpush1.xpose.msra.mxu0 0.0
    %4534 = vmatprep.subr.mxu0 0.0
    %4535 = vmatpush1.xpose.msra.mxu0 0.0
    %4536 = vmatprep.subr.mxu0 0.0
    %4537 = vmatpush1.xpose.msra.mxu0 0.0
    %4538 = vmatprep.subr.mxu0 0.0
    %4539 = vmatpush1.xpose.msra.mxu0 0.0
    %4540 = vmatprep.subr.mxu0 0.0
    %4541 = vmatpush1.xpose.msra.mxu0 0.0
    %4542 = vmatprep.subr.mxu0 0.0
    %4543 = vmatpush1.xpose.msra.mxu0 0.0
    %4544 = vmatprep.subr.mxu0 0.0
    %4545 = vmatpush1.xpose.msra.mxu0 0.0
    %4546 = vmatprep.subr.mxu0 0.0
    %4547 = vmatpush1.xpose.msra.mxu0 0.0
    %4548 = vmatprep.subr.mxu0 0.0
    %4549 = vmatpush1.xpose.msra.mxu0 0.0
    %4550 = vmatprep.subr.mxu0 0.0
    %4551 = vmatpush1.xpose.msra.mxu0 0.0
    %4552 = vmatprep.subr.mxu0 0.0
    %4553 = vmatpush1.xpose.msra.mxu0 %v4520
    %4554 = vmatprep.subr.mxu0 0.0
    %4555 = vmatpush2.xpose.msra.mxu0 0.0
    %4556 = vmatprep.subr.mxu0 0.0
    %4557 = vmatpush2.xpose.msra.mxu0 0.0
    %4558 = vmatprep.subr.mxu0 0.0
    %4559 = vmatpush2.xpose.msra.mxu0 0.0
    %4560 = vmatprep.subr.mxu0 0.0
    %4561 = vmatpush2.xpose.msra.mxu0 0.0
    %4562 = vmatprep.subr.mxu0 0.0
    %4563 = vmatpush2.xpose.msra.mxu0 0.0
    %4564 = vmatprep.subr.mxu0 0.0
    %4565 = vmatpush2.xpose.msra.mxu0 0.0
    %4566 = vmatprep.subr.mxu0 0.0
    %4567 = vmatpush2.xpose.msra.mxu0 0.0
    %4568 = vmatprep.subr.mxu0 0.0
    %4569 = vmatpush2.xpose.msra.mxu0 0.0
    %4570 = vmatprep.subr.mxu0 0.0
    %4571 = vmatpush2.xpose.msra.mxu0 0.0
    %4572 = vmatprep.subr.mxu0 0.0
    %4573 = vmatpush2.xpose.msra.mxu0 0.0
    %4574 = vmatprep.subr.mxu0 0.0
    %4575 = vmatpush2.xpose.msra.mxu0 0.0
    %4576 = vmatprep.subr.mxu0 0.0
    %4577 = vmatpush2.xpose.msra.mxu0 0.0
    %4578 = vmatprep.subr.mxu0 0.0
    %4579 = vmatpush2.xpose.msra.mxu0 0.0
    %4580 = vmatprep.subr.mxu0 0.0
    %4581 = vmatpush2.xpose.msra.mxu0 0.0
    %4582 = vmatprep.subr.mxu0 0.0
    %4583 = vmatpush2.xpose.msra.mxu0 0.0
    %4584 = vmatprep.subr.mxu0 0.0
    %4585 = vmatpush2.xpose.msra.mxu0 0.0
    %4586 = vmatprep.mubr.f32.mxu0 0.0
    %4587 = vmatmul.mubr.f32.gmra.mxu0 %v4518
    %v4588 = vpop.f32.mrf.mxu0
    %v4589 = vadd.f32 0.0, %v4588
    %v4590 = vpop.f32.mrf.mxu0
    %4591 = vdwg.mxu0
    %v4593 = vsel %vm407, %v4103, 0
    %v4596 = vsel %vm407, %v4191, 0
    %4598 = vmatprep.subr.mxu0 0.0
    %4599 = vmatpush1.xpose.msra.mxu0 0.0
    %4600 = vmatprep.subr.mxu0 0.0
    %4601 = vmatpush1.xpose.msra.mxu0 0.0
    %4602 = vmatprep.subr.mxu0 0.0
    %4603 = vmatpush1.xpose.msra.mxu0 0.0
    %4604 = vmatprep.subr.mxu0 0.0
    %4605 = vmatpush1.xpose.msra.mxu0 0.0
    %4606 = vmatprep.subr.mxu0 0.0
    %4607 = vmatpush1.xpose.msra.mxu0 0.0
    %4608 = vmatprep.subr.mxu0 0.0
    %4609 = vmatpush1.xpose.msra.mxu0 0.0
    %4610 = vmatprep.subr.mxu0 0.0
    %4611 = vmatpush1.xpose.msra.mxu0 0.0
    %4612 = vmatprep.subr.mxu0 0.0
    %4613 = vmatpush1.xpose.msra.mxu0 0.0
    %4614 = vmatprep.subr.mxu0 0.0
    %4615 = vmatpush1.xpose.msra.mxu0 0.0
    %4616 = vmatprep.subr.mxu0 0.0
    %4617 = vmatpush1.xpose.msra.mxu0 0.0
    %4618 = vmatprep.subr.mxu0 0.0
    %4619 = vmatpush1.xpose.msra.mxu0 0.0
    %4620 = vmatprep.subr.mxu0 0.0
    %4621 = vmatpush1.xpose.msra.mxu0 0.0
    %4622 = vmatprep.subr.mxu0 0.0
    %4623 = vmatpush1.xpose.msra.mxu0 0.0
    %4624 = vmatprep.subr.mxu0 0.0
    %4625 = vmatpush1.xpose.msra.mxu0 0.0
    %4626 = vmatprep.subr.mxu0 0.0
    %4627 = vmatpush1.xpose.msra.mxu0 0.0
    %4628 = vmatprep.subr.mxu0 0.0
    %4629 = vmatpush1.xpose.msra.mxu0 %v4596
    %4630 = vmatprep.subr.mxu0 0.0
    %4631 = vmatpush2.xpose.msra.mxu0 0.0
    %4632 = vmatprep.subr.mxu0 0.0
    %4633 = vmatpush2.xpose.msra.mxu0 0.0
    %4634 = vmatprep.subr.mxu0 0.0
    %4635 = vmatpush2.xpose.msra.mxu0 0.0
    %4636 = vmatprep.subr.mxu0 0.0
    %4637 = vmatpush2.xpose.msra.mxu0 0.0
    %4638 = vmatprep.subr.mxu0 0.0
    %4639 = vmatpush2.xpose.msra.mxu0 0.0
    %4640 = vmatprep.subr.mxu0 0.0
    %4641 = vmatpush2.xpose.msra.mxu0 0.0
    %4642 = vmatprep.subr.mxu0 0.0
    %4643 = vmatpush2.xpose.msra.mxu0 0.0
    %4644 = vmatprep.subr.mxu0 0.0
    %4645 = vmatpush2.xpose.msra.mxu0 0.0
    %4646 = vmatprep.subr.mxu0 0.0
    %4647 = vmatpush2.xpose.msra.mxu0 0.0
    %4648 = vmatprep.subr.mxu0 0.0
    %4649 = vmatpush2.xpose.msra.mxu0 0.0
    %4650 = vmatprep.subr.mxu0 0.0
    %4651 = vmatpush2.xpose.msra.mxu0 0.0
    %4652 = vmatprep.subr.mxu0 0.0
    %4653 = vmatpush2.xpose.msra.mxu0 0.0
    %4654 = vmatprep.subr.mxu0 0.0
    %4655 = vmatpush2.xpose.msra.mxu0 0.0
    %4656 = vmatprep.subr.mxu0 0.0
    %4657 = vmatpush2.xpose.msra.mxu0 0.0
    %4658 = vmatprep.subr.mxu0 0.0
    %4659 = vmatpush2.xpose.msra.mxu0 0.0
    %4660 = vmatprep.subr.mxu0 0.0
    %4661 = vmatpush2.xpose.msra.mxu0 0.0
    %4662 = vmatprep.mubr.f32.mxu0 0.0
    %4663 = vmatmul.mubr.f32.gmra.mxu0 %v4593
    %v4664 = vpop.f32.mrf.mxu0
    %v4665 = vadd.f32 0.0, %v4664
    %v4666 = vpop.f32.mrf.mxu0
    %4667 = vdwg.mxu0
    %4668 = vrot.lane.b32.xlu0 %v4103, 120
    %v4669 = vpop.permute.xlu0 %4668
    %4670 = vrot.lane.b32.xlu0 %v4191, 120
    %v4671 = vpop.permute.xlu0 %4670
    %v4672 = vsel %vm407, %v4669, 0
    %v4674 = vsel %vm407, %v4671, 0
    %4676 = vmatprep.subr.mxu0 0.0
    %4677 = vmatpush1.xpose.msra.mxu0 0.0
    %4678 = vmatprep.subr.mxu0 0.0
    %4679 = vmatpush1.xpose.msra.mxu0 0.0
    %4680 = vmatprep.subr.mxu0 0.0
    %4681 = vmatpush1.xpose.msra.mxu0 0.0
    %4682 = vmatprep.subr.mxu0 0.0
    %4683 = vmatpush1.xpose.msra.mxu0 0.0
    %4684 = vmatprep.subr.mxu0 0.0
    %4685 = vmatpush1.xpose.msra.mxu0 0.0
    %4686 = vmatprep.subr.mxu0 0.0
    %4687 = vmatpush1.xpose.msra.mxu0 0.0
    %4688 = vmatprep.subr.mxu0 0.0
    %4689 = vmatpush1.xpose.msra.mxu0 0.0
    %4690 = vmatprep.subr.mxu0 0.0
    %4691 = vmatpush1.xpose.msra.mxu0 0.0
    %4692 = vmatprep.subr.mxu0 0.0
    %4693 = vmatpush1.xpose.msra.mxu0 0.0
    %4694 = vmatprep.subr.mxu0 0.0
    %4695 = vmatpush1.xpose.msra.mxu0 0.0
    %4696 = vmatprep.subr.mxu0 0.0
    %4697 = vmatpush1.xpose.msra.mxu0 0.0
    %4698 = vmatprep.subr.mxu0 0.0
    %4699 = vmatpush1.xpose.msra.mxu0 0.0
    %4700 = vmatprep.subr.mxu0 0.0
    %4701 = vmatpush1.xpose.msra.mxu0 0.0
    %4702 = vmatprep.subr.mxu0 0.0
    %4703 = vmatpush1.xpose.msra.mxu0 0.0
    %4704 = vmatprep.subr.mxu0 0.0
    %4705 = vmatpush1.xpose.msra.mxu0 0.0
    %4706 = vmatprep.subr.mxu0 0.0
    %4707 = vmatpush1.xpose.msra.mxu0 %v4674
    %4708 = vmatprep.subr.mxu0 0.0
    %4709 = vmatpush2.xpose.msra.mxu0 0.0
    %4710 = vmatprep.subr.mxu0 0.0
    %4711 = vmatpush2.xpose.msra.mxu0 0.0
    %4712 = vmatprep.subr.mxu0 0.0
    %4713 = vmatpush2.xpose.msra.mxu0 0.0
    %4714 = vmatprep.subr.mxu0 0.0
    %4715 = vmatpush2.xpose.msra.mxu0 0.0
    %4716 = vmatprep.subr.mxu0 0.0
    %4717 = vmatpush2.xpose.msra.mxu0 0.0
    %4718 = vmatprep.subr.mxu0 0.0
    %4719 = vmatpush2.xpose.msra.mxu0 0.0
    %4720 = vmatprep.subr.mxu0 0.0
    %4721 = vmatpush2.xpose.msra.mxu0 0.0
    %4722 = vmatprep.subr.mxu0 0.0
    %4723 = vmatpush2.xpose.msra.mxu0 0.0
    %4724 = vmatprep.subr.mxu0 0.0
    %4725 = vmatpush2.xpose.msra.mxu0 0.0
    %4726 = vmatprep.subr.mxu0 0.0
    %4727 = vmatpush2.xpose.msra.mxu0 0.0
    %4728 = vmatprep.subr.mxu0 0.0
    %4729 = vmatpush2.xpose.msra.mxu0 0.0
    %4730 = vmatprep.subr.mxu0 0.0
    %4731 = vmatpush2.xpose.msra.mxu0 0.0
    %4732 = vmatprep.subr.mxu0 0.0
    %4733 = vmatpush2.xpose.msra.mxu0 0.0
    %4734 = vmatprep.subr.mxu0 0.0
    %4735 = vmatpush2.xpose.msra.mxu0 0.0
    %4736 = vmatprep.subr.mxu0 0.0
    %4737 = vmatpush2.xpose.msra.mxu0 0.0
    %4738 = vmatprep.subr.mxu0 0.0
    %4739 = vmatpush2.xpose.msra.mxu0 0.0
    %4740 = vmatprep.mubr.f32.mxu0 0.0
    %4741 = vmatmul.mubr.f32.gmra.mxu0 %v4672
    %v4742 = vpop.f32.mrf.mxu0
    %v4743 = vadd.f32 0.0, %v4742
    %v4744 = vpop.f32.mrf.mxu0
    %4745 = vdwg.mxu0
    %4746 = vrot.lane.b32.xlu0 %v4103, 112
    %v4747 = vpop.permute.xlu0 %4746
    %4748 = vrot.lane.b32.xlu0 %v4191, 112
    %v4749 = vpop.permute.xlu0 %4748
    %v4750 = vsel %vm407, %v4747, 0
    %v4752 = vsel %vm407, %v4749, 0
    %4754 = vmatprep.subr.mxu0 0.0
    %4755 = vmatpush1.xpose.msra.mxu0 0.0
    %4756 = vmatprep.subr.mxu0 0.0
    %4757 = vmatpush1.xpose.msra.mxu0 0.0
    %4758 = vmatprep.subr.mxu0 0.0
    %4759 = vmatpush1.xpose.msra.mxu0 0.0
    %4760 = vmatprep.subr.mxu0 0.0
    %4761 = vmatpush1.xpose.msra.mxu0 0.0
    %4762 = vmatprep.subr.mxu0 0.0
    %4763 = vmatpush1.xpose.msra.mxu0 0.0
    %4764 = vmatprep.subr.mxu0 0.0
    %4765 = vmatpush1.xpose.msra.mxu0 0.0
    %4766 = vmatprep.subr.mxu0 0.0
    %4767 = vmatpush1.xpose.msra.mxu0 0.0
    %4768 = vmatprep.subr.mxu0 0.0
    %4769 = vmatpush1.xpose.msra.mxu0 0.0
    %4770 = vmatprep.subr.mxu0 0.0
    %4771 = vmatpush1.xpose.msra.mxu0 0.0
    %4772 = vmatprep.subr.mxu0 0.0
    %4773 = vmatpush1.xpose.msra.mxu0 0.0
    %4774 = vmatprep.subr.mxu0 0.0
    %4775 = vmatpush1.xpose.msra.mxu0 0.0
    %4776 = vmatprep.subr.mxu0 0.0
    %4777 = vmatpush1.xpose.msra.mxu0 0.0
    %4778 = vmatprep.subr.mxu0 0.0
    %4779 = vmatpush1.xpose.msra.mxu0 0.0
    %4780 = vmatprep.subr.mxu0 0.0
    %4781 = vmatpush1.xpose.msra.mxu0 0.0
    %4782 = vmatprep.subr.mxu0 0.0
    %4783 = vmatpush1.xpose.msra.mxu0 0.0
    %4784 = vmatprep.subr.mxu0 0.0
    %4785 = vmatpush1.xpose.msra.mxu0 %v4752
    %4786 = vmatprep.subr.mxu0 0.0
    %4787 = vmatpush2.xpose.msra.mxu0 0.0
    %4788 = vmatprep.subr.mxu0 0.0
    %4789 = vmatpush2.xpose.msra.mxu0 0.0
    %4790 = vmatprep.subr.mxu0 0.0
    %4791 = vmatpush2.xpose.msra.mxu0 0.0
    %4792 = vmatprep.subr.mxu0 0.0
    %4793 = vmatpush2.xpose.msra.mxu0 0.0
    %4794 = vmatprep.subr.mxu0 0.0
    %4795 = vmatpush2.xpose.msra.mxu0 0.0
    %4796 = vmatprep.subr.mxu0 0.0
    %4797 = vmatpush2.xpose.msra.mxu0 0.0
    %4798 = vmatprep.subr.mxu0 0.0
    %4799 = vmatpush2.xpose.msra.mxu0 0.0
    %4800 = vmatprep.subr.mxu0 0.0
    %4801 = vmatpush2.xpose.msra.mxu0 0.0
    %4802 = vmatprep.subr.mxu0 0.0
    %4803 = vmatpush2.xpose.msra.mxu0 0.0
    %4804 = vmatprep.subr.mxu0 0.0
    %4805 = vmatpush2.xpose.msra.mxu0 0.0
    %4806 = vmatprep.subr.mxu0 0.0
    %4807 = vmatpush2.xpose.msra.mxu0 0.0
    %4808 = vmatprep.subr.mxu0 0.0
    %4809 = vmatpush2.xpose.msra.mxu0 0.0
    %4810 = vmatprep.subr.mxu0 0.0
    %4811 = vmatpush2.xpose.msra.mxu0 0.0
    %4812 = vmatprep.subr.mxu0 0.0
    %4813 = vmatpush2.xpose.msra.mxu0 0.0
    %4814 = vmatprep.subr.mxu0 0.0
    %4815 = vmatpush2.xpose.msra.mxu0 0.0
    %4816 = vmatprep.subr.mxu0 0.0
    %4817 = vmatpush2.xpose.msra.mxu0 0.0
    %4818 = vmatprep.mubr.f32.mxu0 0.0
    %4819 = vmatmul.mubr.f32.gmra.mxu0 %v4750
    %v4820 = vpop.f32.mrf.mxu0
    %v4821 = vadd.f32 0.0, %v4820
    %v4822 = vpop.f32.mrf.mxu0
    %4823 = vdwg.mxu0
    %4824 = vrot.lane.b32.xlu0 %v4103, 104
    %v4825 = vpop.permute.xlu0 %4824
    %4826 = vrot.lane.b32.xlu0 %v4191, 104
    %v4827 = vpop.permute.xlu0 %4826
    %v4828 = vsel %vm407, %v4825, 0
    %v4830 = vsel %vm407, %v4827, 0
    %4832 = vmatprep.subr.mxu0 0.0
    %4833 = vmatpush1.xpose.msra.mxu0 0.0
    %4834 = vmatprep.subr.mxu0 0.0
    %4835 = vmatpush1.xpose.msra.mxu0 0.0
    %4836 = vmatprep.subr.mxu0 0.0
    %4837 = vmatpush1.xpose.msra.mxu0 0.0
    %4838 = vmatprep.subr.mxu0 0.0
    %4839 = vmatpush1.xpose.msra.mxu0 0.0
    %4840 = vmatprep.subr.mxu0 0.0
    %4841 = vmatpush1.xpose.msra.mxu0 0.0
    %4842 = vmatprep.subr.mxu0 0.0
    %4843 = vmatpush1.xpose.msra.mxu0 0.0
    %4844 = vmatprep.subr.mxu0 0.0
    %4845 = vmatpush1.xpose.msra.mxu0 0.0
    %4846 = vmatprep.subr.mxu0 0.0
    %4847 = vmatpush1.xpose.msra.mxu0 0.0
    %4848 = vmatprep.subr.mxu0 0.0
    %4849 = vmatpush1.xpose.msra.mxu0 0.0
    %4850 = vmatprep.subr.mxu0 0.0
    %4851 = vmatpush1.xpose.msra.mxu0 0.0
    %4852 = vmatprep.subr.mxu0 0.0
    %4853 = vmatpush1.xpose.msra.mxu0 0.0
    %4854 = vmatprep.subr.mxu0 0.0
    %4855 = vmatpush1.xpose.msra.mxu0 0.0
    %4856 = vmatprep.subr.mxu0 0.0
    %4857 = vmatpush1.xpose.msra.mxu0 0.0
    %4858 = vmatprep.subr.mxu0 0.0
    %4859 = vmatpush1.xpose.msra.mxu0 0.0
    %4860 = vmatprep.subr.mxu0 0.0
    %4861 = vmatpush1.xpose.msra.mxu0 0.0
    %4862 = vmatprep.subr.mxu0 0.0
    %4863 = vmatpush1.xpose.msra.mxu0 %v4830
    %4864 = vmatprep.subr.mxu0 0.0
    %4865 = vmatpush2.xpose.msra.mxu0 0.0
    %4866 = vmatprep.subr.mxu0 0.0
    %4867 = vmatpush2.xpose.msra.mxu0 0.0
    %4868 = vmatprep.subr.mxu0 0.0
    %4869 = vmatpush2.xpose.msra.mxu0 0.0
    %4870 = vmatprep.subr.mxu0 0.0
    %4871 = vmatpush2.xpose.msra.mxu0 0.0
    %4872 = vmatprep.subr.mxu0 0.0
    %4873 = vmatpush2.xpose.msra.mxu0 0.0
    %4874 = vmatprep.subr.mxu0 0.0
    %4875 = vmatpush2.xpose.msra.mxu0 0.0
    %4876 = vmatprep.subr.mxu0 0.0
    %4877 = vmatpush2.xpose.msra.mxu0 0.0
    %4878 = vmatprep.subr.mxu0 0.0
    %4879 = vmatpush2.xpose.msra.mxu0 0.0
    %4880 = vmatprep.subr.mxu0 0.0
    %4881 = vmatpush2.xpose.msra.mxu0 0.0
    %4882 = vmatprep.subr.mxu0 0.0
    %4883 = vmatpush2.xpose.msra.mxu0 0.0
    %4884 = vmatprep.subr.mxu0 0.0
    %4885 = vmatpush2.xpose.msra.mxu0 0.0
    %4886 = vmatprep.subr.mxu0 0.0
    %4887 = vmatpush2.xpose.msra.mxu0 0.0
    %4888 = vmatprep.subr.mxu0 0.0
    %4889 = vmatpush2.xpose.msra.mxu0 0.0
    %4890 = vmatprep.subr.mxu0 0.0
    %4891 = vmatpush2.xpose.msra.mxu0 0.0
    %4892 = vmatprep.subr.mxu0 0.0
    %4893 = vmatpush2.xpose.msra.mxu0 0.0
    %4894 = vmatprep.subr.mxu0 0.0
    %4895 = vmatpush2.xpose.msra.mxu0 0.0
    %4896 = vmatprep.mubr.f32.mxu0 0.0
    %4897 = vmatmul.mubr.f32.gmra.mxu0 %v4828
    %v4898 = vpop.f32.mrf.mxu0
    %v4899 = vadd.f32 0.0, %v4898
    %v4900 = vpop.f32.mrf.mxu0
    %4901 = vdwg.mxu0
    %v4902 = vmul.f32 %v4355, 0.35355338
    %v4903 = vmul.f32 %v4433, 0.35355338
    %v4904 = vmul.f32 %v4511, 0.35355338
    %v4905 = vmul.f32 %v4589, 0.35355338
    %v4906 = vmul.f32 %v4665, 0.35355338
    %v4907 = vmul.f32 %v4743, 0.35355338
    %v4908 = vmul.f32 %v4821, 0.35355338
    %v4909 = vmul.f32 %v4899, 0.35355338
    %v4910 = vadd.f32 %v4902, %v69
    %v4911 = vadd.f32 %v4903, %v70
    %v4912 = vadd.f32 %v4904, %v71
    %v4913 = vadd.f32 %v4905, %v72
    %v4914 = vadd.f32 %v4906, %v73
    %v4915 = vadd.f32 %v4907, %v74
    %v4916 = vadd.f32 %v4908, %v75
    %v4917 = vadd.f32 %v4909, %v76
    %v4918 = vsel %vm407, %v4910, -inf
    %4919 = vmax.xlane.f32.xlu0 %v4918
    %v4920 = vpop.xlane.xlu0 %4919
    %v4921 = vsel %vm407, %v4911, -inf
    %4922 = vmax.xlane.f32.xlu0 %v4921
    %v4923 = vpop.xlane.xlu0 %4922
    %v4924 = vsel %vm407, %v4912, -inf
    %4925 = vmax.xlane.f32.xlu0 %v4924
    %v4926 = vpop.xlane.xlu0 %4925
    %v4927 = vsel %vm407, %v4913, -inf
    %4928 = vmax.xlane.f32.xlu0 %v4927
    %v4929 = vpop.xlane.xlu0 %4928
    %v4930 = vsel %vm407, %v4914, -inf
    %4931 = vmax.xlane.f32.xlu0 %v4930
    %v4932 = vpop.xlane.xlu0 %4931
    %v4933 = vsel %vm407, %v4915, -inf
    %4934 = vmax.xlane.f32.xlu0 %v4933
    %v4935 = vpop.xlane.xlu0 %4934
    %v4936 = vsel %vm407, %v4916, -inf
    %4937 = vmax.xlane.f32.xlu0 %v4936
    %v4938 = vpop.xlane.xlu0 %4937
    %v4939 = vsel %vm407, %v4917, -inf
    %4940 = vmax.xlane.f32.xlu0 %v4939
    %v4941 = vpop.xlane.xlu0 %4940
    %v4942 = vsub.f32 %v4910, %v4920
    %v4943 = vsub.f32 %v4911, %v4923
    %v4944 = vsub.f32 %v4912, %v4926
    %v4945 = vsub.f32 %v4913, %v4929
    %v4946 = vsub.f32 %v4914, %v4932
    %v4947 = vsub.f32 %v4915, %v4935
    %v4948 = vsub.f32 %v4916, %v4938
    %v4949 = vsub.f32 %v4917, %v4941
    %v4950 = vmul.f32 %v4942, 1.442695
    %v4951 = vpow.pop %v4950
    %v4952 = vmul.f32 %v4943, 1.442695
    %v4953 = vpow.pop %v4952
    %v4954 = vmul.f32 %v4944, 1.442695
    %v4955 = vpow.pop %v4954
    %v4956 = vmul.f32 %v4945, 1.442695
    %v4957 = vpow.pop %v4956
    %v4958 = vmul.f32 %v4946, 1.442695
    %v4959 = vpow.pop %v4958
    %v4960 = vmul.f32 %v4947, 1.442695
    %v4961 = vpow.pop %v4960
    %v4962 = vmul.f32 %v4948, 1.442695
    %v4963 = vpow.pop %v4962
    %v4964 = vmul.f32 %v4949, 1.442695
    %v4965 = vpow.pop %v4964
    %v4966 = vsel %vm407, %v4951, 0.0
    %4967 = vadd.xlane.f32.xlu0 %v4966
    %v4968 = vpop.xlane.xlu0 %4967
    %v4969 = vsel %vm407, %v4953, 0.0
    %4970 = vadd.xlane.f32.xlu0 %v4969
    %v4971 = vpop.xlane.xlu0 %4970
    %v4972 = vsel %vm407, %v4955, 0.0
    %4973 = vadd.xlane.f32.xlu0 %v4972
    %v4974 = vpop.xlane.xlu0 %4973
    %v4975 = vsel %vm407, %v4957, 0.0
    %4976 = vadd.xlane.f32.xlu0 %v4975
    %v4977 = vpop.xlane.xlu0 %4976
    %v4978 = vsel %vm407, %v4959, 0.0
    %4979 = vadd.xlane.f32.xlu0 %v4978
    %v4980 = vpop.xlane.xlu0 %4979
    %v4981 = vsel %vm407, %v4961, 0.0
    %4982 = vadd.xlane.f32.xlu0 %v4981
    %v4983 = vpop.xlane.xlu0 %4982
    %v4984 = vsel %vm407, %v4963, 0.0
    %4985 = vadd.xlane.f32.xlu0 %v4984
    %v4986 = vpop.xlane.xlu0 %4985
    %v4987 = vsel %vm407, %v4965, 0.0
    %4988 = vadd.xlane.f32.xlu0 %v4987
    %v4989 = vpop.xlane.xlu0 %4988
    %v4990 = vrcp.pop %v4968
    %v4991 = vmul.f32 %v4951, %v4990
    %v4992 = vrcp.pop %v4971
    %v4993 = vmul.f32 %v4953, %v4992
    %v4994 = vrcp.pop %v4974
    %v4995 = vmul.f32 %v4955, %v4994
    %v4996 = vrcp.pop %v4977
    %v4997 = vmul.f32 %v4957, %v4996
    %v4998 = vrcp.pop %v4980
    %v4999 = vmul.f32 %v4959, %v4998
    %v5000 = vrcp.pop %v4983
    %v5001 = vmul.f32 %v4961, %v5000
    %v5002 = vrcp.pop %v4986
    %v5003 = vmul.f32 %v4963, %v5002
    %v5004 = vrcp.pop %v4989
    %v5005 = vmul.f32 %v4965, %v5004
    %v5007 = vsel %vm407, %v4991, 0
    %5009 = vmatprep.subr.mxu0 0.0
    %5010 = vmatpush1.msra.mxu0 0.0
    %5011 = vmatprep.subr.mxu0 0.0
    %5012 = vmatpush1.msra.mxu0 0.0
    %5013 = vmatprep.subr.mxu0 0.0
    %5014 = vmatpush1.msra.mxu0 0.0
    %5015 = vmatprep.subr.mxu0 0.0
    %5016 = vmatpush1.msra.mxu0 0.0
    %5017 = vmatprep.subr.mxu0 0.0
    %5018 = vmatpush1.msra.mxu0 0.0
    %5019 = vmatprep.subr.mxu0 0.0
    %5020 = vmatpush1.msra.mxu0 0.0
    %5021 = vmatprep.subr.mxu0 0.0
    %5022 = vmatpush1.msra.mxu0 0.0
    %5023 = vmatprep.subr.mxu0 0.0
    %5024 = vmatpush1.msra.mxu0 0.0
    %5025 = vmatprep.subr.mxu0 0.0
    %5026 = vmatpush1.msra.mxu0 0.0
    %5027 = vmatprep.subr.mxu0 0.0
    %5028 = vmatpush1.msra.mxu0 0.0
    %5029 = vmatprep.subr.mxu0 0.0
    %5030 = vmatpush1.msra.mxu0 0.0
    %5031 = vmatprep.subr.mxu0 0.0
    %5032 = vmatpush1.msra.mxu0 0.0
    %5033 = vmatprep.subr.mxu0 0.0
    %5034 = vmatpush1.msra.mxu0 0.0
    %5035 = vmatprep.subr.mxu0 0.0
    %5036 = vmatpush1.msra.mxu0 0.0
    %5037 = vmatprep.subr.mxu0 0.0
    %5038 = vmatpush1.msra.mxu0 0.0
    %5039 = vmatprep.subr.mxu0 0.0
    %5040 = vmatpush1.msra.mxu0 %v4274
    %5041 = vmatprep.subr.mxu0 0.0
    %5042 = vmatpush2.msra.mxu0 0.0
    %5043 = vmatprep.subr.mxu0 0.0
    %5044 = vmatpush2.msra.mxu0 0.0
    %5045 = vmatprep.subr.mxu0 0.0
    %5046 = vmatpush2.msra.mxu0 0.0
    %5047 = vmatprep.subr.mxu0 0.0
    %5048 = vmatpush2.msra.mxu0 0.0
    %5049 = vmatprep.subr.mxu0 0.0
    %5050 = vmatpush2.msra.mxu0 0.0
    %5051 = vmatprep.subr.mxu0 0.0
    %5052 = vmatpush2.msra.mxu0 0.0
    %5053 = vmatprep.subr.mxu0 0.0
    %5054 = vmatpush2.msra.mxu0 0.0
    %5055 = vmatprep.subr.mxu0 0.0
    %5056 = vmatpush2.msra.mxu0 0.0
    %5057 = vmatprep.subr.mxu0 0.0
    %5058 = vmatpush2.msra.mxu0 0.0
    %5059 = vmatprep.subr.mxu0 0.0
    %5060 = vmatpush2.msra.mxu0 0.0
    %5061 = vmatprep.subr.mxu0 0.0
    %5062 = vmatpush2.msra.mxu0 0.0
    %5063 = vmatprep.subr.mxu0 0.0
    %5064 = vmatpush2.msra.mxu0 0.0
    %5065 = vmatprep.subr.mxu0 0.0
    %5066 = vmatpush2.msra.mxu0 0.0
    %5067 = vmatprep.subr.mxu0 0.0
    %5068 = vmatpush2.msra.mxu0 0.0
    %5069 = vmatprep.subr.mxu0 0.0
    %5070 = vmatpush2.msra.mxu0 0.0
    %5071 = vmatprep.subr.mxu0 0.0
    %5072 = vmatpush2.msra.mxu0 0.0
    %5073 = vmatprep.mubr.f32.mxu0 0.0
    %5074 = vmatmul.mubr.f32.gmra.mxu0 %v5007
    %v5075 = vpop.f32.mrf.mxu0
    %v5076 = vadd.f32 0.0, %v5075
    %v5077 = vpop.f32.mrf.mxu0
    %5078 = vdwg.mxu0
    %5080 = vrot.lane.b32.xlu0 %v4274, 120
    %v5081 = vpop.permute.xlu0 %5080
    %v5084 = vsel %vm407, %v4993, 0
    %5086 = vmatprep.subr.mxu0 0.0
    %5087 = vmatpush1.msra.mxu0 0.0
    %5088 = vmatprep.subr.mxu0 0.0
    %5089 = vmatpush1.msra.mxu0 0.0
    %5090 = vmatprep.subr.mxu0 0.0
    %5091 = vmatpush1.msra.mxu0 0.0
    %5092 = vmatprep.subr.mxu0 0.0
    %5093 = vmatpush1.msra.mxu0 0.0
    %5094 = vmatprep.subr.mxu0 0.0
    %5095 = vmatpush1.msra.mxu0 0.0
    %5096 = vmatprep.subr.mxu0 0.0
    %5097 = vmatpush1.msra.mxu0 0.0
    %5098 = vmatprep.subr.mxu0 0.0
    %5099 = vmatpush1.msra.mxu0 0.0
    %5100 = vmatprep.subr.mxu0 0.0
    %5101 = vmatpush1.msra.mxu0 0.0
    %5102 = vmatprep.subr.mxu0 0.0
    %5103 = vmatpush1.msra.mxu0 0.0
    %5104 = vmatprep.subr.mxu0 0.0
    %5105 = vmatpush1.msra.mxu0 0.0
    %5106 = vmatprep.subr.mxu0 0.0
    %5107 = vmatpush1.msra.mxu0 0.0
    %5108 = vmatprep.subr.mxu0 0.0
    %5109 = vmatpush1.msra.mxu0 0.0
    %5110 = vmatprep.subr.mxu0 0.0
    %5111 = vmatpush1.msra.mxu0 0.0
    %5112 = vmatprep.subr.mxu0 0.0
    %5113 = vmatpush1.msra.mxu0 0.0
    %5114 = vmatprep.subr.mxu0 0.0
    %5115 = vmatpush1.msra.mxu0 0.0
    %5116 = vmatprep.subr.mxu0 0.0
    %5117 = vmatpush1.msra.mxu0 %v5081
    %5118 = vmatprep.subr.mxu0 0.0
    %5119 = vmatpush2.msra.mxu0 0.0
    %5120 = vmatprep.subr.mxu0 0.0
    %5121 = vmatpush2.msra.mxu0 0.0
    %5122 = vmatprep.subr.mxu0 0.0
    %5123 = vmatpush2.msra.mxu0 0.0
    %5124 = vmatprep.subr.mxu0 0.0
    %5125 = vmatpush2.msra.mxu0 0.0
    %5126 = vmatprep.subr.mxu0 0.0
    %5127 = vmatpush2.msra.mxu0 0.0
    %5128 = vmatprep.subr.mxu0 0.0
    %5129 = vmatpush2.msra.mxu0 0.0
    %5130 = vmatprep.subr.mxu0 0.0
    %5131 = vmatpush2.msra.mxu0 0.0
    %5132 = vmatprep.subr.mxu0 0.0
    %5133 = vmatpush2.msra.mxu0 0.0
    %5134 = vmatprep.subr.mxu0 0.0
    %5135 = vmatpush2.msra.mxu0 0.0
    %5136 = vmatprep.subr.mxu0 0.0
    %5137 = vmatpush2.msra.mxu0 0.0
    %5138 = vmatprep.subr.mxu0 0.0
    %5139 = vmatpush2.msra.mxu0 0.0
    %5140 = vmatprep.subr.mxu0 0.0
    %5141 = vmatpush2.msra.mxu0 0.0
    %5142 = vmatprep.subr.mxu0 0.0
    %5143 = vmatpush2.msra.mxu0 0.0
    %5144 = vmatprep.subr.mxu0 0.0
    %5145 = vmatpush2.msra.mxu0 0.0
    %5146 = vmatprep.subr.mxu0 0.0
    %5147 = vmatpush2.msra.mxu0 0.0
    %5148 = vmatprep.subr.mxu0 0.0
    %5149 = vmatpush2.msra.mxu0 0.0
    %5150 = vmatprep.mubr.f32.mxu0 0.0
    %5151 = vmatmul.mubr.f32.gmra.mxu0 %v5084
    %v5152 = vpop.f32.mrf.mxu0
    %v5153 = vadd.f32 0.0, %v5152
    %v5154 = vpop.f32.mrf.mxu0
    %5155 = vdwg.mxu0
    %5156 = vrot.lane.b32.xlu0 %v4274, 112
    %v5157 = vpop.permute.xlu0 %5156
    %v5160 = vsel %vm407, %v4995, 0
    %5162 = vmatprep.subr.mxu0 0.0
    %5163 = vmatpush1.msra.mxu0 0.0
    %5164 = vmatprep.subr.mxu0 0.0
    %5165 = vmatpush1.msra.mxu0 0.0
    %5166 = vmatprep.subr.mxu0 0.0
    %5167 = vmatpush1.msra.mxu0 0.0
    %5168 = vmatprep.subr.mxu0 0.0
    %5169 = vmatpush1.msra.mxu0 0.0
    %5170 = vmatprep.subr.mxu0 0.0
    %5171 = vmatpush1.msra.mxu0 0.0
    %5172 = vmatprep.subr.mxu0 0.0
    %5173 = vmatpush1.msra.mxu0 0.0
    %5174 = vmatprep.subr.mxu0 0.0
    %5175 = vmatpush1.msra.mxu0 0.0
    %5176 = vmatprep.subr.mxu0 0.0
    %5177 = vmatpush1.msra.mxu0 0.0
    %5178 = vmatprep.subr.mxu0 0.0
    %5179 = vmatpush1.msra.mxu0 0.0
    %5180 = vmatprep.subr.mxu0 0.0
    %5181 = vmatpush1.msra.mxu0 0.0
    %5182 = vmatprep.subr.mxu0 0.0
    %5183 = vmatpush1.msra.mxu0 0.0
    %5184 = vmatprep.subr.mxu0 0.0
    %5185 = vmatpush1.msra.mxu0 0.0
    %5186 = vmatprep.subr.mxu0 0.0
    %5187 = vmatpush1.msra.mxu0 0.0
    %5188 = vmatprep.subr.mxu0 0.0
    %5189 = vmatpush1.msra.mxu0 0.0
    %5190 = vmatprep.subr.mxu0 0.0
    %5191 = vmatpush1.msra.mxu0 0.0
    %5192 = vmatprep.subr.mxu0 0.0
    %5193 = vmatpush1.msra.mxu0 %v5157
    %5194 = vmatprep.subr.mxu0 0.0
    %5195 = vmatpush2.msra.mxu0 0.0
    %5196 = vmatprep.subr.mxu0 0.0
    %5197 = vmatpush2.msra.mxu0 0.0
    %5198 = vmatprep.subr.mxu0 0.0
    %5199 = vmatpush2.msra.mxu0 0.0
    %5200 = vmatprep.subr.mxu0 0.0
    %5201 = vmatpush2.msra.mxu0 0.0
    %5202 = vmatprep.subr.mxu0 0.0
    %5203 = vmatpush2.msra.mxu0 0.0
    %5204 = vmatprep.subr.mxu0 0.0
    %5205 = vmatpush2.msra.mxu0 0.0
    %5206 = vmatprep.subr.mxu0 0.0
    %5207 = vmatpush2.msra.mxu0 0.0
    %5208 = vmatprep.subr.mxu0 0.0
    %5209 = vmatpush2.msra.mxu0 0.0
    %5210 = vmatprep.subr.mxu0 0.0
    %5211 = vmatpush2.msra.mxu0 0.0
    %5212 = vmatprep.subr.mxu0 0.0
    %5213 = vmatpush2.msra.mxu0 0.0
    %5214 = vmatprep.subr.mxu0 0.0
    %5215 = vmatpush2.msra.mxu0 0.0
    %5216 = vmatprep.subr.mxu0 0.0
    %5217 = vmatpush2.msra.mxu0 0.0
    %5218 = vmatprep.subr.mxu0 0.0
    %5219 = vmatpush2.msra.mxu0 0.0
    %5220 = vmatprep.subr.mxu0 0.0
    %5221 = vmatpush2.msra.mxu0 0.0
    %5222 = vmatprep.subr.mxu0 0.0
    %5223 = vmatpush2.msra.mxu0 0.0
    %5224 = vmatprep.subr.mxu0 0.0
    %5225 = vmatpush2.msra.mxu0 0.0
    %5226 = vmatprep.mubr.f32.mxu0 0.0
    %5227 = vmatmul.mubr.f32.gmra.mxu0 %v5160
    %v5228 = vpop.f32.mrf.mxu0
    %v5229 = vadd.f32 0.0, %v5228
    %v5230 = vpop.f32.mrf.mxu0
    %5231 = vdwg.mxu0
    %5232 = vrot.lane.b32.xlu0 %v4274, 104
    %v5233 = vpop.permute.xlu0 %5232
    %v5236 = vsel %vm407, %v4997, 0
    %5238 = vmatprep.subr.mxu0 0.0
    %5239 = vmatpush1.msra.mxu0 0.0
    %5240 = vmatprep.subr.mxu0 0.0
    %5241 = vmatpush1.msra.mxu0 0.0
    %5242 = vmatprep.subr.mxu0 0.0
    %5243 = vmatpush1.msra.mxu0 0.0
    %5244 = vmatprep.subr.mxu0 0.0
    %5245 = vmatpush1.msra.mxu0 0.0
    %5246 = vmatprep.subr.mxu0 0.0
    %5247 = vmatpush1.msra.mxu0 0.0
    %5248 = vmatprep.subr.mxu0 0.0
    %5249 = vmatpush1.msra.mxu0 0.0
    %5250 = vmatprep.subr.mxu0 0.0
    %5251 = vmatpush1.msra.mxu0 0.0
    %5252 = vmatprep.subr.mxu0 0.0
    %5253 = vmatpush1.msra.mxu0 0.0
    %5254 = vmatprep.subr.mxu0 0.0
    %5255 = vmatpush1.msra.mxu0 0.0
    %5256 = vmatprep.subr.mxu0 0.0
    %5257 = vmatpush1.msra.mxu0 0.0
    %5258 = vmatprep.subr.mxu0 0.0
    %5259 = vmatpush1.msra.mxu0 0.0
    %5260 = vmatprep.subr.mxu0 0.0
    %5261 = vmatpush1.msra.mxu0 0.0
    %5262 = vmatprep.subr.mxu0 0.0
    %5263 = vmatpush1.msra.mxu0 0.0
    %5264 = vmatprep.subr.mxu0 0.0
    %5265 = vmatpush1.msra.mxu0 0.0
    %5266 = vmatprep.subr.mxu0 0.0
    %5267 = vmatpush1.msra.mxu0 0.0
    %5268 = vmatprep.subr.mxu0 0.0
    %5269 = vmatpush1.msra.mxu0 %v5233
    %5270 = vmatprep.subr.mxu0 0.0
    %5271 = vmatpush2.msra.mxu0 0.0
    %5272 = vmatprep.subr.mxu0 0.0
    %5273 = vmatpush2.msra.mxu0 0.0
    %5274 = vmatprep.subr.mxu0 0.0
    %5275 = vmatpush2.msra.mxu0 0.0
    %5276 = vmatprep.subr.mxu0 0.0
    %5277 = vmatpush2.msra.mxu0 0.0
    %5278 = vmatprep.subr.mxu0 0.0
    %5279 = vmatpush2.msra.mxu0 0.0
    %5280 = vmatprep.subr.mxu0 0.0
    %5281 = vmatpush2.msra.mxu0 0.0
    %5282 = vmatprep.subr.mxu0 0.0
    %5283 = vmatpush2.msra.mxu0 0.0
    %5284 = vmatprep.subr.mxu0 0.0
    %5285 = vmatpush2.msra.mxu0 0.0
    %5286 = vmatprep.subr.mxu0 0.0
    %5287 = vmatpush2.msra.mxu0 0.0
    %5288 = vmatprep.subr.mxu0 0.0
    %5289 = vmatpush2.msra.mxu0 0.0
    %5290 = vmatprep.subr.mxu0 0.0
    %5291 = vmatpush2.msra.mxu0 0.0
    %5292 = vmatprep.subr.mxu0 0.0
    %5293 = vmatpush2.msra.mxu0 0.0
    %5294 = vmatprep.subr.mxu0 0.0
    %5295 = vmatpush2.msra.mxu0 0.0
    %5296 = vmatprep.subr.mxu0 0.0
    %5297 = vmatpush2.msra.mxu0 0.0
    %5298 = vmatprep.subr.mxu0 0.0
    %5299 = vmatpush2.msra.mxu0 0.0
    %5300 = vmatprep.subr.mxu0 0.0
    %5301 = vmatpush2.msra.mxu0 0.0
    %5302 = vmatprep.mubr.f32.mxu0 0.0
    %5303 = vmatmul.mubr.f32.gmra.mxu0 %v5236
    %v5304 = vpop.f32.mrf.mxu0
    %v5305 = vadd.f32 0.0, %v5304
    %v5306 = vpop.f32.mrf.mxu0
    %5307 = vdwg.mxu0
    %5309 = vrot.lane.b32.xlu0 %v5153, 8
    %v5310 = vpop.permute.xlu0 %5309
    %5313 = vrot.lane.b32.xlu0 %v5229, 16
    %v5314 = vpop.permute.xlu0 %5313
    %5317 = vrot.lane.b32.xlu0 %v5305, 24
    %v5318 = vpop.permute.xlu0 %5317
    %v5320 = vsel %vm407, %v5076, %v5310
    %v5321 = vsel %vm1447, %v5320, %v5314
    %v5322 = vsel %vm1449, %v5321, %v5318
    %v5324 = vsel %vm407, %v4999, 0
    %5326 = vmatprep.subr.mxu0 0.0
    %5327 = vmatpush1.msra.mxu0 0.0
    %5328 = vmatprep.subr.mxu0 0.0
    %5329 = vmatpush1.msra.mxu0 0.0
    %5330 = vmatprep.subr.mxu0 0.0
    %5331 = vmatpush1.msra.mxu0 0.0
    %5332 = vmatprep.subr.mxu0 0.0
    %5333 = vmatpush1.msra.mxu0 0.0
    %5334 = vmatprep.subr.mxu0 0.0
    %5335 = vmatpush1.msra.mxu0 0.0
    %5336 = vmatprep.subr.mxu0 0.0
    %5337 = vmatpush1.msra.mxu0 0.0
    %5338 = vmatprep.subr.mxu0 0.0
    %5339 = vmatpush1.msra.mxu0 0.0
    %5340 = vmatprep.subr.mxu0 0.0
    %5341 = vmatpush1.msra.mxu0 0.0
    %5342 = vmatprep.subr.mxu0 0.0
    %5343 = vmatpush1.msra.mxu0 0.0
    %5344 = vmatprep.subr.mxu0 0.0
    %5345 = vmatpush1.msra.mxu0 0.0
    %5346 = vmatprep.subr.mxu0 0.0
    %5347 = vmatpush1.msra.mxu0 0.0
    %5348 = vmatprep.subr.mxu0 0.0
    %5349 = vmatpush1.msra.mxu0 0.0
    %5350 = vmatprep.subr.mxu0 0.0
    %5351 = vmatpush1.msra.mxu0 0.0
    %5352 = vmatprep.subr.mxu0 0.0
    %5353 = vmatpush1.msra.mxu0 0.0
    %5354 = vmatprep.subr.mxu0 0.0
    %5355 = vmatpush1.msra.mxu0 0.0
    %5356 = vmatprep.subr.mxu0 0.0
    %5357 = vmatpush1.msra.mxu0 %v4279
    %5358 = vmatprep.subr.mxu0 0.0
    %5359 = vmatpush2.msra.mxu0 0.0
    %5360 = vmatprep.subr.mxu0 0.0
    %5361 = vmatpush2.msra.mxu0 0.0
    %5362 = vmatprep.subr.mxu0 0.0
    %5363 = vmatpush2.msra.mxu0 0.0
    %5364 = vmatprep.subr.mxu0 0.0
    %5365 = vmatpush2.msra.mxu0 0.0
    %5366 = vmatprep.subr.mxu0 0.0
    %5367 = vmatpush2.msra.mxu0 0.0
    %5368 = vmatprep.subr.mxu0 0.0
    %5369 = vmatpush2.msra.mxu0 0.0
    %5370 = vmatprep.subr.mxu0 0.0
    %5371 = vmatpush2.msra.mxu0 0.0
    %5372 = vmatprep.subr.mxu0 0.0
    %5373 = vmatpush2.msra.mxu0 0.0
    %5374 = vmatprep.subr.mxu0 0.0
    %5375 = vmatpush2.msra.mxu0 0.0
    %5376 = vmatprep.subr.mxu0 0.0
    %5377 = vmatpush2.msra.mxu0 0.0
    %5378 = vmatprep.subr.mxu0 0.0
    %5379 = vmatpush2.msra.mxu0 0.0
    %5380 = vmatprep.subr.mxu0 0.0
    %5381 = vmatpush2.msra.mxu0 0.0
    %5382 = vmatprep.subr.mxu0 0.0
    %5383 = vmatpush2.msra.mxu0 0.0
    %5384 = vmatprep.subr.mxu0 0.0
    %5385 = vmatpush2.msra.mxu0 0.0
    %5386 = vmatprep.subr.mxu0 0.0
    %5387 = vmatpush2.msra.mxu0 0.0
    %5388 = vmatprep.subr.mxu0 0.0
    %5389 = vmatpush2.msra.mxu0 0.0
    %5390 = vmatprep.mubr.f32.mxu0 0.0
    %5391 = vmatmul.mubr.f32.gmra.mxu0 %v5324
    %v5392 = vpop.f32.mrf.mxu0
    %v5393 = vadd.f32 0.0, %v5392
    %v5394 = vpop.f32.mrf.mxu0
    %5395 = vdwg.mxu0
    %5397 = vrot.lane.b32.xlu0 %v4279, 120
    %v5398 = vpop.permute.xlu0 %5397
    %v5401 = vsel %vm407, %v5001, 0
    %5403 = vmatprep.subr.mxu0 0.0
    %5404 = vmatpush1.msra.mxu0 0.0
    %5405 = vmatprep.subr.mxu0 0.0
    %5406 = vmatpush1.msra.mxu0 0.0
    %5407 = vmatprep.subr.mxu0 0.0
    %5408 = vmatpush1.msra.mxu0 0.0
    %5409 = vmatprep.subr.mxu0 0.0
    %5410 = vmatpush1.msra.mxu0 0.0
    %5411 = vmatprep.subr.mxu0 0.0
    %5412 = vmatpush1.msra.mxu0 0.0
    %5413 = vmatprep.subr.mxu0 0.0
    %5414 = vmatpush1.msra.mxu0 0.0
    %5415 = vmatprep.subr.mxu0 0.0
    %5416 = vmatpush1.msra.mxu0 0.0
    %5417 = vmatprep.subr.mxu0 0.0
    %5418 = vmatpush1.msra.mxu0 0.0
    %5419 = vmatprep.subr.mxu0 0.0
    %5420 = vmatpush1.msra.mxu0 0.0
    %5421 = vmatprep.subr.mxu0 0.0
    %5422 = vmatpush1.msra.mxu0 0.0
    %5423 = vmatprep.subr.mxu0 0.0
    %5424 = vmatpush1.msra.mxu0 0.0
    %5425 = vmatprep.subr.mxu0 0.0
    %5426 = vmatpush1.msra.mxu0 0.0
    %5427 = vmatprep.subr.mxu0 0.0
    %5428 = vmatpush1.msra.mxu0 0.0
    %5429 = vmatprep.subr.mxu0 0.0
    %5430 = vmatpush1.msra.mxu0 0.0
    %5431 = vmatprep.subr.mxu0 0.0
    %5432 = vmatpush1.msra.mxu0 0.0
    %5433 = vmatprep.subr.mxu0 0.0
    %5434 = vmatpush1.msra.mxu0 %v5398
    %5435 = vmatprep.subr.mxu0 0.0
    %5436 = vmatpush2.msra.mxu0 0.0
    %5437 = vmatprep.subr.mxu0 0.0
    %5438 = vmatpush2.msra.mxu0 0.0
    %5439 = vmatprep.subr.mxu0 0.0
    %5440 = vmatpush2.msra.mxu0 0.0
    %5441 = vmatprep.subr.mxu0 0.0
    %5442 = vmatpush2.msra.mxu0 0.0
    %5443 = vmatprep.subr.mxu0 0.0
    %5444 = vmatpush2.msra.mxu0 0.0
    %5445 = vmatprep.subr.mxu0 0.0
    %5446 = vmatpush2.msra.mxu0 0.0
    %5447 = vmatprep.subr.mxu0 0.0
    %5448 = vmatpush2.msra.mxu0 0.0
    %5449 = vmatprep.subr.mxu0 0.0
    %5450 = vmatpush2.msra.mxu0 0.0
    %5451 = vmatprep.subr.mxu0 0.0
    %5452 = vmatpush2.msra.mxu0 0.0
    %5453 = vmatprep.subr.mxu0 0.0
    %5454 = vmatpush2.msra.mxu0 0.0
    %5455 = vmatprep.subr.mxu0 0.0
    %5456 = vmatpush2.msra.mxu0 0.0
    %5457 = vmatprep.subr.mxu0 0.0
    %5458 = vmatpush2.msra.mxu0 0.0
    %5459 = vmatprep.subr.mxu0 0.0
    %5460 = vmatpush2.msra.mxu0 0.0
    %5461 = vmatprep.subr.mxu0 0.0
    %5462 = vmatpush2.msra.mxu0 0.0
    %5463 = vmatprep.subr.mxu0 0.0
    %5464 = vmatpush2.msra.mxu0 0.0
    %5465 = vmatprep.subr.mxu0 0.0
    %5466 = vmatpush2.msra.mxu0 0.0
    %5467 = vmatprep.mubr.f32.mxu0 0.0
    %5468 = vmatmul.mubr.f32.gmra.mxu0 %v5401
    %v5469 = vpop.f32.mrf.mxu0
    %v5470 = vadd.f32 0.0, %v5469
    %v5471 = vpop.f32.mrf.mxu0
    %5472 = vdwg.mxu0
    %5473 = vrot.lane.b32.xlu0 %v4279, 112
    %v5474 = vpop.permute.xlu0 %5473
    %v5477 = vsel %vm407, %v5003, 0
    %5479 = vmatprep.subr.mxu0 0.0
    %5480 = vmatpush1.msra.mxu0 0.0
    %5481 = vmatprep.subr.mxu0 0.0
    %5482 = vmatpush1.msra.mxu0 0.0
    %5483 = vmatprep.subr.mxu0 0.0
    %5484 = vmatpush1.msra.mxu0 0.0
    %5485 = vmatprep.subr.mxu0 0.0
    %5486 = vmatpush1.msra.mxu0 0.0
    %5487 = vmatprep.subr.mxu0 0.0
    %5488 = vmatpush1.msra.mxu0 0.0
    %5489 = vmatprep.subr.mxu0 0.0
    %5490 = vmatpush1.msra.mxu0 0.0
    %5491 = vmatprep.subr.mxu0 0.0
    %5492 = vmatpush1.msra.mxu0 0.0
    %5493 = vmatprep.subr.mxu0 0.0
    %5494 = vmatpush1.msra.mxu0 0.0
    %5495 = vmatprep.subr.mxu0 0.0
    %5496 = vmatpush1.msra.mxu0 0.0
    %5497 = vmatprep.subr.mxu0 0.0
    %5498 = vmatpush1.msra.mxu0 0.0
    %5499 = vmatprep.subr.mxu0 0.0
    %5500 = vmatpush1.msra.mxu0 0.0
    %5501 = vmatprep.subr.mxu0 0.0
    %5502 = vmatpush1.msra.mxu0 0.0
    %5503 = vmatprep.subr.mxu0 0.0
    %5504 = vmatpush1.msra.mxu0 0.0
    %5505 = vmatprep.subr.mxu0 0.0
    %5506 = vmatpush1.msra.mxu0 0.0
    %5507 = vmatprep.subr.mxu0 0.0
    %5508 = vmatpush1.msra.mxu0 0.0
    %5509 = vmatprep.subr.mxu0 0.0
    %5510 = vmatpush1.msra.mxu0 %v5474
    %5511 = vmatprep.subr.mxu0 0.0
    %5512 = vmatpush2.msra.mxu0 0.0
    %5513 = vmatprep.subr.mxu0 0.0
    %5514 = vmatpush2.msra.mxu0 0.0
    %5515 = vmatprep.subr.mxu0 0.0
    %5516 = vmatpush2.msra.mxu0 0.0
    %5517 = vmatprep.subr.mxu0 0.0
    %5518 = vmatpush2.msra.mxu0 0.0
    %5519 = vmatprep.subr.mxu0 0.0
    %5520 = vmatpush2.msra.mxu0 0.0
    %5521 = vmatprep.subr.mxu0 0.0
    %5522 = vmatpush2.msra.mxu0 0.0
    %5523 = vmatprep.subr.mxu0 0.0
    %5524 = vmatpush2.msra.mxu0 0.0
    %5525 = vmatprep.subr.mxu0 0.0
    %5526 = vmatpush2.msra.mxu0 0.0
    %5527 = vmatprep.subr.mxu0 0.0
    %5528 = vmatpush2.msra.mxu0 0.0
    %5529 = vmatprep.subr.mxu0 0.0
    %5530 = vmatpush2.msra.mxu0 0.0
    %5531 = vmatprep.subr.mxu0 0.0
    %5532 = vmatpush2.msra.mxu0 0.0
    %5533 = vmatprep.subr.mxu0 0.0
    %5534 = vmatpush2.msra.mxu0 0.0
    %5535 = vmatprep.subr.mxu0 0.0
    %5536 = vmatpush2.msra.mxu0 0.0
    %5537 = vmatprep.subr.mxu0 0.0
    %5538 = vmatpush2.msra.mxu0 0.0
    %5539 = vmatprep.subr.mxu0 0.0
    %5540 = vmatpush2.msra.mxu0 0.0
    %5541 = vmatprep.subr.mxu0 0.0
    %5542 = vmatpush2.msra.mxu0 0.0
    %5543 = vmatprep.mubr.f32.mxu0 0.0
    %5544 = vmatmul.mubr.f32.gmra.mxu0 %v5477
    %v5545 = vpop.f32.mrf.mxu0
    %v5546 = vadd.f32 0.0, %v5545
    %v5547 = vpop.f32.mrf.mxu0
    %5548 = vdwg.mxu0
    %5549 = vrot.lane.b32.xlu0 %v4279, 104
    %v5550 = vpop.permute.xlu0 %5549
    %v5553 = vsel %vm407, %v5005, 0
    %5555 = vmatprep.subr.mxu0 0.0
    %5556 = vmatpush1.msra.mxu0 0.0
    %5557 = vmatprep.subr.mxu0 0.0
    %5558 = vmatpush1.msra.mxu0 0.0
    %5559 = vmatprep.subr.mxu0 0.0
    %5560 = vmatpush1.msra.mxu0 0.0
    %5561 = vmatprep.subr.mxu0 0.0
    %5562 = vmatpush1.msra.mxu0 0.0
    %5563 = vmatprep.subr.mxu0 0.0
    %5564 = vmatpush1.msra.mxu0 0.0
    %5565 = vmatprep.subr.mxu0 0.0
    %5566 = vmatpush1.msra.mxu0 0.0
    %5567 = vmatprep.subr.mxu0 0.0
    %5568 = vmatpush1.msra.mxu0 0.0
    %5569 = vmatprep.subr.mxu0 0.0
    %5570 = vmatpush1.msra.mxu0 0.0
    %5571 = vmatprep.subr.mxu0 0.0
    %5572 = vmatpush1.msra.mxu0 0.0
    %5573 = vmatprep.subr.mxu0 0.0
    %5574 = vmatpush1.msra.mxu0 0.0
    %5575 = vmatprep.subr.mxu0 0.0
    %5576 = vmatpush1.msra.mxu0 0.0
    %5577 = vmatprep.subr.mxu0 0.0
    %5578 = vmatpush1.msra.mxu0 0.0
    %5579 = vmatprep.subr.mxu0 0.0
    %5580 = vmatpush1.msra.mxu0 0.0
    %5581 = vmatprep.subr.mxu0 0.0
    %5582 = vmatpush1.msra.mxu0 0.0
    %5583 = vmatprep.subr.mxu0 0.0
    %5584 = vmatpush1.msra.mxu0 0.0
    %5585 = vmatprep.subr.mxu0 0.0
    %5586 = vmatpush1.msra.mxu0 %v5550
    %5587 = vmatprep.subr.mxu0 0.0
    %5588 = vmatpush2.msra.mxu0 0.0
    %5589 = vmatprep.subr.mxu0 0.0
    %5590 = vmatpush2.msra.mxu0 0.0
    %5591 = vmatprep.subr.mxu0 0.0
    %5592 = vmatpush2.msra.mxu0 0.0
    %5593 = vmatprep.subr.mxu0 0.0
    %5594 = vmatpush2.msra.mxu0 0.0
    %5595 = vmatprep.subr.mxu0 0.0
    %5596 = vmatpush2.msra.mxu0 0.0
    %5597 = vmatprep.subr.mxu0 0.0
    %5598 = vmatpush2.msra.mxu0 0.0
    %5599 = vmatprep.subr.mxu0 0.0
    %5600 = vmatpush2.msra.mxu0 0.0
    %5601 = vmatprep.subr.mxu0 0.0
    %5602 = vmatpush2.msra.mxu0 0.0
    %5603 = vmatprep.subr.mxu0 0.0
    %5604 = vmatpush2.msra.mxu0 0.0
    %5605 = vmatprep.subr.mxu0 0.0
    %5606 = vmatpush2.msra.mxu0 0.0
    %5607 = vmatprep.subr.mxu0 0.0
    %5608 = vmatpush2.msra.mxu0 0.0
    %5609 = vmatprep.subr.mxu0 0.0
    %5610 = vmatpush2.msra.mxu0 0.0
    %5611 = vmatprep.subr.mxu0 0.0
    %5612 = vmatpush2.msra.mxu0 0.0
    %5613 = vmatprep.subr.mxu0 0.0
    %5614 = vmatpush2.msra.mxu0 0.0
    %5615 = vmatprep.subr.mxu0 0.0
    %5616 = vmatpush2.msra.mxu0 0.0
    %5617 = vmatprep.subr.mxu0 0.0
    %5618 = vmatpush2.msra.mxu0 0.0
    %5619 = vmatprep.mubr.f32.mxu0 0.0
    %5620 = vmatmul.mubr.f32.gmra.mxu0 %v5553
    %v5621 = vpop.f32.mrf.mxu0
    %v5622 = vadd.f32 0.0, %v5621
    %v5623 = vpop.f32.mrf.mxu0
    %5624 = vdwg.mxu0
    %5626 = vrot.lane.b32.xlu0 %v5470, 8
    %v5627 = vpop.permute.xlu0 %5626
    %5630 = vrot.lane.b32.xlu0 %v5546, 16
    %v5631 = vpop.permute.xlu0 %5630
    %5634 = vrot.lane.b32.xlu0 %v5622, 24
    %v5635 = vpop.permute.xlu0 %5634
    %v5637 = vsel %vm407, %v5393, %v5627
    %v5638 = vsel %vm1447, %v5637, %v5631
    %v5639 = vsel %vm1449, %v5638, %v5635
    %s5640 = scalar_lea.vmem [#allocation6], 352
    %v5641 = vld [vmem:[%s5640] sm:$0xff]
    %v5642 = vld [vmem:[%s5640 + $0x8] sm:$0xff]
    %v5643 = vld [vmem:[%s5640 + $0x10] sm:$0xff]
    %v5644 = vld [vmem:[%s5640 + $0x18] sm:$0xff]
    %v5646 = vsel %vm91, %v5322, 0
    %v5649 = vsel %vm91, %v5639, 0
    %5651 = vmatprep.subr.mxu0 0.0
    %5652 = vmatpush1.msra.mxu0 0.0
    %5653 = vmatprep.subr.mxu0 0.0
    %5654 = vmatpush1.msra.mxu0 0.0
    %5655 = vmatprep.subr.mxu0 0.0
    %5656 = vmatpush1.msra.mxu0 0.0
    %5657 = vmatprep.subr.mxu0 0.0
    %5658 = vmatpush1.msra.mxu0 0.0
    %5659 = vmatprep.subr.mxu0 0.0
    %5660 = vmatpush1.msra.mxu0 0.0
    %5661 = vmatprep.subr.mxu0 0.0
    %5662 = vmatpush1.msra.mxu0 0.0
    %5663 = vmatprep.subr.mxu0 0.0
    %5664 = vmatpush1.msra.mxu0 0.0
    %5665 = vmatprep.subr.mxu0 0.0
    %5666 = vmatpush1.msra.mxu0 0.0
    %5667 = vmatprep.subr.mxu0 0.0
    %5668 = vmatpush1.msra.mxu0 0.0
    %5669 = vmatprep.subr.mxu0 0.0
    %5670 = vmatpush1.msra.mxu0 0.0
    %5671 = vmatprep.subr.mxu0 0.0
    %5672 = vmatpush1.msra.mxu0 0.0
    %5673 = vmatprep.subr.mxu0 0.0
    %5674 = vmatpush1.msra.mxu0 0.0
    %5675 = vmatprep.subr.mxu0 0.0
    %5676 = vmatpush1.msra.mxu0 %v5644
    %5677 = vmatprep.subr.mxu0 0.0
    %5678 = vmatpush1.msra.mxu0 %v5643
    %5679 = vmatprep.subr.mxu0 0.0
    %5680 = vmatpush1.msra.mxu0 %v5642
    %5681 = vmatprep.subr.mxu0 0.0
    %5682 = vmatpush1.msra.mxu0 %v5641
    %5683 = vmatprep.subr.mxu0 0.0
    %5684 = vmatpush2.msra.mxu0 0.0
    %5685 = vmatprep.subr.mxu0 0.0
    %5686 = vmatpush2.msra.mxu0 0.0
    %5687 = vmatprep.subr.mxu0 0.0
    %5688 = vmatpush2.msra.mxu0 0.0
    %5689 = vmatprep.subr.mxu0 0.0
    %5690 = vmatpush2.msra.mxu0 0.0
    %5691 = vmatprep.subr.mxu0 0.0
    %5692 = vmatpush2.msra.mxu0 0.0
    %5693 = vmatprep.subr.mxu0 0.0
    %5694 = vmatpush2.msra.mxu0 0.0
    %5695 = vmatprep.subr.mxu0 0.0
    %5696 = vmatpush2.msra.mxu0 0.0
    %5697 = vmatprep.subr.mxu0 0.0
    %5698 = vmatpush2.msra.mxu0 0.0
    %5699 = vmatprep.subr.mxu0 0.0
    %5700 = vmatpush2.msra.mxu0 0.0
    %5701 = vmatprep.subr.mxu0 0.0
    %5702 = vmatpush2.msra.mxu0 0.0
    %5703 = vmatprep.subr.mxu0 0.0
    %5704 = vmatpush2.msra.mxu0 0.0
    %5705 = vmatprep.subr.mxu0 0.0
    %5706 = vmatpush2.msra.mxu0 0.0
    %5707 = vmatprep.subr.mxu0 0.0
    %5708 = vmatpush2.msra.mxu0 0.0
    %5709 = vmatprep.subr.mxu0 0.0
    %5710 = vmatpush2.msra.mxu0 0.0
    %5711 = vmatprep.subr.mxu0 0.0
    %5712 = vmatpush2.msra.mxu0 0.0
    %5713 = vmatprep.subr.mxu0 0.0
    %5714 = vmatpush2.msra.mxu0 0.0
    %5715 = vmatprep.mubr.f32.mxu0 0.0
    %5716 = vmatmul.mubr.f32.gmra.mxu0 %v5646
    %v5717 = vpop.f32.mrf.mxu0
    %v5718 = vadd.f32 0.0, %v5717
    %v5719 = vpop.f32.mrf.mxu0
    %5720 = vmatprep.mubr.f32.mxu0 0.0
    %5721 = vmatmul.mubr.f32.gmra.mxu0 %v5649
    %v5722 = vpop.f32.mrf.mxu0
    %v5723 = vadd.f32 0.0, %v5722
    %v5724 = vpop.f32.mrf.mxu0
    %5725 = vdwg.mxu0
    %v5726 = vadd.f32 %v3958, %v5718
    %v5727 = vadd.f32 %v3959, %v5723
    %s5728 = scalar_lea.vmem %s6, 12
    %v5729 = vld [vmem:[%s5728] sm:$0x1]
    %v5731 = vlaneseq
    %v5732 = vshrl.u32 %v5731, 7
    %v5733 = vsub.s32 0, %v5732
    %v5734 = vrot.slane %v5729, %v5733
    %v5736 = vadd.f32 %v5726, %v5734
    %v5737 = vadd.f32 %v5727, %v5734
    %v5738 = vsel %vm91, %v5736, 0.0
    %5739 = vadd.xlane.f32.xlu0 %v5738
    %v5740 = vpop.xlane.xlu0 %5739
    %v5741 = vsel %vm91, %v5737, 0.0
    %5742 = vadd.xlane.f32.xlu0 %v5741
    %v5743 = vpop.xlane.xlu0 %5742
    %v5744 = vmul.f32 %v5740, %v98
    %v5745 = vmul.f32 %v5743, %v98
    %v5746 = vsub.f32 %v5736, %v5744
    %v5747 = vsub.f32 %v5737, %v5745
    %v5748 = vmul.f32 %v5746, %v5746
    %v5749 = vmul.f32 %v5747, %v5747
    %v5750 = vsel %vm91, %v5748, 0.0
    %5751 = vadd.xlane.f32.xlu0 %v5750
    %v5752 = vpop.xlane.xlu0 %5751
    %v5753 = vsel %vm91, %v5749, 0.0
    %5754 = vadd.xlane.f32.xlu0 %v5753
    %v5755 = vpop.xlane.xlu0 %5754
    %v5756 = vmul.f32 %v5752, 0.032258064
    %v5757 = vmul.f32 %v5755, 0.032258064
    %v5758 = vstv %s3962
    %v5759 = vmul.f32 %v5758, %v5746
    %v5760 = vmul.f32 %v5758, %v5747
    %v5761 = vrsqrt.pop %v5756
    %v5762 = vmul.f32 %v5756, %v5761
    %vm5763 = vcmp.eq.f32.partialorder %v5756, inf
    %v5764 = vsel %vm5763, %v5756, %v5762
    %vm5765 = vcmp.eq.f32.partialorder %v5756, 0.0
    %v5766 = vand.u32 %v5756, 2147483648
    %v5767 = vsel %vm5765, %v5766, %v5764
    %v5768 = vrsqrt.pop %v5757
    %v5769 = vmul.f32 %v5757, %v5768
    %vm5770 = vcmp.eq.f32.partialorder %v5757, inf
    %v5771 = vsel %vm5770, %v5757, %v5769
    %vm5772 = vcmp.eq.f32.partialorder %v5757, 0.0
    %v5773 = vand.u32 %v5757, 2147483648
    %v5774 = vsel %vm5772, %v5773, %v5771
    %v5775 = vadd.f32 %v5767, 1e-06
    %v5776 = vadd.f32 %v5774, 1e-06
    %v5777 = vrcp.pop %v5775
    %v5778 = vmul.f32 %v5759, %v5777
    %v5779 = vrcp.pop %v5776
    %v5780 = vmul.f32 %v5760, %v5779
    %v5781 = vstv %s3963
    %v5782 = vadd.f32 %v5778, %v5781
    %v5783 = vadd.f32 %v5780, %v5781
    %s5784 = scalar_lea.vmem [#allocation6], 384
    %v5785 = vld [vmem:[%s5784] sm:$0xff]
    %v5786 = vld [vmem:[%s5784 + $0x8] sm:$0xff]
    %v5787 = vld [vmem:[%s5784 + $0x10] sm:$0xff]
    %v5788 = vld [vmem:[%s5784 + $0x18] sm:$0xff]
    %s5789 = scalar_lea.vmem %s6, 13
    %v5790 = vld [vmem:[%s5789] sm:$0x1]
    %v5792 = vlaneseq
    %v5793 = vshrl.u32 %v5792, 7
    %v5794 = vsub.s32 0, %v5793
    %v5795 = vrot.slane %v5790, %v5794
    %v5798 = vsel %vm91, %v5782, 0
    %v5801 = vsel %vm91, %v5783, 0
    %5803 = vmatprep.subr.mxu0 0.0
    %5804 = vmatpush1.msra.mxu0 0.0
    %5805 = vmatprep.subr.mxu0 0.0
    %5806 = vmatpush1.msra.mxu0 0.0
    %5807 = vmatprep.subr.mxu0 0.0
    %5808 = vmatpush1.msra.mxu0 0.0
    %5809 = vmatprep.subr.mxu0 0.0
    %5810 = vmatpush1.msra.mxu0 0.0
    %5811 = vmatprep.subr.mxu0 0.0
    %5812 = vmatpush1.msra.mxu0 0.0
    %5813 = vmatprep.subr.mxu0 0.0
    %5814 = vmatpush1.msra.mxu0 0.0
    %5815 = vmatprep.subr.mxu0 0.0
    %5816 = vmatpush1.msra.mxu0 0.0
    %5817 = vmatprep.subr.mxu0 0.0
    %5818 = vmatpush1.msra.mxu0 0.0
    %5819 = vmatprep.subr.mxu0 0.0
    %5820 = vmatpush1.msra.mxu0 0.0
    %5821 = vmatprep.subr.mxu0 0.0
    %5822 = vmatpush1.msra.mxu0 0.0
    %5823 = vmatprep.subr.mxu0 0.0
    %5824 = vmatpush1.msra.mxu0 0.0
    %5825 = vmatprep.subr.mxu0 0.0
    %5826 = vmatpush1.msra.mxu0 0.0
    %5827 = vmatprep.subr.mxu0 0.0
    %5828 = vmatpush1.msra.mxu0 %v5788
    %5829 = vmatprep.subr.mxu0 0.0
    %5830 = vmatpush1.msra.mxu0 %v5787
    %5831 = vmatprep.subr.mxu0 0.0
    %5832 = vmatpush1.msra.mxu0 %v5786
    %5833 = vmatprep.subr.mxu0 0.0
    %5834 = vmatpush1.msra.mxu0 %v5785
    %5835 = vmatprep.subr.mxu0 0.0
    %5836 = vmatpush2.msra.mxu0 0.0
    %5837 = vmatprep.subr.mxu0 0.0
    %5838 = vmatpush2.msra.mxu0 0.0
    %5839 = vmatprep.subr.mxu0 0.0
    %5840 = vmatpush2.msra.mxu0 0.0
    %5841 = vmatprep.subr.mxu0 0.0
    %5842 = vmatpush2.msra.mxu0 0.0
    %5843 = vmatprep.subr.mxu0 0.0
    %5844 = vmatpush2.msra.mxu0 0.0
    %5845 = vmatprep.subr.mxu0 0.0
    %5846 = vmatpush2.msra.mxu0 0.0
    %5847 = vmatprep.subr.mxu0 0.0
    %5848 = vmatpush2.msra.mxu0 0.0
    %5849 = vmatprep.subr.mxu0 0.0
    %5850 = vmatpush2.msra.mxu0 0.0
    %5851 = vmatprep.subr.mxu0 0.0
    %5852 = vmatpush2.msra.mxu0 0.0
    %5853 = vmatprep.subr.mxu0 0.0
    %5854 = vmatpush2.msra.mxu0 0.0
    %5855 = vmatprep.subr.mxu0 0.0
    %5856 = vmatpush2.msra.mxu0 0.0
    %5857 = vmatprep.subr.mxu0 0.0
    %5858 = vmatpush2.msra.mxu0 0.0
    %5859 = vmatprep.subr.mxu0 0.0
    %5860 = vmatpush2.msra.mxu0 0.0
    %5861 = vmatprep.subr.mxu0 0.0
    %5862 = vmatpush2.msra.mxu0 0.0
    %5863 = vmatprep.subr.mxu0 0.0
    %5864 = vmatpush2.msra.mxu0 0.0
    %5865 = vmatprep.subr.mxu0 0.0
    %5866 = vmatpush2.msra.mxu0 0.0
    %5867 = vmatprep.mubr.f32.mxu0 0.0
    %5868 = vmatmul.mubr.f32.gmra.mxu0 %v5798
    %v5869 = vpop.f32.mrf.mxu0
    %v5870 = vadd.f32 %v5795, %v5869
    %v5871 = vpop.f32.mrf.mxu0
    %5872 = vmatprep.mubr.f32.mxu0 0.0
    %5873 = vmatmul.mubr.f32.gmra.mxu0 %v5801
    %v5874 = vpop.f32.mrf.mxu0
    %v5875 = vadd.f32 %v5795, %v5874
    %v5876 = vpop.f32.mrf.mxu0
    %5877 = vdwg.mxu0
    %s5878 = scalar_lea.vmem [#allocation6], 416
    %v5879 = vld [vmem:[%s5878] sm:$0xff]
    %v5880 = vld [vmem:[%s5878 + $0x8] sm:$0xff]
    %v5881 = vld [vmem:[%s5878 + $0x10] sm:$0xff]
    %v5882 = vld [vmem:[%s5878 + $0x18] sm:$0xff]
    %s5883 = scalar_lea.vmem %s6, 14
    %v5884 = vld [vmem:[%s5883] sm:$0x1]
    %v5886 = vlaneseq
    %v5887 = vshrl.u32 %v5886, 7
    %v5888 = vsub.s32 0, %v5887
    %v5889 = vrot.slane %v5884, %v5888
    %5891 = vmatprep.subr.mxu0 0.0
    %5892 = vmatpush1.msra.mxu0 0.0
    %5893 = vmatprep.subr.mxu0 0.0
    %5894 = vmatpush1.msra.mxu0 0.0
    %5895 = vmatprep.subr.mxu0 0.0
    %5896 = vmatpush1.msra.mxu0 0.0
    %5897 = vmatprep.subr.mxu0 0.0
    %5898 = vmatpush1.msra.mxu0 0.0
    %5899 = vmatprep.subr.mxu0 0.0
    %5900 = vmatpush1.msra.mxu0 0.0
    %5901 = vmatprep.subr.mxu0 0.0
    %5902 = vmatpush1.msra.mxu0 0.0
    %5903 = vmatprep.subr.mxu0 0.0
    %5904 = vmatpush1.msra.mxu0 0.0
    %5905 = vmatprep.subr.mxu0 0.0
    %5906 = vmatpush1.msra.mxu0 0.0
    %5907 = vmatprep.subr.mxu0 0.0
    %5908 = vmatpush1.msra.mxu0 0.0
    %5909 = vmatprep.subr.mxu0 0.0
    %5910 = vmatpush1.msra.mxu0 0.0
    %5911 = vmatprep.subr.mxu0 0.0
    %5912 = vmatpush1.msra.mxu0 0.0
    %5913 = vmatprep.subr.mxu0 0.0
    %5914 = vmatpush1.msra.mxu0 0.0
    %5915 = vmatprep.subr.mxu0 0.0
    %5916 = vmatpush1.msra.mxu0 %v5882
    %5917 = vmatprep.subr.mxu0 0.0
    %5918 = vmatpush1.msra.mxu0 %v5881
    %5919 = vmatprep.subr.mxu0 0.0
    %5920 = vmatpush1.msra.mxu0 %v5880
    %5921 = vmatprep.subr.mxu0 0.0
    %5922 = vmatpush1.msra.mxu0 %v5879
    %5923 = vmatprep.subr.mxu0 0.0
    %5924 = vmatpush2.msra.mxu0 0.0
    %5925 = vmatprep.subr.mxu0 0.0
    %5926 = vmatpush2.msra.mxu0 0.0
    %5927 = vmatprep.subr.mxu0 0.0
    %5928 = vmatpush2.msra.mxu0 0.0
    %5929 = vmatprep.subr.mxu0 0.0
    %5930 = vmatpush2.msra.mxu0 0.0
    %5931 = vmatprep.subr.mxu0 0.0
    %5932 = vmatpush2.msra.mxu0 0.0
    %5933 = vmatprep.subr.mxu0 0.0
    %5934 = vmatpush2.msra.mxu0 0.0
    %5935 = vmatprep.subr.mxu0 0.0
    %5936 = vmatpush2.msra.mxu0 0.0
    %5937 = vmatprep.subr.mxu0 0.0
    %5938 = vmatpush2.msra.mxu0 0.0
    %5939 = vmatprep.subr.mxu0 0.0
    %5940 = vmatpush2.msra.mxu0 0.0
    %5941 = vmatprep.subr.mxu0 0.0
    %5942 = vmatpush2.msra.mxu0 0.0
    %5943 = vmatprep.subr.mxu0 0.0
    %5944 = vmatpush2.msra.mxu0 0.0
    %5945 = vmatprep.subr.mxu0 0.0
    %5946 = vmatpush2.msra.mxu0 0.0
    %5947 = vmatprep.subr.mxu0 0.0
    %5948 = vmatpush2.msra.mxu0 0.0
    %5949 = vmatprep.subr.mxu0 0.0
    %5950 = vmatpush2.msra.mxu0 0.0
    %5951 = vmatprep.subr.mxu0 0.0
    %5952 = vmatpush2.msra.mxu0 0.0
    %5953 = vmatprep.subr.mxu0 0.0
    %5954 = vmatpush2.msra.mxu0 0.0
    %5955 = vmatprep.mubr.f32.mxu0 0.0
    %5956 = vmatmul.mubr.f32.gmra.mxu0 %v2020
    %v5957 = vpop.f32.mrf.mxu0
    %v5958 = vadd.f32 %v5889, %v5957
    %v5959 = vpop.f32.mrf.mxu0
    %5960 = vmatprep.mubr.f32.mxu0 0.0
    %5961 = vmatmul.mubr.f32.gmra.mxu0 %v2023
    %v5962 = vpop.f32.mrf.mxu0
    %v5963 = vadd.f32 %v5889, %v5962
    %v5964 = vpop.f32.mrf.mxu0
    %5965 = vmatprep.mubr.f32.mxu0 0.0
    %5966 = vmatmul.mubr.f32.gmra.mxu0 %v2026
    %v5967 = vpop.f32.mrf.mxu0
    %v5968 = vadd.f32 %v5889, %v5967
    %v5969 = vpop.f32.mrf.mxu0
    %5970 = vmatprep.mubr.f32.mxu0 0.0
    %5971 = vmatmul.mubr.f32.gmra.mxu0 %v2029
    %v5972 = vpop.f32.mrf.mxu0
    %v5973 = vadd.f32 %v5889, %v5972
    %v5974 = vpop.f32.mrf.mxu0
    %5975 = vdwg.mxu0
    %s5976 = scalar_lea.vmem [#allocation6], 448
    %v5977 = vld [vmem:[%s5976] sm:$0xff]
    %v5978 = vld [vmem:[%s5976 + $0x8] sm:$0xff]
    %v5979 = vld [vmem:[%s5976 + $0x10] sm:$0xff]
    %v5980 = vld [vmem:[%s5976 + $0x18] sm:$0xff]
    %s5981 = scalar_lea.vmem %s6, 15
    %v5982 = vld [vmem:[%s5981] sm:$0x1]
    %v5984 = vlaneseq
    %v5985 = vshrl.u32 %v5984, 7
    %v5986 = vsub.s32 0, %v5985
    %v5987 = vrot.slane %v5982, %v5986
    %5989 = vmatprep.subr.mxu0 0.0
    %5990 = vmatpush1.msra.mxu0 0.0
    %5991 = vmatprep.subr.mxu0 0.0
    %5992 = vmatpush1.msra.mxu0 0.0
    %5993 = vmatprep.subr.mxu0 0.0
    %5994 = vmatpush1.msra.mxu0 0.0
    %5995 = vmatprep.subr.mxu0 0.0
    %5996 = vmatpush1.msra.mxu0 0.0
    %5997 = vmatprep.subr.mxu0 0.0
    %5998 = vmatpush1.msra.mxu0 0.0
    %5999 = vmatprep.subr.mxu0 0.0
    %6000 = vmatpush1.msra.mxu0 0.0
    %6001 = vmatprep.subr.mxu0 0.0
    %6002 = vmatpush1.msra.mxu0 0.0
    %6003 = vmatprep.subr.mxu0 0.0
    %6004 = vmatpush1.msra.mxu0 0.0
    %6005 = vmatprep.subr.mxu0 0.0
    %6006 = vmatpush1.msra.mxu0 0.0
    %6007 = vmatprep.subr.mxu0 0.0
    %6008 = vmatpush1.msra.mxu0 0.0
    %6009 = vmatprep.subr.mxu0 0.0
    %6010 = vmatpush1.msra.mxu0 0.0
    %6011 = vmatprep.subr.mxu0 0.0
    %6012 = vmatpush1.msra.mxu0 0.0
    %6013 = vmatprep.subr.mxu0 0.0
    %6014 = vmatpush1.msra.mxu0 %v5980
    %6015 = vmatprep.subr.mxu0 0.0
    %6016 = vmatpush1.msra.mxu0 %v5979
    %6017 = vmatprep.subr.mxu0 0.0
    %6018 = vmatpush1.msra.mxu0 %v5978
    %6019 = vmatprep.subr.mxu0 0.0
    %6020 = vmatpush1.msra.mxu0 %v5977
    %6021 = vmatprep.subr.mxu0 0.0
    %6022 = vmatpush2.msra.mxu0 0.0
    %6023 = vmatprep.subr.mxu0 0.0
    %6024 = vmatpush2.msra.mxu0 0.0
    %6025 = vmatprep.subr.mxu0 0.0
    %6026 = vmatpush2.msra.mxu0 0.0
    %6027 = vmatprep.subr.mxu0 0.0
    %6028 = vmatpush2.msra.mxu0 0.0
    %6029 = vmatprep.subr.mxu0 0.0
    %6030 = vmatpush2.msra.mxu0 0.0
    %6031 = vmatprep.subr.mxu0 0.0
    %6032 = vmatpush2.msra.mxu0 0.0
    %6033 = vmatprep.subr.mxu0 0.0
    %6034 = vmatpush2.msra.mxu0 0.0
    %6035 = vmatprep.subr.mxu0 0.0
    %6036 = vmatpush2.msra.mxu0 0.0
    %6037 = vmatprep.subr.mxu0 0.0
    %6038 = vmatpush2.msra.mxu0 0.0
    %6039 = vmatprep.subr.mxu0 0.0
    %6040 = vmatpush2.msra.mxu0 0.0
    %6041 = vmatprep.subr.mxu0 0.0
    %6042 = vmatpush2.msra.mxu0 0.0
    %6043 = vmatprep.subr.mxu0 0.0
    %6044 = vmatpush2.msra.mxu0 0.0
    %6045 = vmatprep.subr.mxu0 0.0
    %6046 = vmatpush2.msra.mxu0 0.0
    %6047 = vmatprep.subr.mxu0 0.0
    %6048 = vmatpush2.msra.mxu0 0.0
    %6049 = vmatprep.subr.mxu0 0.0
    %6050 = vmatpush2.msra.mxu0 0.0
    %6051 = vmatprep.subr.mxu0 0.0
    %6052 = vmatpush2.msra.mxu0 0.0
    %6053 = vmatprep.mubr.f32.mxu0 0.0
    %6054 = vmatmul.mubr.f32.gmra.mxu0 %v2020
    %v6055 = vpop.f32.mrf.mxu0
    %v6056 = vadd.f32 %v5987, %v6055
    %v6057 = vpop.f32.mrf.mxu0
    %6058 = vmatprep.mubr.f32.mxu0 0.0
    %6059 = vmatmul.mubr.f32.gmra.mxu0 %v2023
    %v6060 = vpop.f32.mrf.mxu0
    %v6061 = vadd.f32 %v5987, %v6060
    %v6062 = vpop.f32.mrf.mxu0
    %6063 = vmatprep.mubr.f32.mxu0 0.0
    %6064 = vmatmul.mubr.f32.gmra.mxu0 %v2026
    %v6065 = vpop.f32.mrf.mxu0
    %v6066 = vadd.f32 %v5987, %v6065
    %v6067 = vpop.f32.mrf.mxu0
    %6068 = vmatprep.mubr.f32.mxu0 0.0
    %6069 = vmatmul.mubr.f32.gmra.mxu0 %v2029
    %v6070 = vpop.f32.mrf.mxu0
    %v6071 = vadd.f32 %v5987, %v6070
    %v6072 = vpop.f32.mrf.mxu0
    %6073 = vdwg.mxu0
    %v6075 = vsel %vm407, %v5870, 0
    %v6078 = vsel %vm407, %v5958, 0
    %v6081 = vsel %vm407, %v5963, 0
    %6083 = vmatprep.subr.mxu0 0.0
    %6084 = vmatpush1.xpose.msra.mxu0 0.0
    %6085 = vmatprep.subr.mxu0 0.0
    %6086 = vmatpush1.xpose.msra.mxu0 0.0
    %6087 = vmatprep.subr.mxu0 0.0
    %6088 = vmatpush1.xpose.msra.mxu0 0.0
    %6089 = vmatprep.subr.mxu0 0.0
    %6090 = vmatpush1.xpose.msra.mxu0 0.0
    %6091 = vmatprep.subr.mxu0 0.0
    %6092 = vmatpush1.xpose.msra.mxu0 0.0
    %6093 = vmatprep.subr.mxu0 0.0
    %6094 = vmatpush1.xpose.msra.mxu0 0.0
    %6095 = vmatprep.subr.mxu0 0.0
    %6096 = vmatpush1.xpose.msra.mxu0 0.0
    %6097 = vmatprep.subr.mxu0 0.0
    %6098 = vmatpush1.xpose.msra.mxu0 0.0
    %6099 = vmatprep.subr.mxu0 0.0
    %6100 = vmatpush1.xpose.msra.mxu0 0.0
    %6101 = vmatprep.subr.mxu0 0.0
    %6102 = vmatpush1.xpose.msra.mxu0 0.0
    %6103 = vmatprep.subr.mxu0 0.0
    %6104 = vmatpush1.xpose.msra.mxu0 0.0
    %6105 = vmatprep.subr.mxu0 0.0
    %6106 = vmatpush1.xpose.msra.mxu0 0.0
    %6107 = vmatprep.subr.mxu0 0.0
    %6108 = vmatpush1.xpose.msra.mxu0 0.0
    %6109 = vmatprep.subr.mxu0 0.0
    %6110 = vmatpush1.xpose.msra.mxu0 0.0
    %6111 = vmatprep.subr.mxu0 0.0
    %6112 = vmatpush1.xpose.msra.mxu0 %v6081
    %6113 = vmatprep.subr.mxu0 0.0
    %6114 = vmatpush1.xpose.msra.mxu0 %v6078
    %6115 = vmatprep.subr.mxu0 0.0
    %6116 = vmatpush2.xpose.msra.mxu0 0.0
    %6117 = vmatprep.subr.mxu0 0.0
    %6118 = vmatpush2.xpose.msra.mxu0 0.0
    %6119 = vmatprep.subr.mxu0 0.0
    %6120 = vmatpush2.xpose.msra.mxu0 0.0
    %6121 = vmatprep.subr.mxu0 0.0
    %6122 = vmatpush2.xpose.msra.mxu0 0.0
    %6123 = vmatprep.subr.mxu0 0.0
    %6124 = vmatpush2.xpose.msra.mxu0 0.0
    %6125 = vmatprep.subr.mxu0 0.0
    %6126 = vmatpush2.xpose.msra.mxu0 0.0
    %6127 = vmatprep.subr.mxu0 0.0
    %6128 = vmatpush2.xpose.msra.mxu0 0.0
    %6129 = vmatprep.subr.mxu0 0.0
    %6130 = vmatpush2.xpose.msra.mxu0 0.0
    %6131 = vmatprep.subr.mxu0 0.0
    %6132 = vmatpush2.xpose.msra.mxu0 0.0
    %6133 = vmatprep.subr.mxu0 0.0
    %6134 = vmatpush2.xpose.msra.mxu0 0.0
    %6135 = vmatprep.subr.mxu0 0.0
    %6136 = vmatpush2.xpose.msra.mxu0 0.0
    %6137 = vmatprep.subr.mxu0 0.0
    %6138 = vmatpush2.xpose.msra.mxu0 0.0
    %6139 = vmatprep.subr.mxu0 0.0
    %6140 = vmatpush2.xpose.msra.mxu0 0.0
    %6141 = vmatprep.subr.mxu0 0.0
    %6142 = vmatpush2.xpose.msra.mxu0 0.0
    %6143 = vmatprep.subr.mxu0 0.0
    %6144 = vmatpush2.xpose.msra.mxu0 0.0
    %6145 = vmatprep.subr.mxu0 0.0
    %6146 = vmatpush2.xpose.msra.mxu0 0.0
    %6147 = vmatprep.mubr.f32.mxu0 0.0
    %6148 = vmatmul.mubr.f32.gmra.mxu0 %v6075
    %v6149 = vpop.f32.mrf.mxu0
    %v6150 = vadd.f32 0.0, %v6149
    %v6151 = vpop.f32.mrf.mxu0
    %6152 = vdwg.mxu0
    %6153 = vrot.lane.b32.xlu0 %v5870, 120
    %v6154 = vpop.permute.xlu0 %6153
    %6155 = vrot.lane.b32.xlu0 %v5958, 120
    %v6156 = vpop.permute.xlu0 %6155
    %6157 = vrot.lane.b32.xlu0 %v5963, 120
    %v6158 = vpop.permute.xlu0 %6157
    %v6159 = vsel %vm407, %v6154, 0
    %v6161 = vsel %vm407, %v6156, 0
    %v6163 = vsel %vm407, %v6158, 0
    %6165 = vmatprep.subr.mxu0 0.0
    %6166 = vmatpush1.xpose.msra.mxu0 0.0
    %6167 = vmatprep.subr.mxu0 0.0
    %6168 = vmatpush1.xpose.msra.mxu0 0.0
    %6169 = vmatprep.subr.mxu0 0.0
    %6170 = vmatpush1.xpose.msra.mxu0 0.0
    %6171 = vmatprep.subr.mxu0 0.0
    %6172 = vmatpush1.xpose.msra.mxu0 0.0
    %6173 = vmatprep.subr.mxu0 0.0
    %6174 = vmatpush1.xpose.msra.mxu0 0.0
    %6175 = vmatprep.subr.mxu0 0.0
    %6176 = vmatpush1.xpose.msra.mxu0 0.0
    %6177 = vmatprep.subr.mxu0 0.0
    %6178 = vmatpush1.xpose.msra.mxu0 0.0
    %6179 = vmatprep.subr.mxu0 0.0
    %6180 = vmatpush1.xpose.msra.mxu0 0.0
    %6181 = vmatprep.subr.mxu0 0.0
    %6182 = vmatpush1.xpose.msra.mxu0 0.0
    %6183 = vmatprep.subr.mxu0 0.0
    %6184 = vmatpush1.xpose.msra.mxu0 0.0
    %6185 = vmatprep.subr.mxu0 0.0
    %6186 = vmatpush1.xpose.msra.mxu0 0.0
    %6187 = vmatprep.subr.mxu0 0.0
    %6188 = vmatpush1.xpose.msra.mxu0 0.0
    %6189 = vmatprep.subr.mxu0 0.0
    %6190 = vmatpush1.xpose.msra.mxu0 0.0
    %6191 = vmatprep.subr.mxu0 0.0
    %6192 = vmatpush1.xpose.msra.mxu0 0.0
    %6193 = vmatprep.subr.mxu0 0.0
    %6194 = vmatpush1.xpose.msra.mxu0 %v6163
    %6195 = vmatprep.subr.mxu0 0.0
    %6196 = vmatpush1.xpose.msra.mxu0 %v6161
    %6197 = vmatprep.subr.mxu0 0.0
    %6198 = vmatpush2.xpose.msra.mxu0 0.0
    %6199 = vmatprep.subr.mxu0 0.0
    %6200 = vmatpush2.xpose.msra.mxu0 0.0
    %6201 = vmatprep.subr.mxu0 0.0
    %6202 = vmatpush2.xpose.msra.mxu0 0.0
    %6203 = vmatprep.subr.mxu0 0.0
    %6204 = vmatpush2.xpose.msra.mxu0 0.0
    %6205 = vmatprep.subr.mxu0 0.0
    %6206 = vmatpush2.xpose.msra.mxu0 0.0
    %6207 = vmatprep.subr.mxu0 0.0
    %6208 = vmatpush2.xpose.msra.mxu0 0.0
    %6209 = vmatprep.subr.mxu0 0.0
    %6210 = vmatpush2.xpose.msra.mxu0 0.0
    %6211 = vmatprep.subr.mxu0 0.0
    %6212 = vmatpush2.xpose.msra.mxu0 0.0
    %6213 = vmatprep.subr.mxu0 0.0
    %6214 = vmatpush2.xpose.msra.mxu0 0.0
    %6215 = vmatprep.subr.mxu0 0.0
    %6216 = vmatpush2.xpose.msra.mxu0 0.0
    %6217 = vmatprep.subr.mxu0 0.0
    %6218 = vmatpush2.xpose.msra.mxu0 0.0
    %6219 = vmatprep.subr.mxu0 0.0
    %6220 = vmatpush2.xpose.msra.mxu0 0.0
    %6221 = vmatprep.subr.mxu0 0.0
    %6222 = vmatpush2.xpose.msra.mxu0 0.0
    %6223 = vmatprep.subr.mxu0 0.0
    %6224 = vmatpush2.xpose.msra.mxu0 0.0
    %6225 = vmatprep.subr.mxu0 0.0
    %6226 = vmatpush2.xpose.msra.mxu0 0.0
    %6227 = vmatprep.subr.mxu0 0.0
    %6228 = vmatpush2.xpose.msra.mxu0 0.0
    %6229 = vmatprep.mubr.f32.mxu0 0.0
    %6230 = vmatmul.mubr.f32.gmra.mxu0 %v6159
    %v6231 = vpop.f32.mrf.mxu0
    %v6232 = vadd.f32 0.0, %v6231
    %v6233 = vpop.f32.mrf.mxu0
    %6234 = vdwg.mxu0
    %6235 = vrot.lane.b32.xlu0 %v5870, 112
    %v6236 = vpop.permute.xlu0 %6235
    %6237 = vrot.lane.b32.xlu0 %v5958, 112
    %v6238 = vpop.permute.xlu0 %6237
    %6239 = vrot.lane.b32.xlu0 %v5963, 112
    %v6240 = vpop.permute.xlu0 %6239
    %v6241 = vsel %vm407, %v6236, 0
    %v6243 = vsel %vm407, %v6238, 0
    %v6245 = vsel %vm407, %v6240, 0
    %6247 = vmatprep.subr.mxu0 0.0
    %6248 = vmatpush1.xpose.msra.mxu0 0.0
    %6249 = vmatprep.subr.mxu0 0.0
    %6250 = vmatpush1.xpose.msra.mxu0 0.0
    %6251 = vmatprep.subr.mxu0 0.0
    %6252 = vmatpush1.xpose.msra.mxu0 0.0
    %6253 = vmatprep.subr.mxu0 0.0
    %6254 = vmatpush1.xpose.msra.mxu0 0.0
    %6255 = vmatprep.subr.mxu0 0.0
    %6256 = vmatpush1.xpose.msra.mxu0 0.0
    %6257 = vmatprep.subr.mxu0 0.0
    %6258 = vmatpush1.xpose.msra.mxu0 0.0
    %6259 = vmatprep.subr.mxu0 0.0
    %6260 = vmatpush1.xpose.msra.mxu0 0.0
    %6261 = vmatprep.subr.mxu0 0.0
    %6262 = vmatpush1.xpose.msra.mxu0 0.0
    %6263 = vmatprep.subr.mxu0 0.0
    %6264 = vmatpush1.xpose.msra.mxu0 0.0
    %6265 = vmatprep.subr.mxu0 0.0
    %6266 = vmatpush1.xpose.msra.mxu0 0.0
    %6267 = vmatprep.subr.mxu0 0.0
    %6268 = vmatpush1.xpose.msra.mxu0 0.0
    %6269 = vmatprep.subr.mxu0 0.0
    %6270 = vmatpush1.xpose.msra.mxu0 0.0
    %6271 = vmatprep.subr.mxu0 0.0
    %6272 = vmatpush1.xpose.msra.mxu0 0.0
    %6273 = vmatprep.subr.mxu0 0.0
    %6274 = vmatpush1.xpose.msra.mxu0 0.0
    %6275 = vmatprep.subr.mxu0 0.0
    %6276 = vmatpush1.xpose.msra.mxu0 %v6245
    %6277 = vmatprep.subr.mxu0 0.0
    %6278 = vmatpush1.xpose.msra.mxu0 %v6243
    %6279 = vmatprep.subr.mxu0 0.0
    %6280 = vmatpush2.xpose.msra.mxu0 0.0
    %6281 = vmatprep.subr.mxu0 0.0
    %6282 = vmatpush2.xpose.msra.mxu0 0.0
    %6283 = vmatprep.subr.mxu0 0.0
    %6284 = vmatpush2.xpose.msra.mxu0 0.0
    %6285 = vmatprep.subr.mxu0 0.0
    %6286 = vmatpush2.xpose.msra.mxu0 0.0
    %6287 = vmatprep.subr.mxu0 0.0
    %6288 = vmatpush2.xpose.msra.mxu0 0.0
    %6289 = vmatprep.subr.mxu0 0.0
    %6290 = vmatpush2.xpose.msra.mxu0 0.0
    %6291 = vmatprep.subr.mxu0 0.0
    %6292 = vmatpush2.xpose.msra.mxu0 0.0
    %6293 = vmatprep.subr.mxu0 0.0
    %6294 = vmatpush2.xpose.msra.mxu0 0.0
    %6295 = vmatprep.subr.mxu0 0.0
    %6296 = vmatpush2.xpose.msra.mxu0 0.0
    %6297 = vmatprep.subr.mxu0 0.0
    %6298 = vmatpush2.xpose.msra.mxu0 0.0
    %6299 = vmatprep.subr.mxu0 0.0
    %6300 = vmatpush2.xpose.msra.mxu0 0.0
    %6301 = vmatprep.subr.mxu0 0.0
    %6302 = vmatpush2.xpose.msra.mxu0 0.0
    %6303 = vmatprep.subr.mxu0 0.0
    %6304 = vmatpush2.xpose.msra.mxu0 0.0
    %6305 = vmatprep.subr.mxu0 0.0
    %6306 = vmatpush2.xpose.msra.mxu0 0.0
    %6307 = vmatprep.subr.mxu0 0.0
    %6308 = vmatpush2.xpose.msra.mxu0 0.0
    %6309 = vmatprep.subr.mxu0 0.0
    %6310 = vmatpush2.xpose.msra.mxu0 0.0
    %6311 = vmatprep.mubr.f32.mxu0 0.0
    %6312 = vmatmul.mubr.f32.gmra.mxu0 %v6241
    %v6313 = vpop.f32.mrf.mxu0
    %v6314 = vadd.f32 0.0, %v6313
    %v6315 = vpop.f32.mrf.mxu0
    %6316 = vdwg.mxu0
    %6317 = vrot.lane.b32.xlu0 %v5870, 104
    %v6318 = vpop.permute.xlu0 %6317
    %6319 = vrot.lane.b32.xlu0 %v5958, 104
    %v6320 = vpop.permute.xlu0 %6319
    %6321 = vrot.lane.b32.xlu0 %v5963, 104
    %v6322 = vpop.permute.xlu0 %6321
    %v6323 = vsel %vm407, %v6318, 0
    %v6325 = vsel %vm407, %v6320, 0
    %v6327 = vsel %vm407, %v6322, 0
    %6329 = vmatprep.subr.mxu0 0.0
    %6330 = vmatpush1.xpose.msra.mxu0 0.0
    %6331 = vmatprep.subr.mxu0 0.0
    %6332 = vmatpush1.xpose.msra.mxu0 0.0
    %6333 = vmatprep.subr.mxu0 0.0
    %6334 = vmatpush1.xpose.msra.mxu0 0.0
    %6335 = vmatprep.subr.mxu0 0.0
    %6336 = vmatpush1.xpose.msra.mxu0 0.0
    %6337 = vmatprep.subr.mxu0 0.0
    %6338 = vmatpush1.xpose.msra.mxu0 0.0
    %6339 = vmatprep.subr.mxu0 0.0
    %6340 = vmatpush1.xpose.msra.mxu0 0.0
    %6341 = vmatprep.subr.mxu0 0.0
    %6342 = vmatpush1.xpose.msra.mxu0 0.0
    %6343 = vmatprep.subr.mxu0 0.0
    %6344 = vmatpush1.xpose.msra.mxu0 0.0
    %6345 = vmatprep.subr.mxu0 0.0
    %6346 = vmatpush1.xpose.msra.mxu0 0.0
    %6347 = vmatprep.subr.mxu0 0.0
    %6348 = vmatpush1.xpose.msra.mxu0 0.0
    %6349 = vmatprep.subr.mxu0 0.0
    %6350 = vmatpush1.xpose.msra.mxu0 0.0
    %6351 = vmatprep.subr.mxu0 0.0
    %6352 = vmatpush1.xpose.msra.mxu0 0.0
    %6353 = vmatprep.subr.mxu0 0.0
    %6354 = vmatpush1.xpose.msra.mxu0 0.0
    %6355 = vmatprep.subr.mxu0 0.0
    %6356 = vmatpush1.xpose.msra.mxu0 0.0
    %6357 = vmatprep.subr.mxu0 0.0
    %6358 = vmatpush1.xpose.msra.mxu0 %v6327
    %6359 = vmatprep.subr.mxu0 0.0
    %6360 = vmatpush1.xpose.msra.mxu0 %v6325
    %6361 = vmatprep.subr.mxu0 0.0
    %6362 = vmatpush2.xpose.msra.mxu0 0.0
    %6363 = vmatprep.subr.mxu0 0.0
    %6364 = vmatpush2.xpose.msra.mxu0 0.0
    %6365 = vmatprep.subr.mxu0 0.0
    %6366 = vmatpush2.xpose.msra.mxu0 0.0
    %6367 = vmatprep.subr.mxu0 0.0
    %6368 = vmatpush2.xpose.msra.mxu0 0.0
    %6369 = vmatprep.subr.mxu0 0.0
    %6370 = vmatpush2.xpose.msra.mxu0 0.0
    %6371 = vmatprep.subr.mxu0 0.0
    %6372 = vmatpush2.xpose.msra.mxu0 0.0
    %6373 = vmatprep.subr.mxu0 0.0
    %6374 = vmatpush2.xpose.msra.mxu0 0.0
    %6375 = vmatprep.subr.mxu0 0.0
    %6376 = vmatpush2.xpose.msra.mxu0 0.0
    %6377 = vmatprep.subr.mxu0 0.0
    %6378 = vmatpush2.xpose.msra.mxu0 0.0
    %6379 = vmatprep.subr.mxu0 0.0
    %6380 = vmatpush2.xpose.msra.mxu0 0.0
    %6381 = vmatprep.subr.mxu0 0.0
    %6382 = vmatpush2.xpose.msra.mxu0 0.0
    %6383 = vmatprep.subr.mxu0 0.0
    %6384 = vmatpush2.xpose.msra.mxu0 0.0
    %6385 = vmatprep.subr.mxu0 0.0
    %6386 = vmatpush2.xpose.msra.mxu0 0.0
    %6387 = vmatprep.subr.mxu0 0.0
    %6388 = vmatpush2.xpose.msra.mxu0 0.0
    %6389 = vmatprep.subr.mxu0 0.0
    %6390 = vmatpush2.xpose.msra.mxu0 0.0
    %6391 = vmatprep.subr.mxu0 0.0
    %6392 = vmatpush2.xpose.msra.mxu0 0.0
    %6393 = vmatprep.mubr.f32.mxu0 0.0
    %6394 = vmatmul.mubr.f32.gmra.mxu0 %v6323
    %v6395 = vpop.f32.mrf.mxu0
    %v6396 = vadd.f32 0.0, %v6395
    %v6397 = vpop.f32.mrf.mxu0
    %6398 = vdwg.mxu0
    %v6400 = vsel %vm407, %v5875, 0
    %v6403 = vsel %vm407, %v5968, 0
    %v6406 = vsel %vm407, %v5973, 0
    %6408 = vmatprep.subr.mxu0 0.0
    %6409 = vmatpush1.xpose.msra.mxu0 0.0
    %6410 = vmatprep.subr.mxu0 0.0
    %6411 = vmatpush1.xpose.msra.mxu0 0.0
    %6412 = vmatprep.subr.mxu0 0.0
    %6413 = vmatpush1.xpose.msra.mxu0 0.0
    %6414 = vmatprep.subr.mxu0 0.0
    %6415 = vmatpush1.xpose.msra.mxu0 0.0
    %6416 = vmatprep.subr.mxu0 0.0
    %6417 = vmatpush1.xpose.msra.mxu0 0.0
    %6418 = vmatprep.subr.mxu0 0.0
    %6419 = vmatpush1.xpose.msra.mxu0 0.0
    %6420 = vmatprep.subr.mxu0 0.0
    %6421 = vmatpush1.xpose.msra.mxu0 0.0
    %6422 = vmatprep.subr.mxu0 0.0
    %6423 = vmatpush1.xpose.msra.mxu0 0.0
    %6424 = vmatprep.subr.mxu0 0.0
    %6425 = vmatpush1.xpose.msra.mxu0 0.0
    %6426 = vmatprep.subr.mxu0 0.0
    %6427 = vmatpush1.xpose.msra.mxu0 0.0
    %6428 = vmatprep.subr.mxu0 0.0
    %6429 = vmatpush1.xpose.msra.mxu0 0.0
    %6430 = vmatprep.subr.mxu0 0.0
    %6431 = vmatpush1.xpose.msra.mxu0 0.0
    %6432 = vmatprep.subr.mxu0 0.0
    %6433 = vmatpush1.xpose.msra.mxu0 0.0
    %6434 = vmatprep.subr.mxu0 0.0
    %6435 = vmatpush1.xpose.msra.mxu0 0.0
    %6436 = vmatprep.subr.mxu0 0.0
    %6437 = vmatpush1.xpose.msra.mxu0 %v6406
    %6438 = vmatprep.subr.mxu0 0.0
    %6439 = vmatpush1.xpose.msra.mxu0 %v6403
    %6440 = vmatprep.subr.mxu0 0.0
    %6441 = vmatpush2.xpose.msra.mxu0 0.0
    %6442 = vmatprep.subr.mxu0 0.0
    %6443 = vmatpush2.xpose.msra.mxu0 0.0
    %6444 = vmatprep.subr.mxu0 0.0
    %6445 = vmatpush2.xpose.msra.mxu0 0.0
    %6446 = vmatprep.subr.mxu0 0.0
    %6447 = vmatpush2.xpose.msra.mxu0 0.0
    %6448 = vmatprep.subr.mxu0 0.0
    %6449 = vmatpush2.xpose.msra.mxu0 0.0
    %6450 = vmatprep.subr.mxu0 0.0
    %6451 = vmatpush2.xpose.msra.mxu0 0.0
    %6452 = vmatprep.subr.mxu0 0.0
    %6453 = vmatpush2.xpose.msra.mxu0 0.0
    %6454 = vmatprep.subr.mxu0 0.0
    %6455 = vmatpush2.xpose.msra.mxu0 0.0
    %6456 = vmatprep.subr.mxu0 0.0
    %6457 = vmatpush2.xpose.msra.mxu0 0.0
    %6458 = vmatprep.subr.mxu0 0.0
    %6459 = vmatpush2.xpose.msra.mxu0 0.0
    %6460 = vmatprep.subr.mxu0 0.0
    %6461 = vmatpush2.xpose.msra.mxu0 0.0
    %6462 = vmatprep.subr.mxu0 0.0
    %6463 = vmatpush2.xpose.msra.mxu0 0.0
    %6464 = vmatprep.subr.mxu0 0.0
    %6465 = vmatpush2.xpose.msra.mxu0 0.0
    %6466 = vmatprep.subr.mxu0 0.0
    %6467 = vmatpush2.xpose.msra.mxu0 0.0
    %6468 = vmatprep.subr.mxu0 0.0
    %6469 = vmatpush2.xpose.msra.mxu0 0.0
    %6470 = vmatprep.subr.mxu0 0.0
    %6471 = vmatpush2.xpose.msra.mxu0 0.0
    %6472 = vmatprep.mubr.f32.mxu0 0.0
    %6473 = vmatmul.mubr.f32.gmra.mxu0 %v6400
    %v6474 = vpop.f32.mrf.mxu0
    %v6475 = vadd.f32 0.0, %v6474
    %v6476 = vpop.f32.mrf.mxu0
    %6477 = vdwg.mxu0
    %6478 = vrot.lane.b32.xlu0 %v5875, 120
    %v6479 = vpop.permute.xlu0 %6478
    %6480 = vrot.lane.b32.xlu0 %v5968, 120
    %v6481 = vpop.permute.xlu0 %6480
    %6482 = vrot.lane.b32.xlu0 %v5973, 120
    %v6483 = vpop.permute.xlu0 %6482
    %v6484 = vsel %vm407, %v6479, 0
    %v6486 = vsel %vm407, %v6481, 0
    %v6488 = vsel %vm407, %v6483, 0
    %6490 = vmatprep.subr.mxu0 0.0
    %6491 = vmatpush1.xpose.msra.mxu0 0.0
    %6492 = vmatprep.subr.mxu0 0.0
    %6493 = vmatpush1.xpose.msra.mxu0 0.0
    %6494 = vmatprep.subr.mxu0 0.0
    %6495 = vmatpush1.xpose.msra.mxu0 0.0
    %6496 = vmatprep.subr.mxu0 0.0
    %6497 = vmatpush1.xpose.msra.mxu0 0.0
    %6498 = vmatprep.subr.mxu0 0.0
    %6499 = vmatpush1.xpose.msra.mxu0 0.0
    %6500 = vmatprep.subr.mxu0 0.0
    %6501 = vmatpush1.xpose.msra.mxu0 0.0
    %6502 = vmatprep.subr.mxu0 0.0
    %6503 = vmatpush1.xpose.msra.mxu0 0.0
    %6504 = vmatprep.subr.mxu0 0.0
    %6505 = vmatpush1.xpose.msra.mxu0 0.0
    %6506 = vmatprep.subr.mxu0 0.0
    %6507 = vmatpush1.xpose.msra.mxu0 0.0
    %6508 = vmatprep.subr.mxu0 0.0
    %6509 = vmatpush1.xpose.msra.mxu0 0.0
    %6510 = vmatprep.subr.mxu0 0.0
    %6511 = vmatpush1.xpose.msra.mxu0 0.0
    %6512 = vmatprep.subr.mxu0 0.0
    %6513 = vmatpush1.xpose.msra.mxu0 0.0
    %6514 = vmatprep.subr.mxu0 0.0
    %6515 = vmatpush1.xpose.msra.mxu0 0.0
    %6516 = vmatprep.subr.mxu0 0.0
    %6517 = vmatpush1.xpose.msra.mxu0 0.0
    %6518 = vmatprep.subr.mxu0 0.0
    %6519 = vmatpush1.xpose.msra.mxu0 %v6488
    %6520 = vmatprep.subr.mxu0 0.0
    %6521 = vmatpush1.xpose.msra.mxu0 %v6486
    %6522 = vmatprep.subr.mxu0 0.0
    %6523 = vmatpush2.xpose.msra.mxu0 0.0
    %6524 = vmatprep.subr.mxu0 0.0
    %6525 = vmatpush2.xpose.msra.mxu0 0.0
    %6526 = vmatprep.subr.mxu0 0.0
    %6527 = vmatpush2.xpose.msra.mxu0 0.0
    %6528 = vmatprep.subr.mxu0 0.0
    %6529 = vmatpush2.xpose.msra.mxu0 0.0
    %6530 = vmatprep.subr.mxu0 0.0
    %6531 = vmatpush2.xpose.msra.mxu0 0.0
    %6532 = vmatprep.subr.mxu0 0.0
    %6533 = vmatpush2.xpose.msra.mxu0 0.0
    %6534 = vmatprep.subr.mxu0 0.0
    %6535 = vmatpush2.xpose.msra.mxu0 0.0
    %6536 = vmatprep.subr.mxu0 0.0
    %6537 = vmatpush2.xpose.msra.mxu0 0.0
    %6538 = vmatprep.subr.mxu0 0.0
    %6539 = vmatpush2.xpose.msra.mxu0 0.0
    %6540 = vmatprep.subr.mxu0 0.0
    %6541 = vmatpush2.xpose.msra.mxu0 0.0
    %6542 = vmatprep.subr.mxu0 0.0
    %6543 = vmatpush2.xpose.msra.mxu0 0.0
    %6544 = vmatprep.subr.mxu0 0.0
    %6545 = vmatpush2.xpose.msra.mxu0 0.0
    %6546 = vmatprep.subr.mxu0 0.0
    %6547 = vmatpush2.xpose.msra.mxu0 0.0
    %6548 = vmatprep.subr.mxu0 0.0
    %6549 = vmatpush2.xpose.msra.mxu0 0.0
    %6550 = vmatprep.subr.mxu0 0.0
    %6551 = vmatpush2.xpose.msra.mxu0 0.0
    %6552 = vmatprep.subr.mxu0 0.0
    %6553 = vmatpush2.xpose.msra.mxu0 0.0
    %6554 = vmatprep.mubr.f32.mxu0 0.0
    %6555 = vmatmul.mubr.f32.gmra.mxu0 %v6484
    %v6556 = vpop.f32.mrf.mxu0
    %v6557 = vadd.f32 0.0, %v6556
    %v6558 = vpop.f32.mrf.mxu0
    %6559 = vdwg.mxu0
    %6560 = vrot.lane.b32.xlu0 %v5875, 112
    %v6561 = vpop.permute.xlu0 %6560
    %6562 = vrot.lane.b32.xlu0 %v5968, 112
    %v6563 = vpop.permute.xlu0 %6562
    %6564 = vrot.lane.b32.xlu0 %v5973, 112
    %v6565 = vpop.permute.xlu0 %6564
    %v6566 = vsel %vm407, %v6561, 0
    %v6568 = vsel %vm407, %v6563, 0
    %v6570 = vsel %vm407, %v6565, 0
    %6572 = vmatprep.subr.mxu0 0.0
    %6573 = vmatpush1.xpose.msra.mxu0 0.0
    %6574 = vmatprep.subr.mxu0 0.0
    %6575 = vmatpush1.xpose.msra.mxu0 0.0
    %6576 = vmatprep.subr.mxu0 0.0
    %6577 = vmatpush1.xpose.msra.mxu0 0.0
    %6578 = vmatprep.subr.mxu0 0.0
    %6579 = vmatpush1.xpose.msra.mxu0 0.0
    %6580 = vmatprep.subr.mxu0 0.0
    %6581 = vmatpush1.xpose.msra.mxu0 0.0
    %6582 = vmatprep.subr.mxu0 0.0
    %6583 = vmatpush1.xpose.msra.mxu0 0.0
    %6584 = vmatprep.subr.mxu0 0.0
    %6585 = vmatpush1.xpose.msra.mxu0 0.0
    %6586 = vmatprep.subr.mxu0 0.0
    %6587 = vmatpush1.xpose.msra.mxu0 0.0
    %6588 = vmatprep.subr.mxu0 0.0
    %6589 = vmatpush1.xpose.msra.mxu0 0.0
    %6590 = vmatprep.subr.mxu0 0.0
    %6591 = vmatpush1.xpose.msra.mxu0 0.0
    %6592 = vmatprep.subr.mxu0 0.0
    %6593 = vmatpush1.xpose.msra.mxu0 0.0
    %6594 = vmatprep.subr.mxu0 0.0
    %6595 = vmatpush1.xpose.msra.mxu0 0.0
    %6596 = vmatprep.subr.mxu0 0.0
    %6597 = vmatpush1.xpose.msra.mxu0 0.0
    %6598 = vmatprep.subr.mxu0 0.0
    %6599 = vmatpush1.xpose.msra.mxu0 0.0
    %6600 = vmatprep.subr.mxu0 0.0
    %6601 = vmatpush1.xpose.msra.mxu0 %v6570
    %6602 = vmatprep.subr.mxu0 0.0
    %6603 = vmatpush1.xpose.msra.mxu0 %v6568
    %6604 = vmatprep.subr.mxu0 0.0
    %6605 = vmatpush2.xpose.msra.mxu0 0.0
    %6606 = vmatprep.subr.mxu0 0.0
    %6607 = vmatpush2.xpose.msra.mxu0 0.0
    %6608 = vmatprep.subr.mxu0 0.0
    %6609 = vmatpush2.xpose.msra.mxu0 0.0
    %6610 = vmatprep.subr.mxu0 0.0
    %6611 = vmatpush2.xpose.msra.mxu0 0.0
    %6612 = vmatprep.subr.mxu0 0.0
    %6613 = vmatpush2.xpose.msra.mxu0 0.0
    %6614 = vmatprep.subr.mxu0 0.0
    %6615 = vmatpush2.xpose.msra.mxu0 0.0
    %6616 = vmatprep.subr.mxu0 0.0
    %6617 = vmatpush2.xpose.msra.mxu0 0.0
    %6618 = vmatprep.subr.mxu0 0.0
    %6619 = vmatpush2.xpose.msra.mxu0 0.0
    %6620 = vmatprep.subr.mxu0 0.0
    %6621 = vmatpush2.xpose.msra.mxu0 0.0
    %6622 = vmatprep.subr.mxu0 0.0
    %6623 = vmatpush2.xpose.msra.mxu0 0.0
    %6624 = vmatprep.subr.mxu0 0.0
    %6625 = vmatpush2.xpose.msra.mxu0 0.0
    %6626 = vmatprep.subr.mxu0 0.0
    %6627 = vmatpush2.xpose.msra.mxu0 0.0
    %6628 = vmatprep.subr.mxu0 0.0
    %6629 = vmatpush2.xpose.msra.mxu0 0.0
    %6630 = vmatprep.subr.mxu0 0.0
    %6631 = vmatpush2.xpose.msra.mxu0 0.0
    %6632 = vmatprep.subr.mxu0 0.0
    %6633 = vmatpush2.xpose.msra.mxu0 0.0
    %6634 = vmatprep.subr.mxu0 0.0
    %6635 = vmatpush2.xpose.msra.mxu0 0.0
    %6636 = vmatprep.mubr.f32.mxu0 0.0
    %6637 = vmatmul.mubr.f32.gmra.mxu0 %v6566
    %v6638 = vpop.f32.mrf.mxu0
    %v6639 = vadd.f32 0.0, %v6638
    %v6640 = vpop.f32.mrf.mxu0
    %6641 = vdwg.mxu0
    %6642 = vrot.lane.b32.xlu0 %v5875, 104
    %v6643 = vpop.permute.xlu0 %6642
    %6644 = vrot.lane.b32.xlu0 %v5968, 104
    %v6645 = vpop.permute.xlu0 %6644
    %6646 = vrot.lane.b32.xlu0 %v5973, 104
    %v6647 = vpop.permute.xlu0 %6646
    %v6648 = vsel %vm407, %v6643, 0
    %v6650 = vsel %vm407, %v6645, 0
    %v6652 = vsel %vm407, %v6647, 0
    %6654 = vmatprep.subr.mxu0 0.0
    %6655 = vmatpush1.xpose.msra.mxu0 0.0
    %6656 = vmatprep.subr.mxu0 0.0
    %6657 = vmatpush1.xpose.msra.mxu0 0.0
    %6658 = vmatprep.subr.mxu0 0.0
    %6659 = vmatpush1.xpose.msra.mxu0 0.0
    %6660 = vmatprep.subr.mxu0 0.0
    %6661 = vmatpush1.xpose.msra.mxu0 0.0
    %6662 = vmatprep.subr.mxu0 0.0
    %6663 = vmatpush1.xpose.msra.mxu0 0.0
    %6664 = vmatprep.subr.mxu0 0.0
    %6665 = vmatpush1.xpose.msra.mxu0 0.0
    %6666 = vmatprep.subr.mxu0 0.0
    %6667 = vmatpush1.xpose.msra.mxu0 0.0
    %6668 = vmatprep.subr.mxu0 0.0
    %6669 = vmatpush1.xpose.msra.mxu0 0.0
    %6670 = vmatprep.subr.mxu0 0.0
    %6671 = vmatpush1.xpose.msra.mxu0 0.0
    %6672 = vmatprep.subr.mxu0 0.0
    %6673 = vmatpush1.xpose.msra.mxu0 0.0
    %6674 = vmatprep.subr.mxu0 0.0
    %6675 = vmatpush1.xpose.msra.mxu0 0.0
    %6676 = vmatprep.subr.mxu0 0.0
    %6677 = vmatpush1.xpose.msra.mxu0 0.0
    %6678 = vmatprep.subr.mxu0 0.0
    %6679 = vmatpush1.xpose.msra.mxu0 0.0
    %6680 = vmatprep.subr.mxu0 0.0
    %6681 = vmatpush1.xpose.msra.mxu0 0.0
    %6682 = vmatprep.subr.mxu0 0.0
    %6683 = vmatpush1.xpose.msra.mxu0 %v6652
    %6684 = vmatprep.subr.mxu0 0.0
    %6685 = vmatpush1.xpose.msra.mxu0 %v6650
    %6686 = vmatprep.subr.mxu0 0.0
    %6687 = vmatpush2.xpose.msra.mxu0 0.0
    %6688 = vmatprep.subr.mxu0 0.0
    %6689 = vmatpush2.xpose.msra.mxu0 0.0
    %6690 = vmatprep.subr.mxu0 0.0
    %6691 = vmatpush2.xpose.msra.mxu0 0.0
    %6692 = vmatprep.subr.mxu0 0.0
    %6693 = vmatpush2.xpose.msra.mxu0 0.0
    %6694 = vmatprep.subr.mxu0 0.0
    %6695 = vmatpush2.xpose.msra.mxu0 0.0
    %6696 = vmatprep.subr.mxu0 0.0
    %6697 = vmatpush2.xpose.msra.mxu0 0.0
    %6698 = vmatprep.subr.mxu0 0.0
    %6699 = vmatpush2.xpose.msra.mxu0 0.0
    %6700 = vmatprep.subr.mxu0 0.0
    %6701 = vmatpush2.xpose.msra.mxu0 0.0
    %6702 = vmatprep.subr.mxu0 0.0
    %6703 = vmatpush2.xpose.msra.mxu0 0.0
    %6704 = vmatprep.subr.mxu0 0.0
    %6705 = vmatpush2.xpose.msra.mxu0 0.0
    %6706 = vmatprep.subr.mxu0 0.0
    %6707 = vmatpush2.xpose.msra.mxu0 0.0
    %6708 = vmatprep.subr.mxu0 0.0
    %6709 = vmatpush2.xpose.msra.mxu0 0.0
    %6710 = vmatprep.subr.mxu0 0.0
    %6711 = vmatpush2.xpose.msra.mxu0 0.0
    %6712 = vmatprep.subr.mxu0 0.0
    %6713 = vmatpush2.xpose.msra.mxu0 0.0
    %6714 = vmatprep.subr.mxu0 0.0
    %6715 = vmatpush2.xpose.msra.mxu0 0.0
    %6716 = vmatprep.subr.mxu0 0.0
    %6717 = vmatpush2.xpose.msra.mxu0 0.0
    %6718 = vmatprep.mubr.f32.mxu0 0.0
    %6719 = vmatmul.mubr.f32.gmra.mxu0 %v6648
    %v6720 = vpop.f32.mrf.mxu0
    %v6721 = vadd.f32 0.0, %v6720
    %v6722 = vpop.f32.mrf.mxu0
    %6723 = vdwg.mxu0
    %v6724 = vmul.f32 %v6150, 0.35355338
    %v6725 = vmul.f32 %v6232, 0.35355338
    %v6726 = vmul.f32 %v6314, 0.35355338
    %v6727 = vmul.f32 %v6396, 0.35355338
    %v6728 = vmul.f32 %v6475, 0.35355338
    %v6729 = vmul.f32 %v6557, 0.35355338
    %v6730 = vmul.f32 %v6639, 0.35355338
    %v6731 = vmul.f32 %v6721, 0.35355338
    %v6732 = vadd.f32 %v6724, %v77
    %v6733 = vadd.f32 %v6725, %v78
    %v6734 = vadd.f32 %v6726, %v79
    %v6735 = vadd.f32 %v6727, %v80
    %v6736 = vadd.f32 %v6728, %v81
    %v6737 = vadd.f32 %v6729, %v82
    %v6738 = vadd.f32 %v6730, %v83
    %v6739 = vadd.f32 %v6731, %v84
    %v6740 = vsel %vm1447, %v6732, -inf
    %6741 = vmax.xlane.f32.xlu0 %v6740
    %v6742 = vpop.xlane.xlu0 %6741
    %v6743 = vsel %vm1447, %v6733, -inf
    %6744 = vmax.xlane.f32.xlu0 %v6743
    %v6745 = vpop.xlane.xlu0 %6744
    %v6746 = vsel %vm1447, %v6734, -inf
    %6747 = vmax.xlane.f32.xlu0 %v6746
    %v6748 = vpop.xlane.xlu0 %6747
    %v6749 = vsel %vm1447, %v6735, -inf
    %6750 = vmax.xlane.f32.xlu0 %v6749
    %v6751 = vpop.xlane.xlu0 %6750
    %v6752 = vsel %vm1447, %v6736, -inf
    %6753 = vmax.xlane.f32.xlu0 %v6752
    %v6754 = vpop.xlane.xlu0 %6753
    %v6755 = vsel %vm1447, %v6737, -inf
    %6756 = vmax.xlane.f32.xlu0 %v6755
    %v6757 = vpop.xlane.xlu0 %6756
    %v6758 = vsel %vm1447, %v6738, -inf
    %6759 = vmax.xlane.f32.xlu0 %v6758
    %v6760 = vpop.xlane.xlu0 %6759
    %v6761 = vsel %vm1447, %v6739, -inf
    %6762 = vmax.xlane.f32.xlu0 %v6761
    %v6763 = vpop.xlane.xlu0 %6762
    %v6764 = vsub.f32 %v6732, %v6742
    %v6765 = vsub.f32 %v6733, %v6745
    %v6766 = vsub.f32 %v6734, %v6748
    %v6767 = vsub.f32 %v6735, %v6751
    %v6768 = vsub.f32 %v6736, %v6754
    %v6769 = vsub.f32 %v6737, %v6757
    %v6770 = vsub.f32 %v6738, %v6760
    %v6771 = vsub.f32 %v6739, %v6763
    %v6772 = vmul.f32 %v6764, 1.442695
    %v6773 = vpow.pop %v6772
    %v6774 = vmul.f32 %v6765, 1.442695
    %v6775 = vpow.pop %v6774
    %v6776 = vmul.f32 %v6766, 1.442695
    %v6777 = vpow.pop %v6776
    %v6778 = vmul.f32 %v6767, 1.442695
    %v6779 = vpow.pop %v6778
    %v6780 = vmul.f32 %v6768, 1.442695
    %v6781 = vpow.pop %v6780
    %v6782 = vmul.f32 %v6769, 1.442695
    %v6783 = vpow.pop %v6782
    %v6784 = vmul.f32 %v6770, 1.442695
    %v6785 = vpow.pop %v6784
    %v6786 = vmul.f32 %v6771, 1.442695
    %v6787 = vpow.pop %v6786
    %v6788 = vsel %vm1447, %v6773, 0.0
    %6789 = vadd.xlane.f32.xlu0 %v6788
    %v6790 = vpop.xlane.xlu0 %6789
    %v6791 = vsel %vm1447, %v6775, 0.0
    %6792 = vadd.xlane.f32.xlu0 %v6791
    %v6793 = vpop.xlane.xlu0 %6792
    %v6794 = vsel %vm1447, %v6777, 0.0
    %6795 = vadd.xlane.f32.xlu0 %v6794
    %v6796 = vpop.xlane.xlu0 %6795
    %v6797 = vsel %vm1447, %v6779, 0.0
    %6798 = vadd.xlane.f32.xlu0 %v6797
    %v6799 = vpop.xlane.xlu0 %6798
    %v6800 = vsel %vm1447, %v6781, 0.0
    %6801 = vadd.xlane.f32.xlu0 %v6800
    %v6802 = vpop.xlane.xlu0 %6801
    %v6803 = vsel %vm1447, %v6783, 0.0
    %6804 = vadd.xlane.f32.xlu0 %v6803
    %v6805 = vpop.xlane.xlu0 %6804
    %v6806 = vsel %vm1447, %v6785, 0.0
    %6807 = vadd.xlane.f32.xlu0 %v6806
    %v6808 = vpop.xlane.xlu0 %6807
    %v6809 = vsel %vm1447, %v6787, 0.0
    %6810 = vadd.xlane.f32.xlu0 %v6809
    %v6811 = vpop.xlane.xlu0 %6810
    %v6812 = vrcp.pop %v6790
    %v6813 = vmul.f32 %v6773, %v6812
    %v6814 = vrcp.pop %v6793
    %v6815 = vmul.f32 %v6775, %v6814
    %v6816 = vrcp.pop %v6796
    %v6817 = vmul.f32 %v6777, %v6816
    %v6818 = vrcp.pop %v6799
    %v6819 = vmul.f32 %v6779, %v6818
    %v6820 = vrcp.pop %v6802
    %v6821 = vmul.f32 %v6781, %v6820
    %v6822 = vrcp.pop %v6805
    %v6823 = vmul.f32 %v6783, %v6822
    %v6824 = vrcp.pop %v6808
    %v6825 = vmul.f32 %v6785, %v6824
    %v6826 = vrcp.pop %v6811
    %v6827 = vmul.f32 %v6787, %v6826
    %v6829 = vsel %vm1447, %v6813, 0
    %6831 = vmatprep.subr.mxu0 0.0
    %6832 = vmatpush1.msra.mxu0 0.0
    %6833 = vmatprep.subr.mxu0 0.0
    %6834 = vmatpush1.msra.mxu0 0.0
    %6835 = vmatprep.subr.mxu0 0.0
    %6836 = vmatpush1.msra.mxu0 0.0
    %6837 = vmatprep.subr.mxu0 0.0
    %6838 = vmatpush1.msra.mxu0 0.0
    %6839 = vmatprep.subr.mxu0 0.0
    %6840 = vmatpush1.msra.mxu0 0.0
    %6841 = vmatprep.subr.mxu0 0.0
    %6842 = vmatpush1.msra.mxu0 0.0
    %6843 = vmatprep.subr.mxu0 0.0
    %6844 = vmatpush1.msra.mxu0 0.0
    %6845 = vmatprep.subr.mxu0 0.0
    %6846 = vmatpush1.msra.mxu0 0.0
    %6847 = vmatprep.subr.mxu0 0.0
    %6848 = vmatpush1.msra.mxu0 0.0
    %6849 = vmatprep.subr.mxu0 0.0
    %6850 = vmatpush1.msra.mxu0 0.0
    %6851 = vmatprep.subr.mxu0 0.0
    %6852 = vmatpush1.msra.mxu0 0.0
    %6853 = vmatprep.subr.mxu0 0.0
    %6854 = vmatpush1.msra.mxu0 0.0
    %6855 = vmatprep.subr.mxu0 0.0
    %6856 = vmatpush1.msra.mxu0 0.0
    %6857 = vmatprep.subr.mxu0 0.0
    %6858 = vmatpush1.msra.mxu0 0.0
    %6859 = vmatprep.subr.mxu0 0.0
    %6860 = vmatpush1.msra.mxu0 %v6061
    %6861 = vmatprep.subr.mxu0 0.0
    %6862 = vmatpush1.msra.mxu0 %v6056
    %6863 = vmatprep.subr.mxu0 0.0
    %6864 = vmatpush2.msra.mxu0 0.0
    %6865 = vmatprep.subr.mxu0 0.0
    %6866 = vmatpush2.msra.mxu0 0.0
    %6867 = vmatprep.subr.mxu0 0.0
    %6868 = vmatpush2.msra.mxu0 0.0
    %6869 = vmatprep.subr.mxu0 0.0
    %6870 = vmatpush2.msra.mxu0 0.0
    %6871 = vmatprep.subr.mxu0 0.0
    %6872 = vmatpush2.msra.mxu0 0.0
    %6873 = vmatprep.subr.mxu0 0.0
    %6874 = vmatpush2.msra.mxu0 0.0
    %6875 = vmatprep.subr.mxu0 0.0
    %6876 = vmatpush2.msra.mxu0 0.0
    %6877 = vmatprep.subr.mxu0 0.0
    %6878 = vmatpush2.msra.mxu0 0.0
    %6879 = vmatprep.subr.mxu0 0.0
    %6880 = vmatpush2.msra.mxu0 0.0
    %6881 = vmatprep.subr.mxu0 0.0
    %6882 = vmatpush2.msra.mxu0 0.0
    %6883 = vmatprep.subr.mxu0 0.0
    %6884 = vmatpush2.msra.mxu0 0.0
    %6885 = vmatprep.subr.mxu0 0.0
    %6886 = vmatpush2.msra.mxu0 0.0
    %6887 = vmatprep.subr.mxu0 0.0
    %6888 = vmatpush2.msra.mxu0 0.0
    %6889 = vmatprep.subr.mxu0 0.0
    %6890 = vmatpush2.msra.mxu0 0.0
    %6891 = vmatprep.subr.mxu0 0.0
    %6892 = vmatpush2.msra.mxu0 0.0
    %6893 = vmatprep.subr.mxu0 0.0
    %6894 = vmatpush2.msra.mxu0 0.0
    %6895 = vmatprep.mubr.f32.mxu0 0.0
    %6896 = vmatmul.mubr.f32.gmra.mxu0 %v6829
    %v6897 = vpop.f32.mrf.mxu0
    %v6898 = vadd.f32 0.0, %v6897
    %v6899 = vpop.f32.mrf.mxu0
    %6900 = vdwg.mxu0
    %6903 = vrot.lane.b32.xlu0 %v6056, 120
    %v6904 = vpop.permute.xlu0 %6903
    %6905 = vrot.lane.b32.xlu0 %v6061, 120
    %v6906 = vpop.permute.xlu0 %6905
    %v6910 = vsel %vm1447, %v6815, 0
    %6912 = vmatprep.subr.mxu0 0.0
    %6913 = vmatpush1.msra.mxu0 0.0
    %6914 = vmatprep.subr.mxu0 0.0
    %6915 = vmatpush1.msra.mxu0 0.0
    %6916 = vmatprep.subr.mxu0 0.0
    %6917 = vmatpush1.msra.mxu0 0.0
    %6918 = vmatprep.subr.mxu0 0.0
    %6919 = vmatpush1.msra.mxu0 0.0
    %6920 = vmatprep.subr.mxu0 0.0
    %6921 = vmatpush1.msra.mxu0 0.0
    %6922 = vmatprep.subr.mxu0 0.0
    %6923 = vmatpush1.msra.mxu0 0.0
    %6924 = vmatprep.subr.mxu0 0.0
    %6925 = vmatpush1.msra.mxu0 0.0
    %6926 = vmatprep.subr.mxu0 0.0
    %6927 = vmatpush1.msra.mxu0 0.0
    %6928 = vmatprep.subr.mxu0 0.0
    %6929 = vmatpush1.msra.mxu0 0.0
    %6930 = vmatprep.subr.mxu0 0.0
    %6931 = vmatpush1.msra.mxu0 0.0
    %6932 = vmatprep.subr.mxu0 0.0
    %6933 = vmatpush1.msra.mxu0 0.0
    %6934 = vmatprep.subr.mxu0 0.0
    %6935 = vmatpush1.msra.mxu0 0.0
    %6936 = vmatprep.subr.mxu0 0.0
    %6937 = vmatpush1.msra.mxu0 0.0
    %6938 = vmatprep.subr.mxu0 0.0
    %6939 = vmatpush1.msra.mxu0 0.0
    %6940 = vmatprep.subr.mxu0 0.0
    %6941 = vmatpush1.msra.mxu0 %v6906
    %6942 = vmatprep.subr.mxu0 0.0
    %6943 = vmatpush1.msra.mxu0 %v6904
    %6944 = vmatprep.subr.mxu0 0.0
    %6945 = vmatpush2.msra.mxu0 0.0
    %6946 = vmatprep.subr.mxu0 0.0
    %6947 = vmatpush2.msra.mxu0 0.0
    %6948 = vmatprep.subr.mxu0 0.0
    %6949 = vmatpush2.msra.mxu0 0.0
    %6950 = vmatprep.subr.mxu0 0.0
    %6951 = vmatpush2.msra.mxu0 0.0
    %6952 = vmatprep.subr.mxu0 0.0
    %6953 = vmatpush2.msra.mxu0 0.0
    %6954 = vmatprep.subr.mxu0 0.0
    %6955 = vmatpush2.msra.mxu0 0.0
    %6956 = vmatprep.subr.mxu0 0.0
    %6957 = vmatpush2.msra.mxu0 0.0
    %6958 = vmatprep.subr.mxu0 0.0
    %6959 = vmatpush2.msra.mxu0 0.0
    %6960 = vmatprep.subr.mxu0 0.0
    %6961 = vmatpush2.msra.mxu0 0.0
    %6962 = vmatprep.subr.mxu0 0.0
    %6963 = vmatpush2.msra.mxu0 0.0
    %6964 = vmatprep.subr.mxu0 0.0
    %6965 = vmatpush2.msra.mxu0 0.0
    %6966 = vmatprep.subr.mxu0 0.0
    %6967 = vmatpush2.msra.mxu0 0.0
    %6968 = vmatprep.subr.mxu0 0.0
    %6969 = vmatpush2.msra.mxu0 0.0
    %6970 = vmatprep.subr.mxu0 0.0
    %6971 = vmatpush2.msra.mxu0 0.0
    %6972 = vmatprep.subr.mxu0 0.0
    %6973 = vmatpush2.msra.mxu0 0.0
    %6974 = vmatprep.subr.mxu0 0.0
    %6975 = vmatpush2.msra.mxu0 0.0
    %6976 = vmatprep.mubr.f32.mxu0 0.0
    %6977 = vmatmul.mubr.f32.gmra.mxu0 %v6910
    %v6978 = vpop.f32.mrf.mxu0
    %v6979 = vadd.f32 0.0, %v6978
    %v6980 = vpop.f32.mrf.mxu0
    %6981 = vdwg.mxu0
    %6982 = vrot.lane.b32.xlu0 %v6056, 112
    %v6983 = vpop.permute.xlu0 %6982
    %6984 = vrot.lane.b32.xlu0 %v6061, 112
    %v6985 = vpop.permute.xlu0 %6984
    %v6989 = vsel %vm1447, %v6817, 0
    %6991 = vmatprep.subr.mxu0 0.0
    %6992 = vmatpush1.msra.mxu0 0.0
    %6993 = vmatprep.subr.mxu0 0.0
    %6994 = vmatpush1.msra.mxu0 0.0
    %6995 = vmatprep.subr.mxu0 0.0
    %6996 = vmatpush1.msra.mxu0 0.0
    %6997 = vmatprep.subr.mxu0 0.0
    %6998 = vmatpush1.msra.mxu0 0.0
    %6999 = vmatprep.subr.mxu0 0.0
    %7000 = vmatpush1.msra.mxu0 0.0
    %7001 = vmatprep.subr.mxu0 0.0
    %7002 = vmatpush1.msra.mxu0 0.0
    %7003 = vmatprep.subr.mxu0 0.0
    %7004 = vmatpush1.msra.mxu0 0.0
    %7005 = vmatprep.subr.mxu0 0.0
    %7006 = vmatpush1.msra.mxu0 0.0
    %7007 = vmatprep.subr.mxu0 0.0
    %7008 = vmatpush1.msra.mxu0 0.0
    %7009 = vmatprep.subr.mxu0 0.0
    %7010 = vmatpush1.msra.mxu0 0.0
    %7011 = vmatprep.subr.mxu0 0.0
    %7012 = vmatpush1.msra.mxu0 0.0
    %7013 = vmatprep.subr.mxu0 0.0
    %7014 = vmatpush1.msra.mxu0 0.0
    %7015 = vmatprep.subr.mxu0 0.0
    %7016 = vmatpush1.msra.mxu0 0.0
    %7017 = vmatprep.subr.mxu0 0.0
    %7018 = vmatpush1.msra.mxu0 0.0
    %7019 = vmatprep.subr.mxu0 0.0
    %7020 = vmatpush1.msra.mxu0 %v6985
    %7021 = vmatprep.subr.mxu0 0.0
    %7022 = vmatpush1.msra.mxu0 %v6983
    %7023 = vmatprep.subr.mxu0 0.0
    %7024 = vmatpush2.msra.mxu0 0.0
    %7025 = vmatprep.subr.mxu0 0.0
    %7026 = vmatpush2.msra.mxu0 0.0
    %7027 = vmatprep.subr.mxu0 0.0
    %7028 = vmatpush2.msra.mxu0 0.0
    %7029 = vmatprep.subr.mxu0 0.0
    %7030 = vmatpush2.msra.mxu0 0.0
    %7031 = vmatprep.subr.mxu0 0.0
    %7032 = vmatpush2.msra.mxu0 0.0
    %7033 = vmatprep.subr.mxu0 0.0
    %7034 = vmatpush2.msra.mxu0 0.0
    %7035 = vmatprep.subr.mxu0 0.0
    %7036 = vmatpush2.msra.mxu0 0.0
    %7037 = vmatprep.subr.mxu0 0.0
    %7038 = vmatpush2.msra.mxu0 0.0
    %7039 = vmatprep.subr.mxu0 0.0
    %7040 = vmatpush2.msra.mxu0 0.0
    %7041 = vmatprep.subr.mxu0 0.0
    %7042 = vmatpush2.msra.mxu0 0.0
    %7043 = vmatprep.subr.mxu0 0.0
    %7044 = vmatpush2.msra.mxu0 0.0
    %7045 = vmatprep.subr.mxu0 0.0
    %7046 = vmatpush2.msra.mxu0 0.0
    %7047 = vmatprep.subr.mxu0 0.0
    %7048 = vmatpush2.msra.mxu0 0.0
    %7049 = vmatprep.subr.mxu0 0.0
    %7050 = vmatpush2.msra.mxu0 0.0
    %7051 = vmatprep.subr.mxu0 0.0
    %7052 = vmatpush2.msra.mxu0 0.0
    %7053 = vmatprep.subr.mxu0 0.0
    %7054 = vmatpush2.msra.mxu0 0.0
    %7055 = vmatprep.mubr.f32.mxu0 0.0
    %7056 = vmatmul.mubr.f32.gmra.mxu0 %v6989
    %v7057 = vpop.f32.mrf.mxu0
    %v7058 = vadd.f32 0.0, %v7057
    %v7059 = vpop.f32.mrf.mxu0
    %7060 = vdwg.mxu0
    %7061 = vrot.lane.b32.xlu0 %v6056, 104
    %v7062 = vpop.permute.xlu0 %7061
    %7063 = vrot.lane.b32.xlu0 %v6061, 104
    %v7064 = vpop.permute.xlu0 %7063
    %v7068 = vsel %vm1447, %v6819, 0
    %7070 = vmatprep.subr.mxu0 0.0
    %7071 = vmatpush1.msra.mxu0 0.0
    %7072 = vmatprep.subr.mxu0 0.0
    %7073 = vmatpush1.msra.mxu0 0.0
    %7074 = vmatprep.subr.mxu0 0.0
    %7075 = vmatpush1.msra.mxu0 0.0
    %7076 = vmatprep.subr.mxu0 0.0
    %7077 = vmatpush1.msra.mxu0 0.0
    %7078 = vmatprep.subr.mxu0 0.0
    %7079 = vmatpush1.msra.mxu0 0.0
    %7080 = vmatprep.subr.mxu0 0.0
    %7081 = vmatpush1.msra.mxu0 0.0
    %7082 = vmatprep.subr.mxu0 0.0
    %7083 = vmatpush1.msra.mxu0 0.0
    %7084 = vmatprep.subr.mxu0 0.0
    %7085 = vmatpush1.msra.mxu0 0.0
    %7086 = vmatprep.subr.mxu0 0.0
    %7087 = vmatpush1.msra.mxu0 0.0
    %7088 = vmatprep.subr.mxu0 0.0
    %7089 = vmatpush1.msra.mxu0 0.0
    %7090 = vmatprep.subr.mxu0 0.0
    %7091 = vmatpush1.msra.mxu0 0.0
    %7092 = vmatprep.subr.mxu0 0.0
    %7093 = vmatpush1.msra.mxu0 0.0
    %7094 = vmatprep.subr.mxu0 0.0
    %7095 = vmatpush1.msra.mxu0 0.0
    %7096 = vmatprep.subr.mxu0 0.0
    %7097 = vmatpush1.msra.mxu0 0.0
    %7098 = vmatprep.subr.mxu0 0.0
    %7099 = vmatpush1.msra.mxu0 %v7064
    %7100 = vmatprep.subr.mxu0 0.0
    %7101 = vmatpush1.msra.mxu0 %v7062
    %7102 = vmatprep.subr.mxu0 0.0
    %7103 = vmatpush2.msra.mxu0 0.0
    %7104 = vmatprep.subr.mxu0 0.0
    %7105 = vmatpush2.msra.mxu0 0.0
    %7106 = vmatprep.subr.mxu0 0.0
    %7107 = vmatpush2.msra.mxu0 0.0
    %7108 = vmatprep.subr.mxu0 0.0
    %7109 = vmatpush2.msra.mxu0 0.0
    %7110 = vmatprep.subr.mxu0 0.0
    %7111 = vmatpush2.msra.mxu0 0.0
    %7112 = vmatprep.subr.mxu0 0.0
    %7113 = vmatpush2.msra.mxu0 0.0
    %7114 = vmatprep.subr.mxu0 0.0
    %7115 = vmatpush2.msra.mxu0 0.0
    %7116 = vmatprep.subr.mxu0 0.0
    %7117 = vmatpush2.msra.mxu0 0.0
    %7118 = vmatprep.subr.mxu0 0.0
    %7119 = vmatpush2.msra.mxu0 0.0
    %7120 = vmatprep.subr.mxu0 0.0
    %7121 = vmatpush2.msra.mxu0 0.0
    %7122 = vmatprep.subr.mxu0 0.0
    %7123 = vmatpush2.msra.mxu0 0.0
    %7124 = vmatprep.subr.mxu0 0.0
    %7125 = vmatpush2.msra.mxu0 0.0
    %7126 = vmatprep.subr.mxu0 0.0
    %7127 = vmatpush2.msra.mxu0 0.0
    %7128 = vmatprep.subr.mxu0 0.0
    %7129 = vmatpush2.msra.mxu0 0.0
    %7130 = vmatprep.subr.mxu0 0.0
    %7131 = vmatpush2.msra.mxu0 0.0
    %7132 = vmatprep.subr.mxu0 0.0
    %7133 = vmatpush2.msra.mxu0 0.0
    %7134 = vmatprep.mubr.f32.mxu0 0.0
    %7135 = vmatmul.mubr.f32.gmra.mxu0 %v7068
    %v7136 = vpop.f32.mrf.mxu0
    %v7137 = vadd.f32 0.0, %v7136
    %v7138 = vpop.f32.mrf.mxu0
    %7139 = vdwg.mxu0
    %7141 = vrot.lane.b32.xlu0 %v6979, 8
    %v7142 = vpop.permute.xlu0 %7141
    %7145 = vrot.lane.b32.xlu0 %v7058, 16
    %v7146 = vpop.permute.xlu0 %7145
    %7149 = vrot.lane.b32.xlu0 %v7137, 24
    %v7150 = vpop.permute.xlu0 %7149
    %v7152 = vsel %vm407, %v6898, %v7142
    %v7153 = vsel %vm1447, %v7152, %v7146
    %v7154 = vsel %vm1449, %v7153, %v7150
    %v7156 = vsel %vm1447, %v6821, 0
    %7158 = vmatprep.subr.mxu0 0.0
    %7159 = vmatpush1.msra.mxu0 0.0
    %7160 = vmatprep.subr.mxu0 0.0
    %7161 = vmatpush1.msra.mxu0 0.0
    %7162 = vmatprep.subr.mxu0 0.0
    %7163 = vmatpush1.msra.mxu0 0.0
    %7164 = vmatprep.subr.mxu0 0.0
    %7165 = vmatpush1.msra.mxu0 0.0
    %7166 = vmatprep.subr.mxu0 0.0
    %7167 = vmatpush1.msra.mxu0 0.0
    %7168 = vmatprep.subr.mxu0 0.0
    %7169 = vmatpush1.msra.mxu0 0.0
    %7170 = vmatprep.subr.mxu0 0.0
    %7171 = vmatpush1.msra.mxu0 0.0
    %7172 = vmatprep.subr.mxu0 0.0
    %7173 = vmatpush1.msra.mxu0 0.0
    %7174 = vmatprep.subr.mxu0 0.0
    %7175 = vmatpush1.msra.mxu0 0.0
    %7176 = vmatprep.subr.mxu0 0.0
    %7177 = vmatpush1.msra.mxu0 0.0
    %7178 = vmatprep.subr.mxu0 0.0
    %7179 = vmatpush1.msra.mxu0 0.0
    %7180 = vmatprep.subr.mxu0 0.0
    %7181 = vmatpush1.msra.mxu0 0.0
    %7182 = vmatprep.subr.mxu0 0.0
    %7183 = vmatpush1.msra.mxu0 0.0
    %7184 = vmatprep.subr.mxu0 0.0
    %7185 = vmatpush1.msra.mxu0 0.0
    %7186 = vmatprep.subr.mxu0 0.0
    %7187 = vmatpush1.msra.mxu0 %v6071
    %7188 = vmatprep.subr.mxu0 0.0
    %7189 = vmatpush1.msra.mxu0 %v6066
    %7190 = vmatprep.subr.mxu0 0.0
    %7191 = vmatpush2.msra.mxu0 0.0
    %7192 = vmatprep.subr.mxu0 0.0
    %7193 = vmatpush2.msra.mxu0 0.0
    %7194 = vmatprep.subr.mxu0 0.0
    %7195 = vmatpush2.msra.mxu0 0.0
    %7196 = vmatprep.subr.mxu0 0.0
    %7197 = vmatpush2.msra.mxu0 0.0
    %7198 = vmatprep.subr.mxu0 0.0
    %7199 = vmatpush2.msra.mxu0 0.0
    %7200 = vmatprep.subr.mxu0 0.0
    %7201 = vmatpush2.msra.mxu0 0.0
    %7202 = vmatprep.subr.mxu0 0.0
    %7203 = vmatpush2.msra.mxu0 0.0
    %7204 = vmatprep.subr.mxu0 0.0
    %7205 = vmatpush2.msra.mxu0 0.0
    %7206 = vmatprep.subr.mxu0 0.0
    %7207 = vmatpush2.msra.mxu0 0.0
    %7208 = vmatprep.subr.mxu0 0.0
    %7209 = vmatpush2.msra.mxu0 0.0
    %7210 = vmatprep.subr.mxu0 0.0
    %7211 = vmatpush2.msra.mxu0 0.0
    %7212 = vmatprep.subr.mxu0 0.0
    %7213 = vmatpush2.msra.mxu0 0.0
    %7214 = vmatprep.subr.mxu0 0.0
    %7215 = vmatpush2.msra.mxu0 0.0
    %7216 = vmatprep.subr.mxu0 0.0
    %7217 = vmatpush2.msra.mxu0 0.0
    %7218 = vmatprep.subr.mxu0 0.0
    %7219 = vmatpush2.msra.mxu0 0.0
    %7220 = vmatprep.subr.mxu0 0.0
    %7221 = vmatpush2.msra.mxu0 0.0
    %7222 = vmatprep.mubr.f32.mxu0 0.0
    %7223 = vmatmul.mubr.f32.gmra.mxu0 %v7156
    %v7224 = vpop.f32.mrf.mxu0
    %v7225 = vadd.f32 0.0, %v7224
    %v7226 = vpop.f32.mrf.mxu0
    %7227 = vdwg.mxu0
    %7230 = vrot.lane.b32.xlu0 %v6066, 120
    %v7231 = vpop.permute.xlu0 %7230
    %7232 = vrot.lane.b32.xlu0 %v6071, 120
    %v7233 = vpop.permute.xlu0 %7232
    %v7237 = vsel %vm1447, %v6823, 0
    %7239 = vmatprep.subr.mxu0 0.0
    %7240 = vmatpush1.msra.mxu0 0.0
    %7241 = vmatprep.subr.mxu0 0.0
    %7242 = vmatpush1.msra.mxu0 0.0
    %7243 = vmatprep.subr.mxu0 0.0
    %7244 = vmatpush1.msra.mxu0 0.0
    %7245 = vmatprep.subr.mxu0 0.0
    %7246 = vmatpush1.msra.mxu0 0.0
    %7247 = vmatprep.subr.mxu0 0.0
    %7248 = vmatpush1.msra.mxu0 0.0
    %7249 = vmatprep.subr.mxu0 0.0
    %7250 = vmatpush1.msra.mxu0 0.0
    %7251 = vmatprep.subr.mxu0 0.0
    %7252 = vmatpush1.msra.mxu0 0.0
    %7253 = vmatprep.subr.mxu0 0.0
    %7254 = vmatpush1.msra.mxu0 0.0
    %7255 = vmatprep.subr.mxu0 0.0
    %7256 = vmatpush1.msra.mxu0 0.0
    %7257 = vmatprep.subr.mxu0 0.0
    %7258 = vmatpush1.msra.mxu0 0.0
    %7259 = vmatprep.subr.mxu0 0.0
    %7260 = vmatpush1.msra.mxu0 0.0
    %7261 = vmatprep.subr.mxu0 0.0
    %7262 = vmatpush1.msra.mxu0 0.0
    %7263 = vmatprep.subr.mxu0 0.0
    %7264 = vmatpush1.msra.mxu0 0.0
    %7265 = vmatprep.subr.mxu0 0.0
    %7266 = vmatpush1.msra.mxu0 0.0
    %7267 = vmatprep.subr.mxu0 0.0
    %7268 = vmatpush1.msra.mxu0 %v7233
    %7269 = vmatprep.subr.mxu0 0.0
    %7270 = vmatpush1.msra.mxu0 %v7231
    %7271 = vmatprep.subr.mxu0 0.0
    %7272 = vmatpush2.msra.mxu0 0.0
    %7273 = vmatprep.subr.mxu0 0.0
    %7274 = vmatpush2.msra.mxu0 0.0
    %7275 = vmatprep.subr.mxu0 0.0
    %7276 = vmatpush2.msra.mxu0 0.0
    %7277 = vmatprep.subr.mxu0 0.0
    %7278 = vmatpush2.msra.mxu0 0.0
    %7279 = vmatprep.subr.mxu0 0.0
    %7280 = vmatpush2.msra.mxu0 0.0
    %7281 = vmatprep.subr.mxu0 0.0
    %7282 = vmatpush2.msra.mxu0 0.0
    %7283 = vmatprep.subr.mxu0 0.0
    %7284 = vmatpush2.msra.mxu0 0.0
    %7285 = vmatprep.subr.mxu0 0.0
    %7286 = vmatpush2.msra.mxu0 0.0
    %7287 = vmatprep.subr.mxu0 0.0
    %7288 = vmatpush2.msra.mxu0 0.0
    %7289 = vmatprep.subr.mxu0 0.0
    %7290 = vmatpush2.msra.mxu0 0.0
    %7291 = vmatprep.subr.mxu0 0.0
    %7292 = vmatpush2.msra.mxu0 0.0
    %7293 = vmatprep.subr.mxu0 0.0
    %7294 = vmatpush2.msra.mxu0 0.0
    %7295 = vmatprep.subr.mxu0 0.0
    %7296 = vmatpush2.msra.mxu0 0.0
    %7297 = vmatprep.subr.mxu0 0.0
    %7298 = vmatpush2.msra.mxu0 0.0
    %7299 = vmatprep.subr.mxu0 0.0
    %7300 = vmatpush2.msra.mxu0 0.0
    %7301 = vmatprep.subr.mxu0 0.0
    %7302 = vmatpush2.msra.mxu0 0.0
    %7303 = vmatprep.mubr.f32.mxu0 0.0
    %7304 = vmatmul.mubr.f32.gmra.mxu0 %v7237
    %v7305 = vpop.f32.mrf.mxu0
    %v7306 = vadd.f32 0.0, %v7305
    %v7307 = vpop.f32.mrf.mxu0
    %7308 = vdwg.mxu0
    %7309 = vrot.lane.b32.xlu0 %v6066, 112
    %v7310 = vpop.permute.xlu0 %7309
    %7311 = vrot.lane.b32.xlu0 %v6071, 112
    %v7312 = vpop.permute.xlu0 %7311
    %v7316 = vsel %vm1447, %v6825, 0
    %7318 = vmatprep.subr.mxu0 0.0
    %7319 = vmatpush1.msra.mxu0 0.0
    %7320 = vmatprep.subr.mxu0 0.0
    %7321 = vmatpush1.msra.mxu0 0.0
    %7322 = vmatprep.subr.mxu0 0.0
    %7323 = vmatpush1.msra.mxu0 0.0
    %7324 = vmatprep.subr.mxu0 0.0
    %7325 = vmatpush1.msra.mxu0 0.0
    %7326 = vmatprep.subr.mxu0 0.0
    %7327 = vmatpush1.msra.mxu0 0.0
    %7328 = vmatprep.subr.mxu0 0.0
    %7329 = vmatpush1.msra.mxu0 0.0
    %7330 = vmatprep.subr.mxu0 0.0
    %7331 = vmatpush1.msra.mxu0 0.0
    %7332 = vmatprep.subr.mxu0 0.0
    %7333 = vmatpush1.msra.mxu0 0.0
    %7334 = vmatprep.subr.mxu0 0.0
    %7335 = vmatpush1.msra.mxu0 0.0
    %7336 = vmatprep.subr.mxu0 0.0
    %7337 = vmatpush1.msra.mxu0 0.0
    %7338 = vmatprep.subr.mxu0 0.0
    %7339 = vmatpush1.msra.mxu0 0.0
    %7340 = vmatprep.subr.mxu0 0.0
    %7341 = vmatpush1.msra.mxu0 0.0
    %7342 = vmatprep.subr.mxu0 0.0
    %7343 = vmatpush1.msra.mxu0 0.0
    %7344 = vmatprep.subr.mxu0 0.0
    %7345 = vmatpush1.msra.mxu0 0.0
    %7346 = vmatprep.subr.mxu0 0.0
    %7347 = vmatpush1.msra.mxu0 %v7312
    %7348 = vmatprep.subr.mxu0 0.0
    %7349 = vmatpush1.msra.mxu0 %v7310
    %7350 = vmatprep.subr.mxu0 0.0
    %7351 = vmatpush2.msra.mxu0 0.0
    %7352 = vmatprep.subr.mxu0 0.0
    %7353 = vmatpush2.msra.mxu0 0.0
    %7354 = vmatprep.subr.mxu0 0.0
    %7355 = vmatpush2.msra.mxu0 0.0
    %7356 = vmatprep.subr.mxu0 0.0
    %7357 = vmatpush2.msra.mxu0 0.0
    %7358 = vmatprep.subr.mxu0 0.0
    %7359 = vmatpush2.msra.mxu0 0.0
    %7360 = vmatprep.subr.mxu0 0.0
    %7361 = vmatpush2.msra.mxu0 0.0
    %7362 = vmatprep.subr.mxu0 0.0
    %7363 = vmatpush2.msra.mxu0 0.0
    %7364 = vmatprep.subr.mxu0 0.0
    %7365 = vmatpush2.msra.mxu0 0.0
    %7366 = vmatprep.subr.mxu0 0.0
    %7367 = vmatpush2.msra.mxu0 0.0
    %7368 = vmatprep.subr.mxu0 0.0
    %7369 = vmatpush2.msra.mxu0 0.0
    %7370 = vmatprep.subr.mxu0 0.0
    %7371 = vmatpush2.msra.mxu0 0.0
    %7372 = vmatprep.subr.mxu0 0.0
    %7373 = vmatpush2.msra.mxu0 0.0
    %7374 = vmatprep.subr.mxu0 0.0
    %7375 = vmatpush2.msra.mxu0 0.0
    %7376 = vmatprep.subr.mxu0 0.0
    %7377 = vmatpush2.msra.mxu0 0.0
    %7378 = vmatprep.subr.mxu0 0.0
    %7379 = vmatpush2.msra.mxu0 0.0
    %7380 = vmatprep.subr.mxu0 0.0
    %7381 = vmatpush2.msra.mxu0 0.0
    %7382 = vmatprep.mubr.f32.mxu0 0.0
    %7383 = vmatmul.mubr.f32.gmra.mxu0 %v7316
    %v7384 = vpop.f32.mrf.mxu0
    %v7385 = vadd.f32 0.0, %v7384
    %v7386 = vpop.f32.mrf.mxu0
    %7387 = vdwg.mxu0
    %7388 = vrot.lane.b32.xlu0 %v6066, 104
    %v7389 = vpop.permute.xlu0 %7388
    %7390 = vrot.lane.b32.xlu0 %v6071, 104
    %v7391 = vpop.permute.xlu0 %7390
    %v7395 = vsel %vm1447, %v6827, 0
    %7397 = vmatprep.subr.mxu0 0.0
    %7398 = vmatpush1.msra.mxu0 0.0
    %7399 = vmatprep.subr.mxu0 0.0
    %7400 = vmatpush1.msra.mxu0 0.0
    %7401 = vmatprep.subr.mxu0 0.0
    %7402 = vmatpush1.msra.mxu0 0.0
    %7403 = vmatprep.subr.mxu0 0.0
    %7404 = vmatpush1.msra.mxu0 0.0
    %7405 = vmatprep.subr.mxu0 0.0
    %7406 = vmatpush1.msra.mxu0 0.0
    %7407 = vmatprep.subr.mxu0 0.0
    %7408 = vmatpush1.msra.mxu0 0.0
    %7409 = vmatprep.subr.mxu0 0.0
    %7410 = vmatpush1.msra.mxu0 0.0
    %7411 = vmatprep.subr.mxu0 0.0
    %7412 = vmatpush1.msra.mxu0 0.0
    %7413 = vmatprep.subr.mxu0 0.0
    %7414 = vmatpush1.msra.mxu0 0.0
    %7415 = vmatprep.subr.mxu0 0.0
    %7416 = vmatpush1.msra.mxu0 0.0
    %7417 = vmatprep.subr.mxu0 0.0
    %7418 = vmatpush1.msra.mxu0 0.0
    %7419 = vmatprep.subr.mxu0 0.0
    %7420 = vmatpush1.msra.mxu0 0.0
    %7421 = vmatprep.subr.mxu0 0.0
    %7422 = vmatpush1.msra.mxu0 0.0
    %7423 = vmatprep.subr.mxu0 0.0
    %7424 = vmatpush1.msra.mxu0 0.0
    %7425 = vmatprep.subr.mxu0 0.0
    %7426 = vmatpush1.msra.mxu0 %v7391
    %7427 = vmatprep.subr.mxu0 0.0
    %7428 = vmatpush1.msra.mxu0 %v7389
    %7429 = vmatprep.subr.mxu0 0.0
    %7430 = vmatpush2.msra.mxu0 0.0
    %7431 = vmatprep.subr.mxu0 0.0
    %7432 = vmatpush2.msra.mxu0 0.0
    %7433 = vmatprep.subr.mxu0 0.0
    %7434 = vmatpush2.msra.mxu0 0.0
    %7435 = vmatprep.subr.mxu0 0.0
    %7436 = vmatpush2.msra.mxu0 0.0
    %7437 = vmatprep.subr.mxu0 0.0
    %7438 = vmatpush2.msra.mxu0 0.0
    %7439 = vmatprep.subr.mxu0 0.0
    %7440 = vmatpush2.msra.mxu0 0.0
    %7441 = vmatprep.subr.mxu0 0.0
    %7442 = vmatpush2.msra.mxu0 0.0
    %7443 = vmatprep.subr.mxu0 0.0
    %7444 = vmatpush2.msra.mxu0 0.0
    %7445 = vmatprep.subr.mxu0 0.0
    %7446 = vmatpush2.msra.mxu0 0.0
    %7447 = vmatprep.subr.mxu0 0.0
    %7448 = vmatpush2.msra.mxu0 0.0
    %7449 = vmatprep.subr.mxu0 0.0
    %7450 = vmatpush2.msra.mxu0 0.0
    %7451 = vmatprep.subr.mxu0 0.0
    %7452 = vmatpush2.msra.mxu0 0.0
    %7453 = vmatprep.subr.mxu0 0.0
    %7454 = vmatpush2.msra.mxu0 0.0
    %7455 = vmatprep.subr.mxu0 0.0
    %7456 = vmatpush2.msra.mxu0 0.0
    %7457 = vmatprep.subr.mxu0 0.0
    %7458 = vmatpush2.msra.mxu0 0.0
    %7459 = vmatprep.subr.mxu0 0.0
    %7460 = vmatpush2.msra.mxu0 0.0
    %7461 = vmatprep.mubr.f32.mxu0 0.0
    %7462 = vmatmul.mubr.f32.gmra.mxu0 %v7395
    %v7463 = vpop.f32.mrf.mxu0
    %v7464 = vadd.f32 0.0, %v7463
    %v7465 = vpop.f32.mrf.mxu0
    %7466 = vdwg.mxu0
    %7468 = vrot.lane.b32.xlu0 %v7306, 8
    %v7469 = vpop.permute.xlu0 %7468
    %7472 = vrot.lane.b32.xlu0 %v7385, 16
    %v7473 = vpop.permute.xlu0 %7472
    %7476 = vrot.lane.b32.xlu0 %v7464, 24
    %v7477 = vpop.permute.xlu0 %7476
    %v7479 = vsel %vm407, %v7225, %v7469
    %v7480 = vsel %vm1447, %v7479, %v7473
    %v7481 = vsel %vm1449, %v7480, %v7477
    %s7482 = scalar_lea.vmem [#allocation6], 480
    %v7483 = vld [vmem:[%s7482] sm:$0xff]
    %v7484 = vld [vmem:[%s7482 + $0x8] sm:$0xff]
    %v7485 = vld [vmem:[%s7482 + $0x10] sm:$0xff]
    %v7486 = vld [vmem:[%s7482 + $0x18] sm:$0xff]
    %v7488 = vsel %vm91, %v7154, 0
    %v7491 = vsel %vm91, %v7481, 0
    %7493 = vmatprep.subr.mxu0 0.0
    %7494 = vmatpush1.msra.mxu0 0.0
    %7495 = vmatprep.subr.mxu0 0.0
    %7496 = vmatpush1.msra.mxu0 0.0
    %7497 = vmatprep.subr.mxu0 0.0
    %7498 = vmatpush1.msra.mxu0 0.0
    %7499 = vmatprep.subr.mxu0 0.0
    %7500 = vmatpush1.msra.mxu0 0.0
    %7501 = vmatprep.subr.mxu0 0.0
    %7502 = vmatpush1.msra.mxu0 0.0
    %7503 = vmatprep.subr.mxu0 0.0
    %7504 = vmatpush1.msra.mxu0 0.0
    %7505 = vmatprep.subr.mxu0 0.0
    %7506 = vmatpush1.msra.mxu0 0.0
    %7507 = vmatprep.subr.mxu0 0.0
    %7508 = vmatpush1.msra.mxu0 0.0
    %7509 = vmatprep.subr.mxu0 0.0
    %7510 = vmatpush1.msra.mxu0 0.0
    %7511 = vmatprep.subr.mxu0 0.0
    %7512 = vmatpush1.msra.mxu0 0.0
    %7513 = vmatprep.subr.mxu0 0.0
    %7514 = vmatpush1.msra.mxu0 0.0
    %7515 = vmatprep.subr.mxu0 0.0
    %7516 = vmatpush1.msra.mxu0 0.0
    %7517 = vmatprep.subr.mxu0 0.0
    %7518 = vmatpush1.msra.mxu0 %v7486
    %7519 = vmatprep.subr.mxu0 0.0
    %7520 = vmatpush1.msra.mxu0 %v7485
    %7521 = vmatprep.subr.mxu0 0.0
    %7522 = vmatpush1.msra.mxu0 %v7484
    %7523 = vmatprep.subr.mxu0 0.0
    %7524 = vmatpush1.msra.mxu0 %v7483
    %7525 = vmatprep.subr.mxu0 0.0
    %7526 = vmatpush2.msra.mxu0 0.0
    %7527 = vmatprep.subr.mxu0 0.0
    %7528 = vmatpush2.msra.mxu0 0.0
    %7529 = vmatprep.subr.mxu0 0.0
    %7530 = vmatpush2.msra.mxu0 0.0
    %7531 = vmatprep.subr.mxu0 0.0
    %7532 = vmatpush2.msra.mxu0 0.0
    %7533 = vmatprep.subr.mxu0 0.0
    %7534 = vmatpush2.msra.mxu0 0.0
    %7535 = vmatprep.subr.mxu0 0.0
    %7536 = vmatpush2.msra.mxu0 0.0
    %7537 = vmatprep.subr.mxu0 0.0
    %7538 = vmatpush2.msra.mxu0 0.0
    %7539 = vmatprep.subr.mxu0 0.0
    %7540 = vmatpush2.msra.mxu0 0.0
    %7541 = vmatprep.subr.mxu0 0.0
    %7542 = vmatpush2.msra.mxu0 0.0
    %7543 = vmatprep.subr.mxu0 0.0
    %7544 = vmatpush2.msra.mxu0 0.0
    %7545 = vmatprep.subr.mxu0 0.0
    %7546 = vmatpush2.msra.mxu0 0.0
    %7547 = vmatprep.subr.mxu0 0.0
    %7548 = vmatpush2.msra.mxu0 0.0
    %7549 = vmatprep.subr.mxu0 0.0
    %7550 = vmatpush2.msra.mxu0 0.0
    %7551 = vmatprep.subr.mxu0 0.0
    %7552 = vmatpush2.msra.mxu0 0.0
    %7553 = vmatprep.subr.mxu0 0.0
    %7554 = vmatpush2.msra.mxu0 0.0
    %7555 = vmatprep.subr.mxu0 0.0
    %7556 = vmatpush2.msra.mxu0 0.0
    %7557 = vmatprep.mubr.f32.mxu0 0.0
    %7558 = vmatmul.mubr.f32.gmra.mxu0 %v7488
    %v7559 = vpop.f32.mrf.mxu0
    %v7560 = vadd.f32 0.0, %v7559
    %v7561 = vpop.f32.mrf.mxu0
    %7562 = vmatprep.mubr.f32.mxu0 0.0
    %7563 = vmatmul.mubr.f32.gmra.mxu0 %v7491
    %v7564 = vpop.f32.mrf.mxu0
    %v7565 = vadd.f32 0.0, %v7564
    %v7566 = vpop.f32.mrf.mxu0
    %7567 = vdwg.mxu0
    %v7568 = vadd.f32 %v5736, %v7560
    %v7569 = vadd.f32 %v5737, %v7565
    %s7570 = scalar_lea.vmem %s6, 16
    %v7571 = vld [vmem:[%s7570] sm:$0x1]
    %v7573 = vlaneseq
    %v7574 = vshrl.u32 %v7573, 7
    %v7575 = vsub.s32 0, %v7574
    %v7576 = vrot.slane %v7571, %v7575
    %v7578 = vadd.f32 %v7568, %v7576
    %v7579 = vadd.f32 %v7569, %v7576
    %v7580 = vsel %vm91, %v7578, 0.0
    %7581 = vadd.xlane.f32.xlu0 %v7580
    %v7582 = vpop.xlane.xlu0 %7581
    %v7583 = vsel %vm91, %v7579, 0.0
    %7584 = vadd.xlane.f32.xlu0 %v7583
    %v7585 = vpop.xlane.xlu0 %7584
    %v7586 = vmul.f32 %v7582, %v98
    %v7587 = vmul.f32 %v7585, %v98
    %v7588 = vsub.f32 %v7578, %v7586
    %v7589 = vsub.f32 %v7579, %v7587
    %v7590 = vmul.f32 %v7588, %v7588
    %v7591 = vmul.f32 %v7589, %v7589
    %v7592 = vsel %vm91, %v7590, 0.0
    %7593 = vadd.xlane.f32.xlu0 %v7592
    %v7594 = vpop.xlane.xlu0 %7593
    %v7595 = vsel %vm91, %v7591, 0.0
    %7596 = vadd.xlane.f32.xlu0 %v7595
    %v7597 = vpop.xlane.xlu0 %7596
    %v7598 = vmul.f32 %v7594, 0.032258064
    %v7599 = vmul.f32 %v7597, 0.032258064
    %v7600 = vstv %s3964
    %v7601 = vmul.f32 %v7600, %v7588
    %v7602 = vmul.f32 %v7600, %v7589
    %v7603 = vrsqrt.pop %v7598
    %v7604 = vmul.f32 %v7598, %v7603
    %vm7605 = vcmp.eq.f32.partialorder %v7598, inf
    %v7606 = vsel %vm7605, %v7598, %v7604
    %vm7607 = vcmp.eq.f32.partialorder %v7598, 0.0
    %v7608 = vand.u32 %v7598, 2147483648
    %v7609 = vsel %vm7607, %v7608, %v7606
    %v7610 = vrsqrt.pop %v7599
    %v7611 = vmul.f32 %v7599, %v7610
    %vm7612 = vcmp.eq.f32.partialorder %v7599, inf
    %v7613 = vsel %vm7612, %v7599, %v7611
    %vm7614 = vcmp.eq.f32.partialorder %v7599, 0.0
    %v7615 = vand.u32 %v7599, 2147483648
    %v7616 = vsel %vm7614, %v7615, %v7613
    %v7617 = vadd.f32 %v7609, 1e-06
    %v7618 = vadd.f32 %v7616, 1e-06
    %v7619 = vrcp.pop %v7617
    %v7620 = vmul.f32 %v7601, %v7619
    %v7621 = vrcp.pop %v7618
    %v7622 = vmul.f32 %v7602, %v7621
    %v7623 = vstv %s3965
    %v7624 = vadd.f32 %v7620, %v7623
    %v7625 = vadd.f32 %v7622, %v7623
    %s7626 = scalar_lea.vmem %s7, 32
    %v7627 = vld [vmem:[%s7626] sm:$0xff]
    %v7628 = vld [vmem:[%s7626 + $0x8] sm:$0xff]
    %v7629 = vld [vmem:[%s7626 + $0x10] sm:$0xff]
    %v7630 = vld [vmem:[%s7626 + $0x18] sm:$0xff]
    %s7631 = scalar_lea.vmem %s8, 1
    %v7632 = vld [vmem:[%s7631] sm:$0x1]
    %v7634 = vlaneseq
    %v7635 = vshrl.u32 %v7634, 7
    %v7636 = vsub.s32 0, %v7635
    %v7637 = vrot.slane %v7632, %v7636
    %v7640 = vsel %vm91, %v7624, 0
    %v7643 = vsel %vm91, %v7625, 0
    %7645 = vmatprep.subr.mxu0 0.0
    %7646 = vmatpush1.msra.mxu0 0.0
    %7647 = vmatprep.subr.mxu0 0.0
    %7648 = vmatpush1.msra.mxu0 0.0
    %7649 = vmatprep.subr.mxu0 0.0
    %7650 = vmatpush1.msra.mxu0 0.0
    %7651 = vmatprep.subr.mxu0 0.0
    %7652 = vmatpush1.msra.mxu0 0.0
    %7653 = vmatprep.subr.mxu0 0.0
    %7654 = vmatpush1.msra.mxu0 0.0
    %7655 = vmatprep.subr.mxu0 0.0
    %7656 = vmatpush1.msra.mxu0 0.0
    %7657 = vmatprep.subr.mxu0 0.0
    %7658 = vmatpush1.msra.mxu0 0.0
    %7659 = vmatprep.subr.mxu0 0.0
    %7660 = vmatpush1.msra.mxu0 0.0
    %7661 = vmatprep.subr.mxu0 0.0
    %7662 = vmatpush1.msra.mxu0 0.0
    %7663 = vmatprep.subr.mxu0 0.0
    %7664 = vmatpush1.msra.mxu0 0.0
    %7665 = vmatprep.subr.mxu0 0.0
    %7666 = vmatpush1.msra.mxu0 0.0
    %7667 = vmatprep.subr.mxu0 0.0
    %7668 = vmatpush1.msra.mxu0 0.0
    %7669 = vmatprep.subr.mxu0 0.0
    %7670 = vmatpush1.msra.mxu0 %v7630
    %7671 = vmatprep.subr.mxu0 0.0
    %7672 = vmatpush1.msra.mxu0 %v7629
    %7673 = vmatprep.subr.mxu0 0.0
    %7674 = vmatpush1.msra.mxu0 %v7628
    %7675 = vmatprep.subr.mxu0 0.0
    %7676 = vmatpush1.msra.mxu0 %v7627
    %7677 = vmatprep.subr.mxu0 0.0
    %7678 = vmatpush2.msra.mxu0 0.0
    %7679 = vmatprep.subr.mxu0 0.0
    %7680 = vmatpush2.msra.mxu0 0.0
    %7681 = vmatprep.subr.mxu0 0.0
    %7682 = vmatpush2.msra.mxu0 0.0
    %7683 = vmatprep.subr.mxu0 0.0
    %7684 = vmatpush2.msra.mxu0 0.0
    %7685 = vmatprep.subr.mxu0 0.0
    %7686 = vmatpush2.msra.mxu0 0.0
    %7687 = vmatprep.subr.mxu0 0.0
    %7688 = vmatpush2.msra.mxu0 0.0
    %7689 = vmatprep.subr.mxu0 0.0
    %7690 = vmatpush2.msra.mxu0 0.0
    %7691 = vmatprep.subr.mxu0 0.0
    %7692 = vmatpush2.msra.mxu0 0.0
    %7693 = vmatprep.subr.mxu0 0.0
    %7694 = vmatpush2.msra.mxu0 0.0
    %7695 = vmatprep.subr.mxu0 0.0
    %7696 = vmatpush2.msra.mxu0 0.0
    %7697 = vmatprep.subr.mxu0 0.0
    %7698 = vmatpush2.msra.mxu0 0.0
    %7699 = vmatprep.subr.mxu0 0.0
    %7700 = vmatpush2.msra.mxu0 0.0
    %7701 = vmatprep.subr.mxu0 0.0
    %7702 = vmatpush2.msra.mxu0 0.0
    %7703 = vmatprep.subr.mxu0 0.0
    %7704 = vmatpush2.msra.mxu0 0.0
    %7705 = vmatprep.subr.mxu0 0.0
    %7706 = vmatpush2.msra.mxu0 0.0
    %7707 = vmatprep.subr.mxu0 0.0
    %7708 = vmatpush2.msra.mxu0 0.0
    %7709 = vmatprep.mubr.f32.mxu0 0.0
    %7710 = vmatmul.mubr.f32.gmra.mxu0 %v7640
    %v7711 = vpop.f32.mrf.mxu0
    %v7712 = vadd.f32 %v7637, %v7711
    %v7713 = vpop.f32.mrf.mxu0
    %7714 = vmatprep.mubr.f32.mxu0 0.0
    %7715 = vmatmul.mubr.f32.gmra.mxu0 %v7643
    %v7716 = vpop.f32.mrf.mxu0
    %v7717 = vadd.f32 %v7637, %v7716
    %v7718 = vpop.f32.mrf.mxu0
    %7719 = vdwg.mxu0
    %v7720 = vmax.f32 %v7712, 0.0
    %v7721 = vmax.f32 %v7717, 0.0
    %s7722 = scalar_lea.vmem %s9, 64
    %v7723 = vld [vmem:[%s7722] sm:$0xff]
    %v7724 = vld [vmem:[%s7722 + $0x8] sm:$0xff]
    %v7725 = vld [vmem:[%s7722 + $0x10] sm:$0xff]
    %v7726 = vld [vmem:[%s7722 + $0x18] sm:$0xff]
    %v7727 = vld [vmem:[%s7722 + $0x20] sm:$0xff]
    %v7728 = vld [vmem:[%s7722 + $0x28] sm:$0xff]
    %v7729 = vld [vmem:[%s7722 + $0x30] sm:$0xff]
    %v7730 = vld [vmem:[%s7722 + $0x38] sm:$0xff]
    %s7731 = scalar_lea.vmem %s6, 17
    %v7732 = vld [vmem:[%s7731] sm:$0x1]
    %v7734 = vlaneseq
    %v7735 = vshrl.u32 %v7734, 7
    %v7736 = vsub.s32 0, %v7735
    %v7737 = vrot.slane %v7732, %v7736
    %v7740 = vsel %vm3876, %v7720, 0
    %v7743 = vsel %vm3876, %v7721, 0
    %7745 = vmatprep.subr.mxu0 0.0
    %7746 = vmatpush1.msra.mxu0 0.0
    %7747 = vmatprep.subr.mxu0 0.0
    %7748 = vmatpush1.msra.mxu0 0.0
    %7749 = vmatprep.subr.mxu0 0.0
    %7750 = vmatpush1.msra.mxu0 0.0
    %7751 = vmatprep.subr.mxu0 0.0
    %7752 = vmatpush1.msra.mxu0 0.0
    %7753 = vmatprep.subr.mxu0 0.0
    %7754 = vmatpush1.msra.mxu0 0.0
    %7755 = vmatprep.subr.mxu0 0.0
    %7756 = vmatpush1.msra.mxu0 0.0
    %7757 = vmatprep.subr.mxu0 0.0
    %7758 = vmatpush1.msra.mxu0 0.0
    %7759 = vmatprep.subr.mxu0 0.0
    %7760 = vmatpush1.msra.mxu0 0.0
    %7761 = vmatprep.subr.mxu0 0.0
    %7762 = vmatpush1.msra.mxu0 %v7730
    %7763 = vmatprep.subr.mxu0 0.0
    %7764 = vmatpush1.msra.mxu0 %v7729
    %7765 = vmatprep.subr.mxu0 0.0
    %7766 = vmatpush1.msra.mxu0 %v7728
    %7767 = vmatprep.subr.mxu0 0.0
    %7768 = vmatpush1.msra.mxu0 %v7727
    %7769 = vmatprep.subr.mxu0 0.0
    %7770 = vmatpush1.msra.mxu0 %v7726
    %7771 = vmatprep.subr.mxu0 0.0
    %7772 = vmatpush1.msra.mxu0 %v7725
    %7773 = vmatprep.subr.mxu0 0.0
    %7774 = vmatpush1.msra.mxu0 %v7724
    %7775 = vmatprep.subr.mxu0 0.0
    %7776 = vmatpush1.msra.mxu0 %v7723
    %7777 = vmatprep.subr.mxu0 0.0
    %7778 = vmatpush2.msra.mxu0 0.0
    %7779 = vmatprep.subr.mxu0 0.0
    %7780 = vmatpush2.msra.mxu0 0.0
    %7781 = vmatprep.subr.mxu0 0.0
    %7782 = vmatpush2.msra.mxu0 0.0
    %7783 = vmatprep.subr.mxu0 0.0
    %7784 = vmatpush2.msra.mxu0 0.0
    %7785 = vmatprep.subr.mxu0 0.0
    %7786 = vmatpush2.msra.mxu0 0.0
    %7787 = vmatprep.subr.mxu0 0.0
    %7788 = vmatpush2.msra.mxu0 0.0
    %7789 = vmatprep.subr.mxu0 0.0
    %7790 = vmatpush2.msra.mxu0 0.0
    %7791 = vmatprep.subr.mxu0 0.0
    %7792 = vmatpush2.msra.mxu0 0.0
    %7793 = vmatprep.subr.mxu0 0.0
    %7794 = vmatpush2.msra.mxu0 0.0
    %7795 = vmatprep.subr.mxu0 0.0
    %7796 = vmatpush2.msra.mxu0 0.0
    %7797 = vmatprep.subr.mxu0 0.0
    %7798 = vmatpush2.msra.mxu0 0.0
    %7799 = vmatprep.subr.mxu0 0.0
    %7800 = vmatpush2.msra.mxu0 0.0
    %7801 = vmatprep.subr.mxu0 0.0
    %7802 = vmatpush2.msra.mxu0 0.0
    %7803 = vmatprep.subr.mxu0 0.0
    %7804 = vmatpush2.msra.mxu0 0.0
    %7805 = vmatprep.subr.mxu0 0.0
    %7806 = vmatpush2.msra.mxu0 0.0
    %7807 = vmatprep.subr.mxu0 0.0
    %7808 = vmatpush2.msra.mxu0 0.0
    %7809 = vmatprep.mubr.f32.mxu0 0.0
    %7810 = vmatmul.mubr.f32.gmra.mxu0 %v7740
    %v7811 = vpop.f32.mrf.mxu0
    %v7812 = vadd.f32 %v7737, %v7811
    %v7813 = vpop.f32.mrf.mxu0
    %7814 = vmatprep.mubr.f32.mxu0 0.0
    %7815 = vmatmul.mubr.f32.gmra.mxu0 %v7743
    %v7816 = vpop.f32.mrf.mxu0
    %v7817 = vadd.f32 %v7737, %v7816
    %v7818 = vpop.f32.mrf.mxu0
    %7819 = vdwg.mxu0
    %v7820 = vadd.f32 %v7578, %v7812
    %v7821 = vadd.f32 %v7579, %v7817
    %s7822 = sld [smem:[#allocation2 + $0xc]]
    %s7823 = sld [smem:[#allocation2 + $0xd]]
    %v7824 = vsel %vm91, %v7820, 0.0
    %7825 = vadd.xlane.f32.xlu0 %v7824
    %v7826 = vpop.xlane.xlu0 %7825
    %v7827 = vsel %vm91, %v7821, 0.0
    %7828 = vadd.xlane.f32.xlu0 %v7827
    %v7829 = vpop.xlane.xlu0 %7828
    %v7830 = vmul.f32 %v7826, %v98
    %v7831 = vmul.f32 %v7829, %v98
    %v7832 = vsub.f32 %v7820, %v7830
    %v7833 = vsub.f32 %v7821, %v7831
    %v7834 = vmul.f32 %v7832, %v7832
    %v7835 = vmul.f32 %v7833, %v7833
    %v7836 = vsel %vm91, %v7834, 0.0
    %7837 = vadd.xlane.f32.xlu0 %v7836
    %v7838 = vpop.xlane.xlu0 %7837
    %v7839 = vsel %vm91, %v7835, 0.0
    %7840 = vadd.xlane.f32.xlu0 %v7839
    %v7841 = vpop.xlane.xlu0 %7840
    %v7842 = vmul.f32 %v7838, 0.032258064
    %v7843 = vmul.f32 %v7841, 0.032258064
    %v7844 = vstv %s7822
    %v7845 = vmul.f32 %v7844, %v7832
    %v7846 = vmul.f32 %v7844, %v7833
    %v7847 = vrsqrt.pop %v7842
    %v7848 = vmul.f32 %v7842, %v7847
    %vm7849 = vcmp.eq.f32.partialorder %v7842, inf
    %v7850 = vsel %vm7849, %v7842, %v7848
    %vm7851 = vcmp.eq.f32.partialorder %v7842, 0.0
    %v7852 = vand.u32 %v7842, 2147483648
    %v7853 = vsel %vm7851, %v7852, %v7850
    %v7854 = vrsqrt.pop %v7843
    %v7855 = vmul.f32 %v7843, %v7854
    %vm7856 = vcmp.eq.f32.partialorder %v7843, inf
    %v7857 = vsel %vm7856, %v7843, %v7855
    %vm7858 = vcmp.eq.f32.partialorder %v7843, 0.0
    %v7859 = vand.u32 %v7843, 2147483648
    %v7860 = vsel %vm7858, %v7859, %v7857
    %v7861 = vadd.f32 %v7853, 1e-06
    %v7862 = vadd.f32 %v7860, 1e-06
    %v7863 = vrcp.pop %v7861
    %v7864 = vmul.f32 %v7845, %v7863
    %v7865 = vrcp.pop %v7862
    %v7866 = vmul.f32 %v7846, %v7865
    %v7867 = vstv %s7823
    %v7868 = vadd.f32 %v7864, %v7867
    %v7869 = vadd.f32 %v7866, %v7867
    %7870 = vst.msk [vmem:[#allocation7] sm:$0xff] %vm91, %v7868
    %7871 = vst.msk [vmem:[#allocation7 + $0x8] sm:$0xff] %vm91, %v7869
    // Predicated region
    $region50: #{tpu_custom_call.1} parent=1 // pred_check
      _
    $region51: #{tpu_custom_call.1} parent=1 // pred_check_branch
      %7873 = sbr.rel (0) target = $region53
    $region52: #{tpu_custom_call.1} parent=1 // pred_region
      %s7875 = ssub.s32 256, 256
      %7876 = vsyncadd [#allocation4], %s7875
      %s7877 = sshll.u32 [#allocation7], 4
      %s7878 = int_to_ptr.vmem [resolvable:$true] %s7877
      %7883 = dma.vmem_to_hbm [thread:$0]  %s7878, 256, %s10, [#allocation4], 128, 128, 8
    $region53: #{tpu_custom_call.1} parent=1 // pred_fallthru
      _
    // Predicated region
    $region54: #{tpu_custom_call.1} parent=1 // pred_check
      _
    $region55: #{tpu_custom_call.1} parent=1 // pred_check_branch
      %7885 = sbr.rel (0) target = $region57
    $region56: #{tpu_custom_call.1} parent=1 // pred_region
      %7886 = dma.done [#allocation4], 256
    $region57: #{tpu_custom_call.1} parent=1 // pred_fallthru
      _
    %7887 = vsyncpa [#allocation3], 1
    %7888 = vsyncpa [#allocation4], 1
    %7889 = vsyncpa [#allocation5], 1

</llo_original>
